<compile_context>
chip_gen: v5e
topology: v5e:2x2
jax: 0.10.0
libtpu: 0.0.40
codegen_flags: <defaults>
</compile_context>

<pallas_src>
import functools

import jax
import jax.numpy as jnp
from jax.experimental import pallas as pl
from jax.experimental.pallas import tpu as pltpu

C_IN, C_OUT, KH, KW = 3, 16, 5, 5
STRIDE, PAD = 2, 2
BN_EPS = 1e-5
_LANE = 128
_ROWS = 4 * C_IN          # 12 real rows per shifted slab (parity_h, parity_w, ci)
_KPAD = 16                # slab rows padded to 16 for aligned scratch stripes
_KFUSED = 9 * _KPAD       # 144 = fused contraction depth


def _round_up(v, m):
    return (v + m - 1) // m * m


def _largest_divisor_leq(n, cap):
    g = 1
    for d in range(1, min(n, cap) + 1):
        if n % d == 0:
            g = d
    return g


def _zero_pad_rows(xk_ref, hwp):
    """Zero the 4 padding rows of every 16-row stripe (once per grid step)."""
    z = jnp.zeros((_KPAD - _ROWS, hwp), jnp.float32)
    for idx in range(9):
        xk_ref[idx * _KPAD + _ROWS:(idx + 1) * _KPAD, :] = z


def _conv_relu(x, w_ref, b2_ref, xk_ref, *, wd, hwp):
    """relu(conv(x) + (bias - 2)) for one image.

    x: (12, hwp) f32 slab; lanes = flattened decimated spatial positions.
    Writes the 9 lane-shifted copies into the (144, hwp) VMEM scratch and
    performs a single fused K=144 MXU dot (f32 operands, f32 accumulate).
    """
    for idx in range(9):
        dh, dw = idx // 3, idx % 3
        s = dh * wd + dw
        # Left shift by s: xs[:, j] = x[:, (j + s) mod hwp].  Static jnp.roll
        # lowers to two lane slices + concat (same XLU class as pltpu.roll,
        # which rejects axis=-1) and also works under interpret mode.
        xs = x if s == 0 else jnp.roll(x, shift=-s, axis=1)
        xk_ref[idx * _KPAD:idx * _KPAD + _ROWS, :] = xs
    acc = jnp.dot(w_ref[...], xk_ref[...], preferred_element_type=jnp.float32)
    return jnp.maximum(acc + b2_ref[...], 0.0)


# --------- pass 1: conv (+bias-2, relu) -> per-channel sum / sum-of-squares ---------
def _stats_kernel(x_ref, mask_ref, w_ref, b2_ref, ssum_ref, ssq_ref, xk_ref,
                  *, wd, hwp, group):
    step = pl.program_id(1)

    @pl.when(step == 0)
    def _():
        ssum_ref[...] = jnp.zeros_like(ssum_ref)
        ssq_ref[...] = jnp.zeros_like(ssq_ref)

    _zero_pad_rows(xk_ref, hwp)
    mask = mask_ref[...]                               # (1, hwp) validity mask
    ssum = jnp.zeros((C_OUT, 1), jnp.float32)
    ssq = jnp.zeros((C_OUT, 1), jnp.float32)
    for g in range(group):                             # G images per grid step
        v4 = _conv_relu(x_ref[g], w_ref, b2_ref, xk_ref, wd=wd, hwp=hwp)
        v4m = v4 * mask                                # drop halo / lane-pad cols
        ssum = ssum + jnp.sum(v4m, axis=1, keepdims=True)
        ssq = ssq + jnp.sum(v4m * v4m, axis=1, keepdims=True)
    ssum_ref[0] += ssum                                # resident per-core partials
    ssq_ref[0] += ssq


# --------- pass 2: recompute conv, folded BatchNorm, -3, relu (dropout = identity) --
def _norm_kernel(x_ref, w_ref, b2_ref, scale_ref, offset_ref, o_ref, xk_ref,
                 *, wd, hwp, group):
    _zero_pad_rows(xk_ref, hwp)
    scale = scale_ref[...]
    offset = offset_ref[...]
    for g in range(group):
        v4 = _conv_relu(x_ref[g], w_ref, b2_ref, xk_ref, wd=wd, hwp=hwp)
        # relu((v4 - mean) * inv - 3) == relu(v4 * scale - offset)
        o_ref[g] = jnp.maximum(v4 * scale - offset, 0.0)
        # TODO(synk): Dropout2d(0.1) train-mode channel dropout omitted (identity).


def model_forward(x, conv_w, conv_b, *, group_cap=8):
    """x: (N, 3, H, W) f32 -> (N, 16, Ho, Wo) f32 (NCHW, train-mode BN stats)."""
    n, c, h, w = x.shape
    assert c == C_IN
    ho = (h + 2 * PAD - KH) // STRIDE + 1
    wo = (w + 2 * PAD - KW) // STRIDE + 1
    hd, wd = ho + 2, wo + 2                 # per-parity decimated extents
    hp, wp = 2 * ho + 4, 2 * wo + 4         # padded input extents (even)
    hwp = _round_up(hd * wd, _LANE)         # per-image flattened, lane-padded

    group = _largest_divisor_leq(n, group_cap)     # images per grid step
    num_groups = n // group
    nc = 2 if num_groups % 2 == 0 else 1           # per-core partial BN stats (v7x)
    steps = num_groups // nc

    # ---- wrapper: pad + polyphase (parity) decimation, ~1x input bytes ----
    xp = jnp.pad(x, ((0, 0), (0, 0), (PAD, hp - h - PAD), (PAD, wp - w - PAD)))
    slabs = []
    for ph in range(2):
        for pw in range(2):
            slabs.append(xp[:, :, ph:ph + 2 * hd:2, pw:pw + 2 * wd:2])  # (N,3,hd,wd)
    xd = jnp.stack(slabs, axis=1)                           # (N, 4, 3, hd, wd)
    xd = xd.reshape(n, _ROWS, hd * wd)                      # rows = (ph, pw, ci)
    xd = jnp.pad(xd, ((0, 0), (0, 0), (0, hwp - hd * wd))).astype(jnp.float32)

    # ---- fused (16, 144) weight matrix matching the scratch stripe layout ----
    wcols = []
    for dh in range(3):
        for dw in range(3):
            for ph in range(2):
                for pw in range(2):
                    kh, kw = 2 * dh + ph, 2 * dw + pw
                    if kh < KH and kw < KW:
                        wcols.append(conv_w[:, :, kh, kw])              # (16, 3)
                    else:
                        wcols.append(jnp.zeros((C_OUT, C_IN), conv_w.dtype))
            wcols.append(jnp.zeros((C_OUT, _KPAD - _ROWS), conv_w.dtype))
    w_fused = jnp.concatenate(wcols, axis=1).astype(jnp.float32)        # (16, 144)

    b2 = (conv_b - 2.0).reshape(C_OUT, 1).astype(jnp.float32)           # bias-2 folded

    # validity mask over the flattened layout (excludes halo / lane-pad columns)
    m_idx = jnp.arange(hwp)
    valid = ((m_idx // wd) < ho) & ((m_idx % wd) < wo)
    mask = valid.astype(jnp.float32).reshape(1, hwp)

    kern1 = functools.partial(_stats_kernel, wd=wd, hwp=hwp, group=group)
    ssum, ssq = pl.pallas_call(
        kern1,
        out_shape=(
            jax.ShapeDtypeStruct((nc, C_OUT, 1), jnp.float32),
            jax.ShapeDtypeStruct((nc, C_OUT, 1), jnp.float32),
        ),
        grid=(nc, steps),
        in_specs=[
            pl.BlockSpec((group, _ROWS, hwp), lambda c, i: (c * steps + i, 0, 0)),
            pl.BlockSpec((1, hwp), lambda c, i: (0, 0)),
            pl.BlockSpec((C_OUT, _KFUSED), lambda c, i: (0, 0)),
            pl.BlockSpec((C_OUT, 1), lambda c, i: (0, 0)),
        ],
        out_specs=(
            pl.BlockSpec((1, C_OUT, 1), lambda c, i: (c, 0, 0)),
            pl.BlockSpec((1, C_OUT, 1), lambda c, i: (c, 0, 0)),
        ),
        scratch_shapes=[pltpu.VMEM((_KFUSED, hwp), jnp.float32)],
        compiler_params=pltpu.CompilerParams(
            dimension_semantics=("parallel", "arbitrary"),
            vmem_limit_bytes=32 * 1024 * 1024),
    )(xd, mask, w_fused, b2)

    # batch statistics (16 values): sum per-core partials, fold BN + "-3"
    count = float(n * ho * wo)
    ssum_t = jnp.sum(ssum, axis=0)
    ssq_t = jnp.sum(ssq, axis=0)
    mean = ssum_t / count
    var = jnp.maximum(ssq_t / count - mean * mean, 0.0)
    inv = jax.lax.rsqrt(var + BN_EPS)
    scale = inv                                  # (16, 1)
    offset = mean * inv + 3.0                    # (16, 1)

    kern2 = functools.partial(_norm_kernel, wd=wd, hwp=hwp, group=group)
    out = pl.pallas_call(
        kern2,
        out_shape=jax.ShapeDtypeStruct((n, C_OUT, hwp), jnp.float32),
        grid=(num_groups,),
        in_specs=[
            pl.BlockSpec((group, _ROWS, hwp), lambda i: (i, 0, 0)),
            pl.BlockSpec((C_OUT, _KFUSED), lambda i: (0, 0)),
            pl.BlockSpec((C_OUT, 1), lambda i: (0, 0)),
            pl.BlockSpec((C_OUT, 1), lambda i: (0, 0)),
            pl.BlockSpec((C_OUT, 1), lambda i: (0, 0)),
        ],
        out_specs=pl.BlockSpec((group, C_OUT, hwp), lambda i: (i, 0, 0)),
        scratch_shapes=[pltpu.VMEM((_KFUSED, hwp), jnp.float32)],
        compiler_params=pltpu.CompilerParams(
            dimension_semantics=("parallel",),
            vmem_limit_bytes=32 * 1024 * 1024),
    )(xd, w_fused, b2, scale, offset)

    # (N, 16, hwp) -> (N, 16, Ho, Wo); already NCHW-major, no transpose
    out = out[:, :, :hd * wd].reshape(n, C_OUT, hd, wd)[:, :, :ho, :wo]
    return out


def _reference(x_nchw, conv_w, conv_b):
    v2 = jax.lax.conv_general_dilated(
        x_nchw, conv_w, window_strides=(STRIDE, STRIDE),
        padding=((PAD, PAD), (PAD, PAD)),
        dimension_numbers=("NCHW", "OIHW", "NCHW"),
        precision=jax.lax.Precision.HIGHEST,
    ) + conv_b.reshape(1, -1, 1, 1)
    v4 = jnp.maximum(v2 - 2.0, 0.0)
    mean = jnp.mean(v4, axis=(0, 2, 3), keepdims=True)
    var = jnp.mean((v4 - mean) ** 2, axis=(0, 2, 3), keepdims=True)
    v5 = (v4 - mean) * jax.lax.rsqrt(var + BN_EPS)
    return jnp.maximum(v5 - 3.0, 0.0)


if __name__ == "__main__":
    key = jax.random.PRNGKey(0)
    k_x, k_w, k_b = jax.random.split(key, 3)

    # Shapes consistent with the module spec (Conv2d needs 3 input channels).
    x = jax.random.normal(k_x, (2, 3, 64, 64), dtype=jnp.float32)

    fan_in = C_IN * KH * KW
    bound = 1.0 / (fan_in ** 0.5)          # PyTorch Conv2d default init
    conv_w = jax.random.uniform(k_w, (C_OUT, C_IN, KH, KW),
                                minval=-bound, maxval=bound, dtype=jnp.float32)
    conv_b = jax.random.uniform(k_b, (C_OUT,),
                                minval=-bound, maxval=bound, dtype=jnp.float32)

    fwd = jax.jit(model_forward)
    out = fwd(x, conv_w, conv_b)
    jax.block_until_ready(out)

    ref = _reference(x, conv_w, conv_b)
    assert out.shape == (2, C_OUT, 32, 32), out.shape
    err = float(jnp.max(jnp.abs(out - ref)))
    # BN's rsqrt(var+eps) on mostly-dead activations amplifies tiny f32
    # summation-order differences, hence a slightly loosened tolerance.
    assert jnp.allclose(out, ref, atol=2e-3, rtol=2e-3), err

    print("KERNEL_OK")
</pallas_src>

<mosaic_0001>
module attributes {stable_mosaic.version = 11 : i64} {
  func.func @_stats_kernel(%arg0: i32, %arg1: i32, %arg2: memref<2x12x1280xf32, #tpu.memory_space<vmem>>, %arg3: memref<1x1280xf32, #tpu.memory_space<vmem>>, %arg4: memref<16x144xf32, #tpu.memory_space<vmem>>, %arg5: memref<16x1xf32, #tpu.memory_space<vmem>>, %arg6: memref<1x16x1xf32, #tpu.memory_space<vmem>>, %arg7: memref<1x16x1xf32, #tpu.memory_space<vmem>>, %arg8: memref<144x1280xf32, #tpu.memory_space<vmem>>) attributes {dimension_semantics = [#tpu.dimension_semantics<parallel>, #tpu.dimension_semantics<arbitrary>], iteration_bounds = array<i64: 1, 1>, scalar_prefetch = 0 : i64, scratch_operands = 1 : i64, tpu.core_type = #tpu.core_type<tc>, window_params = [{transform_indices = @transform_0, window_bounds = array<i64: 2, 12, 1280>}, {pipeline_mode = #tpu.pipeline_mode<synchronous>, transform_indices = @transform_1, window_bounds = array<i64: 1, 1280>}, {pipeline_mode = #tpu.pipeline_mode<synchronous>, transform_indices = @transform_2, window_bounds = array<i64: 16, 144>}, {pipeline_mode = #tpu.pipeline_mode<synchronous>, transform_indices = @transform_3, window_bounds = array<i64: 16, 1>}, {transform_indices = @transform_4, window_bounds = array<i64: 1, 16, 1>}, {transform_indices = @transform_5, window_bounds = array<i64: 1, 16, 1>}]} {
    %c0_i32 = arith.constant 0 : i32
    %0 = arith.cmpi eq, %arg1, %c0_i32 : i32
    %1 = arith.extui %0 : i1 to i32
    %c0_i32_0 = arith.constant 0 : i32
    %2 = arith.cmpi ne, %1, %c0_i32_0 : i32
    scf.if %2 {
      %cst_78 = arith.constant 0.000000e+00 : f32
      %132 = vector.broadcast %cst_78 : f32 to vector<1x16x1xf32>
      %c0_79 = arith.constant 0 : index
      %c0_80 = arith.constant 0 : index
      %c0_81 = arith.constant 0 : index
      %133 = vector.load %arg6[%c0_79, %c0_80, %c0_81] : memref<1x16x1xf32, #tpu.memory_space<vmem>>, vector<1x16x1xf32>
      tpu.vector_store %arg6[%c0_79, %c0_80, %c0_81], %132 {strides = array<i32>} : memref<1x16x1xf32, #tpu.memory_space<vmem>>, vector<1x16x1xf32>,
      %cst_82 = arith.constant 0.000000e+00 : f32
      %134 = vector.broadcast %cst_82 : f32 to vector<1x16x1xf32>
      %c0_83 = arith.constant 0 : index
      %c0_84 = arith.constant 0 : index
      %c0_85 = arith.constant 0 : index
      %135 = vector.load %arg7[%c0_83, %c0_84, %c0_85] : memref<1x16x1xf32, #tpu.memory_space<vmem>>, vector<1x16x1xf32>
      tpu.vector_store %arg7[%c0_83, %c0_84, %c0_85], %134 {strides = array<i32>} : memref<1x16x1xf32, #tpu.memory_space<vmem>>, vector<1x16x1xf32>,
    } else {
    }
    %cst = arith.constant 0.000000e+00 : f32
    %3 = vector.broadcast %cst : f32 to vector<4x1280xf32>
    %c12 = arith.constant 12 : index
    %c0 = arith.constant 0 : index
    %4 = vector.load %arg8[%c12, %c0] : memref<144x1280xf32, #tpu.memory_space<vmem>>, vector<4x1280xf32>
    tpu.vector_store %arg8[%c12, %c0], %3 {strides = array<i32>} : memref<144x1280xf32, #tpu.memory_space<vmem>>, vector<4x1280xf32>,
    %c28 = arith.constant 28 : index
    %c0_1 = arith.constant 0 : index
    %5 = vector.load %arg8[%c28, %c0_1] : memref<144x1280xf32, #tpu.memory_space<vmem>>, vector<4x1280xf32>
    tpu.vector_store %arg8[%c28, %c0_1], %3 {strides = array<i32>} : memref<144x1280xf32, #tpu.memory_space<vmem>>, vector<4x1280xf32>,
    %c44 = arith.constant 44 : index
    %c0_2 = arith.constant 0 : index
    %6 = vector.load %arg8[%c44, %c0_2] : memref<144x1280xf32, #tpu.memory_space<vmem>>, vector<4x1280xf32>
    tpu.vector_store %arg8[%c44, %c0_2], %3 {strides = array<i32>} : memref<144x1280xf32, #tpu.memory_space<vmem>>, vector<4x1280xf32>,
    %c60 = arith.constant 60 : index
    %c0_3 = arith.constant 0 : index
    %7 = vector.load %arg8[%c60, %c0_3] : memref<144x1280xf32, #tpu.memory_space<vmem>>, vector<4x1280xf32>
    tpu.vector_store %arg8[%c60, %c0_3], %3 {strides = array<i32>} : memref<144x1280xf32, #tpu.memory_space<vmem>>, vector<4x1280xf32>,
    %c76 = arith.constant 76 : index
    %c0_4 = arith.constant 0 : index
    %8 = vector.load %arg8[%c76, %c0_4] : memref<144x1280xf32, #tpu.memory_space<vmem>>, vector<4x1280xf32>
    tpu.vector_store %arg8[%c76, %c0_4], %3 {strides = array<i32>} : memref<144x1280xf32, #tpu.memory_space<vmem>>, vector<4x1280xf32>,
    %c92 = arith.constant 92 : index
    %c0_5 = arith.constant 0 : index
    %9 = vector.load %arg8[%c92, %c0_5] : memref<144x1280xf32, #tpu.memory_space<vmem>>, vector<4x1280xf32>
    tpu.vector_store %arg8[%c92, %c0_5], %3 {strides = array<i32>} : memref<144x1280xf32, #tpu.memory_space<vmem>>, vector<4x1280xf32>,
    %c108 = arith.constant 108 : index
    %c0_6 = arith.constant 0 : index
    %10 = vector.load %arg8[%c108, %c0_6] : memref<144x1280xf32, #tpu.memory_space<vmem>>, vector<4x1280xf32>
    tpu.vector_store %arg8[%c108, %c0_6], %3 {strides = array<i32>} : memref<144x1280xf32, #tpu.memory_space<vmem>>, vector<4x1280xf32>,
    %c124 = arith.constant 124 : index
    %c0_7 = arith.constant 0 : index
    %11 = vector.load %arg8[%c124, %c0_7] : memref<144x1280xf32, #tpu.memory_space<vmem>>, vector<4x1280xf32>
    tpu.vector_store %arg8[%c124, %c0_7], %3 {strides = array<i32>} : memref<144x1280xf32, #tpu.memory_space<vmem>>, vector<4x1280xf32>,
    %c140 = arith.constant 140 : index
    %c0_8 = arith.constant 0 : index
    %12 = vector.load %arg8[%c140, %c0_8] : memref<144x1280xf32, #tpu.memory_space<vmem>>, vector<4x1280xf32>
    tpu.vector_store %arg8[%c140, %c0_8], %3 {strides = array<i32>} : memref<144x1280xf32, #tpu.memory_space<vmem>>, vector<4x1280xf32>,
    %c0_9 = arith.constant 0 : index
    %c0_10 = arith.constant 0 : index
    %13 = vector.load %arg3[%c0_9, %c0_10] : memref<1x1280xf32, #tpu.memory_space<vmem>>, vector<1x1280xf32>
    %cst_11 = arith.constant 0.000000e+00 : f32
    %14 = vector.broadcast %cst_11 : f32 to vector<16x1xf32>
    %cst_12 = arith.constant 0.000000e+00 : f32
    %15 = vector.broadcast %cst_12 : f32 to vector<16x1xf32>
    %c0_13 = arith.constant 0 : index
    %c0_14 = arith.constant 0 : index
    %c0_15 = arith.constant 0 : index
    %16 = vector.load %arg2[%c0_13, %c0_14, %c0_15] : memref<2x12x1280xf32, #tpu.memory_space<vmem>>, vector<1x12x1280xf32>
    %17 = vector.shape_cast %16 : vector<1x12x1280xf32> to vector<12x1280xf32>
    %c0_16 = arith.constant 0 : index
    %c0_17 = arith.constant 0 : index
    %18 = vector.load %arg8[%c0_16, %c0_17] : memref<144x1280xf32, #tpu.memory_space<vmem>>, vector<12x1280xf32>
    tpu.vector_store %arg8[%c0_16, %c0_17], %17 {strides = array<i32>} : memref<144x1280xf32, #tpu.memory_space<vmem>>, vector<12x1280xf32>,
    %19 = vector.extract_strided_slice %17 {offsets = [0, 1], sizes = [12, 1279], strides = [1, 1]} : vector<12x1280xf32> to vector<12x1279xf32>
    %20 = vector.extract_strided_slice %17 {offsets = [0, 0], sizes = [12, 1], strides = [1, 1]} : vector<12x1280xf32> to vector<12x1xf32>
    %21 = tpu.concatenate %19, %20 in 1 : vector<12x1279xf32>, vector<12x1xf32> -> vector<12x1280xf32>
    %c16 = arith.constant 16 : index
    %c0_18 = arith.constant 0 : index
    %22 = vector.load %arg8[%c16, %c0_18] : memref<144x1280xf32, #tpu.memory_space<vmem>>, vector<12x1280xf32>
    tpu.vector_store %arg8[%c16, %c0_18], %21 {strides = array<i32>} : memref<144x1280xf32, #tpu.memory_space<vmem>>, vector<12x1280xf32>,
    %23 = vector.extract_strided_slice %17 {offsets = [0, 2], sizes = [12, 1278], strides = [1, 1]} : vector<12x1280xf32> to vector<12x1278xf32>
    %24 = vector.extract_strided_slice %17 {offsets = [0, 0], sizes = [12, 2], strides = [1, 1]} : vector<12x1280xf32> to vector<12x2xf32>
    %25 = tpu.concatenate %23, %24 in 1 : vector<12x1278xf32>, vector<12x2xf32> -> vector<12x1280xf32>
    %c32 = arith.constant 32 : index
    %c0_19 = arith.constant 0 : index
    %26 = vector.load %arg8[%c32, %c0_19] : memref<144x1280xf32, #tpu.memory_space<vmem>>, vector<12x1280xf32>
    tpu.vector_store %arg8[%c32, %c0_19], %25 {strides = array<i32>} : memref<144x1280xf32, #tpu.memory_space<vmem>>, vector<12x1280xf32>,
    %27 = vector.extract_strided_slice %17 {offsets = [0, 34], sizes = [12, 1246], strides = [1, 1]} : vector<12x1280xf32> to vector<12x1246xf32>
    %28 = vector.extract_strided_slice %17 {offsets = [0, 0], sizes = [12, 34], strides = [1, 1]} : vector<12x1280xf32> to vector<12x34xf32>
    %29 = tpu.concatenate %27, %28 in 1 : vector<12x1246xf32>, vector<12x34xf32> -> vector<12x1280xf32>
    %c48 = arith.constant 48 : index
    %c0_20 = arith.constant 0 : index
    %30 = vector.load %arg8[%c48, %c0_20] : memref<144x1280xf32, #tpu.memory_space<vmem>>, vector<12x1280xf32>
    tpu.vector_store %arg8[%c48, %c0_20], %29 {strides = array<i32>} : memref<144x1280xf32, #tpu.memory_space<vmem>>, vector<12x1280xf32>,
    %31 = vector.extract_strided_slice %17 {offsets = [0, 35], sizes = [12, 1245], strides = [1, 1]} : vector<12x1280xf32> to vector<12x1245xf32>
    %32 = vector.extract_strided_slice %17 {offsets = [0, 0], sizes = [12, 35], strides = [1, 1]} : vector<12x1280xf32> to vector<12x35xf32>
    %33 = tpu.concatenate %31, %32 in 1 : vector<12x1245xf32>, vector<12x35xf32> -> vector<12x1280xf32>
    %c64 = arith.constant 64 : index
    %c0_21 = arith.constant 0 : index
    %34 = vector.load %arg8[%c64, %c0_21] : memref<144x1280xf32, #tpu.memory_space<vmem>>, vector<12x1280xf32>
    tpu.vector_store %arg8[%c64, %c0_21], %33 {strides = array<i32>} : memref<144x1280xf32, #tpu.memory_space<vmem>>, vector<12x1280xf32>,
    %35 = vector.extract_strided_slice %17 {offsets = [0, 36], sizes = [12, 1244], strides = [1, 1]} : vector<12x1280xf32> to vector<12x1244xf32>
    %36 = vector.extract_strided_slice %17 {offsets = [0, 0], sizes = [12, 36], strides = [1, 1]} : vector<12x1280xf32> to vector<12x36xf32>
    %37 = tpu.concatenate %35, %36 in 1 : vector<12x1244xf32>, vector<12x36xf32> -> vector<12x1280xf32>
    %c80 = arith.constant 80 : index
    %c0_22 = arith.constant 0 : index
    %38 = vector.load %arg8[%c80, %c0_22] : memref<144x1280xf32, #tpu.memory_space<vmem>>, vector<12x1280xf32>
    tpu.vector_store %arg8[%c80, %c0_22], %37 {strides = array<i32>} : memref<144x1280xf32, #tpu.memory_space<vmem>>, vector<12x1280xf32>,
    %39 = vector.extract_strided_slice %17 {offsets = [0, 68], sizes = [12, 1212], strides = [1, 1]} : vector<12x1280xf32> to vector<12x1212xf32>
    %40 = vector.extract_strided_slice %17 {offsets = [0, 0], sizes = [12, 68], strides = [1, 1]} : vector<12x1280xf32> to vector<12x68xf32>
    %41 = tpu.concatenate %39, %40 in 1 : vector<12x1212xf32>, vector<12x68xf32> -> vector<12x1280xf32>
    %c96 = arith.constant 96 : index
    %c0_23 = arith.constant 0 : index
    %42 = vector.load %arg8[%c96, %c0_23] : memref<144x1280xf32, #tpu.memory_space<vmem>>, vector<12x1280xf32>
    tpu.vector_store %arg8[%c96, %c0_23], %41 {strides = array<i32>} : memref<144x1280xf32, #tpu.memory_space<vmem>>, vector<12x1280xf32>,
    %43 = vector.extract_strided_slice %17 {offsets = [0, 69], sizes = [12, 1211], strides = [1, 1]} : vector<12x1280xf32> to vector<12x1211xf32>
    %44 = vector.extract_strided_slice %17 {offsets = [0, 0], sizes = [12, 69], strides = [1, 1]} : vector<12x1280xf32> to vector<12x69xf32>
    %45 = tpu.concatenate %43, %44 in 1 : vector<12x1211xf32>, vector<12x69xf32> -> vector<12x1280xf32>
    %c112 = arith.constant 112 : index
    %c0_24 = arith.constant 0 : index
    %46 = vector.load %arg8[%c112, %c0_24] : memref<144x1280xf32, #tpu.memory_space<vmem>>, vector<12x1280xf32>
    tpu.vector_store %arg8[%c112, %c0_24], %45 {strides = array<i32>} : memref<144x1280xf32, #tpu.memory_space<vmem>>, vector<12x1280xf32>,
    %47 = vector.extract_strided_slice %17 {offsets = [0, 70], sizes = [12, 1210], strides = [1, 1]} : vector<12x1280xf32> to vector<12x1210xf32>
    %48 = vector.extract_strided_slice %17 {offsets = [0, 0], sizes = [12, 70], strides = [1, 1]} : vector<12x1280xf32> to vector<12x70xf32>
    %49 = tpu.concatenate %47, %48 in 1 : vector<12x1210xf32>, vector<12x70xf32> -> vector<12x1280xf32>
    %c128 = arith.constant 128 : index
    %c0_25 = arith.constant 0 : index
    %50 = vector.load %arg8[%c128, %c0_25] : memref<144x1280xf32, #tpu.memory_space<vmem>>, vector<12x1280xf32>
    tpu.vector_store %arg8[%c128, %c0_25], %49 {strides = array<i32>} : memref<144x1280xf32, #tpu.memory_space<vmem>>, vector<12x1280xf32>,
    %c0_26 = arith.constant 0 : index
    %c0_27 = arith.constant 0 : index
    %51 = vector.load %arg4[%c0_26, %c0_27] : memref<16x144xf32, #tpu.memory_space<vmem>>, vector<16x144xf32>
    %c0_28 = arith.constant 0 : index
    %c0_29 = arith.constant 0 : index
    %52 = vector.load %arg8[%c0_28, %c0_29] : memref<144x1280xf32, #tpu.memory_space<vmem>>, vector<144x1280xf32>
    %cst_30 = arith.constant dense<0.000000e+00> : vector<16x1280xf32>
    %53 = tpu.matmul %51, %52, %cst_30 {dimension_numbers = #tpu.dot_dimension_numbers<[1], [0], [0], [1], [0, 0, 1, 1], [], []>} : vector<16x144xf32>, vector<144x1280xf32>, vector<16x1280xf32> -> vector<16x1280xf32>
    %c0_31 = arith.constant 0 : index
    %c0_32 = arith.constant 0 : index
    %54 = vector.load %arg5[%c0_31, %c0_32] : memref<16x1xf32, #tpu.memory_space<vmem>>, vector<16x1xf32>
    %55 = vector.broadcast %54 : vector<16x1xf32> to vector<16x1280xf32>
    %56 = arith.addf %53, %55 : vector<16x1280xf32>
    %cst_33 = arith.constant 0.000000e+00 : f32
    %57 = vector.broadcast %cst_33 : f32 to vector<16x1280xf32>
    %58 = arith.maximumf %56, %57 : vector<16x1280xf32>
    %59 = vector.broadcast %13 : vector<1x1280xf32> to vector<16x1280xf32>
    %60 = arith.mulf %58, %59 : vector<16x1280xf32>
    %cst_34 = arith.constant dense<0.000000e+00> : vector<16xf32>
    %61 = vector.multi_reduction <add>, %60, %cst_34 [1] : vector<16x1280xf32> to vector<16xf32>
    %62 = vector.shape_cast %61 : vector<16xf32> to vector<16x1xf32>
    %63 = arith.addf %14, %62 : vector<16x1xf32>
    %64 = arith.mulf %60, %60 : vector<16x1280xf32>
    %cst_35 = arith.constant dense<0.000000e+00> : vector<16xf32>
    %65 = vector.multi_reduction <add>, %64, %cst_35 [1] : vector<16x1280xf32> to vector<16xf32>
    %66 = vector.shape_cast %65 : vector<16xf32> to vector<16x1xf32>
    %67 = arith.addf %15, %66 : vector<16x1xf32>
    %c1 = arith.constant 1 : index
    %c0_36 = arith.constant 0 : index
    %c0_37 = arith.constant 0 : index
    %68 = vector.load %arg2[%c1, %c0_36, %c0_37] : memref<2x12x1280xf32, #tpu.memory_space<vmem>>, vector<1x12x1280xf32>
    %69 = vector.shape_cast %68 : vector<1x12x1280xf32> to vector<12x1280xf32>
    %c0_38 = arith.constant 0 : index
    %c0_39 = arith.constant 0 : index
    %70 = vector.load %arg8[%c0_38, %c0_39] : memref<144x1280xf32, #tpu.memory_space<vmem>>, vector<12x1280xf32>
    tpu.vector_store %arg8[%c0_38, %c0_39], %69 {strides = array<i32>} : memref<144x1280xf32, #tpu.memory_space<vmem>>, vector<12x1280xf32>,
    %71 = vector.extract_strided_slice %69 {offsets = [0, 1], sizes = [12, 1279], strides = [1, 1]} : vector<12x1280xf32> to vector<12x1279xf32>
    %72 = vector.extract_strided_slice %69 {offsets = [0, 0], sizes = [12, 1], strides = [1, 1]} : vector<12x1280xf32> to vector<12x1xf32>
    %73 = tpu.concatenate %71, %72 in 1 : vector<12x1279xf32>, vector<12x1xf32> -> vector<12x1280xf32>
    %c16_40 = arith.constant 16 : index
    %c0_41 = arith.constant 0 : index
    %74 = vector.load %arg8[%c16_40, %c0_41] : memref<144x1280xf32, #tpu.memory_space<vmem>>, vector<12x1280xf32>
    tpu.vector_store %arg8[%c16_40, %c0_41], %73 {strides = array<i32>} : memref<144x1280xf32, #tpu.memory_space<vmem>>, vector<12x1280xf32>,
    %75 = vector.extract_strided_slice %69 {offsets = [0, 2], sizes = [12, 1278], strides = [1, 1]} : vector<12x1280xf32> to vector<12x1278xf32>
    %76 = vector.extract_strided_slice %69 {offsets = [0, 0], sizes = [12, 2], strides = [1, 1]} : vector<12x1280xf32> to vector<12x2xf32>
    %77 = tpu.concatenate %75, %76 in 1 : vector<12x1278xf32>, vector<12x2xf32> -> vector<12x1280xf32>
    %c32_42 = arith.constant 32 : index
    %c0_43 = arith.constant 0 : index
    %78 = vector.load %arg8[%c32_42, %c0_43] : memref<144x1280xf32, #tpu.memory_space<vmem>>, vector<12x1280xf32>
    tpu.vector_store %arg8[%c32_42, %c0_43], %77 {strides = array<i32>} : memref<144x1280xf32, #tpu.memory_space<vmem>>, vector<12x1280xf32>,
    %79 = vector.extract_strided_slice %69 {offsets = [0, 34], sizes = [12, 1246], strides = [1, 1]} : vector<12x1280xf32> to vector<12x1246xf32>
    %80 = vector.extract_strided_slice %69 {offsets = [0, 0], sizes = [12, 34], strides = [1, 1]} : vector<12x1280xf32> to vector<12x34xf32>
    %81 = tpu.concatenate %79, %80 in 1 : vector<12x1246xf32>, vector<12x34xf32> -> vector<12x1280xf32>
    %c48_44 = arith.constant 48 : index
    %c0_45 = arith.constant 0 : index
    %82 = vector.load %arg8[%c48_44, %c0_45] : memref<144x1280xf32, #tpu.memory_space<vmem>>, vector<12x1280xf32>
    tpu.vector_store %arg8[%c48_44, %c0_45], %81 {strides = array<i32>} : memref<144x1280xf32, #tpu.memory_space<vmem>>, vector<12x1280xf32>,
    %83 = vector.extract_strided_slice %69 {offsets = [0, 35], sizes = [12, 1245], strides = [1, 1]} : vector<12x1280xf32> to vector<12x1245xf32>
    %84 = vector.extract_strided_slice %69 {offsets = [0, 0], sizes = [12, 35], strides = [1, 1]} : vector<12x1280xf32> to vector<12x35xf32>
    %85 = tpu.concatenate %83, %84 in 1 : vector<12x1245xf32>, vector<12x35xf32> -> vector<12x1280xf32>
    %c64_46 = arith.constant 64 : index
    %c0_47 = arith.constant 0 : index
    %86 = vector.load %arg8[%c64_46, %c0_47] : memref<144x1280xf32, #tpu.memory_space<vmem>>, vector<12x1280xf32>
    tpu.vector_store %arg8[%c64_46, %c0_47], %85 {strides = array<i32>} : memref<144x1280xf32, #tpu.memory_space<vmem>>, vector<12x1280xf32>,
    %87 = vector.extract_strided_slice %69 {offsets = [0, 36], sizes = [12, 1244], strides = [1, 1]} : vector<12x1280xf32> to vector<12x1244xf32>
    %88 = vector.extract_strided_slice %69 {offsets = [0, 0], sizes = [12, 36], strides = [1, 1]} : vector<12x1280xf32> to vector<12x36xf32>
    %89 = tpu.concatenate %87, %88 in 1 : vector<12x1244xf32>, vector<12x36xf32> -> vector<12x1280xf32>
    %c80_48 = arith.constant 80 : index
    %c0_49 = arith.constant 0 : index
    %90 = vector.load %arg8[%c80_48, %c0_49] : memref<144x1280xf32, #tpu.memory_space<vmem>>, vector<12x1280xf32>
    tpu.vector_store %arg8[%c80_48, %c0_49], %89 {strides = array<i32>} : memref<144x1280xf32, #tpu.memory_space<vmem>>, vector<12x1280xf32>,
    %91 = vector.extract_strided_slice %69 {offsets = [0, 68], sizes = [12, 1212], strides = [1, 1]} : vector<12x1280xf32> to vector<12x1212xf32>
    %92 = vector.extract_strided_slice %69 {offsets = [0, 0], sizes = [12, 68], strides = [1, 1]} : vector<12x1280xf32> to vector<12x68xf32>
    %93 = tpu.concatenate %91, %92 in 1 : vector<12x1212xf32>, vector<12x68xf32> -> vector<12x1280xf32>
    %c96_50 = arith.constant 96 : index
    %c0_51 = arith.constant 0 : index
    %94 = vector.load %arg8[%c96_50, %c0_51] : memref<144x1280xf32, #tpu.memory_space<vmem>>, vector<12x1280xf32>
    tpu.vector_store %arg8[%c96_50, %c0_51], %93 {strides = array<i32>} : memref<144x1280xf32, #tpu.memory_space<vmem>>, vector<12x1280xf32>,
    %95 = vector.extract_strided_slice %69 {offsets = [0, 69], sizes = [12, 1211], strides = [1, 1]} : vector<12x1280xf32> to vector<12x1211xf32>
    %96 = vector.extract_strided_slice %69 {offsets = [0, 0], sizes = [12, 69], strides = [1, 1]} : vector<12x1280xf32> to vector<12x69xf32>
    %97 = tpu.concatenate %95, %96 in 1 : vector<12x1211xf32>, vector<12x69xf32> -> vector<12x1280xf32>
    %c112_52 = arith.constant 112 : index
    %c0_53 = arith.constant 0 : index
    %98 = vector.load %arg8[%c112_52, %c0_53] : memref<144x1280xf32, #tpu.memory_space<vmem>>, vector<12x1280xf32>
    tpu.vector_store %arg8[%c112_52, %c0_53], %97 {strides = array<i32>} : memref<144x1280xf32, #tpu.memory_space<vmem>>, vector<12x1280xf32>,
    %99 = vector.extract_strided_slice %69 {offsets = [0, 70], sizes = [12, 1210], strides = [1, 1]} : vector<12x1280xf32> to vector<12x1210xf32>
    %100 = vector.extract_strided_slice %69 {offsets = [0, 0], sizes = [12, 70], strides = [1, 1]} : vector<12x1280xf32> to vector<12x70xf32>
    %101 = tpu.concatenate %99, %100 in 1 : vector<12x1210xf32>, vector<12x70xf32> -> vector<12x1280xf32>
    %c128_54 = arith.constant 128 : index
    %c0_55 = arith.constant 0 : index
    %102 = vector.load %arg8[%c128_54, %c0_55] : memref<144x1280xf32, #tpu.memory_space<vmem>>, vector<12x1280xf32>
    tpu.vector_store %arg8[%c128_54, %c0_55], %101 {strides = array<i32>} : memref<144x1280xf32, #tpu.memory_space<vmem>>, vector<12x1280xf32>,
    %c0_56 = arith.constant 0 : index
    %c0_57 = arith.constant 0 : index
    %103 = vector.load %arg4[%c0_56, %c0_57] : memref<16x144xf32, #tpu.memory_space<vmem>>, vector<16x144xf32>
    %c0_58 = arith.constant 0 : index
    %c0_59 = arith.constant 0 : index
    %104 = vector.load %arg8[%c0_58, %c0_59] : memref<144x1280xf32, #tpu.memory_space<vmem>>, vector<144x1280xf32>
    %cst_60 = arith.constant dense<0.000000e+00> : vector<16x1280xf32>
    %105 = tpu.matmul %103, %104, %cst_60 {dimension_numbers = #tpu.dot_dimension_numbers<[1], [0], [0], [1], [0, 0, 1, 1], [], []>} : vector<16x144xf32>, vector<144x1280xf32>, vector<16x1280xf32> -> vector<16x1280xf32>
    %c0_61 = arith.constant 0 : index
    %c0_62 = arith.constant 0 : index
    %106 = vector.load %arg5[%c0_61, %c0_62] : memref<16x1xf32, #tpu.memory_space<vmem>>, vector<16x1xf32>
    %107 = vector.broadcast %106 : vector<16x1xf32> to vector<16x1280xf32>
    %108 = arith.addf %105, %107 : vector<16x1280xf32>
    %cst_63 = arith.constant 0.000000e+00 : f32
    %109 = vector.broadcast %cst_63 : f32 to vector<16x1280xf32>
    %110 = arith.maximumf %108, %109 : vector<16x1280xf32>
    %111 = vector.broadcast %13 : vector<1x1280xf32> to vector<16x1280xf32>
    %112 = arith.mulf %110, %111 : vector<16x1280xf32>
    %cst_64 = arith.constant dense<0.000000e+00> : vector<16xf32>
    %113 = vector.multi_reduction <add>, %112, %cst_64 [1] : vector<16x1280xf32> to vector<16xf32>
    %114 = vector.shape_cast %113 : vector<16xf32> to vector<16x1xf32>
    %115 = arith.addf %63, %114 : vector<16x1xf32>
    %116 = arith.mulf %112, %112 : vector<16x1280xf32>
    %cst_65 = arith.constant dense<0.000000e+00> : vector<16xf32>
    %117 = vector.multi_reduction <add>, %116, %cst_65 [1] : vector<16x1280xf32> to vector<16xf32>
    %118 = vector.shape_cast %117 : vector<16xf32> to vector<16x1xf32>
    %119 = arith.addf %67, %118 : vector<16x1xf32>
    %c0_66 = arith.constant 0 : index
    %c0_67 = arith.constant 0 : index
    %c0_68 = arith.constant 0 : index
    %120 = vector.load %arg6[%c0_66, %c0_67, %c0_68] : memref<1x16x1xf32, #tpu.memory_space<vmem>>, vector<1x16x1xf32>
    %121 = vector.shape_cast %120 : vector<1x16x1xf32> to vector<16x1xf32>
    %122 = arith.addf %121, %115 : vector<16x1xf32>
    %c0_69 = arith.constant 0 : index
    %c0_70 = arith.constant 0 : index
    %c0_71 = arith.constant 0 : index
    %123 = vector.load %arg6[%c0_69, %c0_70, %c0_71] : memref<1x16x1xf32, #tpu.memory_space<vmem>>, vector<1x16x1xf32>
    %124 = vector.shape_cast %123 : vector<1x16x1xf32> to vector<16x1xf32>
    %125 = vector.shape_cast %122 : vector<16x1xf32> to vector<1x16x1xf32>
    tpu.vector_store %arg6[%c0_69, %c0_70, %c0_71], %125 {strides = array<i32>} : memref<1x16x1xf32, #tpu.memory_space<vmem>>, vector<1x16x1xf32>,
    %c0_72 = arith.constant 0 : index
    %c0_73 = arith.constant 0 : index
    %c0_74 = arith.constant 0 : index
    %126 = vector.load %arg7[%c0_72, %c0_73, %c0_74] : memref<1x16x1xf32, #tpu.memory_space<vmem>>, vector<1x16x1xf32>
    %127 = vector.shape_cast %126 : vector<1x16x1xf32> to vector<16x1xf32>
    %128 = arith.addf %127, %119 : vector<16x1xf32>
    %c0_75 = arith.constant 0 : index
    %c0_76 = arith.constant 0 : index
    %c0_77 = arith.constant 0 : index
    %129 = vector.load %arg7[%c0_75, %c0_76, %c0_77] : memref<1x16x1xf32, #tpu.memory_space<vmem>>, vector<1x16x1xf32>
    %130 = vector.shape_cast %129 : vector<1x16x1xf32> to vector<16x1xf32>
    %131 = vector.shape_cast %128 : vector<16x1xf32> to vector<1x16x1xf32>
    tpu.vector_store %arg7[%c0_75, %c0_76, %c0_77], %131 {strides = array<i32>} : memref<1x16x1xf32, #tpu.memory_space<vmem>>, vector<1x16x1xf32>,
    return
  }
  func.func @transform_0(%arg0: i32, %arg1: i32) -> (i32, i32, i32) {
    %c1_i32 = arith.constant 1 : i32
    %0 = arith.muli %arg0, %c1_i32 : i32
    %1 = arith.addi %0, %arg1 : i32
    %c0_i32 = arith.constant 0 : i32
    %c0_i32_0 = arith.constant 0 : i32
    %c0_i32_1 = arith.constant 0 : i32
    return %1, %c0_i32, %c0_i32_0 : i32, i32, i32
  }
  func.func @transform_1(%arg0: i32, %arg1: i32) -> (i32, i32) {
    %c0_i32 = arith.constant 0 : i32
    %c0_i32_0 = arith.constant 0 : i32
    %c0_i32_1 = arith.constant 0 : i32
    return %c0_i32, %c0_i32_0 : i32, i32
  }
  func.func @transform_2(%arg0: i32, %arg1: i32) -> (i32, i32) {
    %c0_i32 = arith.constant 0 : i32
    %c0_i32_0 = arith.constant 0 : i32
    %c0_i32_1 = arith.constant 0 : i32
    return %c0_i32, %c0_i32_0 : i32, i32
  }
  func.func @transform_3(%arg0: i32, %arg1: i32) -> (i32, i32) {
    %c0_i32 = arith.constant 0 : i32
    %c0_i32_0 = arith.constant 0 : i32
    %c0_i32_1 = arith.constant 0 : i32
    return %c0_i32, %c0_i32_0 : i32, i32
  }
  func.func @transform_4(%arg0: i32, %arg1: i32) -> (i32, i32, i32) {
    %c0_i32 = arith.constant 0 : i32
    %c0_i32_0 = arith.constant 0 : i32
    %c0_i32_1 = arith.constant 0 : i32
    return %arg0, %c0_i32, %c0_i32_0 : i32, i32, i32
  }
  func.func @transform_5(%arg0: i32, %arg1: i32) -> (i32, i32, i32) {
    %c0_i32 = arith.constant 0 : i32
    %c0_i32_0 = arith.constant 0 : i32
    %c0_i32_1 = arith.constant 0 : i32
    return %arg0, %c0_i32, %c0_i32_0 : i32, i32, i32
  }
}

module attributes {stable_mosaic.version = 11 : i64} {
  func.func @_norm_kernel(%arg0: i32, %arg1: memref<2x12x1280xf32, #tpu.memory_space<vmem>>, %arg2: memref<16x144xf32, #tpu.memory_space<vmem>>, %arg3: memref<16x1xf32, #tpu.memory_space<vmem>>, %arg4: memref<16x1xf32, #tpu.memory_space<vmem>>, %arg5: memref<16x1xf32, #tpu.memory_space<vmem>>, %arg6: memref<2x16x1280xf32, #tpu.memory_space<vmem>>, %arg7: memref<144x1280xf32, #tpu.memory_space<vmem>>) attributes {dimension_semantics = [#tpu.dimension_semantics<parallel>], iteration_bounds = array<i64: 1>, scalar_prefetch = 0 : i64, scratch_operands = 1 : i64, tpu.core_type = #tpu.core_type<tc>, window_params = [{transform_indices = @transform_0, window_bounds = array<i64: 2, 12, 1280>}, {pipeline_mode = #tpu.pipeline_mode<synchronous>, transform_indices = @transform_1, window_bounds = array<i64: 16, 144>}, {pipeline_mode = #tpu.pipeline_mode<synchronous>, transform_indices = @transform_2, window_bounds = array<i64: 16, 1>}, {pipeline_mode = #tpu.pipeline_mode<synchronous>, transform_indices = @transform_3, window_bounds = array<i64: 16, 1>}, {pipeline_mode = #tpu.pipeline_mode<synchronous>, transform_indices = @transform_4, window_bounds = array<i64: 16, 1>}, {transform_indices = @transform_5, window_bounds = array<i64: 2, 16, 1280>}]} {
    %cst = arith.constant 0.000000e+00 : f32
    %0 = vector.broadcast %cst : f32 to vector<4x1280xf32>
    %c12 = arith.constant 12 : index
    %c0 = arith.constant 0 : index
    %1 = vector.load %arg7[%c12, %c0] : memref<144x1280xf32, #tpu.memory_space<vmem>>, vector<4x1280xf32>
    tpu.vector_store %arg7[%c12, %c0], %0 {strides = array<i32>} : memref<144x1280xf32, #tpu.memory_space<vmem>>, vector<4x1280xf32>,
    %c28 = arith.constant 28 : index
    %c0_0 = arith.constant 0 : index
    %2 = vector.load %arg7[%c28, %c0_0] : memref<144x1280xf32, #tpu.memory_space<vmem>>, vector<4x1280xf32>
    tpu.vector_store %arg7[%c28, %c0_0], %0 {strides = array<i32>} : memref<144x1280xf32, #tpu.memory_space<vmem>>, vector<4x1280xf32>,
    %c44 = arith.constant 44 : index
    %c0_1 = arith.constant 0 : index
    %3 = vector.load %arg7[%c44, %c0_1] : memref<144x1280xf32, #tpu.memory_space<vmem>>, vector<4x1280xf32>
    tpu.vector_store %arg7[%c44, %c0_1], %0 {strides = array<i32>} : memref<144x1280xf32, #tpu.memory_space<vmem>>, vector<4x1280xf32>,
    %c60 = arith.constant 60 : index
    %c0_2 = arith.constant 0 : index
    %4 = vector.load %arg7[%c60, %c0_2] : memref<144x1280xf32, #tpu.memory_space<vmem>>, vector<4x1280xf32>
    tpu.vector_store %arg7[%c60, %c0_2], %0 {strides = array<i32>} : memref<144x1280xf32, #tpu.memory_space<vmem>>, vector<4x1280xf32>,
    %c76 = arith.constant 76 : index
    %c0_3 = arith.constant 0 : index
    %5 = vector.load %arg7[%c76, %c0_3] : memref<144x1280xf32, #tpu.memory_space<vmem>>, vector<4x1280xf32>
    tpu.vector_store %arg7[%c76, %c0_3], %0 {strides = array<i32>} : memref<144x1280xf32, #tpu.memory_space<vmem>>, vector<4x1280xf32>,
    %c92 = arith.constant 92 : index
    %c0_4 = arith.constant 0 : index
    %6 = vector.load %arg7[%c92, %c0_4] : memref<144x1280xf32, #tpu.memory_space<vmem>>, vector<4x1280xf32>
    tpu.vector_store %arg7[%c92, %c0_4], %0 {strides = array<i32>} : memref<144x1280xf32, #tpu.memory_space<vmem>>, vector<4x1280xf32>,
    %c108 = arith.constant 108 : index
    %c0_5 = arith.constant 0 : index
    %7 = vector.load %arg7[%c108, %c0_5] : memref<144x1280xf32, #tpu.memory_space<vmem>>, vector<4x1280xf32>
    tpu.vector_store %arg7[%c108, %c0_5], %0 {strides = array<i32>} : memref<144x1280xf32, #tpu.memory_space<vmem>>, vector<4x1280xf32>,
    %c124 = arith.constant 124 : index
    %c0_6 = arith.constant 0 : index
    %8 = vector.load %arg7[%c124, %c0_6] : memref<144x1280xf32, #tpu.memory_space<vmem>>, vector<4x1280xf32>
    tpu.vector_store %arg7[%c124, %c0_6], %0 {strides = array<i32>} : memref<144x1280xf32, #tpu.memory_space<vmem>>, vector<4x1280xf32>,
    %c140 = arith.constant 140 : index
    %c0_7 = arith.constant 0 : index
    %9 = vector.load %arg7[%c140, %c0_7] : memref<144x1280xf32, #tpu.memory_space<vmem>>, vector<4x1280xf32>
    tpu.vector_store %arg7[%c140, %c0_7], %0 {strides = array<i32>} : memref<144x1280xf32, #tpu.memory_space<vmem>>, vector<4x1280xf32>,
    %c0_8 = arith.constant 0 : index
    %c0_9 = arith.constant 0 : index
    %10 = vector.load %arg4[%c0_8, %c0_9] : memref<16x1xf32, #tpu.memory_space<vmem>>, vector<16x1xf32>
    %c0_10 = arith.constant 0 : index
    %c0_11 = arith.constant 0 : index
    %11 = vector.load %arg5[%c0_10, %c0_11] : memref<16x1xf32, #tpu.memory_space<vmem>>, vector<16x1xf32>
    %c0_12 = arith.constant 0 : index
    %c0_13 = arith.constant 0 : index
    %c0_14 = arith.constant 0 : index
    %12 = vector.load %arg1[%c0_12, %c0_13, %c0_14] : memref<2x12x1280xf32, #tpu.memory_space<vmem>>, vector<1x12x1280xf32>
    %13 = vector.shape_cast %12 : vector<1x12x1280xf32> to vector<12x1280xf32>
    %c0_15 = arith.constant 0 : index
    %c0_16 = arith.constant 0 : index
    %14 = vector.load %arg7[%c0_15, %c0_16] : memref<144x1280xf32, #tpu.memory_space<vmem>>, vector<12x1280xf32>
    tpu.vector_store %arg7[%c0_15, %c0_16], %13 {strides = array<i32>} : memref<144x1280xf32, #tpu.memory_space<vmem>>, vector<12x1280xf32>,
    %15 = vector.extract_strided_slice %13 {offsets = [0, 1], sizes = [12, 1279], strides = [1, 1]} : vector<12x1280xf32> to vector<12x1279xf32>
    %16 = vector.extract_strided_slice %13 {offsets = [0, 0], sizes = [12, 1], strides = [1, 1]} : vector<12x1280xf32> to vector<12x1xf32>
    %17 = tpu.concatenate %15, %16 in 1 : vector<12x1279xf32>, vector<12x1xf32> -> vector<12x1280xf32>
    %c16 = arith.constant 16 : index
    %c0_17 = arith.constant 0 : index
    %18 = vector.load %arg7[%c16, %c0_17] : memref<144x1280xf32, #tpu.memory_space<vmem>>, vector<12x1280xf32>
    tpu.vector_store %arg7[%c16, %c0_17], %17 {strides = array<i32>} : memref<144x1280xf32, #tpu.memory_space<vmem>>, vector<12x1280xf32>,
    %19 = vector.extract_strided_slice %13 {offsets = [0, 2], sizes = [12, 1278], strides = [1, 1]} : vector<12x1280xf32> to vector<12x1278xf32>
    %20 = vector.extract_strided_slice %13 {offsets = [0, 0], sizes = [12, 2], strides = [1, 1]} : vector<12x1280xf32> to vector<12x2xf32>
    %21 = tpu.concatenate %19, %20 in 1 : vector<12x1278xf32>, vector<12x2xf32> -> vector<12x1280xf32>
    %c32 = arith.constant 32 : index
    %c0_18 = arith.constant 0 : index
    %22 = vector.load %arg7[%c32, %c0_18] : memref<144x1280xf32, #tpu.memory_space<vmem>>, vector<12x1280xf32>
    tpu.vector_store %arg7[%c32, %c0_18], %21 {strides = array<i32>} : memref<144x1280xf32, #tpu.memory_space<vmem>>, vector<12x1280xf32>,
    %23 = vector.extract_strided_slice %13 {offsets = [0, 34], sizes = [12, 1246], strides = [1, 1]} : vector<12x1280xf32> to vector<12x1246xf32>
    %24 = vector.extract_strided_slice %13 {offsets = [0, 0], sizes = [12, 34], strides = [1, 1]} : vector<12x1280xf32> to vector<12x34xf32>
    %25 = tpu.concatenate %23, %24 in 1 : vector<12x1246xf32>, vector<12x34xf32> -> vector<12x1280xf32>
    %c48 = arith.constant 48 : index
    %c0_19 = arith.constant 0 : index
    %26 = vector.load %arg7[%c48, %c0_19] : memref<144x1280xf32, #tpu.memory_space<vmem>>, vector<12x1280xf32>
    tpu.vector_store %arg7[%c48, %c0_19], %25 {strides = array<i32>} : memref<144x1280xf32, #tpu.memory_space<vmem>>, vector<12x1280xf32>,
    %27 = vector.extract_strided_slice %13 {offsets = [0, 35], sizes = [12, 1245], strides = [1, 1]} : vector<12x1280xf32> to vector<12x1245xf32>
    %28 = vector.extract_strided_slice %13 {offsets = [0, 0], sizes = [12, 35], strides = [1, 1]} : vector<12x1280xf32> to vector<12x35xf32>
    %29 = tpu.concatenate %27, %28 in 1 : vector<12x1245xf32>, vector<12x35xf32> -> vector<12x1280xf32>
    %c64 = arith.constant 64 : index
    %c0_20 = arith.constant 0 : index
    %30 = vector.load %arg7[%c64, %c0_20] : memref<144x1280xf32, #tpu.memory_space<vmem>>, vector<12x1280xf32>
    tpu.vector_store %arg7[%c64, %c0_20], %29 {strides = array<i32>} : memref<144x1280xf32, #tpu.memory_space<vmem>>, vector<12x1280xf32>,
    %31 = vector.extract_strided_slice %13 {offsets = [0, 36], sizes = [12, 1244], strides = [1, 1]} : vector<12x1280xf32> to vector<12x1244xf32>
    %32 = vector.extract_strided_slice %13 {offsets = [0, 0], sizes = [12, 36], strides = [1, 1]} : vector<12x1280xf32> to vector<12x36xf32>
    %33 = tpu.concatenate %31, %32 in 1 : vector<12x1244xf32>, vector<12x36xf32> -> vector<12x1280xf32>
    %c80 = arith.constant 80 : index
    %c0_21 = arith.constant 0 : index
    %34 = vector.load %arg7[%c80, %c0_21] : memref<144x1280xf32, #tpu.memory_space<vmem>>, vector<12x1280xf32>
    tpu.vector_store %arg7[%c80, %c0_21], %33 {strides = array<i32>} : memref<144x1280xf32, #tpu.memory_space<vmem>>, vector<12x1280xf32>,
    %35 = vector.extract_strided_slice %13 {offsets = [0, 68], sizes = [12, 1212], strides = [1, 1]} : vector<12x1280xf32> to vector<12x1212xf32>
    %36 = vector.extract_strided_slice %13 {offsets = [0, 0], sizes = [12, 68], strides = [1, 1]} : vector<12x1280xf32> to vector<12x68xf32>
    %37 = tpu.concatenate %35, %36 in 1 : vector<12x1212xf32>, vector<12x68xf32> -> vector<12x1280xf32>
    %c96 = arith.constant 96 : index
    %c0_22 = arith.constant 0 : index
    %38 = vector.load %arg7[%c96, %c0_22] : memref<144x1280xf32, #tpu.memory_space<vmem>>, vector<12x1280xf32>
    tpu.vector_store %arg7[%c96, %c0_22], %37 {strides = array<i32>} : memref<144x1280xf32, #tpu.memory_space<vmem>>, vector<12x1280xf32>,
    %39 = vector.extract_strided_slice %13 {offsets = [0, 69], sizes = [12, 1211], strides = [1, 1]} : vector<12x1280xf32> to vector<12x1211xf32>
    %40 = vector.extract_strided_slice %13 {offsets = [0, 0], sizes = [12, 69], strides = [1, 1]} : vector<12x1280xf32> to vector<12x69xf32>
    %41 = tpu.concatenate %39, %40 in 1 : vector<12x1211xf32>, vector<12x69xf32> -> vector<12x1280xf32>
    %c112 = arith.constant 112 : index
    %c0_23 = arith.constant 0 : index
    %42 = vector.load %arg7[%c112, %c0_23] : memref<144x1280xf32, #tpu.memory_space<vmem>>, vector<12x1280xf32>
    tpu.vector_store %arg7[%c112, %c0_23], %41 {strides = array<i32>} : memref<144x1280xf32, #tpu.memory_space<vmem>>, vector<12x1280xf32>,
    %43 = vector.extract_strided_slice %13 {offsets = [0, 70], sizes = [12, 1210], strides = [1, 1]} : vector<12x1280xf32> to vector<12x1210xf32>
    %44 = vector.extract_strided_slice %13 {offsets = [0, 0], sizes = [12, 70], strides = [1, 1]} : vector<12x1280xf32> to vector<12x70xf32>
    %45 = tpu.concatenate %43, %44 in 1 : vector<12x1210xf32>, vector<12x70xf32> -> vector<12x1280xf32>
    %c128 = arith.constant 128 : index
    %c0_24 = arith.constant 0 : index
    %46 = vector.load %arg7[%c128, %c0_24] : memref<144x1280xf32, #tpu.memory_space<vmem>>, vector<12x1280xf32>
    tpu.vector_store %arg7[%c128, %c0_24], %45 {strides = array<i32>} : memref<144x1280xf32, #tpu.memory_space<vmem>>, vector<12x1280xf32>,
    %c0_25 = arith.constant 0 : index
    %c0_26 = arith.constant 0 : index
    %47 = vector.load %arg2[%c0_25, %c0_26] : memref<16x144xf32, #tpu.memory_space<vmem>>, vector<16x144xf32>
    %c0_27 = arith.constant 0 : index
    %c0_28 = arith.constant 0 : index
    %48 = vector.load %arg7[%c0_27, %c0_28] : memref<144x1280xf32, #tpu.memory_space<vmem>>, vector<144x1280xf32>
    %cst_29 = arith.constant dense<0.000000e+00> : vector<16x1280xf32>
    %49 = tpu.matmul %47, %48, %cst_29 {dimension_numbers = #tpu.dot_dimension_numbers<[1], [0], [0], [1], [0, 0, 1, 1], [], []>} : vector<16x144xf32>, vector<144x1280xf32>, vector<16x1280xf32> -> vector<16x1280xf32>
    %c0_30 = arith.constant 0 : index
    %c0_31 = arith.constant 0 : index
    %50 = vector.load %arg3[%c0_30, %c0_31] : memref<16x1xf32, #tpu.memory_space<vmem>>, vector<16x1xf32>
    %51 = vector.broadcast %50 : vector<16x1xf32> to vector<16x1280xf32>
    %52 = arith.addf %49, %51 : vector<16x1280xf32>
    %cst_32 = arith.constant 0.000000e+00 : f32
    %53 = vector.broadcast %cst_32 : f32 to vector<16x1280xf32>
    %54 = arith.maximumf %52, %53 : vector<16x1280xf32>
    %55 = vector.broadcast %10 : vector<16x1xf32> to vector<16x1280xf32>
    %56 = arith.mulf %54, %55 : vector<16x1280xf32>
    %57 = vector.broadcast %11 : vector<16x1xf32> to vector<16x1280xf32>
    %58 = arith.subf %56, %57 : vector<16x1280xf32>
    %cst_33 = arith.constant 0.000000e+00 : f32
    %59 = vector.broadcast %cst_33 : f32 to vector<16x1280xf32>
    %60 = arith.maximumf %58, %59 : vector<16x1280xf32>
    %c0_34 = arith.constant 0 : index
    %c0_35 = arith.constant 0 : index
    %c0_36 = arith.constant 0 : index
    %61 = vector.load %arg6[%c0_34, %c0_35, %c0_36] : memref<2x16x1280xf32, #tpu.memory_space<vmem>>, vector<1x16x1280xf32>
    %62 = vector.shape_cast %61 : vector<1x16x1280xf32> to vector<16x1280xf32>
    %63 = vector.shape_cast %60 : vector<16x1280xf32> to vector<1x16x1280xf32>
    tpu.vector_store %arg6[%c0_34, %c0_35, %c0_36], %63 {strides = array<i32>} : memref<2x16x1280xf32, #tpu.memory_space<vmem>>, vector<1x16x1280xf32>,
    %c1 = arith.constant 1 : index
    %c0_37 = arith.constant 0 : index
    %c0_38 = arith.constant 0 : index
    %64 = vector.load %arg1[%c1, %c0_37, %c0_38] : memref<2x12x1280xf32, #tpu.memory_space<vmem>>, vector<1x12x1280xf32>
    %65 = vector.shape_cast %64 : vector<1x12x1280xf32> to vector<12x1280xf32>
    %c0_39 = arith.constant 0 : index
    %c0_40 = arith.constant 0 : index
    %66 = vector.load %arg7[%c0_39, %c0_40] : memref<144x1280xf32, #tpu.memory_space<vmem>>, vector<12x1280xf32>
    tpu.vector_store %arg7[%c0_39, %c0_40], %65 {strides = array<i32>} : memref<144x1280xf32, #tpu.memory_space<vmem>>, vector<12x1280xf32>,
    %67 = vector.extract_strided_slice %65 {offsets = [0, 1], sizes = [12, 1279], strides = [1, 1]} : vector<12x1280xf32> to vector<12x1279xf32>
    %68 = vector.extract_strided_slice %65 {offsets = [0, 0], sizes = [12, 1], strides = [1, 1]} : vector<12x1280xf32> to vector<12x1xf32>
    %69 = tpu.concatenate %67, %68 in 1 : vector<12x1279xf32>, vector<12x1xf32> -> vector<12x1280xf32>
    %c16_41 = arith.constant 16 : index
    %c0_42 = arith.constant 0 : index
    %70 = vector.load %arg7[%c16_41, %c0_42] : memref<144x1280xf32, #tpu.memory_space<vmem>>, vector<12x1280xf32>
    tpu.vector_store %arg7[%c16_41, %c0_42], %69 {strides = array<i32>} : memref<144x1280xf32, #tpu.memory_space<vmem>>, vector<12x1280xf32>,
    %71 = vector.extract_strided_slice %65 {offsets = [0, 2], sizes = [12, 1278], strides = [1, 1]} : vector<12x1280xf32> to vector<12x1278xf32>
    %72 = vector.extract_strided_slice %65 {offsets = [0, 0], sizes = [12, 2], strides = [1, 1]} : vector<12x1280xf32> to vector<12x2xf32>
    %73 = tpu.concatenate %71, %72 in 1 : vector<12x1278xf32>, vector<12x2xf32> -> vector<12x1280xf32>
    %c32_43 = arith.constant 32 : index
    %c0_44 = arith.constant 0 : index
    %74 = vector.load %arg7[%c32_43, %c0_44] : memref<144x1280xf32, #tpu.memory_space<vmem>>, vector<12x1280xf32>
    tpu.vector_store %arg7[%c32_43, %c0_44], %73 {strides = array<i32>} : memref<144x1280xf32, #tpu.memory_space<vmem>>, vector<12x1280xf32>,
    %75 = vector.extract_strided_slice %65 {offsets = [0, 34], sizes = [12, 1246], strides = [1, 1]} : vector<12x1280xf32> to vector<12x1246xf32>
    %76 = vector.extract_strided_slice %65 {offsets = [0, 0], sizes = [12, 34], strides = [1, 1]} : vector<12x1280xf32> to vector<12x34xf32>
    %77 = tpu.concatenate %75, %76 in 1 : vector<12x1246xf32>, vector<12x34xf32> -> vector<12x1280xf32>
    %c48_45 = arith.constant 48 : index
    %c0_46 = arith.constant 0 : index
    %78 = vector.load %arg7[%c48_45, %c0_46] : memref<144x1280xf32, #tpu.memory_space<vmem>>, vector<12x1280xf32>
    tpu.vector_store %arg7[%c48_45, %c0_46], %77 {strides = array<i32>} : memref<144x1280xf32, #tpu.memory_space<vmem>>, vector<12x1280xf32>,
    %79 = vector.extract_strided_slice %65 {offsets = [0, 35], sizes = [12, 1245], strides = [1, 1]} : vector<12x1280xf32> to vector<12x1245xf32>
    %80 = vector.extract_strided_slice %65 {offsets = [0, 0], sizes = [12, 35], strides = [1, 1]} : vector<12x1280xf32> to vector<12x35xf32>
    %81 = tpu.concatenate %79, %80 in 1 : vector<12x1245xf32>, vector<12x35xf32> -> vector<12x1280xf32>
    %c64_47 = arith.constant 64 : index
    %c0_48 = arith.constant 0 : index
    %82 = vector.load %arg7[%c64_47, %c0_48] : memref<144x1280xf32, #tpu.memory_space<vmem>>, vector<12x1280xf32>
    tpu.vector_store %arg7[%c64_47, %c0_48], %81 {strides = array<i32>} : memref<144x1280xf32, #tpu.memory_space<vmem>>, vector<12x1280xf32>,
    %83 = vector.extract_strided_slice %65 {offsets = [0, 36], sizes = [12, 1244], strides = [1, 1]} : vector<12x1280xf32> to vector<12x1244xf32>
    %84 = vector.extract_strided_slice %65 {offsets = [0, 0], sizes = [12, 36], strides = [1, 1]} : vector<12x1280xf32> to vector<12x36xf32>
    %85 = tpu.concatenate %83, %84 in 1 : vector<12x1244xf32>, vector<12x36xf32> -> vector<12x1280xf32>
    %c80_49 = arith.constant 80 : index
    %c0_50 = arith.constant 0 : index
    %86 = vector.load %arg7[%c80_49, %c0_50] : memref<144x1280xf32, #tpu.memory_space<vmem>>, vector<12x1280xf32>
    tpu.vector_store %arg7[%c80_49, %c0_50], %85 {strides = array<i32>} : memref<144x1280xf32, #tpu.memory_space<vmem>>, vector<12x1280xf32>,
    %87 = vector.extract_strided_slice %65 {offsets = [0, 68], sizes = [12, 1212], strides = [1, 1]} : vector<12x1280xf32> to vector<12x1212xf32>
    %88 = vector.extract_strided_slice %65 {offsets = [0, 0], sizes = [12, 68], strides = [1, 1]} : vector<12x1280xf32> to vector<12x68xf32>
    %89 = tpu.concatenate %87, %88 in 1 : vector<12x1212xf32>, vector<12x68xf32> -> vector<12x1280xf32>
    %c96_51 = arith.constant 96 : index
    %c0_52 = arith.constant 0 : index
    %90 = vector.load %arg7[%c96_51, %c0_52] : memref<144x1280xf32, #tpu.memory_space<vmem>>, vector<12x1280xf32>
    tpu.vector_store %arg7[%c96_51, %c0_52], %89 {strides = array<i32>} : memref<144x1280xf32, #tpu.memory_space<vmem>>, vector<12x1280xf32>,
    %91 = vector.extract_strided_slice %65 {offsets = [0, 69], sizes = [12, 1211], strides = [1, 1]} : vector<12x1280xf32> to vector<12x1211xf32>
    %92 = vector.extract_strided_slice %65 {offsets = [0, 0], sizes = [12, 69], strides = [1, 1]} : vector<12x1280xf32> to vector<12x69xf32>
    %93 = tpu.concatenate %91, %92 in 1 : vector<12x1211xf32>, vector<12x69xf32> -> vector<12x1280xf32>
    %c112_53 = arith.constant 112 : index
    %c0_54 = arith.constant 0 : index
    %94 = vector.load %arg7[%c112_53, %c0_54] : memref<144x1280xf32, #tpu.memory_space<vmem>>, vector<12x1280xf32>
    tpu.vector_store %arg7[%c112_53, %c0_54], %93 {strides = array<i32>} : memref<144x1280xf32, #tpu.memory_space<vmem>>, vector<12x1280xf32>,
    %95 = vector.extract_strided_slice %65 {offsets = [0, 70], sizes = [12, 1210], strides = [1, 1]} : vector<12x1280xf32> to vector<12x1210xf32>
    %96 = vector.extract_strided_slice %65 {offsets = [0, 0], sizes = [12, 70], strides = [1, 1]} : vector<12x1280xf32> to vector<12x70xf32>
    %97 = tpu.concatenate %95, %96 in 1 : vector<12x1210xf32>, vector<12x70xf32> -> vector<12x1280xf32>
    %c128_55 = arith.constant 128 : index
    %c0_56 = arith.constant 0 : index
    %98 = vector.load %arg7[%c128_55, %c0_56] : memref<144x1280xf32, #tpu.memory_space<vmem>>, vector<12x1280xf32>
    tpu.vector_store %arg7[%c128_55, %c0_56], %97 {strides = array<i32>} : memref<144x1280xf32, #tpu.memory_space<vmem>>, vector<12x1280xf32>,
    %c0_57 = arith.constant 0 : index
    %c0_58 = arith.constant 0 : index
    %99 = vector.load %arg2[%c0_57, %c0_58] : memref<16x144xf32, #tpu.memory_space<vmem>>, vector<16x144xf32>
    %c0_59 = arith.constant 0 : index
    %c0_60 = arith.constant 0 : index
    %100 = vector.load %arg7[%c0_59, %c0_60] : memref<144x1280xf32, #tpu.memory_space<vmem>>, vector<144x1280xf32>
    %cst_61 = arith.constant dense<0.000000e+00> : vector<16x1280xf32>
    %101 = tpu.matmul %99, %100, %cst_61 {dimension_numbers = #tpu.dot_dimension_numbers<[1], [0], [0], [1], [0, 0, 1, 1], [], []>} : vector<16x144xf32>, vector<144x1280xf32>, vector<16x1280xf32> -> vector<16x1280xf32>
    %c0_62 = arith.constant 0 : index
    %c0_63 = arith.constant 0 : index
    %102 = vector.load %arg3[%c0_62, %c0_63] : memref<16x1xf32, #tpu.memory_space<vmem>>, vector<16x1xf32>
    %103 = vector.broadcast %102 : vector<16x1xf32> to vector<16x1280xf32>
    %104 = arith.addf %101, %103 : vector<16x1280xf32>
    %cst_64 = arith.constant 0.000000e+00 : f32
    %105 = vector.broadcast %cst_64 : f32 to vector<16x1280xf32>
    %106 = arith.maximumf %104, %105 : vector<16x1280xf32>
    %107 = vector.broadcast %10 : vector<16x1xf32> to vector<16x1280xf32>
    %108 = arith.mulf %106, %107 : vector<16x1280xf32>
    %109 = vector.broadcast %11 : vector<16x1xf32> to vector<16x1280xf32>
    %110 = arith.subf %108, %109 : vector<16x1280xf32>
    %cst_65 = arith.constant 0.000000e+00 : f32
    %111 = vector.broadcast %cst_65 : f32 to vector<16x1280xf32>
    %112 = arith.maximumf %110, %111 : vector<16x1280xf32>
    %c1_66 = arith.constant 1 : index
    %c0_67 = arith.constant 0 : index
    %c0_68 = arith.constant 0 : index
    %113 = vector.load %arg6[%c1_66, %c0_67, %c0_68] : memref<2x16x1280xf32, #tpu.memory_space<vmem>>, vector<1x16x1280xf32>
    %114 = vector.shape_cast %113 : vector<1x16x1280xf32> to vector<16x1280xf32>
    %115 = vector.shape_cast %112 : vector<16x1280xf32> to vector<1x16x1280xf32>
    tpu.vector_store %arg6[%c1_66, %c0_67, %c0_68], %115 {strides = array<i32>} : memref<2x16x1280xf32, #tpu.memory_space<vmem>>, vector<1x16x1280xf32>,
    return
  }
  func.func @transform_0(%arg0: i32) -> (i32, i32, i32) {
    %c0_i32 = arith.constant 0 : i32
    %c0_i32_0 = arith.constant 0 : i32
    %c0_i32_1 = arith.constant 0 : i32
    return %arg0, %c0_i32, %c0_i32_0 : i32, i32, i32
  }
  func.func @transform_1(%arg0: i32) -> (i32, i32) {
    %c0_i32 = arith.constant 0 : i32
    %c0_i32_0 = arith.constant 0 : i32
    %c0_i32_1 = arith.constant 0 : i32
    return %c0_i32, %c0_i32_0 : i32, i32
  }
  func.func @transform_2(%arg0: i32) -> (i32, i32) {
    %c0_i32 = arith.constant 0 : i32
    %c0_i32_0 = arith.constant 0 : i32
    %c0_i32_1 = arith.constant 0 : i32
    return %c0_i32, %c0_i32_0 : i32, i32
  }
  func.func @transform_3(%arg0: i32) -> (i32, i32) {
    %c0_i32 = arith.constant 0 : i32
    %c0_i32_0 = arith.constant 0 : i32
    %c0_i32_1 = arith.constant 0 : i32
    return %c0_i32, %c0_i32_0 : i32, i32
  }
  func.func @transform_4(%arg0: i32) -> (i32, i32) {
    %c0_i32 = arith.constant 0 : i32
    %c0_i32_0 = arith.constant 0 : i32
    %c0_i32_1 = arith.constant 0 : i32
    return %c0_i32, %c0_i32_0 : i32, i32
  }
  func.func @transform_5(%arg0: i32) -> (i32, i32, i32) {
    %c0_i32 = arith.constant 0 : i32
    %c0_i32_0 = arith.constant 0 : i32
    %c0_i32_1 = arith.constant 0 : i32
    return %arg0, %c0_i32, %c0_i32_0 : i32, i32, i32
  }
}

</mosaic_0001>

<llo_original>
// kernel: model_forward.2
$region0: #{model_forward.2}
  #allocation0 [shape = 'u32[]', space=smem, size = 0x4, offset = 0x4, fixed_abs, tag = 'smem constant byte address 0x4 - core index']
  #allocation1 [shape = 'u32[72,128]{1,0:T(1,128)}', space=vmem, size = 0x9000, scoped, tag = 'internal scratch']
  #allocation2 [shape = 'f32[144,1280]{1,0:T(8,128)}', space=vmem, size = 0xb4000, scoped, tag = 'scratch operand']
  %s0 = inlined_call_operand.vmem [shape: f32[2,12,1280], index: 0, kind: input, shape index: {}]
  %s1 = inlined_call_operand.vmem [shape: f32[1,1280], index: 1, kind: input, shape index: {}]
  %s2 = inlined_call_operand.vmem [shape: f32[16,144], index: 2, kind: input, shape index: {}]
  %s3 = inlined_call_operand.vmem [shape: f32[16,1], index: 3, kind: input, shape index: {}]
  %s4 = inlined_call_operand.vmem [shape: f32[1,16,1], index: 4, kind: output, shape index: {0}]
  %s5 = inlined_call_operand.vmem [shape: f32[1,16,1], index: 5, kind: output, shape index: {1}]
  %6 = xla_tuple %s4, %s5
  %s7 = sld [smem:[#allocation0]]
  $region38: #{model_forward.2} parent=0
    _
  %s9 = ssub.s32 1, %s7
  %s10 = scalar_select 0, %s9, %s7
  // Predicated region
  $region2: #{model_forward.2} parent=0 // pred_check
    _
  $region3: #{model_forward.2} parent=0 // pred_check_branch
    %12 = sbr.rel (0) target = $region5
  $region4: #{model_forward.2} parent=0 // pred_region
    %s13 = sadd.s32 0, 0
    %s14 = smul.u32 2, %s13
    %p15 = scmp.lt.s32.totalorder %s14, 1
    %s16 = scalar_select %p15, %s14, 1
    %s17 = smul.addr %s16, 20
    %s18 = smul.addr %s17, 8
    %s19 = scalar_lea.vmem %s0, %s18
    %s20 = sadd.s32 0, 0
    %s21 = smul.u32 2, %s20
  $region5: #{model_forward.2} parent=0 // pred_fallthru
    _
  // Predicated region
  $region6: #{model_forward.2} parent=0 // pred_check
    _
  $region7: #{model_forward.2} parent=0 // pred_check_branch
    %23 = sbr.rel (0) target = $region9
  $region8: #{model_forward.2} parent=0 // pred_region
    _
  $region9: #{model_forward.2} parent=0 // pred_fallthru
    _
  // Predicated region
  $region10: #{model_forward.2} parent=0 // pred_check
    _
  $region11: #{model_forward.2} parent=0 // pred_check_branch
    %25 = sbr.rel (0) target = $region13
  $region12: #{model_forward.2} parent=0 // pred_region
    _
  $region13: #{model_forward.2} parent=0 // pred_fallthru
    _
  // Predicated region
  $region14: #{model_forward.2} parent=0 // pred_check
    _
  $region15: #{model_forward.2} parent=0 // pred_check_branch
    %27 = sbr.rel (0) target = $region17
  $region16: #{model_forward.2} parent=0 // pred_region
    _
  $region17: #{model_forward.2} parent=0 // pred_fallthru
    _
  %s28 = sadd.s32 0, 0
  %s29 = smul.u32 2, %s28
  %p30 = scmp.lt.s32.totalorder %s29, 1
  %s31 = scalar_select %p30, %s29, 1
  %s32 = smul.addr %s31, 20
  %s33 = smul.addr %s32, 8
  %s34 = scalar_lea.vmem %s0, %s33
  %s35 = sadd.s32 0, 0
  %s36 = smul.u32 2, %s35
  %p37 = scmp.lt.s32.totalorder %s36, 1
  %s38 = scalar_select %p37, %s36, 1
  %s39 = smul.addr %s38, 20
  %s40 = smul.addr %s39, 8
  %s41 = scalar_lea.vmem %s0, %s40
  %s42 = sadd.s32 0, 0
  %s43 = smul.u32 2, %s42
  %p44 = scmp.eq.s32.totalorder 0, 0
  // Predicated region
  $region18: #{model_forward.2} parent=0 // pred_check
    %p45 = pneg %p44
  $region19: #{model_forward.2} parent=0 // pred_check_branch
    %47 = sbr.rel (%p45) target = $region21
  $region20: #{model_forward.2} parent=0 // pred_region
    %vm48 = vcmask 7168
    %49 = vst.msk [vmem:[%s4] sm:$0xff] %vm48, 0.0
    %50 = vst.msk [vmem:[%s4 + $0x8] sm:$0xff] %vm48, 0.0
    %51 = vst.msk [vmem:[%s5] sm:$0xff] %vm48, 0.0
    %52 = vst.msk [vmem:[%s5 + $0x8] sm:$0xff] %vm48, 0.0
  $region21: #{model_forward.2} parent=0 // pred_fallthru
    _
  %53 = vst [vmem:[#allocation2 + $0x50] sm:$0xf0] 0.0
  %54 = vst [vmem:[#allocation2 + $0x58] sm:$0xf0] 0.0
  %55 = vst [vmem:[#allocation2 + $0x60] sm:$0xf0] 0.0
  %56 = vst [vmem:[#allocation2 + $0x68] sm:$0xf0] 0.0
  %57 = vst [vmem:[#allocation2 + $0x70] sm:$0xf0] 0.0
  %58 = vst [vmem:[#allocation2 + $0x78] sm:$0xf0] 0.0
  %59 = vst [vmem:[#allocation2 + $0x80] sm:$0xf0] 0.0
  %60 = vst [vmem:[#allocation2 + $0x88] sm:$0xf0] 0.0
  %61 = vst [vmem:[#allocation2 + $0x90] sm:$0xf0] 0.0
  %62 = vst [vmem:[#allocation2 + $0x98] sm:$0xf0] 0.0
  %63 = vst [vmem:[#allocation2 + $0xf0] sm:$0xf0] 0.0
  %64 = vst [vmem:[#allocation2 + $0xf8] sm:$0xf0] 0.0
  %65 = vst [vmem:[#allocation2 + $0x100] sm:$0xf0] 0.0
  %66 = vst [vmem:[#allocation2 + $0x108] sm:$0xf0] 0.0
  %67 = vst [vmem:[#allocation2 + $0x110] sm:$0xf0] 0.0
  %68 = vst [vmem:[#allocation2 + $0x118] sm:$0xf0] 0.0
  %69 = vst [vmem:[#allocation2 + $0x120] sm:$0xf0] 0.0
  %70 = vst [vmem:[#allocation2 + $0x128] sm:$0xf0] 0.0
  %71 = vst [vmem:[#allocation2 + $0x130] sm:$0xf0] 0.0
  %72 = vst [vmem:[#allocation2 + $0x138] sm:$0xf0] 0.0
  %73 = vst [vmem:[#allocation2 + $0x190] sm:$0xf0] 0.0
  %74 = vst [vmem:[#allocation2 + $0x198] sm:$0xf0] 0.0
  %75 = vst [vmem:[#allocation2 + $0x1a0] sm:$0xf0] 0.0
  %76 = vst [vmem:[#allocation2 + $0x1a8] sm:$0xf0] 0.0
  %77 = vst [vmem:[#allocation2 + $0x1b0] sm:$0xf0] 0.0
  %78 = vst [vmem:[#allocation2 + $0x1b8] sm:$0xf0] 0.0
  %79 = vst [vmem:[#allocation2 + $0x1c0] sm:$0xf0] 0.0
  %80 = vst [vmem:[#allocation2 + $0x1c8] sm:$0xf0] 0.0
  %81 = vst [vmem:[#allocation2 + $0x1d0] sm:$0xf0] 0.0
  %82 = vst [vmem:[#allocation2 + $0x1d8] sm:$0xf0] 0.0
  %83 = vst [vmem:[#allocation2 + $0x230] sm:$0xf0] 0.0
  %84 = vst [vmem:[#allocation2 + $0x238] sm:$0xf0] 0.0
  %85 = vst [vmem:[#allocation2 + $0x240] sm:$0xf0] 0.0
  %86 = vst [vmem:[#allocation2 + $0x248] sm:$0xf0] 0.0
  %87 = vst [vmem:[#allocation2 + $0x250] sm:$0xf0] 0.0
  %88 = vst [vmem:[#allocation2 + $0x258] sm:$0xf0] 0.0
  %89 = vst [vmem:[#allocation2 + $0x260] sm:$0xf0] 0.0
  %90 = vst [vmem:[#allocation2 + $0x268] sm:$0xf0] 0.0
  %91 = vst [vmem:[#allocation2 + $0x270] sm:$0xf0] 0.0
  %92 = vst [vmem:[#allocation2 + $0x278] sm:$0xf0] 0.0
  %93 = vst [vmem:[#allocation2 + $0x2d0] sm:$0xf0] 0.0
  %94 = vst [vmem:[#allocation2 + $0x2d8] sm:$0xf0] 0.0
  %95 = vst [vmem:[#allocation2 + $0x2e0] sm:$0xf0] 0.0
  %96 = vst [vmem:[#allocation2 + $0x2e8] sm:$0xf0] 0.0
  %97 = vst [vmem:[#allocation2 + $0x2f0] sm:$0xf0] 0.0
  %98 = vst [vmem:[#allocation2 + $0x2f8] sm:$0xf0] 0.0
  %99 = vst [vmem:[#allocation2 + $0x300] sm:$0xf0] 0.0
  %100 = vst [vmem:[#allocation2 + $0x308] sm:$0xf0] 0.0
  %101 = vst [vmem:[#allocation2 + $0x310] sm:$0xf0] 0.0
  %102 = vst [vmem:[#allocation2 + $0x318] sm:$0xf0] 0.0
  %103 = vst [vmem:[#allocation2 + $0x370] sm:$0xf0] 0.0
  %104 = vst [vmem:[#allocation2 + $0x378] sm:$0xf0] 0.0
  %105 = vst [vmem:[#allocation2 + $0x380] sm:$0xf0] 0.0
  %106 = vst [vmem:[#allocation2 + $0x388] sm:$0xf0] 0.0
  %107 = vst [vmem:[#allocation2 + $0x390] sm:$0xf0] 0.0
  %108 = vst [vmem:[#allocation2 + $0x398] sm:$0xf0] 0.0
  %109 = vst [vmem:[#allocation2 + $0x3a0] sm:$0xf0] 0.0
  %110 = vst [vmem:[#allocation2 + $0x3a8] sm:$0xf0] 0.0
  %111 = vst [vmem:[#allocation2 + $0x3b0] sm:$0xf0] 0.0
  %112 = vst [vmem:[#allocation2 + $0x3b8] sm:$0xf0] 0.0
  %113 = vst [vmem:[#allocation2 + $0x410] sm:$0xf0] 0.0
  %114 = vst [vmem:[#allocation2 + $0x418] sm:$0xf0] 0.0
  %115 = vst [vmem:[#allocation2 + $0x420] sm:$0xf0] 0.0
  %116 = vst [vmem:[#allocation2 + $0x428] sm:$0xf0] 0.0
  %117 = vst [vmem:[#allocation2 + $0x430] sm:$0xf0] 0.0
  %118 = vst [vmem:[#allocation2 + $0x438] sm:$0xf0] 0.0
  %119 = vst [vmem:[#allocation2 + $0x440] sm:$0xf0] 0.0
  %120 = vst [vmem:[#allocation2 + $0x448] sm:$0xf0] 0.0
  %121 = vst [vmem:[#allocation2 + $0x450] sm:$0xf0] 0.0
  %122 = vst [vmem:[#allocation2 + $0x458] sm:$0xf0] 0.0
  %123 = vst [vmem:[#allocation2 + $0x4b0] sm:$0xf0] 0.0
  %124 = vst [vmem:[#allocation2 + $0x4b8] sm:$0xf0] 0.0
  %125 = vst [vmem:[#allocation2 + $0x4c0] sm:$0xf0] 0.0
  %126 = vst [vmem:[#allocation2 + $0x4c8] sm:$0xf0] 0.0
  %127 = vst [vmem:[#allocation2 + $0x4d0] sm:$0xf0] 0.0
  %128 = vst [vmem:[#allocation2 + $0x4d8] sm:$0xf0] 0.0
  %129 = vst [vmem:[#allocation2 + $0x4e0] sm:$0xf0] 0.0
  %130 = vst [vmem:[#allocation2 + $0x4e8] sm:$0xf0] 0.0
  %131 = vst [vmem:[#allocation2 + $0x4f0] sm:$0xf0] 0.0
  %132 = vst [vmem:[#allocation2 + $0x4f8] sm:$0xf0] 0.0
  %133 = vst [vmem:[#allocation2 + $0x550] sm:$0xf0] 0.0
  %134 = vst [vmem:[#allocation2 + $0x558] sm:$0xf0] 0.0
  %135 = vst [vmem:[#allocation2 + $0x560] sm:$0xf0] 0.0
  %136 = vst [vmem:[#allocation2 + $0x568] sm:$0xf0] 0.0
  %137 = vst [vmem:[#allocation2 + $0x570] sm:$0xf0] 0.0
  %138 = vst [vmem:[#allocation2 + $0x578] sm:$0xf0] 0.0
  %139 = vst [vmem:[#allocation2 + $0x580] sm:$0xf0] 0.0
  %140 = vst [vmem:[#allocation2 + $0x588] sm:$0xf0] 0.0
  %141 = vst [vmem:[#allocation2 + $0x590] sm:$0xf0] 0.0
  %142 = vst [vmem:[#allocation2 + $0x598] sm:$0xf0] 0.0
  %v143 = vld [vmem:[%s1] sm:$0xff]
  %v144 = vld [vmem:[%s1 + $0x8] sm:$0x3]
  %v145 = vld [vmem:[%s41] sm:$0xff]
  %v146 = vld [vmem:[%s41 + $0x8] sm:$0xff]
  %v147 = vld [vmem:[%s41 + $0x10] sm:$0xff]
  %v148 = vld [vmem:[%s41 + $0x18] sm:$0xff]
  %v149 = vld [vmem:[%s41 + $0x20] sm:$0xff]
  %v150 = vld [vmem:[%s41 + $0x28] sm:$0xff]
  %v151 = vld [vmem:[%s41 + $0x30] sm:$0xff]
  %v152 = vld [vmem:[%s41 + $0x38] sm:$0xff]
  %v153 = vld [vmem:[%s41 + $0x40] sm:$0xff]
  %v154 = vld [vmem:[%s41 + $0x48] sm:$0xff]
  %v155 = vld [vmem:[%s41 + $0x50] sm:$0xf]
  %v156 = vld [vmem:[%s41 + $0x58] sm:$0xf]
  %v157 = vld [vmem:[%s41 + $0x60] sm:$0xf]
  %v158 = vld [vmem:[%s41 + $0x68] sm:$0xf]
  %v159 = vld [vmem:[%s41 + $0x70] sm:$0xf]
  %v160 = vld [vmem:[%s41 + $0x78] sm:$0xf]
  %v161 = vld [vmem:[%s41 + $0x80] sm:$0xf]
  %v162 = vld [vmem:[%s41 + $0x88] sm:$0xf]
  %v163 = vld [vmem:[%s41 + $0x90] sm:$0xf]
  %v164 = vld [vmem:[%s41 + $0x98] sm:$0xf]
  %165 = vst [vmem:[#allocation2] sm:$0xff] %v145
  %166 = vst [vmem:[#allocation2 + $0x8] sm:$0xff] %v146
  %167 = vst [vmem:[#allocation2 + $0x10] sm:$0xff] %v147
  %168 = vst [vmem:[#allocation2 + $0x18] sm:$0xff] %v148
  %169 = vst [vmem:[#allocation2 + $0x20] sm:$0xff] %v149
  %170 = vst [vmem:[#allocation2 + $0x28] sm:$0xff] %v150
  %171 = vst [vmem:[#allocation2 + $0x30] sm:$0xff] %v151
  %172 = vst [vmem:[#allocation2 + $0x38] sm:$0xff] %v152
  %173 = vst [vmem:[#allocation2 + $0x40] sm:$0xff] %v153
  %174 = vst [vmem:[#allocation2 + $0x48] sm:$0xff] %v154
  %175 = vst [vmem:[#allocation2 + $0x50] sm:$0xf] %v155
  %176 = vst [vmem:[#allocation2 + $0x58] sm:$0xf] %v156
  %177 = vst [vmem:[#allocation2 + $0x60] sm:$0xf] %v157
  %178 = vst [vmem:[#allocation2 + $0x68] sm:$0xf] %v158
  %179 = vst [vmem:[#allocation2 + $0x70] sm:$0xf] %v159
  %180 = vst [vmem:[#allocation2 + $0x78] sm:$0xf] %v160
  %181 = vst [vmem:[#allocation2 + $0x80] sm:$0xf] %v161
  %182 = vst [vmem:[#allocation2 + $0x88] sm:$0xf] %v162
  %183 = vst [vmem:[#allocation2 + $0x90] sm:$0xf] %v163
  %184 = vst [vmem:[#allocation2 + $0x98] sm:$0xf] %v164
  %205 = vrot.lane.b32.xlu0 %v145, 127
  %v206 = vpop.permute.xlu0 %205
  %207 = vrot.lane.b32.xlu0 %v146, 127
  %v208 = vpop.permute.xlu0 %207
  %209 = vrot.lane.b32.xlu0 %v147, 127
  %v210 = vpop.permute.xlu0 %209
  %211 = vrot.lane.b32.xlu0 %v148, 127
  %v212 = vpop.permute.xlu0 %211
  %213 = vrot.lane.b32.xlu0 %v149, 127
  %v214 = vpop.permute.xlu0 %213
  %215 = vrot.lane.b32.xlu0 %v150, 127
  %v216 = vpop.permute.xlu0 %215
  %217 = vrot.lane.b32.xlu0 %v151, 127
  %v218 = vpop.permute.xlu0 %217
  %219 = vrot.lane.b32.xlu0 %v152, 127
  %v220 = vpop.permute.xlu0 %219
  %221 = vrot.lane.b32.xlu0 %v153, 127
  %v222 = vpop.permute.xlu0 %221
  %223 = vrot.lane.b32.xlu0 %v154, 127
  %v224 = vpop.permute.xlu0 %223
  %225 = vrot.lane.b32.xlu0 %v155, 127
  %v226 = vpop.permute.xlu0 %225
  %227 = vrot.lane.b32.xlu0 %v156, 127
  %v228 = vpop.permute.xlu0 %227
  %229 = vrot.lane.b32.xlu0 %v157, 127
  %v230 = vpop.permute.xlu0 %229
  %231 = vrot.lane.b32.xlu0 %v158, 127
  %v232 = vpop.permute.xlu0 %231
  %233 = vrot.lane.b32.xlu0 %v159, 127
  %v234 = vpop.permute.xlu0 %233
  %235 = vrot.lane.b32.xlu0 %v160, 127
  %v236 = vpop.permute.xlu0 %235
  %237 = vrot.lane.b32.xlu0 %v161, 127
  %v238 = vpop.permute.xlu0 %237
  %239 = vrot.lane.b32.xlu0 %v162, 127
  %v240 = vpop.permute.xlu0 %239
  %241 = vrot.lane.b32.xlu0 %v163, 127
  %v242 = vpop.permute.xlu0 %241
  %243 = vrot.lane.b32.xlu0 %v164, 127
  %v244 = vpop.permute.xlu0 %243
  %vm245 = vcmask 1039360
  %v246 = vsel %vm245, %v206, %v208
  %v247 = vsel %vm245, %v208, %v210
  %v248 = vsel %vm245, %v210, %v212
  %v249 = vsel %vm245, %v212, %v214
  %v250 = vsel %vm245, %v214, %v216
  %v251 = vsel %vm245, %v216, %v218
  %v252 = vsel %vm245, %v218, %v220
  %v253 = vsel %vm245, %v220, %v222
  %v254 = vsel %vm245, %v222, %v224
  %v255 = vsel %vm245, %v226, %v228
  %v256 = vsel %vm245, %v228, %v230
  %v257 = vsel %vm245, %v230, %v232
  %v258 = vsel %vm245, %v232, %v234
  %v259 = vsel %vm245, %v234, %v236
  %v260 = vsel %vm245, %v236, %v238
  %v261 = vsel %vm245, %v238, %v240
  %v262 = vsel %vm245, %v240, %v242
  %v263 = vsel %vm245, %v242, %v244
  %v286 = vsel %vm245, %v224, %v206
  %v287 = vsel %vm245, %v244, %v226
  %288 = vst [vmem:[#allocation2 + $0xa0] sm:$0xff] %v246
  %289 = vst [vmem:[#allocation2 + $0xa8] sm:$0xff] %v247
  %290 = vst [vmem:[#allocation2 + $0xb0] sm:$0xff] %v248
  %291 = vst [vmem:[#allocation2 + $0xb8] sm:$0xff] %v249
  %292 = vst [vmem:[#allocation2 + $0xc0] sm:$0xff] %v250
  %293 = vst [vmem:[#allocation2 + $0xc8] sm:$0xff] %v251
  %294 = vst [vmem:[#allocation2 + $0xd0] sm:$0xff] %v252
  %295 = vst [vmem:[#allocation2 + $0xd8] sm:$0xff] %v253
  %296 = vst [vmem:[#allocation2 + $0xe0] sm:$0xff] %v254
  %297 = vst [vmem:[#allocation2 + $0xe8] sm:$0xff] %v286
  %298 = vst [vmem:[#allocation2 + $0xf0] sm:$0xf] %v255
  %299 = vst [vmem:[#allocation2 + $0xf8] sm:$0xf] %v256
  %300 = vst [vmem:[#allocation2 + $0x100] sm:$0xf] %v257
  %301 = vst [vmem:[#allocation2 + $0x108] sm:$0xf] %v258
  %302 = vst [vmem:[#allocation2 + $0x110] sm:$0xf] %v259
  %303 = vst [vmem:[#allocation2 + $0x118] sm:$0xf] %v260
  %304 = vst [vmem:[#allocation2 + $0x120] sm:$0xf] %v261
  %305 = vst [vmem:[#allocation2 + $0x128] sm:$0xf] %v262
  %306 = vst [vmem:[#allocation2 + $0x130] sm:$0xf] %v263
  %307 = vst [vmem:[#allocation2 + $0x138] sm:$0xf] %v287
  %308 = vrot.lane.b32.xlu0 %v145, 126
  %v309 = vpop.permute.xlu0 %308
  %310 = vrot.lane.b32.xlu0 %v146, 126
  %v311 = vpop.permute.xlu0 %310
  %312 = vrot.lane.b32.xlu0 %v147, 126
  %v313 = vpop.permute.xlu0 %312
  %314 = vrot.lane.b32.xlu0 %v148, 126
  %v315 = vpop.permute.xlu0 %314
  %316 = vrot.lane.b32.xlu0 %v149, 126
  %v317 = vpop.permute.xlu0 %316
  %318 = vrot.lane.b32.xlu0 %v150, 126
  %v319 = vpop.permute.xlu0 %318
  %320 = vrot.lane.b32.xlu0 %v151, 126
  %v321 = vpop.permute.xlu0 %320
  %322 = vrot.lane.b32.xlu0 %v152, 126
  %v323 = vpop.permute.xlu0 %322
  %324 = vrot.lane.b32.xlu0 %v153, 126
  %v325 = vpop.permute.xlu0 %324
  %326 = vrot.lane.b32.xlu0 %v154, 126
  %v327 = vpop.permute.xlu0 %326
  %328 = vrot.lane.b32.xlu0 %v155, 126
  %v329 = vpop.permute.xlu0 %328
  %330 = vrot.lane.b32.xlu0 %v156, 126
  %v331 = vpop.permute.xlu0 %330
  %332 = vrot.lane.b32.xlu0 %v157, 126
  %v333 = vpop.permute.xlu0 %332
  %334 = vrot.lane.b32.xlu0 %v158, 126
  %v335 = vpop.permute.xlu0 %334
  %336 = vrot.lane.b32.xlu0 %v159, 126
  %v337 = vpop.permute.xlu0 %336
  %338 = vrot.lane.b32.xlu0 %v160, 126
  %v339 = vpop.permute.xlu0 %338
  %340 = vrot.lane.b32.xlu0 %v161, 126
  %v341 = vpop.permute.xlu0 %340
  %342 = vrot.lane.b32.xlu0 %v162, 126
  %v343 = vpop.permute.xlu0 %342
  %344 = vrot.lane.b32.xlu0 %v163, 126
  %v345 = vpop.permute.xlu0 %344
  %346 = vrot.lane.b32.xlu0 %v164, 126
  %v347 = vpop.permute.xlu0 %346
  %vm348 = vcmask 1031168
  %v349 = vsel %vm348, %v309, %v311
  %v350 = vsel %vm348, %v311, %v313
  %v351 = vsel %vm348, %v313, %v315
  %v352 = vsel %vm348, %v315, %v317
  %v353 = vsel %vm348, %v317, %v319
  %v354 = vsel %vm348, %v319, %v321
  %v355 = vsel %vm348, %v321, %v323
  %v356 = vsel %vm348, %v323, %v325
  %v357 = vsel %vm348, %v325, %v327
  %v358 = vsel %vm348, %v329, %v331
  %v359 = vsel %vm348, %v331, %v333
  %v360 = vsel %vm348, %v333, %v335
  %v361 = vsel %vm348, %v335, %v337
  %v362 = vsel %vm348, %v337, %v339
  %v363 = vsel %vm348, %v339, %v341
  %v364 = vsel %vm348, %v341, %v343
  %v365 = vsel %vm348, %v343, %v345
  %v366 = vsel %vm348, %v345, %v347
  %v389 = vsel %vm348, %v327, %v309
  %v390 = vsel %vm348, %v347, %v329
  %391 = vst [vmem:[#allocation2 + $0x140] sm:$0xff] %v349
  %392 = vst [vmem:[#allocation2 + $0x148] sm:$0xff] %v350
  %393 = vst [vmem:[#allocation2 + $0x150] sm:$0xff] %v351
  %394 = vst [vmem:[#allocation2 + $0x158] sm:$0xff] %v352
  %395 = vst [vmem:[#allocation2 + $0x160] sm:$0xff] %v353
  %396 = vst [vmem:[#allocation2 + $0x168] sm:$0xff] %v354
  %397 = vst [vmem:[#allocation2 + $0x170] sm:$0xff] %v355
  %398 = vst [vmem:[#allocation2 + $0x178] sm:$0xff] %v356
  %399 = vst [vmem:[#allocation2 + $0x180] sm:$0xff] %v357
  %400 = vst [vmem:[#allocation2 + $0x188] sm:$0xff] %v389
  %401 = vst [vmem:[#allocation2 + $0x190] sm:$0xf] %v358
  %402 = vst [vmem:[#allocation2 + $0x198] sm:$0xf] %v359
  %403 = vst [vmem:[#allocation2 + $0x1a0] sm:$0xf] %v360
  %404 = vst [vmem:[#allocation2 + $0x1a8] sm:$0xf] %v361
  %405 = vst [vmem:[#allocation2 + $0x1b0] sm:$0xf] %v362
  %406 = vst [vmem:[#allocation2 + $0x1b8] sm:$0xf] %v363
  %407 = vst [vmem:[#allocation2 + $0x1c0] sm:$0xf] %v364
  %408 = vst [vmem:[#allocation2 + $0x1c8] sm:$0xf] %v365
  %409 = vst [vmem:[#allocation2 + $0x1d0] sm:$0xf] %v366
  %410 = vst [vmem:[#allocation2 + $0x1d8] sm:$0xf] %v390
  %411 = vrot.lane.b32.xlu0 %v145, 94
  %v412 = vpop.permute.xlu0 %411
  %413 = vrot.lane.b32.xlu0 %v146, 94
  %v414 = vpop.permute.xlu0 %413
  %415 = vrot.lane.b32.xlu0 %v147, 94
  %v416 = vpop.permute.xlu0 %415
  %417 = vrot.lane.b32.xlu0 %v148, 94
  %v418 = vpop.permute.xlu0 %417
  %419 = vrot.lane.b32.xlu0 %v149, 94
  %v420 = vpop.permute.xlu0 %419
  %421 = vrot.lane.b32.xlu0 %v150, 94
  %v422 = vpop.permute.xlu0 %421
  %423 = vrot.lane.b32.xlu0 %v151, 94
  %v424 = vpop.permute.xlu0 %423
  %425 = vrot.lane.b32.xlu0 %v152, 94
  %v426 = vpop.permute.xlu0 %425
  %427 = vrot.lane.b32.xlu0 %v153, 94
  %v428 = vpop.permute.xlu0 %427
  %429 = vrot.lane.b32.xlu0 %v154, 94
  %v430 = vpop.permute.xlu0 %429
  %431 = vrot.lane.b32.xlu0 %v155, 94
  %v432 = vpop.permute.xlu0 %431
  %433 = vrot.lane.b32.xlu0 %v156, 94
  %v434 = vpop.permute.xlu0 %433
  %435 = vrot.lane.b32.xlu0 %v157, 94
  %v436 = vpop.permute.xlu0 %435
  %437 = vrot.lane.b32.xlu0 %v158, 94
  %v438 = vpop.permute.xlu0 %437
  %439 = vrot.lane.b32.xlu0 %v159, 94
  %v440 = vpop.permute.xlu0 %439
  %441 = vrot.lane.b32.xlu0 %v160, 94
  %v442 = vpop.permute.xlu0 %441
  %443 = vrot.lane.b32.xlu0 %v161, 94
  %v444 = vpop.permute.xlu0 %443
  %445 = vrot.lane.b32.xlu0 %v162, 94
  %v446 = vpop.permute.xlu0 %445
  %447 = vrot.lane.b32.xlu0 %v163, 94
  %v448 = vpop.permute.xlu0 %447
  %449 = vrot.lane.b32.xlu0 %v164, 94
  %v450 = vpop.permute.xlu0 %449
  %vm451 = vcmask 769024
  %v452 = vsel %vm451, %v412, %v414
  %v453 = vsel %vm451, %v414, %v416
  %v454 = vsel %vm451, %v416, %v418
  %v455 = vsel %vm451, %v418, %v420
  %v456 = vsel %vm451, %v420, %v422
  %v457 = vsel %vm451, %v422, %v424
  %v458 = vsel %vm451, %v424, %v426
  %v459 = vsel %vm451, %v426, %v428
  %v460 = vsel %vm451, %v428, %v430
  %v461 = vsel %vm451, %v432, %v434
  %v462 = vsel %vm451, %v434, %v436
  %v463 = vsel %vm451, %v436, %v438
  %v464 = vsel %vm451, %v438, %v440
  %v465 = vsel %vm451, %v440, %v442
  %v466 = vsel %vm451, %v442, %v444
  %v467 = vsel %vm451, %v444, %v446
  %v468 = vsel %vm451, %v446, %v448
  %v469 = vsel %vm451, %v448, %v450
  %v492 = vsel %vm451, %v430, %v412
  %v493 = vsel %vm451, %v450, %v432
  %494 = vst [vmem:[#allocation2 + $0x1e0] sm:$0xff] %v452
  %495 = vst [vmem:[#allocation2 + $0x1e8] sm:$0xff] %v453
  %496 = vst [vmem:[#allocation2 + $0x1f0] sm:$0xff] %v454
  %497 = vst [vmem:[#allocation2 + $0x1f8] sm:$0xff] %v455
  %498 = vst [vmem:[#allocation2 + $0x200] sm:$0xff] %v456
  %499 = vst [vmem:[#allocation2 + $0x208] sm:$0xff] %v457
  %500 = vst [vmem:[#allocation2 + $0x210] sm:$0xff] %v458
  %501 = vst [vmem:[#allocation2 + $0x218] sm:$0xff] %v459
  %502 = vst [vmem:[#allocation2 + $0x220] sm:$0xff] %v460
  %503 = vst [vmem:[#allocation2 + $0x228] sm:$0xff] %v492
  %504 = vst [vmem:[#allocation2 + $0x230] sm:$0xf] %v461
  %505 = vst [vmem:[#allocation2 + $0x238] sm:$0xf] %v462
  %506 = vst [vmem:[#allocation2 + $0x240] sm:$0xf] %v463
  %507 = vst [vmem:[#allocation2 + $0x248] sm:$0xf] %v464
  %508 = vst [vmem:[#allocation2 + $0x250] sm:$0xf] %v465
  %509 = vst [vmem:[#allocation2 + $0x258] sm:$0xf] %v466
  %510 = vst [vmem:[#allocation2 + $0x260] sm:$0xf] %v467
  %511 = vst [vmem:[#allocation2 + $0x268] sm:$0xf] %v468
  %512 = vst [vmem:[#allocation2 + $0x270] sm:$0xf] %v469
  %513 = vst [vmem:[#allocation2 + $0x278] sm:$0xf] %v493
  %514 = vrot.lane.b32.xlu0 %v145, 93
  %v515 = vpop.permute.xlu0 %514
  %516 = vrot.lane.b32.xlu0 %v146, 93
  %v517 = vpop.permute.xlu0 %516
  %518 = vrot.lane.b32.xlu0 %v147, 93
  %v519 = vpop.permute.xlu0 %518
  %520 = vrot.lane.b32.xlu0 %v148, 93
  %v521 = vpop.permute.xlu0 %520
  %522 = vrot.lane.b32.xlu0 %v149, 93
  %v523 = vpop.permute.xlu0 %522
  %524 = vrot.lane.b32.xlu0 %v150, 93
  %v525 = vpop.permute.xlu0 %524
  %526 = vrot.lane.b32.xlu0 %v151, 93
  %v527 = vpop.permute.xlu0 %526
  %528 = vrot.lane.b32.xlu0 %v152, 93
  %v529 = vpop.permute.xlu0 %528
  %530 = vrot.lane.b32.xlu0 %v153, 93
  %v531 = vpop.permute.xlu0 %530
  %532 = vrot.lane.b32.xlu0 %v154, 93
  %v533 = vpop.permute.xlu0 %532
  %534 = vrot.lane.b32.xlu0 %v155, 93
  %v535 = vpop.permute.xlu0 %534
  %536 = vrot.lane.b32.xlu0 %v156, 93
  %v537 = vpop.permute.xlu0 %536
  %538 = vrot.lane.b32.xlu0 %v157, 93
  %v539 = vpop.permute.xlu0 %538
  %540 = vrot.lane.b32.xlu0 %v158, 93
  %v541 = vpop.permute.xlu0 %540
  %542 = vrot.lane.b32.xlu0 %v159, 93
  %v543 = vpop.permute.xlu0 %542
  %544 = vrot.lane.b32.xlu0 %v160, 93
  %v545 = vpop.permute.xlu0 %544
  %546 = vrot.lane.b32.xlu0 %v161, 93
  %v547 = vpop.permute.xlu0 %546
  %548 = vrot.lane.b32.xlu0 %v162, 93
  %v549 = vpop.permute.xlu0 %548
  %550 = vrot.lane.b32.xlu0 %v163, 93
  %v551 = vpop.permute.xlu0 %550
  %552 = vrot.lane.b32.xlu0 %v164, 93
  %v553 = vpop.permute.xlu0 %552
  %vm554 = vcmask 760832
  %v555 = vsel %vm554, %v515, %v517
  %v556 = vsel %vm554, %v517, %v519
  %v557 = vsel %vm554, %v519, %v521
  %v558 = vsel %vm554, %v521, %v523
  %v559 = vsel %vm554, %v523, %v525
  %v560 = vsel %vm554, %v525, %v527
  %v561 = vsel %vm554, %v527, %v529
  %v562 = vsel %vm554, %v529, %v531
  %v563 = vsel %vm554, %v531, %v533
  %v564 = vsel %vm554, %v535, %v537
  %v565 = vsel %vm554, %v537, %v539
  %v566 = vsel %vm554, %v539, %v541
  %v567 = vsel %vm554, %v541, %v543
  %v568 = vsel %vm554, %v543, %v545
  %v569 = vsel %vm554, %v545, %v547
  %v570 = vsel %vm554, %v547, %v549
  %v571 = vsel %vm554, %v549, %v551
  %v572 = vsel %vm554, %v551, %v553
  %v595 = vsel %vm554, %v533, %v515
  %v596 = vsel %vm554, %v553, %v535
  %597 = vst [vmem:[#allocation2 + $0x280] sm:$0xff] %v555
  %598 = vst [vmem:[#allocation2 + $0x288] sm:$0xff] %v556
  %599 = vst [vmem:[#allocation2 + $0x290] sm:$0xff] %v557
  %600 = vst [vmem:[#allocation2 + $0x298] sm:$0xff] %v558
  %601 = vst [vmem:[#allocation2 + $0x2a0] sm:$0xff] %v559
  %602 = vst [vmem:[#allocation2 + $0x2a8] sm:$0xff] %v560
  %603 = vst [vmem:[#allocation2 + $0x2b0] sm:$0xff] %v561
  %604 = vst [vmem:[#allocation2 + $0x2b8] sm:$0xff] %v562
  %605 = vst [vmem:[#allocation2 + $0x2c0] sm:$0xff] %v563
  %606 = vst [vmem:[#allocation2 + $0x2c8] sm:$0xff] %v595
  %607 = vst [vmem:[#allocation2 + $0x2d0] sm:$0xf] %v564
  %608 = vst [vmem:[#allocation2 + $0x2d8] sm:$0xf] %v565
  %609 = vst [vmem:[#allocation2 + $0x2e0] sm:$0xf] %v566
  %610 = vst [vmem:[#allocation2 + $0x2e8] sm:$0xf] %v567
  %611 = vst [vmem:[#allocation2 + $0x2f0] sm:$0xf] %v568
  %612 = vst [vmem:[#allocation2 + $0x2f8] sm:$0xf] %v569
  %613 = vst [vmem:[#allocation2 + $0x300] sm:$0xf] %v570
  %614 = vst [vmem:[#allocation2 + $0x308] sm:$0xf] %v571
  %615 = vst [vmem:[#allocation2 + $0x310] sm:$0xf] %v572
  %616 = vst [vmem:[#allocation2 + $0x318] sm:$0xf] %v596
  %617 = vrot.lane.b32.xlu0 %v145, 92
  %v618 = vpop.permute.xlu0 %617
  %619 = vrot.lane.b32.xlu0 %v146, 92
  %v620 = vpop.permute.xlu0 %619
  %621 = vrot.lane.b32.xlu0 %v147, 92
  %v622 = vpop.permute.xlu0 %621
  %623 = vrot.lane.b32.xlu0 %v148, 92
  %v624 = vpop.permute.xlu0 %623
  %625 = vrot.lane.b32.xlu0 %v149, 92
  %v626 = vpop.permute.xlu0 %625
  %627 = vrot.lane.b32.xlu0 %v150, 92
  %v628 = vpop.permute.xlu0 %627
  %629 = vrot.lane.b32.xlu0 %v151, 92
  %v630 = vpop.permute.xlu0 %629
  %631 = vrot.lane.b32.xlu0 %v152, 92
  %v632 = vpop.permute.xlu0 %631
  %633 = vrot.lane.b32.xlu0 %v153, 92
  %v634 = vpop.permute.xlu0 %633
  %635 = vrot.lane.b32.xlu0 %v154, 92
  %v636 = vpop.permute.xlu0 %635
  %637 = vrot.lane.b32.xlu0 %v155, 92
  %v638 = vpop.permute.xlu0 %637
  %639 = vrot.lane.b32.xlu0 %v156, 92
  %v640 = vpop.permute.xlu0 %639
  %641 = vrot.lane.b32.xlu0 %v157, 92
  %v642 = vpop.permute.xlu0 %641
  %643 = vrot.lane.b32.xlu0 %v158, 92
  %v644 = vpop.permute.xlu0 %643
  %645 = vrot.lane.b32.xlu0 %v159, 92
  %v646 = vpop.permute.xlu0 %645
  %647 = vrot.lane.b32.xlu0 %v160, 92
  %v648 = vpop.permute.xlu0 %647
  %649 = vrot.lane.b32.xlu0 %v161, 92
  %v650 = vpop.permute.xlu0 %649
  %651 = vrot.lane.b32.xlu0 %v162, 92
  %v652 = vpop.permute.xlu0 %651
  %653 = vrot.lane.b32.xlu0 %v163, 92
  %v654 = vpop.permute.xlu0 %653
  %655 = vrot.lane.b32.xlu0 %v164, 92
  %v656 = vpop.permute.xlu0 %655
  %vm657 = vcmask 752640
  %v658 = vsel %vm657, %v618, %v620
  %v659 = vsel %vm657, %v620, %v622
  %v660 = vsel %vm657, %v622, %v624
  %v661 = vsel %vm657, %v624, %v626
  %v662 = vsel %vm657, %v626, %v628
  %v663 = vsel %vm657, %v628, %v630
  %v664 = vsel %vm657, %v630, %v632
  %v665 = vsel %vm657, %v632, %v634
  %v666 = vsel %vm657, %v634, %v636
  %v667 = vsel %vm657, %v638, %v640
  %v668 = vsel %vm657, %v640, %v642
  %v669 = vsel %vm657, %v642, %v644
  %v670 = vsel %vm657, %v644, %v646
  %v671 = vsel %vm657, %v646, %v648
  %v672 = vsel %vm657, %v648, %v650
  %v673 = vsel %vm657, %v650, %v652
  %v674 = vsel %vm657, %v652, %v654
  %v675 = vsel %vm657, %v654, %v656
  %v698 = vsel %vm657, %v636, %v618
  %v699 = vsel %vm657, %v656, %v638
  %700 = vst [vmem:[#allocation2 + $0x320] sm:$0xff] %v658
  %701 = vst [vmem:[#allocation2 + $0x328] sm:$0xff] %v659
  %702 = vst [vmem:[#allocation2 + $0x330] sm:$0xff] %v660
  %703 = vst [vmem:[#allocation2 + $0x338] sm:$0xff] %v661
  %704 = vst [vmem:[#allocation2 + $0x340] sm:$0xff] %v662
  %705 = vst [vmem:[#allocation2 + $0x348] sm:$0xff] %v663
  %706 = vst [vmem:[#allocation2 + $0x350] sm:$0xff] %v664
  %707 = vst [vmem:[#allocation2 + $0x358] sm:$0xff] %v665
  %708 = vst [vmem:[#allocation2 + $0x360] sm:$0xff] %v666
  %709 = vst [vmem:[#allocation2 + $0x368] sm:$0xff] %v698
  %710 = vst [vmem:[#allocation2 + $0x370] sm:$0xf] %v667
  %711 = vst [vmem:[#allocation2 + $0x378] sm:$0xf] %v668
  %712 = vst [vmem:[#allocation2 + $0x380] sm:$0xf] %v669
  %713 = vst [vmem:[#allocation2 + $0x388] sm:$0xf] %v670
  %714 = vst [vmem:[#allocation2 + $0x390] sm:$0xf] %v671
  %715 = vst [vmem:[#allocation2 + $0x398] sm:$0xf] %v672
  %716 = vst [vmem:[#allocation2 + $0x3a0] sm:$0xf] %v673
  %717 = vst [vmem:[#allocation2 + $0x3a8] sm:$0xf] %v674
  %718 = vst [vmem:[#allocation2 + $0x3b0] sm:$0xf] %v675
  %719 = vst [vmem:[#allocation2 + $0x3b8] sm:$0xf] %v699
  %720 = vrot.lane.b32.xlu0 %v145, 60
  %v721 = vpop.permute.xlu0 %720
  %722 = vrot.lane.b32.xlu0 %v146, 60
  %v723 = vpop.permute.xlu0 %722
  %724 = vrot.lane.b32.xlu0 %v147, 60
  %v725 = vpop.permute.xlu0 %724
  %726 = vrot.lane.b32.xlu0 %v148, 60
  %v727 = vpop.permute.xlu0 %726
  %728 = vrot.lane.b32.xlu0 %v149, 60
  %v729 = vpop.permute.xlu0 %728
  %730 = vrot.lane.b32.xlu0 %v150, 60
  %v731 = vpop.permute.xlu0 %730
  %732 = vrot.lane.b32.xlu0 %v151, 60
  %v733 = vpop.permute.xlu0 %732
  %734 = vrot.lane.b32.xlu0 %v152, 60
  %v735 = vpop.permute.xlu0 %734
  %736 = vrot.lane.b32.xlu0 %v153, 60
  %v737 = vpop.permute.xlu0 %736
  %738 = vrot.lane.b32.xlu0 %v154, 60
  %v739 = vpop.permute.xlu0 %738
  %740 = vrot.lane.b32.xlu0 %v155, 60
  %v741 = vpop.permute.xlu0 %740
  %742 = vrot.lane.b32.xlu0 %v156, 60
  %v743 = vpop.permute.xlu0 %742
  %744 = vrot.lane.b32.xlu0 %v157, 60
  %v745 = vpop.permute.xlu0 %744
  %746 = vrot.lane.b32.xlu0 %v158, 60
  %v747 = vpop.permute.xlu0 %746
  %748 = vrot.lane.b32.xlu0 %v159, 60
  %v749 = vpop.permute.xlu0 %748
  %750 = vrot.lane.b32.xlu0 %v160, 60
  %v751 = vpop.permute.xlu0 %750
  %752 = vrot.lane.b32.xlu0 %v161, 60
  %v753 = vpop.permute.xlu0 %752
  %754 = vrot.lane.b32.xlu0 %v162, 60
  %v755 = vpop.permute.xlu0 %754
  %756 = vrot.lane.b32.xlu0 %v163, 60
  %v757 = vpop.permute.xlu0 %756
  %758 = vrot.lane.b32.xlu0 %v164, 60
  %v759 = vpop.permute.xlu0 %758
  %vm760 = vcmask 490496
  %v761 = vsel %vm760, %v721, %v723
  %v762 = vsel %vm760, %v723, %v725
  %v763 = vsel %vm760, %v725, %v727
  %v764 = vsel %vm760, %v727, %v729
  %v765 = vsel %vm760, %v729, %v731
  %v766 = vsel %vm760, %v731, %v733
  %v767 = vsel %vm760, %v733, %v735
  %v768 = vsel %vm760, %v735, %v737
  %v769 = vsel %vm760, %v737, %v739
  %v770 = vsel %vm760, %v741, %v743
  %v771 = vsel %vm760, %v743, %v745
  %v772 = vsel %vm760, %v745, %v747
  %v773 = vsel %vm760, %v747, %v749
  %v774 = vsel %vm760, %v749, %v751
  %v775 = vsel %vm760, %v751, %v753
  %v776 = vsel %vm760, %v753, %v755
  %v777 = vsel %vm760, %v755, %v757
  %v778 = vsel %vm760, %v757, %v759
  %v801 = vsel %vm760, %v739, %v721
  %v802 = vsel %vm760, %v759, %v741
  %803 = vst [vmem:[#allocation2 + $0x3c0] sm:$0xff] %v761
  %804 = vst [vmem:[#allocation2 + $0x3c8] sm:$0xff] %v762
  %805 = vst [vmem:[#allocation2 + $0x3d0] sm:$0xff] %v763
  %806 = vst [vmem:[#allocation2 + $0x3d8] sm:$0xff] %v764
  %807 = vst [vmem:[#allocation2 + $0x3e0] sm:$0xff] %v765
  %808 = vst [vmem:[#allocation2 + $0x3e8] sm:$0xff] %v766
  %809 = vst [vmem:[#allocation2 + $0x3f0] sm:$0xff] %v767
  %810 = vst [vmem:[#allocation2 + $0x3f8] sm:$0xff] %v768
  %811 = vst [vmem:[#allocation2 + $0x400] sm:$0xff] %v769
  %812 = vst [vmem:[#allocation2 + $0x408] sm:$0xff] %v801
  %813 = vst [vmem:[#allocation2 + $0x410] sm:$0xf] %v770
  %814 = vst [vmem:[#allocation2 + $0x418] sm:$0xf] %v771
  %815 = vst [vmem:[#allocation2 + $0x420] sm:$0xf] %v772
  %816 = vst [vmem:[#allocation2 + $0x428] sm:$0xf] %v773
  %817 = vst [vmem:[#allocation2 + $0x430] sm:$0xf] %v774
  %818 = vst [vmem:[#allocation2 + $0x438] sm:$0xf] %v775
  %819 = vst [vmem:[#allocation2 + $0x440] sm:$0xf] %v776
  %820 = vst [vmem:[#allocation2 + $0x448] sm:$0xf] %v777
  %821 = vst [vmem:[#allocation2 + $0x450] sm:$0xf] %v778
  %822 = vst [vmem:[#allocation2 + $0x458] sm:$0xf] %v802
  %823 = vrot.lane.b32.xlu0 %v145, 59
  %v824 = vpop.permute.xlu0 %823
  %825 = vrot.lane.b32.xlu0 %v146, 59
  %v826 = vpop.permute.xlu0 %825
  %827 = vrot.lane.b32.xlu0 %v147, 59
  %v828 = vpop.permute.xlu0 %827
  %829 = vrot.lane.b32.xlu0 %v148, 59
  %v830 = vpop.permute.xlu0 %829
  %831 = vrot.lane.b32.xlu0 %v149, 59
  %v832 = vpop.permute.xlu0 %831
  %833 = vrot.lane.b32.xlu0 %v150, 59
  %v834 = vpop.permute.xlu0 %833
  %835 = vrot.lane.b32.xlu0 %v151, 59
  %v836 = vpop.permute.xlu0 %835
  %837 = vrot.lane.b32.xlu0 %v152, 59
  %v838 = vpop.permute.xlu0 %837
  %839 = vrot.lane.b32.xlu0 %v153, 59
  %v840 = vpop.permute.xlu0 %839
  %841 = vrot.lane.b32.xlu0 %v154, 59
  %v842 = vpop.permute.xlu0 %841
  %843 = vrot.lane.b32.xlu0 %v155, 59
  %v844 = vpop.permute.xlu0 %843
  %845 = vrot.lane.b32.xlu0 %v156, 59
  %v846 = vpop.permute.xlu0 %845
  %847 = vrot.lane.b32.xlu0 %v157, 59
  %v848 = vpop.permute.xlu0 %847
  %849 = vrot.lane.b32.xlu0 %v158, 59
  %v850 = vpop.permute.xlu0 %849
  %851 = vrot.lane.b32.xlu0 %v159, 59
  %v852 = vpop.permute.xlu0 %851
  %853 = vrot.lane.b32.xlu0 %v160, 59
  %v854 = vpop.permute.xlu0 %853
  %855 = vrot.lane.b32.xlu0 %v161, 59
  %v856 = vpop.permute.xlu0 %855
  %857 = vrot.lane.b32.xlu0 %v162, 59
  %v858 = vpop.permute.xlu0 %857
  %859 = vrot.lane.b32.xlu0 %v163, 59
  %v860 = vpop.permute.xlu0 %859
  %861 = vrot.lane.b32.xlu0 %v164, 59
  %v862 = vpop.permute.xlu0 %861
  %vm863 = vcmask 482304
  %v864 = vsel %vm863, %v824, %v826
  %v865 = vsel %vm863, %v826, %v828
  %v866 = vsel %vm863, %v828, %v830
  %v867 = vsel %vm863, %v830, %v832
  %v868 = vsel %vm863, %v832, %v834
  %v869 = vsel %vm863, %v834, %v836
  %v870 = vsel %vm863, %v836, %v838
  %v871 = vsel %vm863, %v838, %v840
  %v872 = vsel %vm863, %v840, %v842
  %v873 = vsel %vm863, %v844, %v846
  %v874 = vsel %vm863, %v846, %v848
  %v875 = vsel %vm863, %v848, %v850
  %v876 = vsel %vm863, %v850, %v852
  %v877 = vsel %vm863, %v852, %v854
  %v878 = vsel %vm863, %v854, %v856
  %v879 = vsel %vm863, %v856, %v858
  %v880 = vsel %vm863, %v858, %v860
  %v881 = vsel %vm863, %v860, %v862
  %v904 = vsel %vm863, %v842, %v824
  %v905 = vsel %vm863, %v862, %v844
  %906 = vst [vmem:[#allocation2 + $0x460] sm:$0xff] %v864
  %907 = vst [vmem:[#allocation2 + $0x468] sm:$0xff] %v865
  %908 = vst [vmem:[#allocation2 + $0x470] sm:$0xff] %v866
  %909 = vst [vmem:[#allocation2 + $0x478] sm:$0xff] %v867
  %910 = vst [vmem:[#allocation2 + $0x480] sm:$0xff] %v868
  %911 = vst [vmem:[#allocation2 + $0x488] sm:$0xff] %v869
  %912 = vst [vmem:[#allocation2 + $0x490] sm:$0xff] %v870
  %913 = vst [vmem:[#allocation2 + $0x498] sm:$0xff] %v871
  %914 = vst [vmem:[#allocation2 + $0x4a0] sm:$0xff] %v872
  %915 = vst [vmem:[#allocation2 + $0x4a8] sm:$0xff] %v904
  %916 = vst [vmem:[#allocation2 + $0x4b0] sm:$0xf] %v873
  %917 = vst [vmem:[#allocation2 + $0x4b8] sm:$0xf] %v874
  %918 = vst [vmem:[#allocation2 + $0x4c0] sm:$0xf] %v875
  %919 = vst [vmem:[#allocation2 + $0x4c8] sm:$0xf] %v876
  %920 = vst [vmem:[#allocation2 + $0x4d0] sm:$0xf] %v877
  %921 = vst [vmem:[#allocation2 + $0x4d8] sm:$0xf] %v878
  %922 = vst [vmem:[#allocation2 + $0x4e0] sm:$0xf] %v879
  %923 = vst [vmem:[#allocation2 + $0x4e8] sm:$0xf] %v880
  %924 = vst [vmem:[#allocation2 + $0x4f0] sm:$0xf] %v881
  %925 = vst [vmem:[#allocation2 + $0x4f8] sm:$0xf] %v905
  %926 = vrot.lane.b32.xlu0 %v145, 58
  %v927 = vpop.permute.xlu0 %926
  %928 = vrot.lane.b32.xlu0 %v146, 58
  %v929 = vpop.permute.xlu0 %928
  %930 = vrot.lane.b32.xlu0 %v147, 58
  %v931 = vpop.permute.xlu0 %930
  %932 = vrot.lane.b32.xlu0 %v148, 58
  %v933 = vpop.permute.xlu0 %932
  %934 = vrot.lane.b32.xlu0 %v149, 58
  %v935 = vpop.permute.xlu0 %934
  %936 = vrot.lane.b32.xlu0 %v150, 58
  %v937 = vpop.permute.xlu0 %936
  %938 = vrot.lane.b32.xlu0 %v151, 58
  %v939 = vpop.permute.xlu0 %938
  %940 = vrot.lane.b32.xlu0 %v152, 58
  %v941 = vpop.permute.xlu0 %940
  %942 = vrot.lane.b32.xlu0 %v153, 58
  %v943 = vpop.permute.xlu0 %942
  %944 = vrot.lane.b32.xlu0 %v154, 58
  %v945 = vpop.permute.xlu0 %944
  %946 = vrot.lane.b32.xlu0 %v155, 58
  %v947 = vpop.permute.xlu0 %946
  %948 = vrot.lane.b32.xlu0 %v156, 58
  %v949 = vpop.permute.xlu0 %948
  %950 = vrot.lane.b32.xlu0 %v157, 58
  %v951 = vpop.permute.xlu0 %950
  %952 = vrot.lane.b32.xlu0 %v158, 58
  %v953 = vpop.permute.xlu0 %952
  %954 = vrot.lane.b32.xlu0 %v159, 58
  %v955 = vpop.permute.xlu0 %954
  %956 = vrot.lane.b32.xlu0 %v160, 58
  %v957 = vpop.permute.xlu0 %956
  %958 = vrot.lane.b32.xlu0 %v161, 58
  %v959 = vpop.permute.xlu0 %958
  %960 = vrot.lane.b32.xlu0 %v162, 58
  %v961 = vpop.permute.xlu0 %960
  %962 = vrot.lane.b32.xlu0 %v163, 58
  %v963 = vpop.permute.xlu0 %962
  %964 = vrot.lane.b32.xlu0 %v164, 58
  %v965 = vpop.permute.xlu0 %964
  %vm966 = vcmask 474112
  %v967 = vsel %vm966, %v927, %v929
  %v968 = vsel %vm966, %v929, %v931
  %v969 = vsel %vm966, %v931, %v933
  %v970 = vsel %vm966, %v933, %v935
  %v971 = vsel %vm966, %v935, %v937
  %v972 = vsel %vm966, %v937, %v939
  %v973 = vsel %vm966, %v939, %v941
  %v974 = vsel %vm966, %v941, %v943
  %v975 = vsel %vm966, %v943, %v945
  %v976 = vsel %vm966, %v947, %v949
  %v977 = vsel %vm966, %v949, %v951
  %v978 = vsel %vm966, %v951, %v953
  %v979 = vsel %vm966, %v953, %v955
  %v980 = vsel %vm966, %v955, %v957
  %v981 = vsel %vm966, %v957, %v959
  %v982 = vsel %vm966, %v959, %v961
  %v983 = vsel %vm966, %v961, %v963
  %v984 = vsel %vm966, %v963, %v965
  %v1007 = vsel %vm966, %v945, %v927
  %v1008 = vsel %vm966, %v965, %v947
  %1009 = vst [vmem:[#allocation2 + $0x500] sm:$0xff] %v967
  %1010 = vst [vmem:[#allocation2 + $0x508] sm:$0xff] %v968
  %1011 = vst [vmem:[#allocation2 + $0x510] sm:$0xff] %v969
  %1012 = vst [vmem:[#allocation2 + $0x518] sm:$0xff] %v970
  %1013 = vst [vmem:[#allocation2 + $0x520] sm:$0xff] %v971
  %1014 = vst [vmem:[#allocation2 + $0x528] sm:$0xff] %v972
  %1015 = vst [vmem:[#allocation2 + $0x530] sm:$0xff] %v973
  %1016 = vst [vmem:[#allocation2 + $0x538] sm:$0xff] %v974
  %1017 = vst [vmem:[#allocation2 + $0x540] sm:$0xff] %v975
  %1018 = vst [vmem:[#allocation2 + $0x548] sm:$0xff] %v1007
  %1019 = vst [vmem:[#allocation2 + $0x550] sm:$0xf] %v976
  %1020 = vst [vmem:[#allocation2 + $0x558] sm:$0xf] %v977
  %1021 = vst [vmem:[#allocation2 + $0x560] sm:$0xf] %v978
  %1022 = vst [vmem:[#allocation2 + $0x568] sm:$0xf] %v979
  %1023 = vst [vmem:[#allocation2 + $0x570] sm:$0xf] %v980
  %1024 = vst [vmem:[#allocation2 + $0x578] sm:$0xf] %v981
  %1025 = vst [vmem:[#allocation2 + $0x580] sm:$0xf] %v982
  %1026 = vst [vmem:[#allocation2 + $0x588] sm:$0xf] %v983
  %1027 = vst [vmem:[#allocation2 + $0x590] sm:$0xf] %v984
  %1028 = vst [vmem:[#allocation2 + $0x598] sm:$0xf] %v1008
  %v1029 = vld [vmem:[%s2] sm:$0xff]
  %v1030 = vld [vmem:[%s2 + $0x8] sm:$0xff]
  %v1031 = vld [vmem:[%s2 + $0x10] sm:$0xff]
  %v1032 = vld [vmem:[%s2 + $0x18] sm:$0xff]
  %v1033 = vld [vmem:[#allocation2] sm:$0xff]
  %v1034 = vld [vmem:[#allocation2 + $0x8] sm:$0xff]
  %v1035 = vld [vmem:[#allocation2 + $0x10] sm:$0xff]
  %v1036 = vld [vmem:[#allocation2 + $0x18] sm:$0xff]
  %v1037 = vld [vmem:[#allocation2 + $0x20] sm:$0xff]
  %v1038 = vld [vmem:[#allocation2 + $0x28] sm:$0xff]
  %v1039 = vld [vmem:[#allocation2 + $0x30] sm:$0xff]
  %v1040 = vld [vmem:[#allocation2 + $0x38] sm:$0xff]
  %v1041 = vld [vmem:[#allocation2 + $0x40] sm:$0xff]
  %v1042 = vld [vmem:[#allocation2 + $0x48] sm:$0xff]
  %v1043 = vld [vmem:[#allocation2 + $0x50] sm:$0xff]
  %v1044 = vld [vmem:[#allocation2 + $0x58] sm:$0xff]
  %v1045 = vld [vmem:[#allocation2 + $0x60] sm:$0xff]
  %v1046 = vld [vmem:[#allocation2 + $0x68] sm:$0xff]
  %v1047 = vld [vmem:[#allocation2 + $0x70] sm:$0xff]
  %v1048 = vld [vmem:[#allocation2 + $0x78] sm:$0xff]
  %v1049 = vld [vmem:[#allocation2 + $0x80] sm:$0xff]
  %v1050 = vld [vmem:[#allocation2 + $0x88] sm:$0xff]
  %v1051 = vld [vmem:[#allocation2 + $0x90] sm:$0xff]
  %v1052 = vld [vmem:[#allocation2 + $0x98] sm:$0xff]
  %v1053 = vld [vmem:[#allocation2 + $0xa0] sm:$0xff]
  %v1054 = vld [vmem:[#allocation2 + $0xa8] sm:$0xff]
  %v1055 = vld [vmem:[#allocation2 + $0xb0] sm:$0xff]
  %v1056 = vld [vmem:[#allocation2 + $0xb8] sm:$0xff]
  %v1057 = vld [vmem:[#allocation2 + $0xc0] sm:$0xff]
  %v1058 = vld [vmem:[#allocation2 + $0xc8] sm:$0xff]
  %v1059 = vld [vmem:[#allocation2 + $0xd0] sm:$0xff]
  %v1060 = vld [vmem:[#allocation2 + $0xd8] sm:$0xff]
  %v1061 = vld [vmem:[#allocation2 + $0xe0] sm:$0xff]
  %v1062 = vld [vmem:[#allocation2 + $0xe8] sm:$0xff]
  %v1063 = vld [vmem:[#allocation2 + $0xf0] sm:$0xff]
  %v1064 = vld [vmem:[#allocation2 + $0xf8] sm:$0xff]
  %v1065 = vld [vmem:[#allocation2 + $0x100] sm:$0xff]
  %v1066 = vld [vmem:[#allocation2 + $0x108] sm:$0xff]
  %v1067 = vld [vmem:[#allocation2 + $0x110] sm:$0xff]
  %v1068 = vld [vmem:[#allocation2 + $0x118] sm:$0xff]
  %v1069 = vld [vmem:[#allocation2 + $0x120] sm:$0xff]
  %v1070 = vld [vmem:[#allocation2 + $0x128] sm:$0xff]
  %v1071 = vld [vmem:[#allocation2 + $0x130] sm:$0xff]
  %v1072 = vld [vmem:[#allocation2 + $0x138] sm:$0xff]
  %v1073 = vld [vmem:[#allocation2 + $0x140] sm:$0xff]
  %v1074 = vld [vmem:[#allocation2 + $0x148] sm:$0xff]
  %v1075 = vld [vmem:[#allocation2 + $0x150] sm:$0xff]
  %v1076 = vld [vmem:[#allocation2 + $0x158] sm:$0xff]
  %v1077 = vld [vmem:[#allocation2 + $0x160] sm:$0xff]
  %v1078 = vld [vmem:[#allocation2 + $0x168] sm:$0xff]
  %v1079 = vld [vmem:[#allocation2 + $0x170] sm:$0xff]
  %v1080 = vld [vmem:[#allocation2 + $0x178] sm:$0xff]
  %v1081 = vld [vmem:[#allocation2 + $0x180] sm:$0xff]
  %v1082 = vld [vmem:[#allocation2 + $0x188] sm:$0xff]
  %v1083 = vld [vmem:[#allocation2 + $0x190] sm:$0xff]
  %v1084 = vld [vmem:[#allocation2 + $0x198] sm:$0xff]
  %v1085 = vld [vmem:[#allocation2 + $0x1a0] sm:$0xff]
  %v1086 = vld [vmem:[#allocation2 + $0x1a8] sm:$0xff]
  %v1087 = vld [vmem:[#allocation2 + $0x1b0] sm:$0xff]
  %v1088 = vld [vmem:[#allocation2 + $0x1b8] sm:$0xff]
  %v1089 = vld [vmem:[#allocation2 + $0x1c0] sm:$0xff]
  %v1090 = vld [vmem:[#allocation2 + $0x1c8] sm:$0xff]
  %v1091 = vld [vmem:[#allocation2 + $0x1d0] sm:$0xff]
  %v1092 = vld [vmem:[#allocation2 + $0x1d8] sm:$0xff]
  %v1093 = vld [vmem:[#allocation2 + $0x1e0] sm:$0xff]
  %v1094 = vld [vmem:[#allocation2 + $0x1e8] sm:$0xff]
  %v1095 = vld [vmem:[#allocation2 + $0x1f0] sm:$0xff]
  %v1096 = vld [vmem:[#allocation2 + $0x1f8] sm:$0xff]
  %v1097 = vld [vmem:[#allocation2 + $0x200] sm:$0xff]
  %v1098 = vld [vmem:[#allocation2 + $0x208] sm:$0xff]
  %v1099 = vld [vmem:[#allocation2 + $0x210] sm:$0xff]
  %v1100 = vld [vmem:[#allocation2 + $0x218] sm:$0xff]
  %v1101 = vld [vmem:[#allocation2 + $0x220] sm:$0xff]
  %v1102 = vld [vmem:[#allocation2 + $0x228] sm:$0xff]
  %v1103 = vld [vmem:[#allocation2 + $0x230] sm:$0xff]
  %v1104 = vld [vmem:[#allocation2 + $0x238] sm:$0xff]
  %v1105 = vld [vmem:[#allocation2 + $0x240] sm:$0xff]
  %v1106 = vld [vmem:[#allocation2 + $0x248] sm:$0xff]
  %v1107 = vld [vmem:[#allocation2 + $0x250] sm:$0xff]
  %v1108 = vld [vmem:[#allocation2 + $0x258] sm:$0xff]
  %v1109 = vld [vmem:[#allocation2 + $0x260] sm:$0xff]
  %v1110 = vld [vmem:[#allocation2 + $0x268] sm:$0xff]
  %v1111 = vld [vmem:[#allocation2 + $0x270] sm:$0xff]
  %v1112 = vld [vmem:[#allocation2 + $0x278] sm:$0xff]
  %v1113 = vld [vmem:[#allocation2 + $0x280] sm:$0xff]
  %v1114 = vld [vmem:[#allocation2 + $0x288] sm:$0xff]
  %v1115 = vld [vmem:[#allocation2 + $0x290] sm:$0xff]
  %v1116 = vld [vmem:[#allocation2 + $0x298] sm:$0xff]
  %v1117 = vld [vmem:[#allocation2 + $0x2a0] sm:$0xff]
  %v1118 = vld [vmem:[#allocation2 + $0x2a8] sm:$0xff]
  %v1119 = vld [vmem:[#allocation2 + $0x2b0] sm:$0xff]
  %v1120 = vld [vmem:[#allocation2 + $0x2b8] sm:$0xff]
  %v1121 = vld [vmem:[#allocation2 + $0x2c0] sm:$0xff]
  %v1122 = vld [vmem:[#allocation2 + $0x2c8] sm:$0xff]
  %v1123 = vld [vmem:[#allocation2 + $0x2d0] sm:$0xff]
  %v1124 = vld [vmem:[#allocation2 + $0x2d8] sm:$0xff]
  %v1125 = vld [vmem:[#allocation2 + $0x2e0] sm:$0xff]
  %v1126 = vld [vmem:[#allocation2 + $0x2e8] sm:$0xff]
  %v1127 = vld [vmem:[#allocation2 + $0x2f0] sm:$0xff]
  %v1128 = vld [vmem:[#allocation2 + $0x2f8] sm:$0xff]
  %v1129 = vld [vmem:[#allocation2 + $0x300] sm:$0xff]
  %v1130 = vld [vmem:[#allocation2 + $0x308] sm:$0xff]
  %v1131 = vld [vmem:[#allocation2 + $0x310] sm:$0xff]
  %v1132 = vld [vmem:[#allocation2 + $0x318] sm:$0xff]
  %v1133 = vld [vmem:[#allocation2 + $0x320] sm:$0xff]
  %v1134 = vld [vmem:[#allocation2 + $0x328] sm:$0xff]
  %v1135 = vld [vmem:[#allocation2 + $0x330] sm:$0xff]
  %v1136 = vld [vmem:[#allocation2 + $0x338] sm:$0xff]
  %v1137 = vld [vmem:[#allocation2 + $0x340] sm:$0xff]
  %v1138 = vld [vmem:[#allocation2 + $0x348] sm:$0xff]
  %v1139 = vld [vmem:[#allocation2 + $0x350] sm:$0xff]
  %v1140 = vld [vmem:[#allocation2 + $0x358] sm:$0xff]
  %v1141 = vld [vmem:[#allocation2 + $0x360] sm:$0xff]
  %v1142 = vld [vmem:[#allocation2 + $0x368] sm:$0xff]
  %v1143 = vld [vmem:[#allocation2 + $0x370] sm:$0xff]
  %v1144 = vld [vmem:[#allocation2 + $0x378] sm:$0xff]
  %v1145 = vld [vmem:[#allocation2 + $0x380] sm:$0xff]
  %v1146 = vld [vmem:[#allocation2 + $0x388] sm:$0xff]
  %v1147 = vld [vmem:[#allocation2 + $0x390] sm:$0xff]
  %v1148 = vld [vmem:[#allocation2 + $0x398] sm:$0xff]
  %v1149 = vld [vmem:[#allocation2 + $0x3a0] sm:$0xff]
  %v1150 = vld [vmem:[#allocation2 + $0x3a8] sm:$0xff]
  %v1151 = vld [vmem:[#allocation2 + $0x3b0] sm:$0xff]
  %v1152 = vld [vmem:[#allocation2 + $0x3b8] sm:$0xff]
  %v1153 = vld [vmem:[#allocation2 + $0x3c0] sm:$0xff]
  %v1154 = vld [vmem:[#allocation2 + $0x3c8] sm:$0xff]
  %v1155 = vld [vmem:[#allocation2 + $0x3d0] sm:$0xff]
  %v1156 = vld [vmem:[#allocation2 + $0x3d8] sm:$0xff]
  %v1157 = vld [vmem:[#allocation2 + $0x3e0] sm:$0xff]
  %v1158 = vld [vmem:[#allocation2 + $0x3e8] sm:$0xff]
  %v1159 = vld [vmem:[#allocation2 + $0x3f0] sm:$0xff]
  %v1160 = vld [vmem:[#allocation2 + $0x3f8] sm:$0xff]
  %v1161 = vld [vmem:[#allocation2 + $0x400] sm:$0xff]
  %v1162 = vld [vmem:[#allocation2 + $0x408] sm:$0xff]
  %v1163 = vld [vmem:[#allocation2 + $0x410] sm:$0xff]
  %v1164 = vld [vmem:[#allocation2 + $0x418] sm:$0xff]
  %v1165 = vld [vmem:[#allocation2 + $0x420] sm:$0xff]
  %v1166 = vld [vmem:[#allocation2 + $0x428] sm:$0xff]
  %v1167 = vld [vmem:[#allocation2 + $0x430] sm:$0xff]
  %v1168 = vld [vmem:[#allocation2 + $0x438] sm:$0xff]
  %v1169 = vld [vmem:[#allocation2 + $0x440] sm:$0xff]
  %v1170 = vld [vmem:[#allocation2 + $0x448] sm:$0xff]
  %v1171 = vld [vmem:[#allocation2 + $0x450] sm:$0xff]
  %v1172 = vld [vmem:[#allocation2 + $0x458] sm:$0xff]
  %v1173 = vld [vmem:[#allocation2 + $0x460] sm:$0xff]
  %v1174 = vld [vmem:[#allocation2 + $0x468] sm:$0xff]
  %v1175 = vld [vmem:[#allocation2 + $0x470] sm:$0xff]
  %v1176 = vld [vmem:[#allocation2 + $0x478] sm:$0xff]
  %v1177 = vld [vmem:[#allocation2 + $0x480] sm:$0xff]
  %v1178 = vld [vmem:[#allocation2 + $0x488] sm:$0xff]
  %v1179 = vld [vmem:[#allocation2 + $0x490] sm:$0xff]
  %v1180 = vld [vmem:[#allocation2 + $0x498] sm:$0xff]
  %v1181 = vld [vmem:[#allocation2 + $0x4a0] sm:$0xff]
  %v1182 = vld [vmem:[#allocation2 + $0x4a8] sm:$0xff]
  %v1183 = vld [vmem:[#allocation2 + $0x4b0] sm:$0xff]
  %v1184 = vld [vmem:[#allocation2 + $0x4b8] sm:$0xff]
  %v1185 = vld [vmem:[#allocation2 + $0x4c0] sm:$0xff]
  %v1186 = vld [vmem:[#allocation2 + $0x4c8] sm:$0xff]
  %v1187 = vld [vmem:[#allocation2 + $0x4d0] sm:$0xff]
  %v1188 = vld [vmem:[#allocation2 + $0x4d8] sm:$0xff]
  %v1189 = vld [vmem:[#allocation2 + $0x4e0] sm:$0xff]
  %v1190 = vld [vmem:[#allocation2 + $0x4e8] sm:$0xff]
  %v1191 = vld [vmem:[#allocation2 + $0x4f0] sm:$0xff]
  %v1192 = vld [vmem:[#allocation2 + $0x4f8] sm:$0xff]
  %v1193 = vld [vmem:[#allocation2 + $0x500] sm:$0xff]
  %v1194 = vld [vmem:[#allocation2 + $0x508] sm:$0xff]
  %v1195 = vld [vmem:[#allocation2 + $0x510] sm:$0xff]
  %v1196 = vld [vmem:[#allocation2 + $0x518] sm:$0xff]
  %v1197 = vld [vmem:[#allocation2 + $0x520] sm:$0xff]
  %v1198 = vld [vmem:[#allocation2 + $0x528] sm:$0xff]
  %v1199 = vld [vmem:[#allocation2 + $0x530] sm:$0xff]
  %v1200 = vld [vmem:[#allocation2 + $0x538] sm:$0xff]
  %v1201 = vld [vmem:[#allocation2 + $0x540] sm:$0xff]
  %v1202 = vld [vmem:[#allocation2 + $0x548] sm:$0xff]
  %v1203 = vld [vmem:[#allocation2 + $0x550] sm:$0xff]
  %v1204 = vld [vmem:[#allocation2 + $0x558] sm:$0xff]
  %v1205 = vld [vmem:[#allocation2 + $0x560] sm:$0xff]
  %v1206 = vld [vmem:[#allocation2 + $0x568] sm:$0xff]
  %v1207 = vld [vmem:[#allocation2 + $0x570] sm:$0xff]
  %v1208 = vld [vmem:[#allocation2 + $0x578] sm:$0xff]
  %v1209 = vld [vmem:[#allocation2 + $0x580] sm:$0xff]
  %v1210 = vld [vmem:[#allocation2 + $0x588] sm:$0xff]
  %v1211 = vld [vmem:[#allocation2 + $0x590] sm:$0xff]
  %v1212 = vld [vmem:[#allocation2 + $0x598] sm:$0xff]
  %v1213 = vld [vmem:[%s3] sm:$0xff]
  %v1214 = vld [vmem:[%s3 + $0x8] sm:$0xff]
  %1216 = vset.pattern.permute.xlu0 0
  %1217 = vperm.xlu0 %1216, %v1213
  %v1218 = vpop.permute.xlu0 %1217
  %1221 = vset.pattern.permute.xlu0 0
  %1222 = vperm.xlu0 %1221, %v1214
  %v1223 = vpop.permute.xlu0 %1222
  %vm1225 = vcmask 130048
  %v1227 = vsel %vm1225, %v1030, 0
  %v1230 = vsel %vm1225, %v1032, 0
  %1232 = vmatpush.msra.mxu0 %v1183
  %1233 = vmatpush.msra.mxu0 %v1173
  %1234 = vmatpush.msra.mxu0 %v1163
  %1235 = vmatpush.msra.mxu0 %v1153
  %1236 = vmatpush.msra.mxu0 %v1143
  %1237 = vmatpush.msra.mxu0 %v1133
  %1238 = vmatpush.msra.mxu0 %v1123
  %1239 = vmatpush.msra.mxu0 %v1113
  %1240 = vmatpush.msra.mxu0 %v1103
  %1241 = vmatpush.msra.mxu0 %v1093
  %1242 = vmatpush.msra.mxu0 %v1083
  %1243 = vmatpush.msra.mxu0 %v1073
  %1244 = vmatpush.msra.mxu0 %v1063
  %1245 = vmatpush.msra.mxu0 %v1053
  %1246 = vmatpush.msra.mxu0 %v1043
  %1247 = vmatpush.msra.mxu0 %v1033
  %1248 = vmatmul.f32.gmra.mxu0 %v1029
  %v1249 = vpop.f32.mrf.mxu0
  %v1250 = vadd.f32 %v1218, %v1249
  %1251 = vmatmul.f32.gmra.mxu0 %v1031
  %v1252 = vpop.f32.mrf.mxu0
  %v1253 = vadd.f32 %v1223, %v1252
  %1254 = vdwg.mxu0
  %1255 = vmatpush.msra.mxu0 0.0
  %1256 = vmatpush.msra.mxu0 0.0
  %1257 = vmatpush.msra.mxu0 0.0
  %1258 = vmatpush.msra.mxu0 0.0
  %1259 = vmatpush.msra.mxu0 0.0
  %1260 = vmatpush.msra.mxu0 0.0
  %1261 = vmatpush.msra.mxu0 0.0
  %1262 = vmatpush.msra.mxu0 0.0
  %1263 = vmatpush.msra.mxu0 0.0
  %1264 = vmatpush.msra.mxu0 0.0
  %1265 = vmatpush.msra.mxu0 0.0
  %1266 = vmatpush.msra.mxu0 0.0
  %1267 = vmatpush.msra.mxu0 0.0
  %1268 = vmatpush.msra.mxu0 0.0
  %1269 = vmatpush.msra.mxu0 %v1203
  %1270 = vmatpush.msra.mxu0 %v1193
  %1271 = vmatmul.f32.gmra.mxu0 %v1227
  %v1272 = vpop.f32.mrf.mxu0
  %v1273 = vadd.f32 %v1250, %v1272
  %1274 = vmatmul.f32.gmra.mxu0 %v1230
  %v1275 = vpop.f32.mrf.mxu0
  %v1276 = vadd.f32 %v1253, %v1275
  %1277 = vdwg.mxu0
  %1278 = vmatpush.msra.mxu0 %v1184
  %1279 = vmatpush.msra.mxu0 %v1174
  %1280 = vmatpush.msra.mxu0 %v1164
  %1281 = vmatpush.msra.mxu0 %v1154
  %1282 = vmatpush.msra.mxu0 %v1144
  %1283 = vmatpush.msra.mxu0 %v1134
  %1284 = vmatpush.msra.mxu0 %v1124
  %1285 = vmatpush.msra.mxu0 %v1114
  %1286 = vmatpush.msra.mxu0 %v1104
  %1287 = vmatpush.msra.mxu0 %v1094
  %1288 = vmatpush.msra.mxu0 %v1084
  %1289 = vmatpush.msra.mxu0 %v1074
  %1290 = vmatpush.msra.mxu0 %v1064
  %1291 = vmatpush.msra.mxu0 %v1054
  %1292 = vmatpush.msra.mxu0 %v1044
  %1293 = vmatpush.msra.mxu0 %v1034
  %1294 = vmatmul.f32.gmra.mxu0 %v1029
  %v1295 = vpop.f32.mrf.mxu0
  %v1296 = vadd.f32 %v1218, %v1295
  %1297 = vmatmul.f32.gmra.mxu0 %v1031
  %v1298 = vpop.f32.mrf.mxu0
  %v1299 = vadd.f32 %v1223, %v1298
  %1300 = vdwg.mxu0
  %1301 = vmatpush.msra.mxu0 0.0
  %1302 = vmatpush.msra.mxu0 0.0
  %1303 = vmatpush.msra.mxu0 0.0
  %1304 = vmatpush.msra.mxu0 0.0
  %1305 = vmatpush.msra.mxu0 0.0
  %1306 = vmatpush.msra.mxu0 0.0
  %1307 = vmatpush.msra.mxu0 0.0
  %1308 = vmatpush.msra.mxu0 0.0
  %1309 = vmatpush.msra.mxu0 0.0
  %1310 = vmatpush.msra.mxu0 0.0
  %1311 = vmatpush.msra.mxu0 0.0
  %1312 = vmatpush.msra.mxu0 0.0
  %1313 = vmatpush.msra.mxu0 0.0
  %1314 = vmatpush.msra.mxu0 0.0
  %1315 = vmatpush.msra.mxu0 %v1204
  %1316 = vmatpush.msra.mxu0 %v1194
  %1317 = vmatmul.f32.gmra.mxu0 %v1227
  %v1318 = vpop.f32.mrf.mxu0
  %v1319 = vadd.f32 %v1296, %v1318
  %1320 = vmatmul.f32.gmra.mxu0 %v1230
  %v1321 = vpop.f32.mrf.mxu0
  %v1322 = vadd.f32 %v1299, %v1321
  %1323 = vdwg.mxu0
  %1324 = vmatpush.msra.mxu0 %v1185
  %1325 = vmatpush.msra.mxu0 %v1175
  %1326 = vmatpush.msra.mxu0 %v1165
  %1327 = vmatpush.msra.mxu0 %v1155
  %1328 = vmatpush.msra.mxu0 %v1145
  %1329 = vmatpush.msra.mxu0 %v1135
  %1330 = vmatpush.msra.mxu0 %v1125
  %1331 = vmatpush.msra.mxu0 %v1115
  %1332 = vmatpush.msra.mxu0 %v1105
  %1333 = vmatpush.msra.mxu0 %v1095
  %1334 = vmatpush.msra.mxu0 %v1085
  %1335 = vmatpush.msra.mxu0 %v1075
  %1336 = vmatpush.msra.mxu0 %v1065
  %1337 = vmatpush.msra.mxu0 %v1055
  %1338 = vmatpush.msra.mxu0 %v1045
  %1339 = vmatpush.msra.mxu0 %v1035
  %1340 = vmatmul.f32.gmra.mxu0 %v1029
  %v1341 = vpop.f32.mrf.mxu0
  %v1342 = vadd.f32 %v1218, %v1341
  %1343 = vmatmul.f32.gmra.mxu0 %v1031
  %v1344 = vpop.f32.mrf.mxu0
  %v1345 = vadd.f32 %v1223, %v1344
  %1346 = vdwg.mxu0
  %1347 = vmatpush.msra.mxu0 0.0
  %1348 = vmatpush.msra.mxu0 0.0
  %1349 = vmatpush.msra.mxu0 0.0
  %1350 = vmatpush.msra.mxu0 0.0
  %1351 = vmatpush.msra.mxu0 0.0
  %1352 = vmatpush.msra.mxu0 0.0
  %1353 = vmatpush.msra.mxu0 0.0
  %1354 = vmatpush.msra.mxu0 0.0
  %1355 = vmatpush.msra.mxu0 0.0
  %1356 = vmatpush.msra.mxu0 0.0
  %1357 = vmatpush.msra.mxu0 0.0
  %1358 = vmatpush.msra.mxu0 0.0
  %1359 = vmatpush.msra.mxu0 0.0
  %1360 = vmatpush.msra.mxu0 0.0
  %1361 = vmatpush.msra.mxu0 %v1205
  %1362 = vmatpush.msra.mxu0 %v1195
  %1363 = vmatmul.f32.gmra.mxu0 %v1227
  %v1364 = vpop.f32.mrf.mxu0
  %v1365 = vadd.f32 %v1342, %v1364
  %1366 = vmatmul.f32.gmra.mxu0 %v1230
  %v1367 = vpop.f32.mrf.mxu0
  %v1368 = vadd.f32 %v1345, %v1367
  %1369 = vdwg.mxu0
  %1370 = vmatpush.msra.mxu0 %v1186
  %1371 = vmatpush.msra.mxu0 %v1176
  %1372 = vmatpush.msra.mxu0 %v1166
  %1373 = vmatpush.msra.mxu0 %v1156
  %1374 = vmatpush.msra.mxu0 %v1146
  %1375 = vmatpush.msra.mxu0 %v1136
  %1376 = vmatpush.msra.mxu0 %v1126
  %1377 = vmatpush.msra.mxu0 %v1116
  %1378 = vmatpush.msra.mxu0 %v1106
  %1379 = vmatpush.msra.mxu0 %v1096
  %1380 = vmatpush.msra.mxu0 %v1086
  %1381 = vmatpush.msra.mxu0 %v1076
  %1382 = vmatpush.msra.mxu0 %v1066
  %1383 = vmatpush.msra.mxu0 %v1056
  %1384 = vmatpush.msra.mxu0 %v1046
  %1385 = vmatpush.msra.mxu0 %v1036
  %1386 = vmatmul.f32.gmra.mxu0 %v1029
  %v1387 = vpop.f32.mrf.mxu0
  %v1388 = vadd.f32 %v1218, %v1387
  %1389 = vmatmul.f32.gmra.mxu0 %v1031
  %v1390 = vpop.f32.mrf.mxu0
  %v1391 = vadd.f32 %v1223, %v1390
  %1392 = vdwg.mxu0
  %1393 = vmatpush.msra.mxu0 0.0
  %1394 = vmatpush.msra.mxu0 0.0
  %1395 = vmatpush.msra.mxu0 0.0
  %1396 = vmatpush.msra.mxu0 0.0
  %1397 = vmatpush.msra.mxu0 0.0
  %1398 = vmatpush.msra.mxu0 0.0
  %1399 = vmatpush.msra.mxu0 0.0
  %1400 = vmatpush.msra.mxu0 0.0
  %1401 = vmatpush.msra.mxu0 0.0
  %1402 = vmatpush.msra.mxu0 0.0
  %1403 = vmatpush.msra.mxu0 0.0
  %1404 = vmatpush.msra.mxu0 0.0
  %1405 = vmatpush.msra.mxu0 0.0
  %1406 = vmatpush.msra.mxu0 0.0
  %1407 = vmatpush.msra.mxu0 %v1206
  %1408 = vmatpush.msra.mxu0 %v1196
  %1409 = vmatmul.f32.gmra.mxu0 %v1227
  %v1410 = vpop.f32.mrf.mxu0
  %v1411 = vadd.f32 %v1388, %v1410
  %1412 = vmatmul.f32.gmra.mxu0 %v1230
  %v1413 = vpop.f32.mrf.mxu0
  %v1414 = vadd.f32 %v1391, %v1413
  %1415 = vdwg.mxu0
  %1416 = vmatpush.msra.mxu0 %v1187
  %1417 = vmatpush.msra.mxu0 %v1177
  %1418 = vmatpush.msra.mxu0 %v1167
  %1419 = vmatpush.msra.mxu0 %v1157
  %1420 = vmatpush.msra.mxu0 %v1147
  %1421 = vmatpush.msra.mxu0 %v1137
  %1422 = vmatpush.msra.mxu0 %v1127
  %1423 = vmatpush.msra.mxu0 %v1117
  %1424 = vmatpush.msra.mxu0 %v1107
  %1425 = vmatpush.msra.mxu0 %v1097
  %1426 = vmatpush.msra.mxu0 %v1087
  %1427 = vmatpush.msra.mxu0 %v1077
  %1428 = vmatpush.msra.mxu0 %v1067
  %1429 = vmatpush.msra.mxu0 %v1057
  %1430 = vmatpush.msra.mxu0 %v1047
  %1431 = vmatpush.msra.mxu0 %v1037
  %1432 = vmatmul.f32.gmra.mxu0 %v1029
  %v1433 = vpop.f32.mrf.mxu0
  %v1434 = vadd.f32 %v1218, %v1433
  %1435 = vmatmul.f32.gmra.mxu0 %v1031
  %v1436 = vpop.f32.mrf.mxu0
  %v1437 = vadd.f32 %v1223, %v1436
  %1438 = vdwg.mxu0
  %1439 = vmatpush.msra.mxu0 0.0
  %1440 = vmatpush.msra.mxu0 0.0
  %1441 = vmatpush.msra.mxu0 0.0
  %1442 = vmatpush.msra.mxu0 0.0
  %1443 = vmatpush.msra.mxu0 0.0
  %1444 = vmatpush.msra.mxu0 0.0
  %1445 = vmatpush.msra.mxu0 0.0
  %1446 = vmatpush.msra.mxu0 0.0
  %1447 = vmatpush.msra.mxu0 0.0
  %1448 = vmatpush.msra.mxu0 0.0
  %1449 = vmatpush.msra.mxu0 0.0
  %1450 = vmatpush.msra.mxu0 0.0
  %1451 = vmatpush.msra.mxu0 0.0
  %1452 = vmatpush.msra.mxu0 0.0
  %1453 = vmatpush.msra.mxu0 %v1207
  %1454 = vmatpush.msra.mxu0 %v1197
  %1455 = vmatmul.f32.gmra.mxu0 %v1227
  %v1456 = vpop.f32.mrf.mxu0
  %v1457 = vadd.f32 %v1434, %v1456
  %1458 = vmatmul.f32.gmra.mxu0 %v1230
  %v1459 = vpop.f32.mrf.mxu0
  %v1460 = vadd.f32 %v1437, %v1459
  %1461 = vdwg.mxu0
  %1462 = vmatpush.msra.mxu0 %v1188
  %1463 = vmatpush.msra.mxu0 %v1178
  %1464 = vmatpush.msra.mxu0 %v1168
  %1465 = vmatpush.msra.mxu0 %v1158
  %1466 = vmatpush.msra.mxu0 %v1148
  %1467 = vmatpush.msra.mxu0 %v1138
  %1468 = vmatpush.msra.mxu0 %v1128
  %1469 = vmatpush.msra.mxu0 %v1118
  %1470 = vmatpush.msra.mxu0 %v1108
  %1471 = vmatpush.msra.mxu0 %v1098
  %1472 = vmatpush.msra.mxu0 %v1088
  %1473 = vmatpush.msra.mxu0 %v1078
  %1474 = vmatpush.msra.mxu0 %v1068
  %1475 = vmatpush.msra.mxu0 %v1058
  %1476 = vmatpush.msra.mxu0 %v1048
  %1477 = vmatpush.msra.mxu0 %v1038
  %1478 = vmatmul.f32.gmra.mxu0 %v1029
  %v1479 = vpop.f32.mrf.mxu0
  %v1480 = vadd.f32 %v1218, %v1479
  %1481 = vmatmul.f32.gmra.mxu0 %v1031
  %v1482 = vpop.f32.mrf.mxu0
  %v1483 = vadd.f32 %v1223, %v1482
  %1484 = vdwg.mxu0
  %1485 = vmatpush.msra.mxu0 0.0
  %1486 = vmatpush.msra.mxu0 0.0
  %1487 = vmatpush.msra.mxu0 0.0
  %1488 = vmatpush.msra.mxu0 0.0
  %1489 = vmatpush.msra.mxu0 0.0
  %1490 = vmatpush.msra.mxu0 0.0
  %1491 = vmatpush.msra.mxu0 0.0
  %1492 = vmatpush.msra.mxu0 0.0
  %1493 = vmatpush.msra.mxu0 0.0
  %1494 = vmatpush.msra.mxu0 0.0
  %1495 = vmatpush.msra.mxu0 0.0
  %1496 = vmatpush.msra.mxu0 0.0
  %1497 = vmatpush.msra.mxu0 0.0
  %1498 = vmatpush.msra.mxu0 0.0
  %1499 = vmatpush.msra.mxu0 %v1208
  %1500 = vmatpush.msra.mxu0 %v1198
  %1501 = vmatmul.f32.gmra.mxu0 %v1227
  %v1502 = vpop.f32.mrf.mxu0
  %v1503 = vadd.f32 %v1480, %v1502
  %1504 = vmatmul.f32.gmra.mxu0 %v1230
  %v1505 = vpop.f32.mrf.mxu0
  %v1506 = vadd.f32 %v1483, %v1505
  %1507 = vdwg.mxu0
  %1508 = vmatpush.msra.mxu0 %v1189
  %1509 = vmatpush.msra.mxu0 %v1179
  %1510 = vmatpush.msra.mxu0 %v1169
  %1511 = vmatpush.msra.mxu0 %v1159
  %1512 = vmatpush.msra.mxu0 %v1149
  %1513 = vmatpush.msra.mxu0 %v1139
  %1514 = vmatpush.msra.mxu0 %v1129
  %1515 = vmatpush.msra.mxu0 %v1119
  %1516 = vmatpush.msra.mxu0 %v1109
  %1517 = vmatpush.msra.mxu0 %v1099
  %1518 = vmatpush.msra.mxu0 %v1089
  %1519 = vmatpush.msra.mxu0 %v1079
  %1520 = vmatpush.msra.mxu0 %v1069
  %1521 = vmatpush.msra.mxu0 %v1059
  %1522 = vmatpush.msra.mxu0 %v1049
  %1523 = vmatpush.msra.mxu0 %v1039
  %1524 = vmatmul.f32.gmra.mxu0 %v1029
  %v1525 = vpop.f32.mrf.mxu0
  %v1526 = vadd.f32 %v1218, %v1525
  %1527 = vmatmul.f32.gmra.mxu0 %v1031
  %v1528 = vpop.f32.mrf.mxu0
  %v1529 = vadd.f32 %v1223, %v1528
  %1530 = vdwg.mxu0
  %1531 = vmatpush.msra.mxu0 0.0
  %1532 = vmatpush.msra.mxu0 0.0
  %1533 = vmatpush.msra.mxu0 0.0
  %1534 = vmatpush.msra.mxu0 0.0
  %1535 = vmatpush.msra.mxu0 0.0
  %1536 = vmatpush.msra.mxu0 0.0
  %1537 = vmatpush.msra.mxu0 0.0
  %1538 = vmatpush.msra.mxu0 0.0
  %1539 = vmatpush.msra.mxu0 0.0
  %1540 = vmatpush.msra.mxu0 0.0
  %1541 = vmatpush.msra.mxu0 0.0
  %1542 = vmatpush.msra.mxu0 0.0
  %1543 = vmatpush.msra.mxu0 0.0
  %1544 = vmatpush.msra.mxu0 0.0
  %1545 = vmatpush.msra.mxu0 %v1209
  %1546 = vmatpush.msra.mxu0 %v1199
  %1547 = vmatmul.f32.gmra.mxu0 %v1227
  %v1548 = vpop.f32.mrf.mxu0
  %v1549 = vadd.f32 %v1526, %v1548
  %1550 = vmatmul.f32.gmra.mxu0 %v1230
  %v1551 = vpop.f32.mrf.mxu0
  %v1552 = vadd.f32 %v1529, %v1551
  %1553 = vdwg.mxu0
  %1554 = vmatpush.msra.mxu0 %v1190
  %1555 = vmatpush.msra.mxu0 %v1180
  %1556 = vmatpush.msra.mxu0 %v1170
  %1557 = vmatpush.msra.mxu0 %v1160
  %1558 = vmatpush.msra.mxu0 %v1150
  %1559 = vmatpush.msra.mxu0 %v1140
  %1560 = vmatpush.msra.mxu0 %v1130
  %1561 = vmatpush.msra.mxu0 %v1120
  %1562 = vmatpush.msra.mxu0 %v1110
  %1563 = vmatpush.msra.mxu0 %v1100
  %1564 = vmatpush.msra.mxu0 %v1090
  %1565 = vmatpush.msra.mxu0 %v1080
  %1566 = vmatpush.msra.mxu0 %v1070
  %1567 = vmatpush.msra.mxu0 %v1060
  %1568 = vmatpush.msra.mxu0 %v1050
  %1569 = vmatpush.msra.mxu0 %v1040
  %1570 = vmatmul.f32.gmra.mxu0 %v1029
  %v1571 = vpop.f32.mrf.mxu0
  %v1572 = vadd.f32 %v1218, %v1571
  %1573 = vmatmul.f32.gmra.mxu0 %v1031
  %v1574 = vpop.f32.mrf.mxu0
  %v1575 = vadd.f32 %v1223, %v1574
  %1576 = vdwg.mxu0
  %1577 = vmatpush.msra.mxu0 0.0
  %1578 = vmatpush.msra.mxu0 0.0
  %1579 = vmatpush.msra.mxu0 0.0
  %1580 = vmatpush.msra.mxu0 0.0
  %1581 = vmatpush.msra.mxu0 0.0
  %1582 = vmatpush.msra.mxu0 0.0
  %1583 = vmatpush.msra.mxu0 0.0
  %1584 = vmatpush.msra.mxu0 0.0
  %1585 = vmatpush.msra.mxu0 0.0
  %1586 = vmatpush.msra.mxu0 0.0
  %1587 = vmatpush.msra.mxu0 0.0
  %1588 = vmatpush.msra.mxu0 0.0
  %1589 = vmatpush.msra.mxu0 0.0
  %1590 = vmatpush.msra.mxu0 0.0
  %1591 = vmatpush.msra.mxu0 %v1210
  %1592 = vmatpush.msra.mxu0 %v1200
  %1593 = vmatmul.f32.gmra.mxu0 %v1227
  %v1594 = vpop.f32.mrf.mxu0
  %v1595 = vadd.f32 %v1572, %v1594
  %1596 = vmatmul.f32.gmra.mxu0 %v1230
  %v1597 = vpop.f32.mrf.mxu0
  %v1598 = vadd.f32 %v1575, %v1597
  %1599 = vdwg.mxu0
  %1600 = vmatpush.msra.mxu0 %v1191
  %1601 = vmatpush.msra.mxu0 %v1181
  %1602 = vmatpush.msra.mxu0 %v1171
  %1603 = vmatpush.msra.mxu0 %v1161
  %1604 = vmatpush.msra.mxu0 %v1151
  %1605 = vmatpush.msra.mxu0 %v1141
  %1606 = vmatpush.msra.mxu0 %v1131
  %1607 = vmatpush.msra.mxu0 %v1121
  %1608 = vmatpush.msra.mxu0 %v1111
  %1609 = vmatpush.msra.mxu0 %v1101
  %1610 = vmatpush.msra.mxu0 %v1091
  %1611 = vmatpush.msra.mxu0 %v1081
  %1612 = vmatpush.msra.mxu0 %v1071
  %1613 = vmatpush.msra.mxu0 %v1061
  %1614 = vmatpush.msra.mxu0 %v1051
  %1615 = vmatpush.msra.mxu0 %v1041
  %1616 = vmatmul.f32.gmra.mxu0 %v1029
  %v1617 = vpop.f32.mrf.mxu0
  %v1618 = vadd.f32 %v1218, %v1617
  %1619 = vmatmul.f32.gmra.mxu0 %v1031
  %v1620 = vpop.f32.mrf.mxu0
  %v1621 = vadd.f32 %v1223, %v1620
  %1622 = vdwg.mxu0
  %1623 = vmatpush.msra.mxu0 0.0
  %1624 = vmatpush.msra.mxu0 0.0
  %1625 = vmatpush.msra.mxu0 0.0
  %1626 = vmatpush.msra.mxu0 0.0
  %1627 = vmatpush.msra.mxu0 0.0
  %1628 = vmatpush.msra.mxu0 0.0
  %1629 = vmatpush.msra.mxu0 0.0
  %1630 = vmatpush.msra.mxu0 0.0
  %1631 = vmatpush.msra.mxu0 0.0
  %1632 = vmatpush.msra.mxu0 0.0
  %1633 = vmatpush.msra.mxu0 0.0
  %1634 = vmatpush.msra.mxu0 0.0
  %1635 = vmatpush.msra.mxu0 0.0
  %1636 = vmatpush.msra.mxu0 0.0
  %1637 = vmatpush.msra.mxu0 %v1211
  %1638 = vmatpush.msra.mxu0 %v1201
  %1639 = vmatmul.f32.gmra.mxu0 %v1227
  %v1640 = vpop.f32.mrf.mxu0
  %v1641 = vadd.f32 %v1618, %v1640
  %1642 = vmatmul.f32.gmra.mxu0 %v1230
  %v1643 = vpop.f32.mrf.mxu0
  %v1644 = vadd.f32 %v1621, %v1643
  %1645 = vdwg.mxu0
  %1646 = vmatpush.msra.mxu0 %v1192
  %1647 = vmatpush.msra.mxu0 %v1182
  %1648 = vmatpush.msra.mxu0 %v1172
  %1649 = vmatpush.msra.mxu0 %v1162
  %1650 = vmatpush.msra.mxu0 %v1152
  %1651 = vmatpush.msra.mxu0 %v1142
  %1652 = vmatpush.msra.mxu0 %v1132
  %1653 = vmatpush.msra.mxu0 %v1122
  %1654 = vmatpush.msra.mxu0 %v1112
  %1655 = vmatpush.msra.mxu0 %v1102
  %1656 = vmatpush.msra.mxu0 %v1092
  %1657 = vmatpush.msra.mxu0 %v1082
  %1658 = vmatpush.msra.mxu0 %v1072
  %1659 = vmatpush.msra.mxu0 %v1062
  %1660 = vmatpush.msra.mxu0 %v1052
  %1661 = vmatpush.msra.mxu0 %v1042
  %1662 = vmatmul.f32.gmra.mxu0 %v1029
  %v1663 = vpop.f32.mrf.mxu0
  %v1664 = vadd.f32 %v1218, %v1663
  %1665 = vmatmul.f32.gmra.mxu0 %v1031
  %v1666 = vpop.f32.mrf.mxu0
  %v1667 = vadd.f32 %v1223, %v1666
  %1668 = vdwg.mxu0
  %1669 = vmatpush.msra.mxu0 0.0
  %1670 = vmatpush.msra.mxu0 0.0
  %1671 = vmatpush.msra.mxu0 0.0
  %1672 = vmatpush.msra.mxu0 0.0
  %1673 = vmatpush.msra.mxu0 0.0
  %1674 = vmatpush.msra.mxu0 0.0
  %1675 = vmatpush.msra.mxu0 0.0
  %1676 = vmatpush.msra.mxu0 0.0
  %1677 = vmatpush.msra.mxu0 0.0
  %1678 = vmatpush.msra.mxu0 0.0
  %1679 = vmatpush.msra.mxu0 0.0
  %1680 = vmatpush.msra.mxu0 0.0
  %1681 = vmatpush.msra.mxu0 0.0
  %1682 = vmatpush.msra.mxu0 0.0
  %1683 = vmatpush.msra.mxu0 %v1212
  %1684 = vmatpush.msra.mxu0 %v1202
  %1685 = vmatmul.f32.gmra.mxu0 %v1227
  %v1686 = vpop.f32.mrf.mxu0
  %v1687 = vadd.f32 %v1664, %v1686
  %1688 = vmatmul.f32.gmra.mxu0 %v1230
  %v1689 = vpop.f32.mrf.mxu0
  %v1690 = vadd.f32 %v1667, %v1689
  %1691 = vdwg.mxu0
  %v1692 = vmax.f32 %v1273, 0.0
  %v1693 = vmax.f32 %v1319, 0.0
  %v1694 = vmax.f32 %v1365, 0.0
  %v1695 = vmax.f32 %v1411, 0.0
  %v1696 = vmax.f32 %v1457, 0.0
  %v1697 = vmax.f32 %v1503, 0.0
  %v1698 = vmax.f32 %v1549, 0.0
  %v1699 = vmax.f32 %v1595, 0.0
  %v1700 = vmax.f32 %v1641, 0.0
  %v1701 = vmax.f32 %v1687, 0.0
  %v1702 = vmax.f32 %v1276, 0.0
  %v1703 = vmax.f32 %v1322, 0.0
  %v1704 = vmax.f32 %v1368, 0.0
  %v1705 = vmax.f32 %v1414, 0.0
  %v1706 = vmax.f32 %v1460, 0.0
  %v1707 = vmax.f32 %v1506, 0.0
  %v1708 = vmax.f32 %v1552, 0.0
  %v1709 = vmax.f32 %v1598, 0.0
  %v1710 = vmax.f32 %v1644, 0.0
  %v1711 = vmax.f32 %v1690, 0.0
  %v1714 = vperm.slane %v143, 0
  %v1715 = vperm.slane %v143, 1
  %v1716 = vperm.slane %v143, 2
  %v1717 = vperm.slane %v143, 3
  %v1718 = vperm.slane %v143, 4
  %v1719 = vperm.slane %v143, 5
  %v1720 = vperm.slane %v143, 6
  %v1721 = vperm.slane %v143, 7
  %v1722 = vperm.slane %v144, 0
  %v1723 = vperm.slane %v144, 1
  %v1734 = vmul.f32 %v1692, %v1714
  %v1735 = vmul.f32 %v1693, %v1715
  %v1736 = vmul.f32 %v1694, %v1716
  %v1737 = vmul.f32 %v1695, %v1717
  %v1738 = vmul.f32 %v1696, %v1718
  %v1739 = vmul.f32 %v1697, %v1719
  %v1740 = vmul.f32 %v1698, %v1720
  %v1741 = vmul.f32 %v1699, %v1721
  %v1742 = vmul.f32 %v1700, %v1722
  %v1743 = vmul.f32 %v1701, %v1723
  %v1744 = vmul.f32 %v1702, %v1714
  %v1745 = vmul.f32 %v1703, %v1715
  %v1746 = vmul.f32 %v1704, %v1716
  %v1747 = vmul.f32 %v1705, %v1717
  %v1748 = vmul.f32 %v1706, %v1718
  %v1749 = vmul.f32 %v1707, %v1719
  %v1750 = vmul.f32 %v1708, %v1720
  %v1751 = vmul.f32 %v1709, %v1721
  %v1752 = vmul.f32 %v1710, %v1722
  %v1753 = vmul.f32 %v1711, %v1723
  %v1754 = vadd.f32 %v1734, %v1735
  %v1755 = vadd.f32 %v1754, %v1736
  %v1756 = vadd.f32 %v1755, %v1737
  %v1757 = vadd.f32 %v1756, %v1738
  %v1758 = vadd.f32 %v1757, %v1739
  %v1759 = vadd.f32 %v1758, %v1740
  %v1760 = vadd.f32 %v1759, %v1741
  %v1761 = vadd.f32 %v1760, %v1742
  %v1762 = vadd.f32 %v1761, %v1743
  %1763 = vadd.xlane.f32.xlu0 %v1762
  %v1764 = vpop.xlane.xlu0 %1763
  %v1765 = vadd.f32 %v1744, %v1745
  %v1766 = vadd.f32 %v1765, %v1746
  %v1767 = vadd.f32 %v1766, %v1747
  %v1768 = vadd.f32 %v1767, %v1748
  %v1769 = vadd.f32 %v1768, %v1749
  %v1770 = vadd.f32 %v1769, %v1750
  %v1771 = vadd.f32 %v1770, %v1751
  %v1772 = vadd.f32 %v1771, %v1752
  %v1773 = vadd.f32 %v1772, %v1753
  %1774 = vadd.xlane.f32.xlu0 %v1773
  %v1775 = vpop.xlane.xlu0 %1774
  %v1776 = vadd.f32 %v1764, 0.0
  %v1777 = vadd.f32 %v1775, 0.0
  %v1778 = vmul.f32 %v1734, %v1734
  %v1779 = vmul.f32 %v1735, %v1735
  %v1780 = vmul.f32 %v1736, %v1736
  %v1781 = vmul.f32 %v1737, %v1737
  %v1782 = vmul.f32 %v1738, %v1738
  %v1783 = vmul.f32 %v1739, %v1739
  %v1784 = vmul.f32 %v1740, %v1740
  %v1785 = vmul.f32 %v1741, %v1741
  %v1786 = vmul.f32 %v1742, %v1742
  %v1787 = vmul.f32 %v1743, %v1743
  %v1788 = vmul.f32 %v1744, %v1744
  %v1789 = vmul.f32 %v1745, %v1745
  %v1790 = vmul.f32 %v1746, %v1746
  %v1791 = vmul.f32 %v1747, %v1747
  %v1792 = vmul.f32 %v1748, %v1748
  %v1793 = vmul.f32 %v1749, %v1749
  %v1794 = vmul.f32 %v1750, %v1750
  %v1795 = vmul.f32 %v1751, %v1751
  %v1796 = vmul.f32 %v1752, %v1752
  %v1797 = vmul.f32 %v1753, %v1753
  %v1798 = vadd.f32 %v1778, %v1779
  %v1799 = vadd.f32 %v1798, %v1780
  %v1800 = vadd.f32 %v1799, %v1781
  %v1801 = vadd.f32 %v1800, %v1782
  %v1802 = vadd.f32 %v1801, %v1783
  %v1803 = vadd.f32 %v1802, %v1784
  %v1804 = vadd.f32 %v1803, %v1785
  %v1805 = vadd.f32 %v1804, %v1786
  %v1806 = vadd.f32 %v1805, %v1787
  %1807 = vadd.xlane.f32.xlu0 %v1806
  %v1808 = vpop.xlane.xlu0 %1807
  %v1809 = vadd.f32 %v1788, %v1789
  %v1810 = vadd.f32 %v1809, %v1790
  %v1811 = vadd.f32 %v1810, %v1791
  %v1812 = vadd.f32 %v1811, %v1792
  %v1813 = vadd.f32 %v1812, %v1793
  %v1814 = vadd.f32 %v1813, %v1794
  %v1815 = vadd.f32 %v1814, %v1795
  %v1816 = vadd.f32 %v1815, %v1796
  %v1817 = vadd.f32 %v1816, %v1797
  %1818 = vadd.xlane.f32.xlu0 %v1817
  %v1819 = vpop.xlane.xlu0 %1818
  %v1820 = vadd.f32 %v1808, 0.0
  %v1821 = vadd.f32 %v1819, 0.0
  %s1822 = scalar_lea.vmem %s41, 160
  %v1823 = vld [vmem:[%s1822] sm:$0xff]
  %v1824 = vld [vmem:[%s1822 + $0x8] sm:$0xff]
  %v1825 = vld [vmem:[%s1822 + $0x10] sm:$0xff]
  %v1826 = vld [vmem:[%s1822 + $0x18] sm:$0xff]
  %v1827 = vld [vmem:[%s1822 + $0x20] sm:$0xff]
  %v1828 = vld [vmem:[%s1822 + $0x28] sm:$0xff]
  %v1829 = vld [vmem:[%s1822 + $0x30] sm:$0xff]
  %v1830 = vld [vmem:[%s1822 + $0x38] sm:$0xff]
  %v1831 = vld [vmem:[%s1822 + $0x40] sm:$0xff]
  %v1832 = vld [vmem:[%s1822 + $0x48] sm:$0xff]
  %v1833 = vld [vmem:[%s1822 + $0x50] sm:$0xf]
  %v1834 = vld [vmem:[%s1822 + $0x58] sm:$0xf]
  %v1835 = vld [vmem:[%s1822 + $0x60] sm:$0xf]
  %v1836 = vld [vmem:[%s1822 + $0x68] sm:$0xf]
  %v1837 = vld [vmem:[%s1822 + $0x70] sm:$0xf]
  %v1838 = vld [vmem:[%s1822 + $0x78] sm:$0xf]
  %v1839 = vld [vmem:[%s1822 + $0x80] sm:$0xf]
  %v1840 = vld [vmem:[%s1822 + $0x88] sm:$0xf]
  %v1841 = vld [vmem:[%s1822 + $0x90] sm:$0xf]
  %v1842 = vld [vmem:[%s1822 + $0x98] sm:$0xf]
  %1843 = vst [vmem:[#allocation2] sm:$0xff] %v1823
  %1844 = vst [vmem:[#allocation2 + $0x8] sm:$0xff] %v1824
  %1845 = vst [vmem:[#allocation2 + $0x10] sm:$0xff] %v1825
  %1846 = vst [vmem:[#allocation2 + $0x18] sm:$0xff] %v1826
  %1847 = vst [vmem:[#allocation2 + $0x20] sm:$0xff] %v1827
  %1848 = vst [vmem:[#allocation2 + $0x28] sm:$0xff] %v1828
  %1849 = vst [vmem:[#allocation2 + $0x30] sm:$0xff] %v1829
  %1850 = vst [vmem:[#allocation2 + $0x38] sm:$0xff] %v1830
  %1851 = vst [vmem:[#allocation2 + $0x40] sm:$0xff] %v1831
  %1852 = vst [vmem:[#allocation2 + $0x48] sm:$0xff] %v1832
  %1853 = vst [vmem:[#allocation2 + $0x50] sm:$0xf] %v1833
  %1854 = vst [vmem:[#allocation2 + $0x58] sm:$0xf] %v1834
  %1855 = vst [vmem:[#allocation2 + $0x60] sm:$0xf] %v1835
  %1856 = vst [vmem:[#allocation2 + $0x68] sm:$0xf] %v1836
  %1857 = vst [vmem:[#allocation2 + $0x70] sm:$0xf] %v1837
  %1858 = vst [vmem:[#allocation2 + $0x78] sm:$0xf] %v1838
  %1859 = vst [vmem:[#allocation2 + $0x80] sm:$0xf] %v1839
  %1860 = vst [vmem:[#allocation2 + $0x88] sm:$0xf] %v1840
  %1861 = vst [vmem:[#allocation2 + $0x90] sm:$0xf] %v1841
  %1862 = vst [vmem:[#allocation2 + $0x98] sm:$0xf] %v1842
  %1883 = vrot.lane.b32.xlu0 %v1823, 127
  %v1884 = vpop.permute.xlu0 %1883
  %1885 = vrot.lane.b32.xlu0 %v1824, 127
  %v1886 = vpop.permute.xlu0 %1885
  %1887 = vrot.lane.b32.xlu0 %v1825, 127
  %v1888 = vpop.permute.xlu0 %1887
  %1889 = vrot.lane.b32.xlu0 %v1826, 127
  %v1890 = vpop.permute.xlu0 %1889
  %1891 = vrot.lane.b32.xlu0 %v1827, 127
  %v1892 = vpop.permute.xlu0 %1891
  %1893 = vrot.lane.b32.xlu0 %v1828, 127
  %v1894 = vpop.permute.xlu0 %1893
  %1895 = vrot.lane.b32.xlu0 %v1829, 127
  %v1896 = vpop.permute.xlu0 %1895
  %1897 = vrot.lane.b32.xlu0 %v1830, 127
  %v1898 = vpop.permute.xlu0 %1897
  %1899 = vrot.lane.b32.xlu0 %v1831, 127
  %v1900 = vpop.permute.xlu0 %1899
  %1901 = vrot.lane.b32.xlu0 %v1832, 127
  %v1902 = vpop.permute.xlu0 %1901
  %1903 = vrot.lane.b32.xlu0 %v1833, 127
  %v1904 = vpop.permute.xlu0 %1903
  %1905 = vrot.lane.b32.xlu0 %v1834, 127
  %v1906 = vpop.permute.xlu0 %1905
  %1907 = vrot.lane.b32.xlu0 %v1835, 127
  %v1908 = vpop.permute.xlu0 %1907
  %1909 = vrot.lane.b32.xlu0 %v1836, 127
  %v1910 = vpop.permute.xlu0 %1909
  %1911 = vrot.lane.b32.xlu0 %v1837, 127
  %v1912 = vpop.permute.xlu0 %1911
  %1913 = vrot.lane.b32.xlu0 %v1838, 127
  %v1914 = vpop.permute.xlu0 %1913
  %1915 = vrot.lane.b32.xlu0 %v1839, 127
  %v1916 = vpop.permute.xlu0 %1915
  %1917 = vrot.lane.b32.xlu0 %v1840, 127
  %v1918 = vpop.permute.xlu0 %1917
  %1919 = vrot.lane.b32.xlu0 %v1841, 127
  %v1920 = vpop.permute.xlu0 %1919
  %1921 = vrot.lane.b32.xlu0 %v1842, 127
  %v1922 = vpop.permute.xlu0 %1921
  %v1923 = vsel %vm245, %v1884, %v1886
  %v1924 = vsel %vm245, %v1886, %v1888
  %v1925 = vsel %vm245, %v1888, %v1890
  %v1926 = vsel %vm245, %v1890, %v1892
  %v1927 = vsel %vm245, %v1892, %v1894
  %v1928 = vsel %vm245, %v1894, %v1896
  %v1929 = vsel %vm245, %v1896, %v1898
  %v1930 = vsel %vm245, %v1898, %v1900
  %v1931 = vsel %vm245, %v1900, %v1902
  %v1932 = vsel %vm245, %v1904, %v1906
  %v1933 = vsel %vm245, %v1906, %v1908
  %v1934 = vsel %vm245, %v1908, %v1910
  %v1935 = vsel %vm245, %v1910, %v1912
  %v1936 = vsel %vm245, %v1912, %v1914
  %v1937 = vsel %vm245, %v1914, %v1916
  %v1938 = vsel %vm245, %v1916, %v1918
  %v1939 = vsel %vm245, %v1918, %v1920
  %v1940 = vsel %vm245, %v1920, %v1922
  %v1963 = vsel %vm245, %v1902, %v1884
  %v1964 = vsel %vm245, %v1922, %v1904
  %1965 = vst [vmem:[#allocation2 + $0xa0] sm:$0xff] %v1923
  %1966 = vst [vmem:[#allocation2 + $0xa8] sm:$0xff] %v1924
  %1967 = vst [vmem:[#allocation2 + $0xb0] sm:$0xff] %v1925
  %1968 = vst [vmem:[#allocation2 + $0xb8] sm:$0xff] %v1926
  %1969 = vst [vmem:[#allocation2 + $0xc0] sm:$0xff] %v1927
  %1970 = vst [vmem:[#allocation2 + $0xc8] sm:$0xff] %v1928
  %1971 = vst [vmem:[#allocation2 + $0xd0] sm:$0xff] %v1929
  %1972 = vst [vmem:[#allocation2 + $0xd8] sm:$0xff] %v1930
  %1973 = vst [vmem:[#allocation2 + $0xe0] sm:$0xff] %v1931
  %1974 = vst [vmem:[#allocation2 + $0xe8] sm:$0xff] %v1963
  %1975 = vst [vmem:[#allocation2 + $0xf0] sm:$0xf] %v1932
  %1976 = vst [vmem:[#allocation2 + $0xf8] sm:$0xf] %v1933
  %1977 = vst [vmem:[#allocation2 + $0x100] sm:$0xf] %v1934
  %1978 = vst [vmem:[#allocation2 + $0x108] sm:$0xf] %v1935
  %1979 = vst [vmem:[#allocation2 + $0x110] sm:$0xf] %v1936
  %1980 = vst [vmem:[#allocation2 + $0x118] sm:$0xf] %v1937
  %1981 = vst [vmem:[#allocation2 + $0x120] sm:$0xf] %v1938
  %1982 = vst [vmem:[#allocation2 + $0x128] sm:$0xf] %v1939
  %1983 = vst [vmem:[#allocation2 + $0x130] sm:$0xf] %v1940
  %1984 = vst [vmem:[#allocation2 + $0x138] sm:$0xf] %v1964
  %1985 = vrot.lane.b32.xlu0 %v1823, 126
  %v1986 = vpop.permute.xlu0 %1985
  %1987 = vrot.lane.b32.xlu0 %v1824, 126
  %v1988 = vpop.permute.xlu0 %1987
  %1989 = vrot.lane.b32.xlu0 %v1825, 126
  %v1990 = vpop.permute.xlu0 %1989
  %1991 = vrot.lane.b32.xlu0 %v1826, 126
  %v1992 = vpop.permute.xlu0 %1991
  %1993 = vrot.lane.b32.xlu0 %v1827, 126
  %v1994 = vpop.permute.xlu0 %1993
  %1995 = vrot.lane.b32.xlu0 %v1828, 126
  %v1996 = vpop.permute.xlu0 %1995
  %1997 = vrot.lane.b32.xlu0 %v1829, 126
  %v1998 = vpop.permute.xlu0 %1997
  %1999 = vrot.lane.b32.xlu0 %v1830, 126
  %v2000 = vpop.permute.xlu0 %1999
  %2001 = vrot.lane.b32.xlu0 %v1831, 126
  %v2002 = vpop.permute.xlu0 %2001
  %2003 = vrot.lane.b32.xlu0 %v1832, 126
  %v2004 = vpop.permute.xlu0 %2003
  %2005 = vrot.lane.b32.xlu0 %v1833, 126
  %v2006 = vpop.permute.xlu0 %2005
  %2007 = vrot.lane.b32.xlu0 %v1834, 126
  %v2008 = vpop.permute.xlu0 %2007
  %2009 = vrot.lane.b32.xlu0 %v1835, 126
  %v2010 = vpop.permute.xlu0 %2009
  %2011 = vrot.lane.b32.xlu0 %v1836, 126
  %v2012 = vpop.permute.xlu0 %2011
  %2013 = vrot.lane.b32.xlu0 %v1837, 126
  %v2014 = vpop.permute.xlu0 %2013
  %2015 = vrot.lane.b32.xlu0 %v1838, 126
  %v2016 = vpop.permute.xlu0 %2015
  %2017 = vrot.lane.b32.xlu0 %v1839, 126
  %v2018 = vpop.permute.xlu0 %2017
  %2019 = vrot.lane.b32.xlu0 %v1840, 126
  %v2020 = vpop.permute.xlu0 %2019
  %2021 = vrot.lane.b32.xlu0 %v1841, 126
  %v2022 = vpop.permute.xlu0 %2021
  %2023 = vrot.lane.b32.xlu0 %v1842, 126
  %v2024 = vpop.permute.xlu0 %2023
  %v2025 = vsel %vm348, %v1986, %v1988
  %v2026 = vsel %vm348, %v1988, %v1990
  %v2027 = vsel %vm348, %v1990, %v1992
  %v2028 = vsel %vm348, %v1992, %v1994
  %v2029 = vsel %vm348, %v1994, %v1996
  %v2030 = vsel %vm348, %v1996, %v1998
  %v2031 = vsel %vm348, %v1998, %v2000
  %v2032 = vsel %vm348, %v2000, %v2002
  %v2033 = vsel %vm348, %v2002, %v2004
  %v2034 = vsel %vm348, %v2006, %v2008
  %v2035 = vsel %vm348, %v2008, %v2010
  %v2036 = vsel %vm348, %v2010, %v2012
  %v2037 = vsel %vm348, %v2012, %v2014
  %v2038 = vsel %vm348, %v2014, %v2016
  %v2039 = vsel %vm348, %v2016, %v2018
  %v2040 = vsel %vm348, %v2018, %v2020
  %v2041 = vsel %vm348, %v2020, %v2022
  %v2042 = vsel %vm348, %v2022, %v2024
  %v2065 = vsel %vm348, %v2004, %v1986
  %v2066 = vsel %vm348, %v2024, %v2006
  %2067 = vst [vmem:[#allocation2 + $0x140] sm:$0xff] %v2025
  %2068 = vst [vmem:[#allocation2 + $0x148] sm:$0xff] %v2026
  %2069 = vst [vmem:[#allocation2 + $0x150] sm:$0xff] %v2027
  %2070 = vst [vmem:[#allocation2 + $0x158] sm:$0xff] %v2028
  %2071 = vst [vmem:[#allocation2 + $0x160] sm:$0xff] %v2029
  %2072 = vst [vmem:[#allocation2 + $0x168] sm:$0xff] %v2030
  %2073 = vst [vmem:[#allocation2 + $0x170] sm:$0xff] %v2031
  %2074 = vst [vmem:[#allocation2 + $0x178] sm:$0xff] %v2032
  %2075 = vst [vmem:[#allocation2 + $0x180] sm:$0xff] %v2033
  %2076 = vst [vmem:[#allocation2 + $0x188] sm:$0xff] %v2065
  %2077 = vst [vmem:[#allocation2 + $0x190] sm:$0xf] %v2034
  %2078 = vst [vmem:[#allocation2 + $0x198] sm:$0xf] %v2035
  %2079 = vst [vmem:[#allocation2 + $0x1a0] sm:$0xf] %v2036
  %2080 = vst [vmem:[#allocation2 + $0x1a8] sm:$0xf] %v2037
  %2081 = vst [vmem:[#allocation2 + $0x1b0] sm:$0xf] %v2038
  %2082 = vst [vmem:[#allocation2 + $0x1b8] sm:$0xf] %v2039
  %2083 = vst [vmem:[#allocation2 + $0x1c0] sm:$0xf] %v2040
  %2084 = vst [vmem:[#allocation2 + $0x1c8] sm:$0xf] %v2041
  %2085 = vst [vmem:[#allocation2 + $0x1d0] sm:$0xf] %v2042
  %2086 = vst [vmem:[#allocation2 + $0x1d8] sm:$0xf] %v2066
  %2087 = vrot.lane.b32.xlu0 %v1823, 94
  %v2088 = vpop.permute.xlu0 %2087
  %2089 = vrot.lane.b32.xlu0 %v1824, 94
  %v2090 = vpop.permute.xlu0 %2089
  %2091 = vrot.lane.b32.xlu0 %v1825, 94
  %v2092 = vpop.permute.xlu0 %2091
  %2093 = vrot.lane.b32.xlu0 %v1826, 94
  %v2094 = vpop.permute.xlu0 %2093
  %2095 = vrot.lane.b32.xlu0 %v1827, 94
  %v2096 = vpop.permute.xlu0 %2095
  %2097 = vrot.lane.b32.xlu0 %v1828, 94
  %v2098 = vpop.permute.xlu0 %2097
  %2099 = vrot.lane.b32.xlu0 %v1829, 94
  %v2100 = vpop.permute.xlu0 %2099
  %2101 = vrot.lane.b32.xlu0 %v1830, 94
  %v2102 = vpop.permute.xlu0 %2101
  %2103 = vrot.lane.b32.xlu0 %v1831, 94
  %v2104 = vpop.permute.xlu0 %2103
  %2105 = vrot.lane.b32.xlu0 %v1832, 94
  %v2106 = vpop.permute.xlu0 %2105
  %2107 = vrot.lane.b32.xlu0 %v1833, 94
  %v2108 = vpop.permute.xlu0 %2107
  %2109 = vrot.lane.b32.xlu0 %v1834, 94
  %v2110 = vpop.permute.xlu0 %2109
  %2111 = vrot.lane.b32.xlu0 %v1835, 94
  %v2112 = vpop.permute.xlu0 %2111
  %2113 = vrot.lane.b32.xlu0 %v1836, 94
  %v2114 = vpop.permute.xlu0 %2113
  %2115 = vrot.lane.b32.xlu0 %v1837, 94
  %v2116 = vpop.permute.xlu0 %2115
  %2117 = vrot.lane.b32.xlu0 %v1838, 94
  %v2118 = vpop.permute.xlu0 %2117
  %2119 = vrot.lane.b32.xlu0 %v1839, 94
  %v2120 = vpop.permute.xlu0 %2119
  %2121 = vrot.lane.b32.xlu0 %v1840, 94
  %v2122 = vpop.permute.xlu0 %2121
  %2123 = vrot.lane.b32.xlu0 %v1841, 94
  %v2124 = vpop.permute.xlu0 %2123
  %2125 = vrot.lane.b32.xlu0 %v1842, 94
  %v2126 = vpop.permute.xlu0 %2125
  %v2127 = vsel %vm451, %v2088, %v2090
  %v2128 = vsel %vm451, %v2090, %v2092
  %v2129 = vsel %vm451, %v2092, %v2094
  %v2130 = vsel %vm451, %v2094, %v2096
  %v2131 = vsel %vm451, %v2096, %v2098
  %v2132 = vsel %vm451, %v2098, %v2100
  %v2133 = vsel %vm451, %v2100, %v2102
  %v2134 = vsel %vm451, %v2102, %v2104
  %v2135 = vsel %vm451, %v2104, %v2106
  %v2136 = vsel %vm451, %v2108, %v2110
  %v2137 = vsel %vm451, %v2110, %v2112
  %v2138 = vsel %vm451, %v2112, %v2114
  %v2139 = vsel %vm451, %v2114, %v2116
  %v2140 = vsel %vm451, %v2116, %v2118
  %v2141 = vsel %vm451, %v2118, %v2120
  %v2142 = vsel %vm451, %v2120, %v2122
  %v2143 = vsel %vm451, %v2122, %v2124
  %v2144 = vsel %vm451, %v2124, %v2126
  %v2167 = vsel %vm451, %v2106, %v2088
  %v2168 = vsel %vm451, %v2126, %v2108
  %2169 = vst [vmem:[#allocation2 + $0x1e0] sm:$0xff] %v2127
  %2170 = vst [vmem:[#allocation2 + $0x1e8] sm:$0xff] %v2128
  %2171 = vst [vmem:[#allocation2 + $0x1f0] sm:$0xff] %v2129
  %2172 = vst [vmem:[#allocation2 + $0x1f8] sm:$0xff] %v2130
  %2173 = vst [vmem:[#allocation2 + $0x200] sm:$0xff] %v2131
  %2174 = vst [vmem:[#allocation2 + $0x208] sm:$0xff] %v2132
  %2175 = vst [vmem:[#allocation2 + $0x210] sm:$0xff] %v2133
  %2176 = vst [vmem:[#allocation2 + $0x218] sm:$0xff] %v2134
  %2177 = vst [vmem:[#allocation2 + $0x220] sm:$0xff] %v2135
  %2178 = vst [vmem:[#allocation2 + $0x228] sm:$0xff] %v2167
  %2179 = vst [vmem:[#allocation2 + $0x230] sm:$0xf] %v2136
  %2180 = vst [vmem:[#allocation2 + $0x238] sm:$0xf] %v2137
  %2181 = vst [vmem:[#allocation2 + $0x240] sm:$0xf] %v2138
  %2182 = vst [vmem:[#allocation2 + $0x248] sm:$0xf] %v2139
  %2183 = vst [vmem:[#allocation2 + $0x250] sm:$0xf] %v2140
  %2184 = vst [vmem:[#allocation2 + $0x258] sm:$0xf] %v2141
  %2185 = vst [vmem:[#allocation2 + $0x260] sm:$0xf] %v2142
  %2186 = vst [vmem:[#allocation2 + $0x268] sm:$0xf] %v2143
  %2187 = vst [vmem:[#allocation2 + $0x270] sm:$0xf] %v2144
  %2188 = vst [vmem:[#allocation2 + $0x278] sm:$0xf] %v2168
  %2189 = vrot.lane.b32.xlu0 %v1823, 93
  %v2190 = vpop.permute.xlu0 %2189
  %2191 = vrot.lane.b32.xlu0 %v1824, 93
  %v2192 = vpop.permute.xlu0 %2191
  %2193 = vrot.lane.b32.xlu0 %v1825, 93
  %v2194 = vpop.permute.xlu0 %2193
  %2195 = vrot.lane.b32.xlu0 %v1826, 93
  %v2196 = vpop.permute.xlu0 %2195
  %2197 = vrot.lane.b32.xlu0 %v1827, 93
  %v2198 = vpop.permute.xlu0 %2197
  %2199 = vrot.lane.b32.xlu0 %v1828, 93
  %v2200 = vpop.permute.xlu0 %2199
  %2201 = vrot.lane.b32.xlu0 %v1829, 93
  %v2202 = vpop.permute.xlu0 %2201
  %2203 = vrot.lane.b32.xlu0 %v1830, 93
  %v2204 = vpop.permute.xlu0 %2203
  %2205 = vrot.lane.b32.xlu0 %v1831, 93
  %v2206 = vpop.permute.xlu0 %2205
  %2207 = vrot.lane.b32.xlu0 %v1832, 93
  %v2208 = vpop.permute.xlu0 %2207
  %2209 = vrot.lane.b32.xlu0 %v1833, 93
  %v2210 = vpop.permute.xlu0 %2209
  %2211 = vrot.lane.b32.xlu0 %v1834, 93
  %v2212 = vpop.permute.xlu0 %2211
  %2213 = vrot.lane.b32.xlu0 %v1835, 93
  %v2214 = vpop.permute.xlu0 %2213
  %2215 = vrot.lane.b32.xlu0 %v1836, 93
  %v2216 = vpop.permute.xlu0 %2215
  %2217 = vrot.lane.b32.xlu0 %v1837, 93
  %v2218 = vpop.permute.xlu0 %2217
  %2219 = vrot.lane.b32.xlu0 %v1838, 93
  %v2220 = vpop.permute.xlu0 %2219
  %2221 = vrot.lane.b32.xlu0 %v1839, 93
  %v2222 = vpop.permute.xlu0 %2221
  %2223 = vrot.lane.b32.xlu0 %v1840, 93
  %v2224 = vpop.permute.xlu0 %2223
  %2225 = vrot.lane.b32.xlu0 %v1841, 93
  %v2226 = vpop.permute.xlu0 %2225
  %2227 = vrot.lane.b32.xlu0 %v1842, 93
  %v2228 = vpop.permute.xlu0 %2227
  %v2229 = vsel %vm554, %v2190, %v2192
  %v2230 = vsel %vm554, %v2192, %v2194
  %v2231 = vsel %vm554, %v2194, %v2196
  %v2232 = vsel %vm554, %v2196, %v2198
  %v2233 = vsel %vm554, %v2198, %v2200
  %v2234 = vsel %vm554, %v2200, %v2202
  %v2235 = vsel %vm554, %v2202, %v2204
  %v2236 = vsel %vm554, %v2204, %v2206
  %v2237 = vsel %vm554, %v2206, %v2208
  %v2238 = vsel %vm554, %v2210, %v2212
  %v2239 = vsel %vm554, %v2212, %v2214
  %v2240 = vsel %vm554, %v2214, %v2216
  %v2241 = vsel %vm554, %v2216, %v2218
  %v2242 = vsel %vm554, %v2218, %v2220
  %v2243 = vsel %vm554, %v2220, %v2222
  %v2244 = vsel %vm554, %v2222, %v2224
  %v2245 = vsel %vm554, %v2224, %v2226
  %v2246 = vsel %vm554, %v2226, %v2228
  %v2269 = vsel %vm554, %v2208, %v2190
  %v2270 = vsel %vm554, %v2228, %v2210
  %2271 = vst [vmem:[#allocation2 + $0x280] sm:$0xff] %v2229
  %2272 = vst [vmem:[#allocation2 + $0x288] sm:$0xff] %v2230
  %2273 = vst [vmem:[#allocation2 + $0x290] sm:$0xff] %v2231
  %2274 = vst [vmem:[#allocation2 + $0x298] sm:$0xff] %v2232
  %2275 = vst [vmem:[#allocation2 + $0x2a0] sm:$0xff] %v2233
  %2276 = vst [vmem:[#allocation2 + $0x2a8] sm:$0xff] %v2234
  %2277 = vst [vmem:[#allocation2 + $0x2b0] sm:$0xff] %v2235
  %2278 = vst [vmem:[#allocation2 + $0x2b8] sm:$0xff] %v2236
  %2279 = vst [vmem:[#allocation2 + $0x2c0] sm:$0xff] %v2237
  %2280 = vst [vmem:[#allocation2 + $0x2c8] sm:$0xff] %v2269
  %2281 = vst [vmem:[#allocation2 + $0x2d0] sm:$0xf] %v2238
  %2282 = vst [vmem:[#allocation2 + $0x2d8] sm:$0xf] %v2239
  %2283 = vst [vmem:[#allocation2 + $0x2e0] sm:$0xf] %v2240
  %2284 = vst [vmem:[#allocation2 + $0x2e8] sm:$0xf] %v2241
  %2285 = vst [vmem:[#allocation2 + $0x2f0] sm:$0xf] %v2242
  %2286 = vst [vmem:[#allocation2 + $0x2f8] sm:$0xf] %v2243
  %2287 = vst [vmem:[#allocation2 + $0x300] sm:$0xf] %v2244
  %2288 = vst [vmem:[#allocation2 + $0x308] sm:$0xf] %v2245
  %2289 = vst [vmem:[#allocation2 + $0x310] sm:$0xf] %v2246
  %2290 = vst [vmem:[#allocation2 + $0x318] sm:$0xf] %v2270
  %2291 = vrot.lane.b32.xlu0 %v1823, 92
  %v2292 = vpop.permute.xlu0 %2291
  %2293 = vrot.lane.b32.xlu0 %v1824, 92
  %v2294 = vpop.permute.xlu0 %2293
  %2295 = vrot.lane.b32.xlu0 %v1825, 92
  %v2296 = vpop.permute.xlu0 %2295
  %2297 = vrot.lane.b32.xlu0 %v1826, 92
  %v2298 = vpop.permute.xlu0 %2297
  %2299 = vrot.lane.b32.xlu0 %v1827, 92
  %v2300 = vpop.permute.xlu0 %2299
  %2301 = vrot.lane.b32.xlu0 %v1828, 92
  %v2302 = vpop.permute.xlu0 %2301
  %2303 = vrot.lane.b32.xlu0 %v1829, 92
  %v2304 = vpop.permute.xlu0 %2303
  %2305 = vrot.lane.b32.xlu0 %v1830, 92
  %v2306 = vpop.permute.xlu0 %2305
  %2307 = vrot.lane.b32.xlu0 %v1831, 92
  %v2308 = vpop.permute.xlu0 %2307
  %2309 = vrot.lane.b32.xlu0 %v1832, 92
  %v2310 = vpop.permute.xlu0 %2309
  %2311 = vrot.lane.b32.xlu0 %v1833, 92
  %v2312 = vpop.permute.xlu0 %2311
  %2313 = vrot.lane.b32.xlu0 %v1834, 92
  %v2314 = vpop.permute.xlu0 %2313
  %2315 = vrot.lane.b32.xlu0 %v1835, 92
  %v2316 = vpop.permute.xlu0 %2315
  %2317 = vrot.lane.b32.xlu0 %v1836, 92
  %v2318 = vpop.permute.xlu0 %2317
  %2319 = vrot.lane.b32.xlu0 %v1837, 92
  %v2320 = vpop.permute.xlu0 %2319
  %2321 = vrot.lane.b32.xlu0 %v1838, 92
  %v2322 = vpop.permute.xlu0 %2321
  %2323 = vrot.lane.b32.xlu0 %v1839, 92
  %v2324 = vpop.permute.xlu0 %2323
  %2325 = vrot.lane.b32.xlu0 %v1840, 92
  %v2326 = vpop.permute.xlu0 %2325
  %2327 = vrot.lane.b32.xlu0 %v1841, 92
  %v2328 = vpop.permute.xlu0 %2327
  %2329 = vrot.lane.b32.xlu0 %v1842, 92
  %v2330 = vpop.permute.xlu0 %2329
  %v2331 = vsel %vm657, %v2292, %v2294
  %v2332 = vsel %vm657, %v2294, %v2296
  %v2333 = vsel %vm657, %v2296, %v2298
  %v2334 = vsel %vm657, %v2298, %v2300
  %v2335 = vsel %vm657, %v2300, %v2302
  %v2336 = vsel %vm657, %v2302, %v2304
  %v2337 = vsel %vm657, %v2304, %v2306
  %v2338 = vsel %vm657, %v2306, %v2308
  %v2339 = vsel %vm657, %v2308, %v2310
  %v2340 = vsel %vm657, %v2312, %v2314
  %v2341 = vsel %vm657, %v2314, %v2316
  %v2342 = vsel %vm657, %v2316, %v2318
  %v2343 = vsel %vm657, %v2318, %v2320
  %v2344 = vsel %vm657, %v2320, %v2322
  %v2345 = vsel %vm657, %v2322, %v2324
  %v2346 = vsel %vm657, %v2324, %v2326
  %v2347 = vsel %vm657, %v2326, %v2328
  %v2348 = vsel %vm657, %v2328, %v2330
  %v2371 = vsel %vm657, %v2310, %v2292
  %v2372 = vsel %vm657, %v2330, %v2312
  %2373 = vst [vmem:[#allocation2 + $0x320] sm:$0xff] %v2331
  %2374 = vst [vmem:[#allocation2 + $0x328] sm:$0xff] %v2332
  %2375 = vst [vmem:[#allocation2 + $0x330] sm:$0xff] %v2333
  %2376 = vst [vmem:[#allocation2 + $0x338] sm:$0xff] %v2334
  %2377 = vst [vmem:[#allocation2 + $0x340] sm:$0xff] %v2335
  %2378 = vst [vmem:[#allocation2 + $0x348] sm:$0xff] %v2336
  %2379 = vst [vmem:[#allocation2 + $0x350] sm:$0xff] %v2337
  %2380 = vst [vmem:[#allocation2 + $0x358] sm:$0xff] %v2338
  %2381 = vst [vmem:[#allocation2 + $0x360] sm:$0xff] %v2339
  %2382 = vst [vmem:[#allocation2 + $0x368] sm:$0xff] %v2371
  %2383 = vst [vmem:[#allocation2 + $0x370] sm:$0xf] %v2340
  %2384 = vst [vmem:[#allocation2 + $0x378] sm:$0xf] %v2341
  %2385 = vst [vmem:[#allocation2 + $0x380] sm:$0xf] %v2342
  %2386 = vst [vmem:[#allocation2 + $0x388] sm:$0xf] %v2343
  %2387 = vst [vmem:[#allocation2 + $0x390] sm:$0xf] %v2344
  %2388 = vst [vmem:[#allocation2 + $0x398] sm:$0xf] %v2345
  %2389 = vst [vmem:[#allocation2 + $0x3a0] sm:$0xf] %v2346
  %2390 = vst [vmem:[#allocation2 + $0x3a8] sm:$0xf] %v2347
  %2391 = vst [vmem:[#allocation2 + $0x3b0] sm:$0xf] %v2348
  %2392 = vst [vmem:[#allocation2 + $0x3b8] sm:$0xf] %v2372
  %2393 = vrot.lane.b32.xlu0 %v1823, 60
  %v2394 = vpop.permute.xlu0 %2393
  %2395 = vrot.lane.b32.xlu0 %v1824, 60
  %v2396 = vpop.permute.xlu0 %2395
  %2397 = vrot.lane.b32.xlu0 %v1825, 60
  %v2398 = vpop.permute.xlu0 %2397
  %2399 = vrot.lane.b32.xlu0 %v1826, 60
  %v2400 = vpop.permute.xlu0 %2399
  %2401 = vrot.lane.b32.xlu0 %v1827, 60
  %v2402 = vpop.permute.xlu0 %2401
  %2403 = vrot.lane.b32.xlu0 %v1828, 60
  %v2404 = vpop.permute.xlu0 %2403
  %2405 = vrot.lane.b32.xlu0 %v1829, 60
  %v2406 = vpop.permute.xlu0 %2405
  %2407 = vrot.lane.b32.xlu0 %v1830, 60
  %v2408 = vpop.permute.xlu0 %2407
  %2409 = vrot.lane.b32.xlu0 %v1831, 60
  %v2410 = vpop.permute.xlu0 %2409
  %2411 = vrot.lane.b32.xlu0 %v1832, 60
  %v2412 = vpop.permute.xlu0 %2411
  %2413 = vrot.lane.b32.xlu0 %v1833, 60
  %v2414 = vpop.permute.xlu0 %2413
  %2415 = vrot.lane.b32.xlu0 %v1834, 60
  %v2416 = vpop.permute.xlu0 %2415
  %2417 = vrot.lane.b32.xlu0 %v1835, 60
  %v2418 = vpop.permute.xlu0 %2417
  %2419 = vrot.lane.b32.xlu0 %v1836, 60
  %v2420 = vpop.permute.xlu0 %2419
  %2421 = vrot.lane.b32.xlu0 %v1837, 60
  %v2422 = vpop.permute.xlu0 %2421
  %2423 = vrot.lane.b32.xlu0 %v1838, 60
  %v2424 = vpop.permute.xlu0 %2423
  %2425 = vrot.lane.b32.xlu0 %v1839, 60
  %v2426 = vpop.permute.xlu0 %2425
  %2427 = vrot.lane.b32.xlu0 %v1840, 60
  %v2428 = vpop.permute.xlu0 %2427
  %2429 = vrot.lane.b32.xlu0 %v1841, 60
  %v2430 = vpop.permute.xlu0 %2429
  %2431 = vrot.lane.b32.xlu0 %v1842, 60
  %v2432 = vpop.permute.xlu0 %2431
  %v2433 = vsel %vm760, %v2394, %v2396
  %v2434 = vsel %vm760, %v2396, %v2398
  %v2435 = vsel %vm760, %v2398, %v2400
  %v2436 = vsel %vm760, %v2400, %v2402
  %v2437 = vsel %vm760, %v2402, %v2404
  %v2438 = vsel %vm760, %v2404, %v2406
  %v2439 = vsel %vm760, %v2406, %v2408
  %v2440 = vsel %vm760, %v2408, %v2410
  %v2441 = vsel %vm760, %v2410, %v2412
  %v2442 = vsel %vm760, %v2414, %v2416
  %v2443 = vsel %vm760, %v2416, %v2418
  %v2444 = vsel %vm760, %v2418, %v2420
  %v2445 = vsel %vm760, %v2420, %v2422
  %v2446 = vsel %vm760, %v2422, %v2424
  %v2447 = vsel %vm760, %v2424, %v2426
  %v2448 = vsel %vm760, %v2426, %v2428
  %v2449 = vsel %vm760, %v2428, %v2430
  %v2450 = vsel %vm760, %v2430, %v2432
  %v2473 = vsel %vm760, %v2412, %v2394
  %v2474 = vsel %vm760, %v2432, %v2414
  %2475 = vst [vmem:[#allocation2 + $0x3c0] sm:$0xff] %v2433
  %2476 = vst [vmem:[#allocation2 + $0x3c8] sm:$0xff] %v2434
  %2477 = vst [vmem:[#allocation2 + $0x3d0] sm:$0xff] %v2435
  %2478 = vst [vmem:[#allocation2 + $0x3d8] sm:$0xff] %v2436
  %2479 = vst [vmem:[#allocation2 + $0x3e0] sm:$0xff] %v2437
  %2480 = vst [vmem:[#allocation2 + $0x3e8] sm:$0xff] %v2438
  %2481 = vst [vmem:[#allocation2 + $0x3f0] sm:$0xff] %v2439
  %2482 = vst [vmem:[#allocation2 + $0x3f8] sm:$0xff] %v2440
  %2483 = vst [vmem:[#allocation2 + $0x400] sm:$0xff] %v2441
  %2484 = vst [vmem:[#allocation2 + $0x408] sm:$0xff] %v2473
  %2485 = vst [vmem:[#allocation2 + $0x410] sm:$0xf] %v2442
  %2486 = vst [vmem:[#allocation2 + $0x418] sm:$0xf] %v2443
  %2487 = vst [vmem:[#allocation2 + $0x420] sm:$0xf] %v2444
  %2488 = vst [vmem:[#allocation2 + $0x428] sm:$0xf] %v2445
  %2489 = vst [vmem:[#allocation2 + $0x430] sm:$0xf] %v2446
  %2490 = vst [vmem:[#allocation2 + $0x438] sm:$0xf] %v2447
  %2491 = vst [vmem:[#allocation2 + $0x440] sm:$0xf] %v2448
  %2492 = vst [vmem:[#allocation2 + $0x448] sm:$0xf] %v2449
  %2493 = vst [vmem:[#allocation2 + $0x450] sm:$0xf] %v2450
  %2494 = vst [vmem:[#allocation2 + $0x458] sm:$0xf] %v2474
  %2495 = vrot.lane.b32.xlu0 %v1823, 59
  %v2496 = vpop.permute.xlu0 %2495
  %2497 = vrot.lane.b32.xlu0 %v1824, 59
  %v2498 = vpop.permute.xlu0 %2497
  %2499 = vrot.lane.b32.xlu0 %v1825, 59
  %v2500 = vpop.permute.xlu0 %2499
  %2501 = vrot.lane.b32.xlu0 %v1826, 59
  %v2502 = vpop.permute.xlu0 %2501
  %2503 = vrot.lane.b32.xlu0 %v1827, 59
  %v2504 = vpop.permute.xlu0 %2503
  %2505 = vrot.lane.b32.xlu0 %v1828, 59
  %v2506 = vpop.permute.xlu0 %2505
  %2507 = vrot.lane.b32.xlu0 %v1829, 59
  %v2508 = vpop.permute.xlu0 %2507
  %2509 = vrot.lane.b32.xlu0 %v1830, 59
  %v2510 = vpop.permute.xlu0 %2509
  %2511 = vrot.lane.b32.xlu0 %v1831, 59
  %v2512 = vpop.permute.xlu0 %2511
  %2513 = vrot.lane.b32.xlu0 %v1832, 59
  %v2514 = vpop.permute.xlu0 %2513
  %2515 = vrot.lane.b32.xlu0 %v1833, 59
  %v2516 = vpop.permute.xlu0 %2515
  %2517 = vrot.lane.b32.xlu0 %v1834, 59
  %v2518 = vpop.permute.xlu0 %2517
  %2519 = vrot.lane.b32.xlu0 %v1835, 59
  %v2520 = vpop.permute.xlu0 %2519
  %2521 = vrot.lane.b32.xlu0 %v1836, 59
  %v2522 = vpop.permute.xlu0 %2521
  %2523 = vrot.lane.b32.xlu0 %v1837, 59
  %v2524 = vpop.permute.xlu0 %2523
  %2525 = vrot.lane.b32.xlu0 %v1838, 59
  %v2526 = vpop.permute.xlu0 %2525
  %2527 = vrot.lane.b32.xlu0 %v1839, 59
  %v2528 = vpop.permute.xlu0 %2527
  %2529 = vrot.lane.b32.xlu0 %v1840, 59
  %v2530 = vpop.permute.xlu0 %2529
  %2531 = vrot.lane.b32.xlu0 %v1841, 59
  %v2532 = vpop.permute.xlu0 %2531
  %2533 = vrot.lane.b32.xlu0 %v1842, 59
  %v2534 = vpop.permute.xlu0 %2533
  %v2535 = vsel %vm863, %v2496, %v2498
  %v2536 = vsel %vm863, %v2498, %v2500
  %v2537 = vsel %vm863, %v2500, %v2502
  %v2538 = vsel %vm863, %v2502, %v2504
  %v2539 = vsel %vm863, %v2504, %v2506
  %v2540 = vsel %vm863, %v2506, %v2508
  %v2541 = vsel %vm863, %v2508, %v2510
  %v2542 = vsel %vm863, %v2510, %v2512
  %v2543 = vsel %vm863, %v2512, %v2514
  %v2544 = vsel %vm863, %v2516, %v2518
  %v2545 = vsel %vm863, %v2518, %v2520
  %v2546 = vsel %vm863, %v2520, %v2522
  %v2547 = vsel %vm863, %v2522, %v2524
  %v2548 = vsel %vm863, %v2524, %v2526
  %v2549 = vsel %vm863, %v2526, %v2528
  %v2550 = vsel %vm863, %v2528, %v2530
  %v2551 = vsel %vm863, %v2530, %v2532
  %v2552 = vsel %vm863, %v2532, %v2534
  %v2575 = vsel %vm863, %v2514, %v2496
  %v2576 = vsel %vm863, %v2534, %v2516
  %2577 = vst [vmem:[#allocation2 + $0x460] sm:$0xff] %v2535
  %2578 = vst [vmem:[#allocation2 + $0x468] sm:$0xff] %v2536
  %2579 = vst [vmem:[#allocation2 + $0x470] sm:$0xff] %v2537
  %2580 = vst [vmem:[#allocation2 + $0x478] sm:$0xff] %v2538
  %2581 = vst [vmem:[#allocation2 + $0x480] sm:$0xff] %v2539
  %2582 = vst [vmem:[#allocation2 + $0x488] sm:$0xff] %v2540
  %2583 = vst [vmem:[#allocation2 + $0x490] sm:$0xff] %v2541
  %2584 = vst [vmem:[#allocation2 + $0x498] sm:$0xff] %v2542
  %2585 = vst [vmem:[#allocation2 + $0x4a0] sm:$0xff] %v2543
  %2586 = vst [vmem:[#allocation2 + $0x4a8] sm:$0xff] %v2575
  %2587 = vst [vmem:[#allocation2 + $0x4b0] sm:$0xf] %v2544
  %2588 = vst [vmem:[#allocation2 + $0x4b8] sm:$0xf] %v2545
  %2589 = vst [vmem:[#allocation2 + $0x4c0] sm:$0xf] %v2546
  %2590 = vst [vmem:[#allocation2 + $0x4c8] sm:$0xf] %v2547
  %2591 = vst [vmem:[#allocation2 + $0x4d0] sm:$0xf] %v2548
  %2592 = vst [vmem:[#allocation2 + $0x4d8] sm:$0xf] %v2549
  %2593 = vst [vmem:[#allocation2 + $0x4e0] sm:$0xf] %v2550
  %2594 = vst [vmem:[#allocation2 + $0x4e8] sm:$0xf] %v2551
  %2595 = vst [vmem:[#allocation2 + $0x4f0] sm:$0xf] %v2552
  %2596 = vst [vmem:[#allocation2 + $0x4f8] sm:$0xf] %v2576
  %2597 = vrot.lane.b32.xlu0 %v1823, 58
  %v2598 = vpop.permute.xlu0 %2597
  %2599 = vrot.lane.b32.xlu0 %v1824, 58
  %v2600 = vpop.permute.xlu0 %2599
  %2601 = vrot.lane.b32.xlu0 %v1825, 58
  %v2602 = vpop.permute.xlu0 %2601
  %2603 = vrot.lane.b32.xlu0 %v1826, 58
  %v2604 = vpop.permute.xlu0 %2603
  %2605 = vrot.lane.b32.xlu0 %v1827, 58
  %v2606 = vpop.permute.xlu0 %2605
  %2607 = vrot.lane.b32.xlu0 %v1828, 58
  %v2608 = vpop.permute.xlu0 %2607
  %2609 = vrot.lane.b32.xlu0 %v1829, 58
  %v2610 = vpop.permute.xlu0 %2609
  %2611 = vrot.lane.b32.xlu0 %v1830, 58
  %v2612 = vpop.permute.xlu0 %2611
  %2613 = vrot.lane.b32.xlu0 %v1831, 58
  %v2614 = vpop.permute.xlu0 %2613
  %2615 = vrot.lane.b32.xlu0 %v1832, 58
  %v2616 = vpop.permute.xlu0 %2615
  %2617 = vrot.lane.b32.xlu0 %v1833, 58
  %v2618 = vpop.permute.xlu0 %2617
  %2619 = vrot.lane.b32.xlu0 %v1834, 58
  %v2620 = vpop.permute.xlu0 %2619
  %2621 = vrot.lane.b32.xlu0 %v1835, 58
  %v2622 = vpop.permute.xlu0 %2621
  %2623 = vrot.lane.b32.xlu0 %v1836, 58
  %v2624 = vpop.permute.xlu0 %2623
  %2625 = vrot.lane.b32.xlu0 %v1837, 58
  %v2626 = vpop.permute.xlu0 %2625
  %2627 = vrot.lane.b32.xlu0 %v1838, 58
  %v2628 = vpop.permute.xlu0 %2627
  %2629 = vrot.lane.b32.xlu0 %v1839, 58
  %v2630 = vpop.permute.xlu0 %2629
  %2631 = vrot.lane.b32.xlu0 %v1840, 58
  %v2632 = vpop.permute.xlu0 %2631
  %2633 = vrot.lane.b32.xlu0 %v1841, 58
  %v2634 = vpop.permute.xlu0 %2633
  %2635 = vrot.lane.b32.xlu0 %v1842, 58
  %v2636 = vpop.permute.xlu0 %2635
  %v2637 = vsel %vm966, %v2598, %v2600
  %v2638 = vsel %vm966, %v2600, %v2602
  %v2639 = vsel %vm966, %v2602, %v2604
  %v2640 = vsel %vm966, %v2604, %v2606
  %v2641 = vsel %vm966, %v2606, %v2608
  %v2642 = vsel %vm966, %v2608, %v2610
  %v2643 = vsel %vm966, %v2610, %v2612
  %v2644 = vsel %vm966, %v2612, %v2614
  %v2645 = vsel %vm966, %v2614, %v2616
  %v2646 = vsel %vm966, %v2618, %v2620
  %v2647 = vsel %vm966, %v2620, %v2622
  %v2648 = vsel %vm966, %v2622, %v2624
  %v2649 = vsel %vm966, %v2624, %v2626
  %v2650 = vsel %vm966, %v2626, %v2628
  %v2651 = vsel %vm966, %v2628, %v2630
  %v2652 = vsel %vm966, %v2630, %v2632
  %v2653 = vsel %vm966, %v2632, %v2634
  %v2654 = vsel %vm966, %v2634, %v2636
  %v2677 = vsel %vm966, %v2616, %v2598
  %v2678 = vsel %vm966, %v2636, %v2618
  %2679 = vst [vmem:[#allocation2 + $0x500] sm:$0xff] %v2637
  %2680 = vst [vmem:[#allocation2 + $0x508] sm:$0xff] %v2638
  %2681 = vst [vmem:[#allocation2 + $0x510] sm:$0xff] %v2639
  %2682 = vst [vmem:[#allocation2 + $0x518] sm:$0xff] %v2640
  %2683 = vst [vmem:[#allocation2 + $0x520] sm:$0xff] %v2641
  %2684 = vst [vmem:[#allocation2 + $0x528] sm:$0xff] %v2642
  %2685 = vst [vmem:[#allocation2 + $0x530] sm:$0xff] %v2643
  %2686 = vst [vmem:[#allocation2 + $0x538] sm:$0xff] %v2644
  %2687 = vst [vmem:[#allocation2 + $0x540] sm:$0xff] %v2645
  %2688 = vst [vmem:[#allocation2 + $0x548] sm:$0xff] %v2677
  %2689 = vst [vmem:[#allocation2 + $0x550] sm:$0xf] %v2646
  %2690 = vst [vmem:[#allocation2 + $0x558] sm:$0xf] %v2647
  %2691 = vst [vmem:[#allocation2 + $0x560] sm:$0xf] %v2648
  %2692 = vst [vmem:[#allocation2 + $0x568] sm:$0xf] %v2649
  %2693 = vst [vmem:[#allocation2 + $0x570] sm:$0xf] %v2650
  %2694 = vst [vmem:[#allocation2 + $0x578] sm:$0xf] %v2651
  %2695 = vst [vmem:[#allocation2 + $0x580] sm:$0xf] %v2652
  %2696 = vst [vmem:[#allocation2 + $0x588] sm:$0xf] %v2653
  %2697 = vst [vmem:[#allocation2 + $0x590] sm:$0xf] %v2654
  %2698 = vst [vmem:[#allocation2 + $0x598] sm:$0xf] %v2678
  %v2699 = vld [vmem:[%s2] sm:$0xff]
  %v2700 = vld [vmem:[%s2 + $0x8] sm:$0xff]
  %v2701 = vld [vmem:[%s2 + $0x10] sm:$0xff]
  %v2702 = vld [vmem:[%s2 + $0x18] sm:$0xff]
  %v2703 = vld [vmem:[#allocation2] sm:$0xff]
  %v2704 = vld [vmem:[#allocation2 + $0x8] sm:$0xff]
  %v2705 = vld [vmem:[#allocation2 + $0x10] sm:$0xff]
  %v2706 = vld [vmem:[#allocation2 + $0x18] sm:$0xff]
  %v2707 = vld [vmem:[#allocation2 + $0x20] sm:$0xff]
  %v2708 = vld [vmem:[#allocation2 + $0x28] sm:$0xff]
  %v2709 = vld [vmem:[#allocation2 + $0x30] sm:$0xff]
  %v2710 = vld [vmem:[#allocation2 + $0x38] sm:$0xff]
  %v2711 = vld [vmem:[#allocation2 + $0x40] sm:$0xff]
  %v2712 = vld [vmem:[#allocation2 + $0x48] sm:$0xff]
  %v2713 = vld [vmem:[#allocation2 + $0x50] sm:$0xff]
  %v2714 = vld [vmem:[#allocation2 + $0x58] sm:$0xff]
  %v2715 = vld [vmem:[#allocation2 + $0x60] sm:$0xff]
  %v2716 = vld [vmem:[#allocation2 + $0x68] sm:$0xff]
  %v2717 = vld [vmem:[#allocation2 + $0x70] sm:$0xff]
  %v2718 = vld [vmem:[#allocation2 + $0x78] sm:$0xff]
  %v2719 = vld [vmem:[#allocation2 + $0x80] sm:$0xff]
  %v2720 = vld [vmem:[#allocation2 + $0x88] sm:$0xff]
  %v2721 = vld [vmem:[#allocation2 + $0x90] sm:$0xff]
  %v2722 = vld [vmem:[#allocation2 + $0x98] sm:$0xff]
  %v2723 = vld [vmem:[#allocation2 + $0xa0] sm:$0xff]
  %v2724 = vld [vmem:[#allocation2 + $0xa8] sm:$0xff]
  %v2725 = vld [vmem:[#allocation2 + $0xb0] sm:$0xff]
  %v2726 = vld [vmem:[#allocation2 + $0xb8] sm:$0xff]
  %v2727 = vld [vmem:[#allocation2 + $0xc0] sm:$0xff]
  %v2728 = vld [vmem:[#allocation2 + $0xc8] sm:$0xff]
  %v2729 = vld [vmem:[#allocation2 + $0xd0] sm:$0xff]
  %v2730 = vld [vmem:[#allocation2 + $0xd8] sm:$0xff]
  %v2731 = vld [vmem:[#allocation2 + $0xe0] sm:$0xff]
  %v2732 = vld [vmem:[#allocation2 + $0xe8] sm:$0xff]
  %v2733 = vld [vmem:[#allocation2 + $0xf0] sm:$0xff]
  %v2734 = vld [vmem:[#allocation2 + $0xf8] sm:$0xff]
  %v2735 = vld [vmem:[#allocation2 + $0x100] sm:$0xff]
  %v2736 = vld [vmem:[#allocation2 + $0x108] sm:$0xff]
  %v2737 = vld [vmem:[#allocation2 + $0x110] sm:$0xff]
  %v2738 = vld [vmem:[#allocation2 + $0x118] sm:$0xff]
  %v2739 = vld [vmem:[#allocation2 + $0x120] sm:$0xff]
  %v2740 = vld [vmem:[#allocation2 + $0x128] sm:$0xff]
  %v2741 = vld [vmem:[#allocation2 + $0x130] sm:$0xff]
  %v2742 = vld [vmem:[#allocation2 + $0x138] sm:$0xff]
  %v2743 = vld [vmem:[#allocation2 + $0x140] sm:$0xff]
  %v2744 = vld [vmem:[#allocation2 + $0x148] sm:$0xff]
  %v2745 = vld [vmem:[#allocation2 + $0x150] sm:$0xff]
  %v2746 = vld [vmem:[#allocation2 + $0x158] sm:$0xff]
  %v2747 = vld [vmem:[#allocation2 + $0x160] sm:$0xff]
  %v2748 = vld [vmem:[#allocation2 + $0x168] sm:$0xff]
  %v2749 = vld [vmem:[#allocation2 + $0x170] sm:$0xff]
  %v2750 = vld [vmem:[#allocation2 + $0x178] sm:$0xff]
  %v2751 = vld [vmem:[#allocation2 + $0x180] sm:$0xff]
  %v2752 = vld [vmem:[#allocation2 + $0x188] sm:$0xff]
  %v2753 = vld [vmem:[#allocation2 + $0x190] sm:$0xff]
  %v2754 = vld [vmem:[#allocation2 + $0x198] sm:$0xff]
  %v2755 = vld [vmem:[#allocation2 + $0x1a0] sm:$0xff]
  %v2756 = vld [vmem:[#allocation2 + $0x1a8] sm:$0xff]
  %v2757 = vld [vmem:[#allocation2 + $0x1b0] sm:$0xff]
  %v2758 = vld [vmem:[#allocation2 + $0x1b8] sm:$0xff]
  %v2759 = vld [vmem:[#allocation2 + $0x1c0] sm:$0xff]
  %v2760 = vld [vmem:[#allocation2 + $0x1c8] sm:$0xff]
  %v2761 = vld [vmem:[#allocation2 + $0x1d0] sm:$0xff]
  %v2762 = vld [vmem:[#allocation2 + $0x1d8] sm:$0xff]
  %v2763 = vld [vmem:[#allocation2 + $0x1e0] sm:$0xff]
  %v2764 = vld [vmem:[#allocation2 + $0x1e8] sm:$0xff]
  %v2765 = vld [vmem:[#allocation2 + $0x1f0] sm:$0xff]
  %v2766 = vld [vmem:[#allocation2 + $0x1f8] sm:$0xff]
  %v2767 = vld [vmem:[#allocation2 + $0x200] sm:$0xff]
  %v2768 = vld [vmem:[#allocation2 + $0x208] sm:$0xff]
  %v2769 = vld [vmem:[#allocation2 + $0x210] sm:$0xff]
  %v2770 = vld [vmem:[#allocation2 + $0x218] sm:$0xff]
  %v2771 = vld [vmem:[#allocation2 + $0x220] sm:$0xff]
  %v2772 = vld [vmem:[#allocation2 + $0x228] sm:$0xff]
  %v2773 = vld [vmem:[#allocation2 + $0x230] sm:$0xff]
  %v2774 = vld [vmem:[#allocation2 + $0x238] sm:$0xff]
  %v2775 = vld [vmem:[#allocation2 + $0x240] sm:$0xff]
  %v2776 = vld [vmem:[#allocation2 + $0x248] sm:$0xff]
  %v2777 = vld [vmem:[#allocation2 + $0x250] sm:$0xff]
  %v2778 = vld [vmem:[#allocation2 + $0x258] sm:$0xff]
  %v2779 = vld [vmem:[#allocation2 + $0x260] sm:$0xff]
  %v2780 = vld [vmem:[#allocation2 + $0x268] sm:$0xff]
  %v2781 = vld [vmem:[#allocation2 + $0x270] sm:$0xff]
  %v2782 = vld [vmem:[#allocation2 + $0x278] sm:$0xff]
  %v2783 = vld [vmem:[#allocation2 + $0x280] sm:$0xff]
  %v2784 = vld [vmem:[#allocation2 + $0x288] sm:$0xff]
  %v2785 = vld [vmem:[#allocation2 + $0x290] sm:$0xff]
  %v2786 = vld [vmem:[#allocation2 + $0x298] sm:$0xff]
  %v2787 = vld [vmem:[#allocation2 + $0x2a0] sm:$0xff]
  %v2788 = vld [vmem:[#allocation2 + $0x2a8] sm:$0xff]
  %v2789 = vld [vmem:[#allocation2 + $0x2b0] sm:$0xff]
  %v2790 = vld [vmem:[#allocation2 + $0x2b8] sm:$0xff]
  %v2791 = vld [vmem:[#allocation2 + $0x2c0] sm:$0xff]
  %v2792 = vld [vmem:[#allocation2 + $0x2c8] sm:$0xff]
  %v2793 = vld [vmem:[#allocation2 + $0x2d0] sm:$0xff]
  %v2794 = vld [vmem:[#allocation2 + $0x2d8] sm:$0xff]
  %v2795 = vld [vmem:[#allocation2 + $0x2e0] sm:$0xff]
  %v2796 = vld [vmem:[#allocation2 + $0x2e8] sm:$0xff]
  %v2797 = vld [vmem:[#allocation2 + $0x2f0] sm:$0xff]
  %v2798 = vld [vmem:[#allocation2 + $0x2f8] sm:$0xff]
  %v2799 = vld [vmem:[#allocation2 + $0x300] sm:$0xff]
  %v2800 = vld [vmem:[#allocation2 + $0x308] sm:$0xff]
  %v2801 = vld [vmem:[#allocation2 + $0x310] sm:$0xff]
  %v2802 = vld [vmem:[#allocation2 + $0x318] sm:$0xff]
  %v2803 = vld [vmem:[#allocation2 + $0x320] sm:$0xff]
  %v2804 = vld [vmem:[#allocation2 + $0x328] sm:$0xff]
  %v2805 = vld [vmem:[#allocation2 + $0x330] sm:$0xff]
  %v2806 = vld [vmem:[#allocation2 + $0x338] sm:$0xff]
  %v2807 = vld [vmem:[#allocation2 + $0x340] sm:$0xff]
  %v2808 = vld [vmem:[#allocation2 + $0x348] sm:$0xff]
  %v2809 = vld [vmem:[#allocation2 + $0x350] sm:$0xff]
  %v2810 = vld [vmem:[#allocation2 + $0x358] sm:$0xff]
  %v2811 = vld [vmem:[#allocation2 + $0x360] sm:$0xff]
  %v2812 = vld [vmem:[#allocation2 + $0x368] sm:$0xff]
  %v2813 = vld [vmem:[#allocation2 + $0x370] sm:$0xff]
  %v2814 = vld [vmem:[#allocation2 + $0x378] sm:$0xff]
  %v2815 = vld [vmem:[#allocation2 + $0x380] sm:$0xff]
  %v2816 = vld [vmem:[#allocation2 + $0x388] sm:$0xff]
  %v2817 = vld [vmem:[#allocation2 + $0x390] sm:$0xff]
  %v2818 = vld [vmem:[#allocation2 + $0x398] sm:$0xff]
  %v2819 = vld [vmem:[#allocation2 + $0x3a0] sm:$0xff]
  %v2820 = vld [vmem:[#allocation2 + $0x3a8] sm:$0xff]
  %v2821 = vld [vmem:[#allocation2 + $0x3b0] sm:$0xff]
  %v2822 = vld [vmem:[#allocation2 + $0x3b8] sm:$0xff]
  %v2823 = vld [vmem:[#allocation2 + $0x3c0] sm:$0xff]
  %v2824 = vld [vmem:[#allocation2 + $0x3c8] sm:$0xff]
  %v2825 = vld [vmem:[#allocation2 + $0x3d0] sm:$0xff]
  %v2826 = vld [vmem:[#allocation2 + $0x3d8] sm:$0xff]
  %v2827 = vld [vmem:[#allocation2 + $0x3e0] sm:$0xff]
  %v2828 = vld [vmem:[#allocation2 + $0x3e8] sm:$0xff]
  %v2829 = vld [vmem:[#allocation2 + $0x3f0] sm:$0xff]
  %v2830 = vld [vmem:[#allocation2 + $0x3f8] sm:$0xff]
  %v2831 = vld [vmem:[#allocation2 + $0x400] sm:$0xff]
  %v2832 = vld [vmem:[#allocation2 + $0x408] sm:$0xff]
  %v2833 = vld [vmem:[#allocation2 + $0x410] sm:$0xff]
  %v2834 = vld [vmem:[#allocation2 + $0x418] sm:$0xff]
  %v2835 = vld [vmem:[#allocation2 + $0x420] sm:$0xff]
  %v2836 = vld [vmem:[#allocation2 + $0x428] sm:$0xff]
  %v2837 = vld [vmem:[#allocation2 + $0x430] sm:$0xff]
  %v2838 = vld [vmem:[#allocation2 + $0x438] sm:$0xff]
  %v2839 = vld [vmem:[#allocation2 + $0x440] sm:$0xff]
  %v2840 = vld [vmem:[#allocation2 + $0x448] sm:$0xff]
  %v2841 = vld [vmem:[#allocation2 + $0x450] sm:$0xff]
  %v2842 = vld [vmem:[#allocation2 + $0x458] sm:$0xff]
  %v2843 = vld [vmem:[#allocation2 + $0x460] sm:$0xff]
  %v2844 = vld [vmem:[#allocation2 + $0x468] sm:$0xff]
  %v2845 = vld [vmem:[#allocation2 + $0x470] sm:$0xff]
  %v2846 = vld [vmem:[#allocation2 + $0x478] sm:$0xff]
  %v2847 = vld [vmem:[#allocation2 + $0x480] sm:$0xff]
  %v2848 = vld [vmem:[#allocation2 + $0x488] sm:$0xff]
  %v2849 = vld [vmem:[#allocation2 + $0x490] sm:$0xff]
  %v2850 = vld [vmem:[#allocation2 + $0x498] sm:$0xff]
  %v2851 = vld [vmem:[#allocation2 + $0x4a0] sm:$0xff]
  %v2852 = vld [vmem:[#allocation2 + $0x4a8] sm:$0xff]
  %v2853 = vld [vmem:[#allocation2 + $0x4b0] sm:$0xff]
  %v2854 = vld [vmem:[#allocation2 + $0x4b8] sm:$0xff]
  %v2855 = vld [vmem:[#allocation2 + $0x4c0] sm:$0xff]
  %v2856 = vld [vmem:[#allocation2 + $0x4c8] sm:$0xff]
  %v2857 = vld [vmem:[#allocation2 + $0x4d0] sm:$0xff]
  %v2858 = vld [vmem:[#allocation2 + $0x4d8] sm:$0xff]
  %v2859 = vld [vmem:[#allocation2 + $0x4e0] sm:$0xff]
  %v2860 = vld [vmem:[#allocation2 + $0x4e8] sm:$0xff]
  %v2861 = vld [vmem:[#allocation2 + $0x4f0] sm:$0xff]
  %v2862 = vld [vmem:[#allocation2 + $0x4f8] sm:$0xff]
  %v2863 = vld [vmem:[#allocation2 + $0x500] sm:$0xff]
  %v2864 = vld [vmem:[#allocation2 + $0x508] sm:$0xff]
  %v2865 = vld [vmem:[#allocation2 + $0x510] sm:$0xff]
  %v2866 = vld [vmem:[#allocation2 + $0x518] sm:$0xff]
  %v2867 = vld [vmem:[#allocation2 + $0x520] sm:$0xff]
  %v2868 = vld [vmem:[#allocation2 + $0x528] sm:$0xff]
  %v2869 = vld [vmem:[#allocation2 + $0x530] sm:$0xff]
  %v2870 = vld [vmem:[#allocation2 + $0x538] sm:$0xff]
  %v2871 = vld [vmem:[#allocation2 + $0x540] sm:$0xff]
  %v2872 = vld [vmem:[#allocation2 + $0x548] sm:$0xff]
  %v2873 = vld [vmem:[#allocation2 + $0x550] sm:$0xff]
  %v2874 = vld [vmem:[#allocation2 + $0x558] sm:$0xff]
  %v2875 = vld [vmem:[#allocation2 + $0x560] sm:$0xff]
  %v2876 = vld [vmem:[#allocation2 + $0x568] sm:$0xff]
  %v2877 = vld [vmem:[#allocation2 + $0x570] sm:$0xff]
  %v2878 = vld [vmem:[#allocation2 + $0x578] sm:$0xff]
  %v2879 = vld [vmem:[#allocation2 + $0x580] sm:$0xff]
  %v2880 = vld [vmem:[#allocation2 + $0x588] sm:$0xff]
  %v2881 = vld [vmem:[#allocation2 + $0x590] sm:$0xff]
  %v2882 = vld [vmem:[#allocation2 + $0x598] sm:$0xff]
  %v2883 = vld [vmem:[%s3] sm:$0xff]
  %v2884 = vld [vmem:[%s3 + $0x8] sm:$0xff]
  %2886 = vset.pattern.permute.xlu0 0
  %2887 = vperm.xlu0 %2886, %v2883
  %v2888 = vpop.permute.xlu0 %2887
  %2891 = vset.pattern.permute.xlu0 0
  %2892 = vperm.xlu0 %2891, %v2884
  %v2893 = vpop.permute.xlu0 %2892
  %v2896 = vsel %vm1225, %v2700, 0
  %v2899 = vsel %vm1225, %v2702, 0
  %2901 = vmatpush.msra.mxu0 %v2853
  %2902 = vmatpush.msra.mxu0 %v2843
  %2903 = vmatpush.msra.mxu0 %v2833
  %2904 = vmatpush.msra.mxu0 %v2823
  %2905 = vmatpush.msra.mxu0 %v2813
  %2906 = vmatpush.msra.mxu0 %v2803
  %2907 = vmatpush.msra.mxu0 %v2793
  %2908 = vmatpush.msra.mxu0 %v2783
  %2909 = vmatpush.msra.mxu0 %v2773
  %2910 = vmatpush.msra.mxu0 %v2763
  %2911 = vmatpush.msra.mxu0 %v2753
  %2912 = vmatpush.msra.mxu0 %v2743
  %2913 = vmatpush.msra.mxu0 %v2733
  %2914 = vmatpush.msra.mxu0 %v2723
  %2915 = vmatpush.msra.mxu0 %v2713
  %2916 = vmatpush.msra.mxu0 %v2703
  %2917 = vmatmul.f32.gmra.mxu0 %v2699
  %v2918 = vpop.f32.mrf.mxu0
  %v2919 = vadd.f32 %v2888, %v2918
  %2920 = vmatmul.f32.gmra.mxu0 %v2701
  %v2921 = vpop.f32.mrf.mxu0
  %v2922 = vadd.f32 %v2893, %v2921
  %2923 = vdwg.mxu0
  %2924 = vmatpush.msra.mxu0 0.0
  %2925 = vmatpush.msra.mxu0 0.0
  %2926 = vmatpush.msra.mxu0 0.0
  %2927 = vmatpush.msra.mxu0 0.0
  %2928 = vmatpush.msra.mxu0 0.0
  %2929 = vmatpush.msra.mxu0 0.0
  %2930 = vmatpush.msra.mxu0 0.0
  %2931 = vmatpush.msra.mxu0 0.0
  %2932 = vmatpush.msra.mxu0 0.0
  %2933 = vmatpush.msra.mxu0 0.0
  %2934 = vmatpush.msra.mxu0 0.0
  %2935 = vmatpush.msra.mxu0 0.0
  %2936 = vmatpush.msra.mxu0 0.0
  %2937 = vmatpush.msra.mxu0 0.0
  %2938 = vmatpush.msra.mxu0 %v2873
  %2939 = vmatpush.msra.mxu0 %v2863
  %2940 = vmatmul.f32.gmra.mxu0 %v2896
  %v2941 = vpop.f32.mrf.mxu0
  %v2942 = vadd.f32 %v2919, %v2941
  %2943 = vmatmul.f32.gmra.mxu0 %v2899
  %v2944 = vpop.f32.mrf.mxu0
  %v2945 = vadd.f32 %v2922, %v2944
  %2946 = vdwg.mxu0
  %2947 = vmatpush.msra.mxu0 %v2854
  %2948 = vmatpush.msra.mxu0 %v2844
  %2949 = vmatpush.msra.mxu0 %v2834
  %2950 = vmatpush.msra.mxu0 %v2824
  %2951 = vmatpush.msra.mxu0 %v2814
  %2952 = vmatpush.msra.mxu0 %v2804
  %2953 = vmatpush.msra.mxu0 %v2794
  %2954 = vmatpush.msra.mxu0 %v2784
  %2955 = vmatpush.msra.mxu0 %v2774
  %2956 = vmatpush.msra.mxu0 %v2764
  %2957 = vmatpush.msra.mxu0 %v2754
  %2958 = vmatpush.msra.mxu0 %v2744
  %2959 = vmatpush.msra.mxu0 %v2734
  %2960 = vmatpush.msra.mxu0 %v2724
  %2961 = vmatpush.msra.mxu0 %v2714
  %2962 = vmatpush.msra.mxu0 %v2704
  %2963 = vmatmul.f32.gmra.mxu0 %v2699
  %v2964 = vpop.f32.mrf.mxu0
  %v2965 = vadd.f32 %v2888, %v2964
  %2966 = vmatmul.f32.gmra.mxu0 %v2701
  %v2967 = vpop.f32.mrf.mxu0
  %v2968 = vadd.f32 %v2893, %v2967
  %2969 = vdwg.mxu0
  %2970 = vmatpush.msra.mxu0 0.0
  %2971 = vmatpush.msra.mxu0 0.0
  %2972 = vmatpush.msra.mxu0 0.0
  %2973 = vmatpush.msra.mxu0 0.0
  %2974 = vmatpush.msra.mxu0 0.0
  %2975 = vmatpush.msra.mxu0 0.0
  %2976 = vmatpush.msra.mxu0 0.0
  %2977 = vmatpush.msra.mxu0 0.0
  %2978 = vmatpush.msra.mxu0 0.0
  %2979 = vmatpush.msra.mxu0 0.0
  %2980 = vmatpush.msra.mxu0 0.0
  %2981 = vmatpush.msra.mxu0 0.0
  %2982 = vmatpush.msra.mxu0 0.0
  %2983 = vmatpush.msra.mxu0 0.0
  %2984 = vmatpush.msra.mxu0 %v2874
  %2985 = vmatpush.msra.mxu0 %v2864
  %2986 = vmatmul.f32.gmra.mxu0 %v2896
  %v2987 = vpop.f32.mrf.mxu0
  %v2988 = vadd.f32 %v2965, %v2987
  %2989 = vmatmul.f32.gmra.mxu0 %v2899
  %v2990 = vpop.f32.mrf.mxu0
  %v2991 = vadd.f32 %v2968, %v2990
  %2992 = vdwg.mxu0
  %2993 = vmatpush.msra.mxu0 %v2855
  %2994 = vmatpush.msra.mxu0 %v2845
  %2995 = vmatpush.msra.mxu0 %v2835
  %2996 = vmatpush.msra.mxu0 %v2825
  %2997 = vmatpush.msra.mxu0 %v2815
  %2998 = vmatpush.msra.mxu0 %v2805
  %2999 = vmatpush.msra.mxu0 %v2795
  %3000 = vmatpush.msra.mxu0 %v2785
  %3001 = vmatpush.msra.mxu0 %v2775
  %3002 = vmatpush.msra.mxu0 %v2765
  %3003 = vmatpush.msra.mxu0 %v2755
  %3004 = vmatpush.msra.mxu0 %v2745
  %3005 = vmatpush.msra.mxu0 %v2735
  %3006 = vmatpush.msra.mxu0 %v2725
  %3007 = vmatpush.msra.mxu0 %v2715
  %3008 = vmatpush.msra.mxu0 %v2705
  %3009 = vmatmul.f32.gmra.mxu0 %v2699
  %v3010 = vpop.f32.mrf.mxu0
  %v3011 = vadd.f32 %v2888, %v3010
  %3012 = vmatmul.f32.gmra.mxu0 %v2701
  %v3013 = vpop.f32.mrf.mxu0
  %v3014 = vadd.f32 %v2893, %v3013
  %3015 = vdwg.mxu0
  %3016 = vmatpush.msra.mxu0 0.0
  %3017 = vmatpush.msra.mxu0 0.0
  %3018 = vmatpush.msra.mxu0 0.0
  %3019 = vmatpush.msra.mxu0 0.0
  %3020 = vmatpush.msra.mxu0 0.0
  %3021 = vmatpush.msra.mxu0 0.0
  %3022 = vmatpush.msra.mxu0 0.0
  %3023 = vmatpush.msra.mxu0 0.0
  %3024 = vmatpush.msra.mxu0 0.0
  %3025 = vmatpush.msra.mxu0 0.0
  %3026 = vmatpush.msra.mxu0 0.0
  %3027 = vmatpush.msra.mxu0 0.0
  %3028 = vmatpush.msra.mxu0 0.0
  %3029 = vmatpush.msra.mxu0 0.0
  %3030 = vmatpush.msra.mxu0 %v2875
  %3031 = vmatpush.msra.mxu0 %v2865
  %3032 = vmatmul.f32.gmra.mxu0 %v2896
  %v3033 = vpop.f32.mrf.mxu0
  %v3034 = vadd.f32 %v3011, %v3033
  %3035 = vmatmul.f32.gmra.mxu0 %v2899
  %v3036 = vpop.f32.mrf.mxu0
  %v3037 = vadd.f32 %v3014, %v3036
  %3038 = vdwg.mxu0
  %3039 = vmatpush.msra.mxu0 %v2856
  %3040 = vmatpush.msra.mxu0 %v2846
  %3041 = vmatpush.msra.mxu0 %v2836
  %3042 = vmatpush.msra.mxu0 %v2826
  %3043 = vmatpush.msra.mxu0 %v2816
  %3044 = vmatpush.msra.mxu0 %v2806
  %3045 = vmatpush.msra.mxu0 %v2796
  %3046 = vmatpush.msra.mxu0 %v2786
  %3047 = vmatpush.msra.mxu0 %v2776
  %3048 = vmatpush.msra.mxu0 %v2766
  %3049 = vmatpush.msra.mxu0 %v2756
  %3050 = vmatpush.msra.mxu0 %v2746
  %3051 = vmatpush.msra.mxu0 %v2736
  %3052 = vmatpush.msra.mxu0 %v2726
  %3053 = vmatpush.msra.mxu0 %v2716
  %3054 = vmatpush.msra.mxu0 %v2706
  %3055 = vmatmul.f32.gmra.mxu0 %v2699
  %v3056 = vpop.f32.mrf.mxu0
  %v3057 = vadd.f32 %v2888, %v3056
  %3058 = vmatmul.f32.gmra.mxu0 %v2701
  %v3059 = vpop.f32.mrf.mxu0
  %v3060 = vadd.f32 %v2893, %v3059
  %3061 = vdwg.mxu0
  %3062 = vmatpush.msra.mxu0 0.0
  %3063 = vmatpush.msra.mxu0 0.0
  %3064 = vmatpush.msra.mxu0 0.0
  %3065 = vmatpush.msra.mxu0 0.0
  %3066 = vmatpush.msra.mxu0 0.0
  %3067 = vmatpush.msra.mxu0 0.0
  %3068 = vmatpush.msra.mxu0 0.0
  %3069 = vmatpush.msra.mxu0 0.0
  %3070 = vmatpush.msra.mxu0 0.0
  %3071 = vmatpush.msra.mxu0 0.0
  %3072 = vmatpush.msra.mxu0 0.0
  %3073 = vmatpush.msra.mxu0 0.0
  %3074 = vmatpush.msra.mxu0 0.0
  %3075 = vmatpush.msra.mxu0 0.0
  %3076 = vmatpush.msra.mxu0 %v2876
  %3077 = vmatpush.msra.mxu0 %v2866
  %3078 = vmatmul.f32.gmra.mxu0 %v2896
  %v3079 = vpop.f32.mrf.mxu0
  %v3080 = vadd.f32 %v3057, %v3079
  %3081 = vmatmul.f32.gmra.mxu0 %v2899
  %v3082 = vpop.f32.mrf.mxu0
  %v3083 = vadd.f32 %v3060, %v3082
  %3084 = vdwg.mxu0
  %3085 = vmatpush.msra.mxu0 %v2857
  %3086 = vmatpush.msra.mxu0 %v2847
  %3087 = vmatpush.msra.mxu0 %v2837
  %3088 = vmatpush.msra.mxu0 %v2827
  %3089 = vmatpush.msra.mxu0 %v2817
  %3090 = vmatpush.msra.mxu0 %v2807
  %3091 = vmatpush.msra.mxu0 %v2797
  %3092 = vmatpush.msra.mxu0 %v2787
  %3093 = vmatpush.msra.mxu0 %v2777
  %3094 = vmatpush.msra.mxu0 %v2767
  %3095 = vmatpush.msra.mxu0 %v2757
  %3096 = vmatpush.msra.mxu0 %v2747
  %3097 = vmatpush.msra.mxu0 %v2737
  %3098 = vmatpush.msra.mxu0 %v2727
  %3099 = vmatpush.msra.mxu0 %v2717
  %3100 = vmatpush.msra.mxu0 %v2707
  %3101 = vmatmul.f32.gmra.mxu0 %v2699
  %v3102 = vpop.f32.mrf.mxu0
  %v3103 = vadd.f32 %v2888, %v3102
  %3104 = vmatmul.f32.gmra.mxu0 %v2701
  %v3105 = vpop.f32.mrf.mxu0
  %v3106 = vadd.f32 %v2893, %v3105
  %3107 = vdwg.mxu0
  %3108 = vmatpush.msra.mxu0 0.0
  %3109 = vmatpush.msra.mxu0 0.0
  %3110 = vmatpush.msra.mxu0 0.0
  %3111 = vmatpush.msra.mxu0 0.0
  %3112 = vmatpush.msra.mxu0 0.0
  %3113 = vmatpush.msra.mxu0 0.0
  %3114 = vmatpush.msra.mxu0 0.0
  %3115 = vmatpush.msra.mxu0 0.0
  %3116 = vmatpush.msra.mxu0 0.0
  %3117 = vmatpush.msra.mxu0 0.0
  %3118 = vmatpush.msra.mxu0 0.0
  %3119 = vmatpush.msra.mxu0 0.0
  %3120 = vmatpush.msra.mxu0 0.0
  %3121 = vmatpush.msra.mxu0 0.0
  %3122 = vmatpush.msra.mxu0 %v2877
  %3123 = vmatpush.msra.mxu0 %v2867
  %3124 = vmatmul.f32.gmra.mxu0 %v2896
  %v3125 = vpop.f32.mrf.mxu0
  %v3126 = vadd.f32 %v3103, %v3125
  %3127 = vmatmul.f32.gmra.mxu0 %v2899
  %v3128 = vpop.f32.mrf.mxu0
  %v3129 = vadd.f32 %v3106, %v3128
  %3130 = vdwg.mxu0
  %3131 = vmatpush.msra.mxu0 %v2858
  %3132 = vmatpush.msra.mxu0 %v2848
  %3133 = vmatpush.msra.mxu0 %v2838
  %3134 = vmatpush.msra.mxu0 %v2828
  %3135 = vmatpush.msra.mxu0 %v2818
  %3136 = vmatpush.msra.mxu0 %v2808
  %3137 = vmatpush.msra.mxu0 %v2798
  %3138 = vmatpush.msra.mxu0 %v2788
  %3139 = vmatpush.msra.mxu0 %v2778
  %3140 = vmatpush.msra.mxu0 %v2768
  %3141 = vmatpush.msra.mxu0 %v2758
  %3142 = vmatpush.msra.mxu0 %v2748
  %3143 = vmatpush.msra.mxu0 %v2738
  %3144 = vmatpush.msra.mxu0 %v2728
  %3145 = vmatpush.msra.mxu0 %v2718
  %3146 = vmatpush.msra.mxu0 %v2708
  %3147 = vmatmul.f32.gmra.mxu0 %v2699
  %v3148 = vpop.f32.mrf.mxu0
  %v3149 = vadd.f32 %v2888, %v3148
  %3150 = vmatmul.f32.gmra.mxu0 %v2701
  %v3151 = vpop.f32.mrf.mxu0
  %v3152 = vadd.f32 %v2893, %v3151
  %3153 = vdwg.mxu0
  %3154 = vmatpush.msra.mxu0 0.0
  %3155 = vmatpush.msra.mxu0 0.0
  %3156 = vmatpush.msra.mxu0 0.0
  %3157 = vmatpush.msra.mxu0 0.0
  %3158 = vmatpush.msra.mxu0 0.0
  %3159 = vmatpush.msra.mxu0 0.0
  %3160 = vmatpush.msra.mxu0 0.0
  %3161 = vmatpush.msra.mxu0 0.0
  %3162 = vmatpush.msra.mxu0 0.0
  %3163 = vmatpush.msra.mxu0 0.0
  %3164 = vmatpush.msra.mxu0 0.0
  %3165 = vmatpush.msra.mxu0 0.0
  %3166 = vmatpush.msra.mxu0 0.0
  %3167 = vmatpush.msra.mxu0 0.0
  %3168 = vmatpush.msra.mxu0 %v2878
  %3169 = vmatpush.msra.mxu0 %v2868
  %3170 = vmatmul.f32.gmra.mxu0 %v2896
  %v3171 = vpop.f32.mrf.mxu0
  %v3172 = vadd.f32 %v3149, %v3171
  %3173 = vmatmul.f32.gmra.mxu0 %v2899
  %v3174 = vpop.f32.mrf.mxu0
  %v3175 = vadd.f32 %v3152, %v3174
  %3176 = vdwg.mxu0
  %3177 = vmatpush.msra.mxu0 %v2859
  %3178 = vmatpush.msra.mxu0 %v2849
  %3179 = vmatpush.msra.mxu0 %v2839
  %3180 = vmatpush.msra.mxu0 %v2829
  %3181 = vmatpush.msra.mxu0 %v2819
  %3182 = vmatpush.msra.mxu0 %v2809
  %3183 = vmatpush.msra.mxu0 %v2799
  %3184 = vmatpush.msra.mxu0 %v2789
  %3185 = vmatpush.msra.mxu0 %v2779
  %3186 = vmatpush.msra.mxu0 %v2769
  %3187 = vmatpush.msra.mxu0 %v2759
  %3188 = vmatpush.msra.mxu0 %v2749
  %3189 = vmatpush.msra.mxu0 %v2739
  %3190 = vmatpush.msra.mxu0 %v2729
  %3191 = vmatpush.msra.mxu0 %v2719
  %3192 = vmatpush.msra.mxu0 %v2709
  %3193 = vmatmul.f32.gmra.mxu0 %v2699
  %v3194 = vpop.f32.mrf.mxu0
  %v3195 = vadd.f32 %v2888, %v3194
  %3196 = vmatmul.f32.gmra.mxu0 %v2701
  %v3197 = vpop.f32.mrf.mxu0
  %v3198 = vadd.f32 %v2893, %v3197
  %3199 = vdwg.mxu0
  %3200 = vmatpush.msra.mxu0 0.0
  %3201 = vmatpush.msra.mxu0 0.0
  %3202 = vmatpush.msra.mxu0 0.0
  %3203 = vmatpush.msra.mxu0 0.0
  %3204 = vmatpush.msra.mxu0 0.0
  %3205 = vmatpush.msra.mxu0 0.0
  %3206 = vmatpush.msra.mxu0 0.0
  %3207 = vmatpush.msra.mxu0 0.0
  %3208 = vmatpush.msra.mxu0 0.0
  %3209 = vmatpush.msra.mxu0 0.0
  %3210 = vmatpush.msra.mxu0 0.0
  %3211 = vmatpush.msra.mxu0 0.0
  %3212 = vmatpush.msra.mxu0 0.0
  %3213 = vmatpush.msra.mxu0 0.0
  %3214 = vmatpush.msra.mxu0 %v2879
  %3215 = vmatpush.msra.mxu0 %v2869
  %3216 = vmatmul.f32.gmra.mxu0 %v2896
  %v3217 = vpop.f32.mrf.mxu0
  %v3218 = vadd.f32 %v3195, %v3217
  %3219 = vmatmul.f32.gmra.mxu0 %v2899
  %v3220 = vpop.f32.mrf.mxu0
  %v3221 = vadd.f32 %v3198, %v3220
  %3222 = vdwg.mxu0
  %3223 = vmatpush.msra.mxu0 %v2860
  %3224 = vmatpush.msra.mxu0 %v2850
  %3225 = vmatpush.msra.mxu0 %v2840
  %3226 = vmatpush.msra.mxu0 %v2830
  %3227 = vmatpush.msra.mxu0 %v2820
  %3228 = vmatpush.msra.mxu0 %v2810
  %3229 = vmatpush.msra.mxu0 %v2800
  %3230 = vmatpush.msra.mxu0 %v2790
  %3231 = vmatpush.msra.mxu0 %v2780
  %3232 = vmatpush.msra.mxu0 %v2770
  %3233 = vmatpush.msra.mxu0 %v2760
  %3234 = vmatpush.msra.mxu0 %v2750
  %3235 = vmatpush.msra.mxu0 %v2740
  %3236 = vmatpush.msra.mxu0 %v2730
  %3237 = vmatpush.msra.mxu0 %v2720
  %3238 = vmatpush.msra.mxu0 %v2710
  %3239 = vmatmul.f32.gmra.mxu0 %v2699
  %v3240 = vpop.f32.mrf.mxu0
  %v3241 = vadd.f32 %v2888, %v3240
  %3242 = vmatmul.f32.gmra.mxu0 %v2701
  %v3243 = vpop.f32.mrf.mxu0
  %v3244 = vadd.f32 %v2893, %v3243
  %3245 = vdwg.mxu0
  %3246 = vmatpush.msra.mxu0 0.0
  %3247 = vmatpush.msra.mxu0 0.0
  %3248 = vmatpush.msra.mxu0 0.0
  %3249 = vmatpush.msra.mxu0 0.0
  %3250 = vmatpush.msra.mxu0 0.0
  %3251 = vmatpush.msra.mxu0 0.0
  %3252 = vmatpush.msra.mxu0 0.0
  %3253 = vmatpush.msra.mxu0 0.0
  %3254 = vmatpush.msra.mxu0 0.0
  %3255 = vmatpush.msra.mxu0 0.0
  %3256 = vmatpush.msra.mxu0 0.0
  %3257 = vmatpush.msra.mxu0 0.0
  %3258 = vmatpush.msra.mxu0 0.0
  %3259 = vmatpush.msra.mxu0 0.0
  %3260 = vmatpush.msra.mxu0 %v2880
  %3261 = vmatpush.msra.mxu0 %v2870
  %3262 = vmatmul.f32.gmra.mxu0 %v2896
  %v3263 = vpop.f32.mrf.mxu0
  %v3264 = vadd.f32 %v3241, %v3263
  %3265 = vmatmul.f32.gmra.mxu0 %v2899
  %v3266 = vpop.f32.mrf.mxu0
  %v3267 = vadd.f32 %v3244, %v3266
  %3268 = vdwg.mxu0
  %3269 = vmatpush.msra.mxu0 %v2861
  %3270 = vmatpush.msra.mxu0 %v2851
  %3271 = vmatpush.msra.mxu0 %v2841
  %3272 = vmatpush.msra.mxu0 %v2831
  %3273 = vmatpush.msra.mxu0 %v2821
  %3274 = vmatpush.msra.mxu0 %v2811
  %3275 = vmatpush.msra.mxu0 %v2801
  %3276 = vmatpush.msra.mxu0 %v2791
  %3277 = vmatpush.msra.mxu0 %v2781
  %3278 = vmatpush.msra.mxu0 %v2771
  %3279 = vmatpush.msra.mxu0 %v2761
  %3280 = vmatpush.msra.mxu0 %v2751
  %3281 = vmatpush.msra.mxu0 %v2741
  %3282 = vmatpush.msra.mxu0 %v2731
  %3283 = vmatpush.msra.mxu0 %v2721
  %3284 = vmatpush.msra.mxu0 %v2711
  %3285 = vmatmul.f32.gmra.mxu0 %v2699
  %v3286 = vpop.f32.mrf.mxu0
  %v3287 = vadd.f32 %v2888, %v3286
  %3288 = vmatmul.f32.gmra.mxu0 %v2701
  %v3289 = vpop.f32.mrf.mxu0
  %v3290 = vadd.f32 %v2893, %v3289
  %3291 = vdwg.mxu0
  %3292 = vmatpush.msra.mxu0 0.0
  %3293 = vmatpush.msra.mxu0 0.0
  %3294 = vmatpush.msra.mxu0 0.0
  %3295 = vmatpush.msra.mxu0 0.0
  %3296 = vmatpush.msra.mxu0 0.0
  %3297 = vmatpush.msra.mxu0 0.0
  %3298 = vmatpush.msra.mxu0 0.0
  %3299 = vmatpush.msra.mxu0 0.0
  %3300 = vmatpush.msra.mxu0 0.0
  %3301 = vmatpush.msra.mxu0 0.0
  %3302 = vmatpush.msra.mxu0 0.0
  %3303 = vmatpush.msra.mxu0 0.0
  %3304 = vmatpush.msra.mxu0 0.0
  %3305 = vmatpush.msra.mxu0 0.0
  %3306 = vmatpush.msra.mxu0 %v2881
  %3307 = vmatpush.msra.mxu0 %v2871
  %3308 = vmatmul.f32.gmra.mxu0 %v2896
  %v3309 = vpop.f32.mrf.mxu0
  %v3310 = vadd.f32 %v3287, %v3309
  %3311 = vmatmul.f32.gmra.mxu0 %v2899
  %v3312 = vpop.f32.mrf.mxu0
  %v3313 = vadd.f32 %v3290, %v3312
  %3314 = vdwg.mxu0
  %3315 = vmatpush.msra.mxu0 %v2862
  %3316 = vmatpush.msra.mxu0 %v2852
  %3317 = vmatpush.msra.mxu0 %v2842
  %3318 = vmatpush.msra.mxu0 %v2832
  %3319 = vmatpush.msra.mxu0 %v2822
  %3320 = vmatpush.msra.mxu0 %v2812
  %3321 = vmatpush.msra.mxu0 %v2802
  %3322 = vmatpush.msra.mxu0 %v2792
  %3323 = vmatpush.msra.mxu0 %v2782
  %3324 = vmatpush.msra.mxu0 %v2772
  %3325 = vmatpush.msra.mxu0 %v2762
  %3326 = vmatpush.msra.mxu0 %v2752
  %3327 = vmatpush.msra.mxu0 %v2742
  %3328 = vmatpush.msra.mxu0 %v2732
  %3329 = vmatpush.msra.mxu0 %v2722
  %3330 = vmatpush.msra.mxu0 %v2712
  %3331 = vmatmul.f32.gmra.mxu0 %v2699
  %v3332 = vpop.f32.mrf.mxu0
  %v3333 = vadd.f32 %v2888, %v3332
  %3334 = vmatmul.f32.gmra.mxu0 %v2701
  %v3335 = vpop.f32.mrf.mxu0
  %v3336 = vadd.f32 %v2893, %v3335
  %3337 = vdwg.mxu0
  %3338 = vmatpush.msra.mxu0 0.0
  %3339 = vmatpush.msra.mxu0 0.0
  %3340 = vmatpush.msra.mxu0 0.0
  %3341 = vmatpush.msra.mxu0 0.0
  %3342 = vmatpush.msra.mxu0 0.0
  %3343 = vmatpush.msra.mxu0 0.0
  %3344 = vmatpush.msra.mxu0 0.0
  %3345 = vmatpush.msra.mxu0 0.0
  %3346 = vmatpush.msra.mxu0 0.0
  %3347 = vmatpush.msra.mxu0 0.0
  %3348 = vmatpush.msra.mxu0 0.0
  %3349 = vmatpush.msra.mxu0 0.0
  %3350 = vmatpush.msra.mxu0 0.0
  %3351 = vmatpush.msra.mxu0 0.0
  %3352 = vmatpush.msra.mxu0 %v2882
  %3353 = vmatpush.msra.mxu0 %v2872
  %3354 = vmatmul.f32.gmra.mxu0 %v2896
  %v3355 = vpop.f32.mrf.mxu0
  %v3356 = vadd.f32 %v3333, %v3355
  %3357 = vmatmul.f32.gmra.mxu0 %v2899
  %v3358 = vpop.f32.mrf.mxu0
  %v3359 = vadd.f32 %v3336, %v3358
  %3360 = vdwg.mxu0
  %v3361 = vmax.f32 %v2942, 0.0
  %v3362 = vmax.f32 %v2988, 0.0
  %v3363 = vmax.f32 %v3034, 0.0
  %v3364 = vmax.f32 %v3080, 0.0
  %v3365 = vmax.f32 %v3126, 0.0
  %v3366 = vmax.f32 %v3172, 0.0
  %v3367 = vmax.f32 %v3218, 0.0
  %v3368 = vmax.f32 %v3264, 0.0
  %v3369 = vmax.f32 %v3310, 0.0
  %v3370 = vmax.f32 %v3356, 0.0
  %v3371 = vmax.f32 %v2945, 0.0
  %v3372 = vmax.f32 %v2991, 0.0
  %v3373 = vmax.f32 %v3037, 0.0
  %v3374 = vmax.f32 %v3083, 0.0
  %v3375 = vmax.f32 %v3129, 0.0
  %v3376 = vmax.f32 %v3175, 0.0
  %v3377 = vmax.f32 %v3221, 0.0
  %v3378 = vmax.f32 %v3267, 0.0
  %v3379 = vmax.f32 %v3313, 0.0
  %v3380 = vmax.f32 %v3359, 0.0
  %v3381 = vmul.f32 %v3361, %v1714
  %v3382 = vmul.f32 %v3362, %v1715
  %v3383 = vmul.f32 %v3363, %v1716
  %v3384 = vmul.f32 %v3364, %v1717
  %v3385 = vmul.f32 %v3365, %v1718
  %v3386 = vmul.f32 %v3366, %v1719
  %v3387 = vmul.f32 %v3367, %v1720
  %v3388 = vmul.f32 %v3368, %v1721
  %v3389 = vmul.f32 %v3369, %v1722
  %v3390 = vmul.f32 %v3370, %v1723
  %v3391 = vmul.f32 %v3371, %v1714
  %v3392 = vmul.f32 %v3372, %v1715
  %v3393 = vmul.f32 %v3373, %v1716
  %v3394 = vmul.f32 %v3374, %v1717
  %v3395 = vmul.f32 %v3375, %v1718
  %v3396 = vmul.f32 %v3376, %v1719
  %v3397 = vmul.f32 %v3377, %v1720
  %v3398 = vmul.f32 %v3378, %v1721
  %v3399 = vmul.f32 %v3379, %v1722
  %v3400 = vmul.f32 %v3380, %v1723
  %v3401 = vadd.f32 %v3381, %v3382
  %v3402 = vadd.f32 %v3401, %v3383
  %v3403 = vadd.f32 %v3402, %v3384
  %v3404 = vadd.f32 %v3403, %v3385
  %v3405 = vadd.f32 %v3404, %v3386
  %v3406 = vadd.f32 %v3405, %v3387
  %v3407 = vadd.f32 %v3406, %v3388
  %v3408 = vadd.f32 %v3407, %v3389
  %v3409 = vadd.f32 %v3408, %v3390
  %3410 = vadd.xlane.f32.xlu0 %v3409
  %v3411 = vpop.xlane.xlu0 %3410
  %v3412 = vadd.f32 %v3391, %v3392
  %v3413 = vadd.f32 %v3412, %v3393
  %v3414 = vadd.f32 %v3413, %v3394
  %v3415 = vadd.f32 %v3414, %v3395
  %v3416 = vadd.f32 %v3415, %v3396
  %v3417 = vadd.f32 %v3416, %v3397
  %v3418 = vadd.f32 %v3417, %v3398
  %v3419 = vadd.f32 %v3418, %v3399
  %v3420 = vadd.f32 %v3419, %v3400
  %3421 = vadd.xlane.f32.xlu0 %v3420
  %v3422 = vpop.xlane.xlu0 %3421
  %v3423 = vadd.f32 %v1776, %v3411
  %v3424 = vadd.f32 %v1777, %v3422
  %v3425 = vmul.f32 %v3381, %v3381
  %v3426 = vmul.f32 %v3382, %v3382
  %v3427 = vmul.f32 %v3383, %v3383
  %v3428 = vmul.f32 %v3384, %v3384
  %v3429 = vmul.f32 %v3385, %v3385
  %v3430 = vmul.f32 %v3386, %v3386
  %v3431 = vmul.f32 %v3387, %v3387
  %v3432 = vmul.f32 %v3388, %v3388
  %v3433 = vmul.f32 %v3389, %v3389
  %v3434 = vmul.f32 %v3390, %v3390
  %v3435 = vmul.f32 %v3391, %v3391
  %v3436 = vmul.f32 %v3392, %v3392
  %v3437 = vmul.f32 %v3393, %v3393
  %v3438 = vmul.f32 %v3394, %v3394
  %v3439 = vmul.f32 %v3395, %v3395
  %v3440 = vmul.f32 %v3396, %v3396
  %v3441 = vmul.f32 %v3397, %v3397
  %v3442 = vmul.f32 %v3398, %v3398
  %v3443 = vmul.f32 %v3399, %v3399
  %v3444 = vmul.f32 %v3400, %v3400
  %v3445 = vadd.f32 %v3425, %v3426
  %v3446 = vadd.f32 %v3445, %v3427
  %v3447 = vadd.f32 %v3446, %v3428
  %v3448 = vadd.f32 %v3447, %v3429
  %v3449 = vadd.f32 %v3448, %v3430
  %v3450 = vadd.f32 %v3449, %v3431
  %v3451 = vadd.f32 %v3450, %v3432
  %v3452 = vadd.f32 %v3451, %v3433
  %v3453 = vadd.f32 %v3452, %v3434
  %3454 = vadd.xlane.f32.xlu0 %v3453
  %v3455 = vpop.xlane.xlu0 %3454
  %v3456 = vadd.f32 %v3435, %v3436
  %v3457 = vadd.f32 %v3456, %v3437
  %v3458 = vadd.f32 %v3457, %v3438
  %v3459 = vadd.f32 %v3458, %v3439
  %v3460 = vadd.f32 %v3459, %v3440
  %v3461 = vadd.f32 %v3460, %v3441
  %v3462 = vadd.f32 %v3461, %v3442
  %v3463 = vadd.f32 %v3462, %v3443
  %v3464 = vadd.f32 %v3463, %v3444
  %3465 = vadd.xlane.f32.xlu0 %v3464
  %v3466 = vpop.xlane.xlu0 %3465
  %v3467 = vadd.f32 %v1820, %v3455
  %v3468 = vadd.f32 %v1821, %v3466
  %v3469 = vld [vmem:[%s4] sm:$0xff]
  %v3470 = vld [vmem:[%s4 + $0x8] sm:$0xff]
  %v3471 = vadd.f32 %v3469, %v3423
  %v3472 = vadd.f32 %v3470, %v3424
  %vm3473 = vcmask 7168
  %3474 = vst.msk [vmem:[%s4] sm:$0xff] %vm3473, %v3471
  %3475 = vst.msk [vmem:[%s4 + $0x8] sm:$0xff] %vm3473, %v3472
  %v3476 = vld [vmem:[%s5] sm:$0xff]
  %v3477 = vld [vmem:[%s5 + $0x8] sm:$0xff]
  %v3478 = vadd.f32 %v3476, %v3467
  %v3479 = vadd.f32 %v3477, %v3468
  %3480 = vst.msk [vmem:[%s5] sm:$0xff] %vm3473, %v3478
  %3481 = vst.msk [vmem:[%s5 + $0x8] sm:$0xff] %vm3473, %v3479
  // Predicated region
  $region22: #{model_forward.2} parent=0 // pred_check
    _
  $region23: #{model_forward.2} parent=0 // pred_check_branch
    %3483 = sbr.rel (0) target = $region25
  $region24: #{model_forward.2} parent=0 // pred_region
    _
  $region25: #{model_forward.2} parent=0 // pred_fallthru
    _
  // Predicated region
  $region26: #{model_forward.2} parent=0 // pred_check
    _
  $region27: #{model_forward.2} parent=0 // pred_check_branch
    %3485 = sbr.rel (0) target = $region29
  $region28: #{model_forward.2} parent=0 // pred_region
    _
  $region29: #{model_forward.2} parent=0 // pred_fallthru
    _
  // Predicated region
  $region30: #{model_forward.2} parent=0 // pred_check
    _
  $region31: #{model_forward.2} parent=0 // pred_check_branch
    %3487 = sbr.rel (0) target = $region33
  $region32: #{model_forward.2} parent=0 // pred_region
    _
  $region33: #{model_forward.2} parent=0 // pred_fallthru
    _
  // Predicated region
  $region34: #{model_forward.2} parent=0 // pred_check
    _
  $region35: #{model_forward.2} parent=0 // pred_check_branch
    %3489 = sbr.rel (0) target = $region37
  $region36: #{model_forward.2} parent=0 // pred_region
    _
  $region37: #{model_forward.2} parent=0 // pred_fallthru
    _

// kernel: model_forward.3
$region0: #{model_forward.3}
  #allocation0 [shape = 'u32[]', space=smem, size = 0x4, offset = 0x4, fixed_abs, tag = 'smem constant byte address 0x4 - core index']
  #allocation1 [shape = 'u32[72,128]{1,0:T(1,128)}', space=vmem, size = 0x9000, scoped, tag = 'internal scratch']
  #allocation2 [shape = 'f32[144,1280]{1,0:T(8,128)}', space=vmem, size = 0xb4000, scoped, tag = 'scratch operand']
  %s0 = inlined_call_operand.vmem [shape: f32[2,12,1280], index: 0, kind: input, shape index: {}]
  %s1 = inlined_call_operand.vmem [shape: f32[16,144], index: 1, kind: input, shape index: {}]
  %s2 = inlined_call_operand.vmem [shape: f32[16,1], index: 2, kind: input, shape index: {}]
  %s3 = inlined_call_operand.vmem [shape: f32[16,1], index: 3, kind: input, shape index: {}]
  %s4 = inlined_call_operand.vmem [shape: f32[16,1], index: 4, kind: input, shape index: {}]
  %s5 = inlined_call_operand.vmem [shape: f32[2,16,1280], index: 5, kind: output, shape index: {}]
  %s6 = sld [smem:[#allocation0]]
  $region30: #{model_forward.3} parent=0
    _
  %s8 = ssub.s32 1, %s6
  %s9 = scalar_select 0, %s8, %s6
  // Predicated region
  $region2: #{model_forward.3} parent=0 // pred_check
    _
  $region3: #{model_forward.3} parent=0 // pred_check_branch
    %11 = sbr.rel (0) target = $region5
  $region4: #{model_forward.3} parent=0 // pred_region
    _
  $region5: #{model_forward.3} parent=0 // pred_fallthru
    _
  // Predicated region
  $region6: #{model_forward.3} parent=0 // pred_check
    _
  $region7: #{model_forward.3} parent=0 // pred_check_branch
    %13 = sbr.rel (0) target = $region9
  $region8: #{model_forward.3} parent=0 // pred_region
    _
  $region9: #{model_forward.3} parent=0 // pred_fallthru
    _
  // Predicated region
  $region10: #{model_forward.3} parent=0 // pred_check
    _
  $region11: #{model_forward.3} parent=0 // pred_check_branch
    %15 = sbr.rel (0) target = $region13
  $region12: #{model_forward.3} parent=0 // pred_region
    _
  $region13: #{model_forward.3} parent=0 // pred_fallthru
    _
  // Predicated region
  $region14: #{model_forward.3} parent=0 // pred_check
    _
  $region15: #{model_forward.3} parent=0 // pred_check_branch
    %17 = sbr.rel (0) target = $region17
  $region16: #{model_forward.3} parent=0 // pred_region
    _
  $region17: #{model_forward.3} parent=0 // pred_fallthru
    _
  // Predicated region
  $region18: #{model_forward.3} parent=0 // pred_check
    _
  $region19: #{model_forward.3} parent=0 // pred_check_branch
    %19 = sbr.rel (0) target = $region21
  $region20: #{model_forward.3} parent=0 // pred_region
    _
  $region21: #{model_forward.3} parent=0 // pred_fallthru
    _
  %20 = vst [vmem:[#allocation2 + $0x50] sm:$0xf0] 0.0
  %21 = vst [vmem:[#allocation2 + $0x58] sm:$0xf0] 0.0
  %22 = vst [vmem:[#allocation2 + $0x60] sm:$0xf0] 0.0
  %23 = vst [vmem:[#allocation2 + $0x68] sm:$0xf0] 0.0
  %24 = vst [vmem:[#allocation2 + $0x70] sm:$0xf0] 0.0
  %25 = vst [vmem:[#allocation2 + $0x78] sm:$0xf0] 0.0
  %26 = vst [vmem:[#allocation2 + $0x80] sm:$0xf0] 0.0
  %27 = vst [vmem:[#allocation2 + $0x88] sm:$0xf0] 0.0
  %28 = vst [vmem:[#allocation2 + $0x90] sm:$0xf0] 0.0
  %29 = vst [vmem:[#allocation2 + $0x98] sm:$0xf0] 0.0
  %30 = vst [vmem:[#allocation2 + $0xf0] sm:$0xf0] 0.0
  %31 = vst [vmem:[#allocation2 + $0xf8] sm:$0xf0] 0.0
  %32 = vst [vmem:[#allocation2 + $0x100] sm:$0xf0] 0.0
  %33 = vst [vmem:[#allocation2 + $0x108] sm:$0xf0] 0.0
  %34 = vst [vmem:[#allocation2 + $0x110] sm:$0xf0] 0.0
  %35 = vst [vmem:[#allocation2 + $0x118] sm:$0xf0] 0.0
  %36 = vst [vmem:[#allocation2 + $0x120] sm:$0xf0] 0.0
  %37 = vst [vmem:[#allocation2 + $0x128] sm:$0xf0] 0.0
  %38 = vst [vmem:[#allocation2 + $0x130] sm:$0xf0] 0.0
  %39 = vst [vmem:[#allocation2 + $0x138] sm:$0xf0] 0.0
  %40 = vst [vmem:[#allocation2 + $0x190] sm:$0xf0] 0.0
  %41 = vst [vmem:[#allocation2 + $0x198] sm:$0xf0] 0.0
  %42 = vst [vmem:[#allocation2 + $0x1a0] sm:$0xf0] 0.0
  %43 = vst [vmem:[#allocation2 + $0x1a8] sm:$0xf0] 0.0
  %44 = vst [vmem:[#allocation2 + $0x1b0] sm:$0xf0] 0.0
  %45 = vst [vmem:[#allocation2 + $0x1b8] sm:$0xf0] 0.0
  %46 = vst [vmem:[#allocation2 + $0x1c0] sm:$0xf0] 0.0
  %47 = vst [vmem:[#allocation2 + $0x1c8] sm:$0xf0] 0.0
  %48 = vst [vmem:[#allocation2 + $0x1d0] sm:$0xf0] 0.0
  %49 = vst [vmem:[#allocation2 + $0x1d8] sm:$0xf0] 0.0
  %50 = vst [vmem:[#allocation2 + $0x230] sm:$0xf0] 0.0
  %51 = vst [vmem:[#allocation2 + $0x238] sm:$0xf0] 0.0
  %52 = vst [vmem:[#allocation2 + $0x240] sm:$0xf0] 0.0
  %53 = vst [vmem:[#allocation2 + $0x248] sm:$0xf0] 0.0
  %54 = vst [vmem:[#allocation2 + $0x250] sm:$0xf0] 0.0
  %55 = vst [vmem:[#allocation2 + $0x258] sm:$0xf0] 0.0
  %56 = vst [vmem:[#allocation2 + $0x260] sm:$0xf0] 0.0
  %57 = vst [vmem:[#allocation2 + $0x268] sm:$0xf0] 0.0
  %58 = vst [vmem:[#allocation2 + $0x270] sm:$0xf0] 0.0
  %59 = vst [vmem:[#allocation2 + $0x278] sm:$0xf0] 0.0
  %60 = vst [vmem:[#allocation2 + $0x2d0] sm:$0xf0] 0.0
  %61 = vst [vmem:[#allocation2 + $0x2d8] sm:$0xf0] 0.0
  %62 = vst [vmem:[#allocation2 + $0x2e0] sm:$0xf0] 0.0
  %63 = vst [vmem:[#allocation2 + $0x2e8] sm:$0xf0] 0.0
  %64 = vst [vmem:[#allocation2 + $0x2f0] sm:$0xf0] 0.0
  %65 = vst [vmem:[#allocation2 + $0x2f8] sm:$0xf0] 0.0
  %66 = vst [vmem:[#allocation2 + $0x300] sm:$0xf0] 0.0
  %67 = vst [vmem:[#allocation2 + $0x308] sm:$0xf0] 0.0
  %68 = vst [vmem:[#allocation2 + $0x310] sm:$0xf0] 0.0
  %69 = vst [vmem:[#allocation2 + $0x318] sm:$0xf0] 0.0
  %70 = vst [vmem:[#allocation2 + $0x370] sm:$0xf0] 0.0
  %71 = vst [vmem:[#allocation2 + $0x378] sm:$0xf0] 0.0
  %72 = vst [vmem:[#allocation2 + $0x380] sm:$0xf0] 0.0
  %73 = vst [vmem:[#allocation2 + $0x388] sm:$0xf0] 0.0
  %74 = vst [vmem:[#allocation2 + $0x390] sm:$0xf0] 0.0
  %75 = vst [vmem:[#allocation2 + $0x398] sm:$0xf0] 0.0
  %76 = vst [vmem:[#allocation2 + $0x3a0] sm:$0xf0] 0.0
  %77 = vst [vmem:[#allocation2 + $0x3a8] sm:$0xf0] 0.0
  %78 = vst [vmem:[#allocation2 + $0x3b0] sm:$0xf0] 0.0
  %79 = vst [vmem:[#allocation2 + $0x3b8] sm:$0xf0] 0.0
  %80 = vst [vmem:[#allocation2 + $0x410] sm:$0xf0] 0.0
  %81 = vst [vmem:[#allocation2 + $0x418] sm:$0xf0] 0.0
  %82 = vst [vmem:[#allocation2 + $0x420] sm:$0xf0] 0.0
  %83 = vst [vmem:[#allocation2 + $0x428] sm:$0xf0] 0.0
  %84 = vst [vmem:[#allocation2 + $0x430] sm:$0xf0] 0.0
  %85 = vst [vmem:[#allocation2 + $0x438] sm:$0xf0] 0.0
  %86 = vst [vmem:[#allocation2 + $0x440] sm:$0xf0] 0.0
  %87 = vst [vmem:[#allocation2 + $0x448] sm:$0xf0] 0.0
  %88 = vst [vmem:[#allocation2 + $0x450] sm:$0xf0] 0.0
  %89 = vst [vmem:[#allocation2 + $0x458] sm:$0xf0] 0.0
  %90 = vst [vmem:[#allocation2 + $0x4b0] sm:$0xf0] 0.0
  %91 = vst [vmem:[#allocation2 + $0x4b8] sm:$0xf0] 0.0
  %92 = vst [vmem:[#allocation2 + $0x4c0] sm:$0xf0] 0.0
  %93 = vst [vmem:[#allocation2 + $0x4c8] sm:$0xf0] 0.0
  %94 = vst [vmem:[#allocation2 + $0x4d0] sm:$0xf0] 0.0
  %95 = vst [vmem:[#allocation2 + $0x4d8] sm:$0xf0] 0.0
  %96 = vst [vmem:[#allocation2 + $0x4e0] sm:$0xf0] 0.0
  %97 = vst [vmem:[#allocation2 + $0x4e8] sm:$0xf0] 0.0
  %98 = vst [vmem:[#allocation2 + $0x4f0] sm:$0xf0] 0.0
  %99 = vst [vmem:[#allocation2 + $0x4f8] sm:$0xf0] 0.0
  %100 = vst [vmem:[#allocation2 + $0x550] sm:$0xf0] 0.0
  %101 = vst [vmem:[#allocation2 + $0x558] sm:$0xf0] 0.0
  %102 = vst [vmem:[#allocation2 + $0x560] sm:$0xf0] 0.0
  %103 = vst [vmem:[#allocation2 + $0x568] sm:$0xf0] 0.0
  %104 = vst [vmem:[#allocation2 + $0x570] sm:$0xf0] 0.0
  %105 = vst [vmem:[#allocation2 + $0x578] sm:$0xf0] 0.0
  %106 = vst [vmem:[#allocation2 + $0x580] sm:$0xf0] 0.0
  %107 = vst [vmem:[#allocation2 + $0x588] sm:$0xf0] 0.0
  %108 = vst [vmem:[#allocation2 + $0x590] sm:$0xf0] 0.0
  %109 = vst [vmem:[#allocation2 + $0x598] sm:$0xf0] 0.0
  %v110 = vld [vmem:[%s3] sm:$0xff]
  %v111 = vld [vmem:[%s3 + $0x8] sm:$0xff]
  %v112 = vld [vmem:[%s4] sm:$0xff]
  %v113 = vld [vmem:[%s4 + $0x8] sm:$0xff]
  %v114 = vld [vmem:[%s0] sm:$0xff]
  %v115 = vld [vmem:[%s0 + $0x8] sm:$0xff]
  %v116 = vld [vmem:[%s0 + $0x10] sm:$0xff]
  %v117 = vld [vmem:[%s0 + $0x18] sm:$0xff]
  %v118 = vld [vmem:[%s0 + $0x20] sm:$0xff]
  %v119 = vld [vmem:[%s0 + $0x28] sm:$0xff]
  %v120 = vld [vmem:[%s0 + $0x30] sm:$0xff]
  %v121 = vld [vmem:[%s0 + $0x38] sm:$0xff]
  %v122 = vld [vmem:[%s0 + $0x40] sm:$0xff]
  %v123 = vld [vmem:[%s0 + $0x48] sm:$0xff]
  %v124 = vld [vmem:[%s0 + $0x50] sm:$0xf]
  %v125 = vld [vmem:[%s0 + $0x58] sm:$0xf]
  %v126 = vld [vmem:[%s0 + $0x60] sm:$0xf]
  %v127 = vld [vmem:[%s0 + $0x68] sm:$0xf]
  %v128 = vld [vmem:[%s0 + $0x70] sm:$0xf]
  %v129 = vld [vmem:[%s0 + $0x78] sm:$0xf]
  %v130 = vld [vmem:[%s0 + $0x80] sm:$0xf]
  %v131 = vld [vmem:[%s0 + $0x88] sm:$0xf]
  %v132 = vld [vmem:[%s0 + $0x90] sm:$0xf]
  %v133 = vld [vmem:[%s0 + $0x98] sm:$0xf]
  %134 = vst [vmem:[#allocation2] sm:$0xff] %v114
  %135 = vst [vmem:[#allocation2 + $0x8] sm:$0xff] %v115
  %136 = vst [vmem:[#allocation2 + $0x10] sm:$0xff] %v116
  %137 = vst [vmem:[#allocation2 + $0x18] sm:$0xff] %v117
  %138 = vst [vmem:[#allocation2 + $0x20] sm:$0xff] %v118
  %139 = vst [vmem:[#allocation2 + $0x28] sm:$0xff] %v119
  %140 = vst [vmem:[#allocation2 + $0x30] sm:$0xff] %v120
  %141 = vst [vmem:[#allocation2 + $0x38] sm:$0xff] %v121
  %142 = vst [vmem:[#allocation2 + $0x40] sm:$0xff] %v122
  %143 = vst [vmem:[#allocation2 + $0x48] sm:$0xff] %v123
  %144 = vst [vmem:[#allocation2 + $0x50] sm:$0xf] %v124
  %145 = vst [vmem:[#allocation2 + $0x58] sm:$0xf] %v125
  %146 = vst [vmem:[#allocation2 + $0x60] sm:$0xf] %v126
  %147 = vst [vmem:[#allocation2 + $0x68] sm:$0xf] %v127
  %148 = vst [vmem:[#allocation2 + $0x70] sm:$0xf] %v128
  %149 = vst [vmem:[#allocation2 + $0x78] sm:$0xf] %v129
  %150 = vst [vmem:[#allocation2 + $0x80] sm:$0xf] %v130
  %151 = vst [vmem:[#allocation2 + $0x88] sm:$0xf] %v131
  %152 = vst [vmem:[#allocation2 + $0x90] sm:$0xf] %v132
  %153 = vst [vmem:[#allocation2 + $0x98] sm:$0xf] %v133
  %174 = vrot.lane.b32.xlu0 %v114, 127
  %v175 = vpop.permute.xlu0 %174
  %176 = vrot.lane.b32.xlu0 %v115, 127
  %v177 = vpop.permute.xlu0 %176
  %178 = vrot.lane.b32.xlu0 %v116, 127
  %v179 = vpop.permute.xlu0 %178
  %180 = vrot.lane.b32.xlu0 %v117, 127
  %v181 = vpop.permute.xlu0 %180
  %182 = vrot.lane.b32.xlu0 %v118, 127
  %v183 = vpop.permute.xlu0 %182
  %184 = vrot.lane.b32.xlu0 %v119, 127
  %v185 = vpop.permute.xlu0 %184
  %186 = vrot.lane.b32.xlu0 %v120, 127
  %v187 = vpop.permute.xlu0 %186
  %188 = vrot.lane.b32.xlu0 %v121, 127
  %v189 = vpop.permute.xlu0 %188
  %190 = vrot.lane.b32.xlu0 %v122, 127
  %v191 = vpop.permute.xlu0 %190
  %192 = vrot.lane.b32.xlu0 %v123, 127
  %v193 = vpop.permute.xlu0 %192
  %194 = vrot.lane.b32.xlu0 %v124, 127
  %v195 = vpop.permute.xlu0 %194
  %196 = vrot.lane.b32.xlu0 %v125, 127
  %v197 = vpop.permute.xlu0 %196
  %198 = vrot.lane.b32.xlu0 %v126, 127
  %v199 = vpop.permute.xlu0 %198
  %200 = vrot.lane.b32.xlu0 %v127, 127
  %v201 = vpop.permute.xlu0 %200
  %202 = vrot.lane.b32.xlu0 %v128, 127
  %v203 = vpop.permute.xlu0 %202
  %204 = vrot.lane.b32.xlu0 %v129, 127
  %v205 = vpop.permute.xlu0 %204
  %206 = vrot.lane.b32.xlu0 %v130, 127
  %v207 = vpop.permute.xlu0 %206
  %208 = vrot.lane.b32.xlu0 %v131, 127
  %v209 = vpop.permute.xlu0 %208
  %210 = vrot.lane.b32.xlu0 %v132, 127
  %v211 = vpop.permute.xlu0 %210
  %212 = vrot.lane.b32.xlu0 %v133, 127
  %v213 = vpop.permute.xlu0 %212
  %vm214 = vcmask 1039360
  %v215 = vsel %vm214, %v175, %v177
  %v216 = vsel %vm214, %v177, %v179
  %v217 = vsel %vm214, %v179, %v181
  %v218 = vsel %vm214, %v181, %v183
  %v219 = vsel %vm214, %v183, %v185
  %v220 = vsel %vm214, %v185, %v187
  %v221 = vsel %vm214, %v187, %v189
  %v222 = vsel %vm214, %v189, %v191
  %v223 = vsel %vm214, %v191, %v193
  %v224 = vsel %vm214, %v195, %v197
  %v225 = vsel %vm214, %v197, %v199
  %v226 = vsel %vm214, %v199, %v201
  %v227 = vsel %vm214, %v201, %v203
  %v228 = vsel %vm214, %v203, %v205
  %v229 = vsel %vm214, %v205, %v207
  %v230 = vsel %vm214, %v207, %v209
  %v231 = vsel %vm214, %v209, %v211
  %v232 = vsel %vm214, %v211, %v213
  %v255 = vsel %vm214, %v193, %v175
  %v256 = vsel %vm214, %v213, %v195
  %257 = vst [vmem:[#allocation2 + $0xa0] sm:$0xff] %v215
  %258 = vst [vmem:[#allocation2 + $0xa8] sm:$0xff] %v216
  %259 = vst [vmem:[#allocation2 + $0xb0] sm:$0xff] %v217
  %260 = vst [vmem:[#allocation2 + $0xb8] sm:$0xff] %v218
  %261 = vst [vmem:[#allocation2 + $0xc0] sm:$0xff] %v219
  %262 = vst [vmem:[#allocation2 + $0xc8] sm:$0xff] %v220
  %263 = vst [vmem:[#allocation2 + $0xd0] sm:$0xff] %v221
  %264 = vst [vmem:[#allocation2 + $0xd8] sm:$0xff] %v222
  %265 = vst [vmem:[#allocation2 + $0xe0] sm:$0xff] %v223
  %266 = vst [vmem:[#allocation2 + $0xe8] sm:$0xff] %v255
  %267 = vst [vmem:[#allocation2 + $0xf0] sm:$0xf] %v224
  %268 = vst [vmem:[#allocation2 + $0xf8] sm:$0xf] %v225
  %269 = vst [vmem:[#allocation2 + $0x100] sm:$0xf] %v226
  %270 = vst [vmem:[#allocation2 + $0x108] sm:$0xf] %v227
  %271 = vst [vmem:[#allocation2 + $0x110] sm:$0xf] %v228
  %272 = vst [vmem:[#allocation2 + $0x118] sm:$0xf] %v229
  %273 = vst [vmem:[#allocation2 + $0x120] sm:$0xf] %v230
  %274 = vst [vmem:[#allocation2 + $0x128] sm:$0xf] %v231
  %275 = vst [vmem:[#allocation2 + $0x130] sm:$0xf] %v232
  %276 = vst [vmem:[#allocation2 + $0x138] sm:$0xf] %v256
  %277 = vrot.lane.b32.xlu0 %v114, 126
  %v278 = vpop.permute.xlu0 %277
  %279 = vrot.lane.b32.xlu0 %v115, 126
  %v280 = vpop.permute.xlu0 %279
  %281 = vrot.lane.b32.xlu0 %v116, 126
  %v282 = vpop.permute.xlu0 %281
  %283 = vrot.lane.b32.xlu0 %v117, 126
  %v284 = vpop.permute.xlu0 %283
  %285 = vrot.lane.b32.xlu0 %v118, 126
  %v286 = vpop.permute.xlu0 %285
  %287 = vrot.lane.b32.xlu0 %v119, 126
  %v288 = vpop.permute.xlu0 %287
  %289 = vrot.lane.b32.xlu0 %v120, 126
  %v290 = vpop.permute.xlu0 %289
  %291 = vrot.lane.b32.xlu0 %v121, 126
  %v292 = vpop.permute.xlu0 %291
  %293 = vrot.lane.b32.xlu0 %v122, 126
  %v294 = vpop.permute.xlu0 %293
  %295 = vrot.lane.b32.xlu0 %v123, 126
  %v296 = vpop.permute.xlu0 %295
  %297 = vrot.lane.b32.xlu0 %v124, 126
  %v298 = vpop.permute.xlu0 %297
  %299 = vrot.lane.b32.xlu0 %v125, 126
  %v300 = vpop.permute.xlu0 %299
  %301 = vrot.lane.b32.xlu0 %v126, 126
  %v302 = vpop.permute.xlu0 %301
  %303 = vrot.lane.b32.xlu0 %v127, 126
  %v304 = vpop.permute.xlu0 %303
  %305 = vrot.lane.b32.xlu0 %v128, 126
  %v306 = vpop.permute.xlu0 %305
  %307 = vrot.lane.b32.xlu0 %v129, 126
  %v308 = vpop.permute.xlu0 %307
  %309 = vrot.lane.b32.xlu0 %v130, 126
  %v310 = vpop.permute.xlu0 %309
  %311 = vrot.lane.b32.xlu0 %v131, 126
  %v312 = vpop.permute.xlu0 %311
  %313 = vrot.lane.b32.xlu0 %v132, 126
  %v314 = vpop.permute.xlu0 %313
  %315 = vrot.lane.b32.xlu0 %v133, 126
  %v316 = vpop.permute.xlu0 %315
  %vm317 = vcmask 1031168
  %v318 = vsel %vm317, %v278, %v280
  %v319 = vsel %vm317, %v280, %v282
  %v320 = vsel %vm317, %v282, %v284
  %v321 = vsel %vm317, %v284, %v286
  %v322 = vsel %vm317, %v286, %v288
  %v323 = vsel %vm317, %v288, %v290
  %v324 = vsel %vm317, %v290, %v292
  %v325 = vsel %vm317, %v292, %v294
  %v326 = vsel %vm317, %v294, %v296
  %v327 = vsel %vm317, %v298, %v300
  %v328 = vsel %vm317, %v300, %v302
  %v329 = vsel %vm317, %v302, %v304
  %v330 = vsel %vm317, %v304, %v306
  %v331 = vsel %vm317, %v306, %v308
  %v332 = vsel %vm317, %v308, %v310
  %v333 = vsel %vm317, %v310, %v312
  %v334 = vsel %vm317, %v312, %v314
  %v335 = vsel %vm317, %v314, %v316
  %v358 = vsel %vm317, %v296, %v278
  %v359 = vsel %vm317, %v316, %v298
  %360 = vst [vmem:[#allocation2 + $0x140] sm:$0xff] %v318
  %361 = vst [vmem:[#allocation2 + $0x148] sm:$0xff] %v319
  %362 = vst [vmem:[#allocation2 + $0x150] sm:$0xff] %v320
  %363 = vst [vmem:[#allocation2 + $0x158] sm:$0xff] %v321
  %364 = vst [vmem:[#allocation2 + $0x160] sm:$0xff] %v322
  %365 = vst [vmem:[#allocation2 + $0x168] sm:$0xff] %v323
  %366 = vst [vmem:[#allocation2 + $0x170] sm:$0xff] %v324
  %367 = vst [vmem:[#allocation2 + $0x178] sm:$0xff] %v325
  %368 = vst [vmem:[#allocation2 + $0x180] sm:$0xff] %v326
  %369 = vst [vmem:[#allocation2 + $0x188] sm:$0xff] %v358
  %370 = vst [vmem:[#allocation2 + $0x190] sm:$0xf] %v327
  %371 = vst [vmem:[#allocation2 + $0x198] sm:$0xf] %v328
  %372 = vst [vmem:[#allocation2 + $0x1a0] sm:$0xf] %v329
  %373 = vst [vmem:[#allocation2 + $0x1a8] sm:$0xf] %v330
  %374 = vst [vmem:[#allocation2 + $0x1b0] sm:$0xf] %v331
  %375 = vst [vmem:[#allocation2 + $0x1b8] sm:$0xf] %v332
  %376 = vst [vmem:[#allocation2 + $0x1c0] sm:$0xf] %v333
  %377 = vst [vmem:[#allocation2 + $0x1c8] sm:$0xf] %v334
  %378 = vst [vmem:[#allocation2 + $0x1d0] sm:$0xf] %v335
  %379 = vst [vmem:[#allocation2 + $0x1d8] sm:$0xf] %v359
  %380 = vrot.lane.b32.xlu0 %v114, 94
  %v381 = vpop.permute.xlu0 %380
  %382 = vrot.lane.b32.xlu0 %v115, 94
  %v383 = vpop.permute.xlu0 %382
  %384 = vrot.lane.b32.xlu0 %v116, 94
  %v385 = vpop.permute.xlu0 %384
  %386 = vrot.lane.b32.xlu0 %v117, 94
  %v387 = vpop.permute.xlu0 %386
  %388 = vrot.lane.b32.xlu0 %v118, 94
  %v389 = vpop.permute.xlu0 %388
  %390 = vrot.lane.b32.xlu0 %v119, 94
  %v391 = vpop.permute.xlu0 %390
  %392 = vrot.lane.b32.xlu0 %v120, 94
  %v393 = vpop.permute.xlu0 %392
  %394 = vrot.lane.b32.xlu0 %v121, 94
  %v395 = vpop.permute.xlu0 %394
  %396 = vrot.lane.b32.xlu0 %v122, 94
  %v397 = vpop.permute.xlu0 %396
  %398 = vrot.lane.b32.xlu0 %v123, 94
  %v399 = vpop.permute.xlu0 %398
  %400 = vrot.lane.b32.xlu0 %v124, 94
  %v401 = vpop.permute.xlu0 %400
  %402 = vrot.lane.b32.xlu0 %v125, 94
  %v403 = vpop.permute.xlu0 %402
  %404 = vrot.lane.b32.xlu0 %v126, 94
  %v405 = vpop.permute.xlu0 %404
  %406 = vrot.lane.b32.xlu0 %v127, 94
  %v407 = vpop.permute.xlu0 %406
  %408 = vrot.lane.b32.xlu0 %v128, 94
  %v409 = vpop.permute.xlu0 %408
  %410 = vrot.lane.b32.xlu0 %v129, 94
  %v411 = vpop.permute.xlu0 %410
  %412 = vrot.lane.b32.xlu0 %v130, 94
  %v413 = vpop.permute.xlu0 %412
  %414 = vrot.lane.b32.xlu0 %v131, 94
  %v415 = vpop.permute.xlu0 %414
  %416 = vrot.lane.b32.xlu0 %v132, 94
  %v417 = vpop.permute.xlu0 %416
  %418 = vrot.lane.b32.xlu0 %v133, 94
  %v419 = vpop.permute.xlu0 %418
  %vm420 = vcmask 769024
  %v421 = vsel %vm420, %v381, %v383
  %v422 = vsel %vm420, %v383, %v385
  %v423 = vsel %vm420, %v385, %v387
  %v424 = vsel %vm420, %v387, %v389
  %v425 = vsel %vm420, %v389, %v391
  %v426 = vsel %vm420, %v391, %v393
  %v427 = vsel %vm420, %v393, %v395
  %v428 = vsel %vm420, %v395, %v397
  %v429 = vsel %vm420, %v397, %v399
  %v430 = vsel %vm420, %v401, %v403
  %v431 = vsel %vm420, %v403, %v405
  %v432 = vsel %vm420, %v405, %v407
  %v433 = vsel %vm420, %v407, %v409
  %v434 = vsel %vm420, %v409, %v411
  %v435 = vsel %vm420, %v411, %v413
  %v436 = vsel %vm420, %v413, %v415
  %v437 = vsel %vm420, %v415, %v417
  %v438 = vsel %vm420, %v417, %v419
  %v461 = vsel %vm420, %v399, %v381
  %v462 = vsel %vm420, %v419, %v401
  %463 = vst [vmem:[#allocation2 + $0x1e0] sm:$0xff] %v421
  %464 = vst [vmem:[#allocation2 + $0x1e8] sm:$0xff] %v422
  %465 = vst [vmem:[#allocation2 + $0x1f0] sm:$0xff] %v423
  %466 = vst [vmem:[#allocation2 + $0x1f8] sm:$0xff] %v424
  %467 = vst [vmem:[#allocation2 + $0x200] sm:$0xff] %v425
  %468 = vst [vmem:[#allocation2 + $0x208] sm:$0xff] %v426
  %469 = vst [vmem:[#allocation2 + $0x210] sm:$0xff] %v427
  %470 = vst [vmem:[#allocation2 + $0x218] sm:$0xff] %v428
  %471 = vst [vmem:[#allocation2 + $0x220] sm:$0xff] %v429
  %472 = vst [vmem:[#allocation2 + $0x228] sm:$0xff] %v461
  %473 = vst [vmem:[#allocation2 + $0x230] sm:$0xf] %v430
  %474 = vst [vmem:[#allocation2 + $0x238] sm:$0xf] %v431
  %475 = vst [vmem:[#allocation2 + $0x240] sm:$0xf] %v432
  %476 = vst [vmem:[#allocation2 + $0x248] sm:$0xf] %v433
  %477 = vst [vmem:[#allocation2 + $0x250] sm:$0xf] %v434
  %478 = vst [vmem:[#allocation2 + $0x258] sm:$0xf] %v435
  %479 = vst [vmem:[#allocation2 + $0x260] sm:$0xf] %v436
  %480 = vst [vmem:[#allocation2 + $0x268] sm:$0xf] %v437
  %481 = vst [vmem:[#allocation2 + $0x270] sm:$0xf] %v438
  %482 = vst [vmem:[#allocation2 + $0x278] sm:$0xf] %v462
  %483 = vrot.lane.b32.xlu0 %v114, 93
  %v484 = vpop.permute.xlu0 %483
  %485 = vrot.lane.b32.xlu0 %v115, 93
  %v486 = vpop.permute.xlu0 %485
  %487 = vrot.lane.b32.xlu0 %v116, 93
  %v488 = vpop.permute.xlu0 %487
  %489 = vrot.lane.b32.xlu0 %v117, 93
  %v490 = vpop.permute.xlu0 %489
  %491 = vrot.lane.b32.xlu0 %v118, 93
  %v492 = vpop.permute.xlu0 %491
  %493 = vrot.lane.b32.xlu0 %v119, 93
  %v494 = vpop.permute.xlu0 %493
  %495 = vrot.lane.b32.xlu0 %v120, 93
  %v496 = vpop.permute.xlu0 %495
  %497 = vrot.lane.b32.xlu0 %v121, 93
  %v498 = vpop.permute.xlu0 %497
  %499 = vrot.lane.b32.xlu0 %v122, 93
  %v500 = vpop.permute.xlu0 %499
  %501 = vrot.lane.b32.xlu0 %v123, 93
  %v502 = vpop.permute.xlu0 %501
  %503 = vrot.lane.b32.xlu0 %v124, 93
  %v504 = vpop.permute.xlu0 %503
  %505 = vrot.lane.b32.xlu0 %v125, 93
  %v506 = vpop.permute.xlu0 %505
  %507 = vrot.lane.b32.xlu0 %v126, 93
  %v508 = vpop.permute.xlu0 %507
  %509 = vrot.lane.b32.xlu0 %v127, 93
  %v510 = vpop.permute.xlu0 %509
  %511 = vrot.lane.b32.xlu0 %v128, 93
  %v512 = vpop.permute.xlu0 %511
  %513 = vrot.lane.b32.xlu0 %v129, 93
  %v514 = vpop.permute.xlu0 %513
  %515 = vrot.lane.b32.xlu0 %v130, 93
  %v516 = vpop.permute.xlu0 %515
  %517 = vrot.lane.b32.xlu0 %v131, 93
  %v518 = vpop.permute.xlu0 %517
  %519 = vrot.lane.b32.xlu0 %v132, 93
  %v520 = vpop.permute.xlu0 %519
  %521 = vrot.lane.b32.xlu0 %v133, 93
  %v522 = vpop.permute.xlu0 %521
  %vm523 = vcmask 760832
  %v524 = vsel %vm523, %v484, %v486
  %v525 = vsel %vm523, %v486, %v488
  %v526 = vsel %vm523, %v488, %v490
  %v527 = vsel %vm523, %v490, %v492
  %v528 = vsel %vm523, %v492, %v494
  %v529 = vsel %vm523, %v494, %v496
  %v530 = vsel %vm523, %v496, %v498
  %v531 = vsel %vm523, %v498, %v500
  %v532 = vsel %vm523, %v500, %v502
  %v533 = vsel %vm523, %v504, %v506
  %v534 = vsel %vm523, %v506, %v508
  %v535 = vsel %vm523, %v508, %v510
  %v536 = vsel %vm523, %v510, %v512
  %v537 = vsel %vm523, %v512, %v514
  %v538 = vsel %vm523, %v514, %v516
  %v539 = vsel %vm523, %v516, %v518
  %v540 = vsel %vm523, %v518, %v520
  %v541 = vsel %vm523, %v520, %v522
  %v564 = vsel %vm523, %v502, %v484
  %v565 = vsel %vm523, %v522, %v504
  %566 = vst [vmem:[#allocation2 + $0x280] sm:$0xff] %v524
  %567 = vst [vmem:[#allocation2 + $0x288] sm:$0xff] %v525
  %568 = vst [vmem:[#allocation2 + $0x290] sm:$0xff] %v526
  %569 = vst [vmem:[#allocation2 + $0x298] sm:$0xff] %v527
  %570 = vst [vmem:[#allocation2 + $0x2a0] sm:$0xff] %v528
  %571 = vst [vmem:[#allocation2 + $0x2a8] sm:$0xff] %v529
  %572 = vst [vmem:[#allocation2 + $0x2b0] sm:$0xff] %v530
  %573 = vst [vmem:[#allocation2 + $0x2b8] sm:$0xff] %v531
  %574 = vst [vmem:[#allocation2 + $0x2c0] sm:$0xff] %v532
  %575 = vst [vmem:[#allocation2 + $0x2c8] sm:$0xff] %v564
  %576 = vst [vmem:[#allocation2 + $0x2d0] sm:$0xf] %v533
  %577 = vst [vmem:[#allocation2 + $0x2d8] sm:$0xf] %v534
  %578 = vst [vmem:[#allocation2 + $0x2e0] sm:$0xf] %v535
  %579 = vst [vmem:[#allocation2 + $0x2e8] sm:$0xf] %v536
  %580 = vst [vmem:[#allocation2 + $0x2f0] sm:$0xf] %v537
  %581 = vst [vmem:[#allocation2 + $0x2f8] sm:$0xf] %v538
  %582 = vst [vmem:[#allocation2 + $0x300] sm:$0xf] %v539
  %583 = vst [vmem:[#allocation2 + $0x308] sm:$0xf] %v540
  %584 = vst [vmem:[#allocation2 + $0x310] sm:$0xf] %v541
  %585 = vst [vmem:[#allocation2 + $0x318] sm:$0xf] %v565
  %586 = vrot.lane.b32.xlu0 %v114, 92
  %v587 = vpop.permute.xlu0 %586
  %588 = vrot.lane.b32.xlu0 %v115, 92
  %v589 = vpop.permute.xlu0 %588
  %590 = vrot.lane.b32.xlu0 %v116, 92
  %v591 = vpop.permute.xlu0 %590
  %592 = vrot.lane.b32.xlu0 %v117, 92
  %v593 = vpop.permute.xlu0 %592
  %594 = vrot.lane.b32.xlu0 %v118, 92
  %v595 = vpop.permute.xlu0 %594
  %596 = vrot.lane.b32.xlu0 %v119, 92
  %v597 = vpop.permute.xlu0 %596
  %598 = vrot.lane.b32.xlu0 %v120, 92
  %v599 = vpop.permute.xlu0 %598
  %600 = vrot.lane.b32.xlu0 %v121, 92
  %v601 = vpop.permute.xlu0 %600
  %602 = vrot.lane.b32.xlu0 %v122, 92
  %v603 = vpop.permute.xlu0 %602
  %604 = vrot.lane.b32.xlu0 %v123, 92
  %v605 = vpop.permute.xlu0 %604
  %606 = vrot.lane.b32.xlu0 %v124, 92
  %v607 = vpop.permute.xlu0 %606
  %608 = vrot.lane.b32.xlu0 %v125, 92
  %v609 = vpop.permute.xlu0 %608
  %610 = vrot.lane.b32.xlu0 %v126, 92
  %v611 = vpop.permute.xlu0 %610
  %612 = vrot.lane.b32.xlu0 %v127, 92
  %v613 = vpop.permute.xlu0 %612
  %614 = vrot.lane.b32.xlu0 %v128, 92
  %v615 = vpop.permute.xlu0 %614
  %616 = vrot.lane.b32.xlu0 %v129, 92
  %v617 = vpop.permute.xlu0 %616
  %618 = vrot.lane.b32.xlu0 %v130, 92
  %v619 = vpop.permute.xlu0 %618
  %620 = vrot.lane.b32.xlu0 %v131, 92
  %v621 = vpop.permute.xlu0 %620
  %622 = vrot.lane.b32.xlu0 %v132, 92
  %v623 = vpop.permute.xlu0 %622
  %624 = vrot.lane.b32.xlu0 %v133, 92
  %v625 = vpop.permute.xlu0 %624
  %vm626 = vcmask 752640
  %v627 = vsel %vm626, %v587, %v589
  %v628 = vsel %vm626, %v589, %v591
  %v629 = vsel %vm626, %v591, %v593
  %v630 = vsel %vm626, %v593, %v595
  %v631 = vsel %vm626, %v595, %v597
  %v632 = vsel %vm626, %v597, %v599
  %v633 = vsel %vm626, %v599, %v601
  %v634 = vsel %vm626, %v601, %v603
  %v635 = vsel %vm626, %v603, %v605
  %v636 = vsel %vm626, %v607, %v609
  %v637 = vsel %vm626, %v609, %v611
  %v638 = vsel %vm626, %v611, %v613
  %v639 = vsel %vm626, %v613, %v615
  %v640 = vsel %vm626, %v615, %v617
  %v641 = vsel %vm626, %v617, %v619
  %v642 = vsel %vm626, %v619, %v621
  %v643 = vsel %vm626, %v621, %v623
  %v644 = vsel %vm626, %v623, %v625
  %v667 = vsel %vm626, %v605, %v587
  %v668 = vsel %vm626, %v625, %v607
  %669 = vst [vmem:[#allocation2 + $0x320] sm:$0xff] %v627
  %670 = vst [vmem:[#allocation2 + $0x328] sm:$0xff] %v628
  %671 = vst [vmem:[#allocation2 + $0x330] sm:$0xff] %v629
  %672 = vst [vmem:[#allocation2 + $0x338] sm:$0xff] %v630
  %673 = vst [vmem:[#allocation2 + $0x340] sm:$0xff] %v631
  %674 = vst [vmem:[#allocation2 + $0x348] sm:$0xff] %v632
  %675 = vst [vmem:[#allocation2 + $0x350] sm:$0xff] %v633
  %676 = vst [vmem:[#allocation2 + $0x358] sm:$0xff] %v634
  %677 = vst [vmem:[#allocation2 + $0x360] sm:$0xff] %v635
  %678 = vst [vmem:[#allocation2 + $0x368] sm:$0xff] %v667
  %679 = vst [vmem:[#allocation2 + $0x370] sm:$0xf] %v636
  %680 = vst [vmem:[#allocation2 + $0x378] sm:$0xf] %v637
  %681 = vst [vmem:[#allocation2 + $0x380] sm:$0xf] %v638
  %682 = vst [vmem:[#allocation2 + $0x388] sm:$0xf] %v639
  %683 = vst [vmem:[#allocation2 + $0x390] sm:$0xf] %v640
  %684 = vst [vmem:[#allocation2 + $0x398] sm:$0xf] %v641
  %685 = vst [vmem:[#allocation2 + $0x3a0] sm:$0xf] %v642
  %686 = vst [vmem:[#allocation2 + $0x3a8] sm:$0xf] %v643
  %687 = vst [vmem:[#allocation2 + $0x3b0] sm:$0xf] %v644
  %688 = vst [vmem:[#allocation2 + $0x3b8] sm:$0xf] %v668
  %689 = vrot.lane.b32.xlu0 %v114, 60
  %v690 = vpop.permute.xlu0 %689
  %691 = vrot.lane.b32.xlu0 %v115, 60
  %v692 = vpop.permute.xlu0 %691
  %693 = vrot.lane.b32.xlu0 %v116, 60
  %v694 = vpop.permute.xlu0 %693
  %695 = vrot.lane.b32.xlu0 %v117, 60
  %v696 = vpop.permute.xlu0 %695
  %697 = vrot.lane.b32.xlu0 %v118, 60
  %v698 = vpop.permute.xlu0 %697
  %699 = vrot.lane.b32.xlu0 %v119, 60
  %v700 = vpop.permute.xlu0 %699
  %701 = vrot.lane.b32.xlu0 %v120, 60
  %v702 = vpop.permute.xlu0 %701
  %703 = vrot.lane.b32.xlu0 %v121, 60
  %v704 = vpop.permute.xlu0 %703
  %705 = vrot.lane.b32.xlu0 %v122, 60
  %v706 = vpop.permute.xlu0 %705
  %707 = vrot.lane.b32.xlu0 %v123, 60
  %v708 = vpop.permute.xlu0 %707
  %709 = vrot.lane.b32.xlu0 %v124, 60
  %v710 = vpop.permute.xlu0 %709
  %711 = vrot.lane.b32.xlu0 %v125, 60
  %v712 = vpop.permute.xlu0 %711
  %713 = vrot.lane.b32.xlu0 %v126, 60
  %v714 = vpop.permute.xlu0 %713
  %715 = vrot.lane.b32.xlu0 %v127, 60
  %v716 = vpop.permute.xlu0 %715
  %717 = vrot.lane.b32.xlu0 %v128, 60
  %v718 = vpop.permute.xlu0 %717
  %719 = vrot.lane.b32.xlu0 %v129, 60
  %v720 = vpop.permute.xlu0 %719
  %721 = vrot.lane.b32.xlu0 %v130, 60
  %v722 = vpop.permute.xlu0 %721
  %723 = vrot.lane.b32.xlu0 %v131, 60
  %v724 = vpop.permute.xlu0 %723
  %725 = vrot.lane.b32.xlu0 %v132, 60
  %v726 = vpop.permute.xlu0 %725
  %727 = vrot.lane.b32.xlu0 %v133, 60
  %v728 = vpop.permute.xlu0 %727
  %vm729 = vcmask 490496
  %v730 = vsel %vm729, %v690, %v692
  %v731 = vsel %vm729, %v692, %v694
  %v732 = vsel %vm729, %v694, %v696
  %v733 = vsel %vm729, %v696, %v698
  %v734 = vsel %vm729, %v698, %v700
  %v735 = vsel %vm729, %v700, %v702
  %v736 = vsel %vm729, %v702, %v704
  %v737 = vsel %vm729, %v704, %v706
  %v738 = vsel %vm729, %v706, %v708
  %v739 = vsel %vm729, %v710, %v712
  %v740 = vsel %vm729, %v712, %v714
  %v741 = vsel %vm729, %v714, %v716
  %v742 = vsel %vm729, %v716, %v718
  %v743 = vsel %vm729, %v718, %v720
  %v744 = vsel %vm729, %v720, %v722
  %v745 = vsel %vm729, %v722, %v724
  %v746 = vsel %vm729, %v724, %v726
  %v747 = vsel %vm729, %v726, %v728
  %v770 = vsel %vm729, %v708, %v690
  %v771 = vsel %vm729, %v728, %v710
  %772 = vst [vmem:[#allocation2 + $0x3c0] sm:$0xff] %v730
  %773 = vst [vmem:[#allocation2 + $0x3c8] sm:$0xff] %v731
  %774 = vst [vmem:[#allocation2 + $0x3d0] sm:$0xff] %v732
  %775 = vst [vmem:[#allocation2 + $0x3d8] sm:$0xff] %v733
  %776 = vst [vmem:[#allocation2 + $0x3e0] sm:$0xff] %v734
  %777 = vst [vmem:[#allocation2 + $0x3e8] sm:$0xff] %v735
  %778 = vst [vmem:[#allocation2 + $0x3f0] sm:$0xff] %v736
  %779 = vst [vmem:[#allocation2 + $0x3f8] sm:$0xff] %v737
  %780 = vst [vmem:[#allocation2 + $0x400] sm:$0xff] %v738
  %781 = vst [vmem:[#allocation2 + $0x408] sm:$0xff] %v770
  %782 = vst [vmem:[#allocation2 + $0x410] sm:$0xf] %v739
  %783 = vst [vmem:[#allocation2 + $0x418] sm:$0xf] %v740
  %784 = vst [vmem:[#allocation2 + $0x420] sm:$0xf] %v741
  %785 = vst [vmem:[#allocation2 + $0x428] sm:$0xf] %v742
  %786 = vst [vmem:[#allocation2 + $0x430] sm:$0xf] %v743
  %787 = vst [vmem:[#allocation2 + $0x438] sm:$0xf] %v744
  %788 = vst [vmem:[#allocation2 + $0x440] sm:$0xf] %v745
  %789 = vst [vmem:[#allocation2 + $0x448] sm:$0xf] %v746
  %790 = vst [vmem:[#allocation2 + $0x450] sm:$0xf] %v747
  %791 = vst [vmem:[#allocation2 + $0x458] sm:$0xf] %v771
  %792 = vrot.lane.b32.xlu0 %v114, 59
  %v793 = vpop.permute.xlu0 %792
  %794 = vrot.lane.b32.xlu0 %v115, 59
  %v795 = vpop.permute.xlu0 %794
  %796 = vrot.lane.b32.xlu0 %v116, 59
  %v797 = vpop.permute.xlu0 %796
  %798 = vrot.lane.b32.xlu0 %v117, 59
  %v799 = vpop.permute.xlu0 %798
  %800 = vrot.lane.b32.xlu0 %v118, 59
  %v801 = vpop.permute.xlu0 %800
  %802 = vrot.lane.b32.xlu0 %v119, 59
  %v803 = vpop.permute.xlu0 %802
  %804 = vrot.lane.b32.xlu0 %v120, 59
  %v805 = vpop.permute.xlu0 %804
  %806 = vrot.lane.b32.xlu0 %v121, 59
  %v807 = vpop.permute.xlu0 %806
  %808 = vrot.lane.b32.xlu0 %v122, 59
  %v809 = vpop.permute.xlu0 %808
  %810 = vrot.lane.b32.xlu0 %v123, 59
  %v811 = vpop.permute.xlu0 %810
  %812 = vrot.lane.b32.xlu0 %v124, 59
  %v813 = vpop.permute.xlu0 %812
  %814 = vrot.lane.b32.xlu0 %v125, 59
  %v815 = vpop.permute.xlu0 %814
  %816 = vrot.lane.b32.xlu0 %v126, 59
  %v817 = vpop.permute.xlu0 %816
  %818 = vrot.lane.b32.xlu0 %v127, 59
  %v819 = vpop.permute.xlu0 %818
  %820 = vrot.lane.b32.xlu0 %v128, 59
  %v821 = vpop.permute.xlu0 %820
  %822 = vrot.lane.b32.xlu0 %v129, 59
  %v823 = vpop.permute.xlu0 %822
  %824 = vrot.lane.b32.xlu0 %v130, 59
  %v825 = vpop.permute.xlu0 %824
  %826 = vrot.lane.b32.xlu0 %v131, 59
  %v827 = vpop.permute.xlu0 %826
  %828 = vrot.lane.b32.xlu0 %v132, 59
  %v829 = vpop.permute.xlu0 %828
  %830 = vrot.lane.b32.xlu0 %v133, 59
  %v831 = vpop.permute.xlu0 %830
  %vm832 = vcmask 482304
  %v833 = vsel %vm832, %v793, %v795
  %v834 = vsel %vm832, %v795, %v797
  %v835 = vsel %vm832, %v797, %v799
  %v836 = vsel %vm832, %v799, %v801
  %v837 = vsel %vm832, %v801, %v803
  %v838 = vsel %vm832, %v803, %v805
  %v839 = vsel %vm832, %v805, %v807
  %v840 = vsel %vm832, %v807, %v809
  %v841 = vsel %vm832, %v809, %v811
  %v842 = vsel %vm832, %v813, %v815
  %v843 = vsel %vm832, %v815, %v817
  %v844 = vsel %vm832, %v817, %v819
  %v845 = vsel %vm832, %v819, %v821
  %v846 = vsel %vm832, %v821, %v823
  %v847 = vsel %vm832, %v823, %v825
  %v848 = vsel %vm832, %v825, %v827
  %v849 = vsel %vm832, %v827, %v829
  %v850 = vsel %vm832, %v829, %v831
  %v873 = vsel %vm832, %v811, %v793
  %v874 = vsel %vm832, %v831, %v813
  %875 = vst [vmem:[#allocation2 + $0x460] sm:$0xff] %v833
  %876 = vst [vmem:[#allocation2 + $0x468] sm:$0xff] %v834
  %877 = vst [vmem:[#allocation2 + $0x470] sm:$0xff] %v835
  %878 = vst [vmem:[#allocation2 + $0x478] sm:$0xff] %v836
  %879 = vst [vmem:[#allocation2 + $0x480] sm:$0xff] %v837
  %880 = vst [vmem:[#allocation2 + $0x488] sm:$0xff] %v838
  %881 = vst [vmem:[#allocation2 + $0x490] sm:$0xff] %v839
  %882 = vst [vmem:[#allocation2 + $0x498] sm:$0xff] %v840
  %883 = vst [vmem:[#allocation2 + $0x4a0] sm:$0xff] %v841
  %884 = vst [vmem:[#allocation2 + $0x4a8] sm:$0xff] %v873
  %885 = vst [vmem:[#allocation2 + $0x4b0] sm:$0xf] %v842
  %886 = vst [vmem:[#allocation2 + $0x4b8] sm:$0xf] %v843
  %887 = vst [vmem:[#allocation2 + $0x4c0] sm:$0xf] %v844
  %888 = vst [vmem:[#allocation2 + $0x4c8] sm:$0xf] %v845
  %889 = vst [vmem:[#allocation2 + $0x4d0] sm:$0xf] %v846
  %890 = vst [vmem:[#allocation2 + $0x4d8] sm:$0xf] %v847
  %891 = vst [vmem:[#allocation2 + $0x4e0] sm:$0xf] %v848
  %892 = vst [vmem:[#allocation2 + $0x4e8] sm:$0xf] %v849
  %893 = vst [vmem:[#allocation2 + $0x4f0] sm:$0xf] %v850
  %894 = vst [vmem:[#allocation2 + $0x4f8] sm:$0xf] %v874
  %895 = vrot.lane.b32.xlu0 %v114, 58
  %v896 = vpop.permute.xlu0 %895
  %897 = vrot.lane.b32.xlu0 %v115, 58
  %v898 = vpop.permute.xlu0 %897
  %899 = vrot.lane.b32.xlu0 %v116, 58
  %v900 = vpop.permute.xlu0 %899
  %901 = vrot.lane.b32.xlu0 %v117, 58
  %v902 = vpop.permute.xlu0 %901
  %903 = vrot.lane.b32.xlu0 %v118, 58
  %v904 = vpop.permute.xlu0 %903
  %905 = vrot.lane.b32.xlu0 %v119, 58
  %v906 = vpop.permute.xlu0 %905
  %907 = vrot.lane.b32.xlu0 %v120, 58
  %v908 = vpop.permute.xlu0 %907
  %909 = vrot.lane.b32.xlu0 %v121, 58
  %v910 = vpop.permute.xlu0 %909
  %911 = vrot.lane.b32.xlu0 %v122, 58
  %v912 = vpop.permute.xlu0 %911
  %913 = vrot.lane.b32.xlu0 %v123, 58
  %v914 = vpop.permute.xlu0 %913
  %915 = vrot.lane.b32.xlu0 %v124, 58
  %v916 = vpop.permute.xlu0 %915
  %917 = vrot.lane.b32.xlu0 %v125, 58
  %v918 = vpop.permute.xlu0 %917
  %919 = vrot.lane.b32.xlu0 %v126, 58
  %v920 = vpop.permute.xlu0 %919
  %921 = vrot.lane.b32.xlu0 %v127, 58
  %v922 = vpop.permute.xlu0 %921
  %923 = vrot.lane.b32.xlu0 %v128, 58
  %v924 = vpop.permute.xlu0 %923
  %925 = vrot.lane.b32.xlu0 %v129, 58
  %v926 = vpop.permute.xlu0 %925
  %927 = vrot.lane.b32.xlu0 %v130, 58
  %v928 = vpop.permute.xlu0 %927
  %929 = vrot.lane.b32.xlu0 %v131, 58
  %v930 = vpop.permute.xlu0 %929
  %931 = vrot.lane.b32.xlu0 %v132, 58
  %v932 = vpop.permute.xlu0 %931
  %933 = vrot.lane.b32.xlu0 %v133, 58
  %v934 = vpop.permute.xlu0 %933
  %vm935 = vcmask 474112
  %v936 = vsel %vm935, %v896, %v898
  %v937 = vsel %vm935, %v898, %v900
  %v938 = vsel %vm935, %v900, %v902
  %v939 = vsel %vm935, %v902, %v904
  %v940 = vsel %vm935, %v904, %v906
  %v941 = vsel %vm935, %v906, %v908
  %v942 = vsel %vm935, %v908, %v910
  %v943 = vsel %vm935, %v910, %v912
  %v944 = vsel %vm935, %v912, %v914
  %v945 = vsel %vm935, %v916, %v918
  %v946 = vsel %vm935, %v918, %v920
  %v947 = vsel %vm935, %v920, %v922
  %v948 = vsel %vm935, %v922, %v924
  %v949 = vsel %vm935, %v924, %v926
  %v950 = vsel %vm935, %v926, %v928
  %v951 = vsel %vm935, %v928, %v930
  %v952 = vsel %vm935, %v930, %v932
  %v953 = vsel %vm935, %v932, %v934
  %v976 = vsel %vm935, %v914, %v896
  %v977 = vsel %vm935, %v934, %v916
  %978 = vst [vmem:[#allocation2 + $0x500] sm:$0xff] %v936
  %979 = vst [vmem:[#allocation2 + $0x508] sm:$0xff] %v937
  %980 = vst [vmem:[#allocation2 + $0x510] sm:$0xff] %v938
  %981 = vst [vmem:[#allocation2 + $0x518] sm:$0xff] %v939
  %982 = vst [vmem:[#allocation2 + $0x520] sm:$0xff] %v940
  %983 = vst [vmem:[#allocation2 + $0x528] sm:$0xff] %v941
  %984 = vst [vmem:[#allocation2 + $0x530] sm:$0xff] %v942
  %985 = vst [vmem:[#allocation2 + $0x538] sm:$0xff] %v943
  %986 = vst [vmem:[#allocation2 + $0x540] sm:$0xff] %v944
  %987 = vst [vmem:[#allocation2 + $0x548] sm:$0xff] %v976
  %988 = vst [vmem:[#allocation2 + $0x550] sm:$0xf] %v945
  %989 = vst [vmem:[#allocation2 + $0x558] sm:$0xf] %v946
  %990 = vst [vmem:[#allocation2 + $0x560] sm:$0xf] %v947
  %991 = vst [vmem:[#allocation2 + $0x568] sm:$0xf] %v948
  %992 = vst [vmem:[#allocation2 + $0x570] sm:$0xf] %v949
  %993 = vst [vmem:[#allocation2 + $0x578] sm:$0xf] %v950
  %994 = vst [vmem:[#allocation2 + $0x580] sm:$0xf] %v951
  %995 = vst [vmem:[#allocation2 + $0x588] sm:$0xf] %v952
  %996 = vst [vmem:[#allocation2 + $0x590] sm:$0xf] %v953
  %997 = vst [vmem:[#allocation2 + $0x598] sm:$0xf] %v977
  %v998 = vld [vmem:[%s1] sm:$0xff]
  %v999 = vld [vmem:[%s1 + $0x8] sm:$0xff]
  %v1000 = vld [vmem:[%s1 + $0x10] sm:$0xff]
  %v1001 = vld [vmem:[%s1 + $0x18] sm:$0xff]
  %v1002 = vld [vmem:[#allocation2] sm:$0xff]
  %v1003 = vld [vmem:[#allocation2 + $0x8] sm:$0xff]
  %v1004 = vld [vmem:[#allocation2 + $0x10] sm:$0xff]
  %v1005 = vld [vmem:[#allocation2 + $0x18] sm:$0xff]
  %v1006 = vld [vmem:[#allocation2 + $0x20] sm:$0xff]
  %v1007 = vld [vmem:[#allocation2 + $0x28] sm:$0xff]
  %v1008 = vld [vmem:[#allocation2 + $0x30] sm:$0xff]
  %v1009 = vld [vmem:[#allocation2 + $0x38] sm:$0xff]
  %v1010 = vld [vmem:[#allocation2 + $0x40] sm:$0xff]
  %v1011 = vld [vmem:[#allocation2 + $0x48] sm:$0xff]
  %v1012 = vld [vmem:[#allocation2 + $0x50] sm:$0xff]
  %v1013 = vld [vmem:[#allocation2 + $0x58] sm:$0xff]
  %v1014 = vld [vmem:[#allocation2 + $0x60] sm:$0xff]
  %v1015 = vld [vmem:[#allocation2 + $0x68] sm:$0xff]
  %v1016 = vld [vmem:[#allocation2 + $0x70] sm:$0xff]
  %v1017 = vld [vmem:[#allocation2 + $0x78] sm:$0xff]
  %v1018 = vld [vmem:[#allocation2 + $0x80] sm:$0xff]
  %v1019 = vld [vmem:[#allocation2 + $0x88] sm:$0xff]
  %v1020 = vld [vmem:[#allocation2 + $0x90] sm:$0xff]
  %v1021 = vld [vmem:[#allocation2 + $0x98] sm:$0xff]
  %v1022 = vld [vmem:[#allocation2 + $0xa0] sm:$0xff]
  %v1023 = vld [vmem:[#allocation2 + $0xa8] sm:$0xff]
  %v1024 = vld [vmem:[#allocation2 + $0xb0] sm:$0xff]
  %v1025 = vld [vmem:[#allocation2 + $0xb8] sm:$0xff]
  %v1026 = vld [vmem:[#allocation2 + $0xc0] sm:$0xff]
  %v1027 = vld [vmem:[#allocation2 + $0xc8] sm:$0xff]
  %v1028 = vld [vmem:[#allocation2 + $0xd0] sm:$0xff]
  %v1029 = vld [vmem:[#allocation2 + $0xd8] sm:$0xff]
  %v1030 = vld [vmem:[#allocation2 + $0xe0] sm:$0xff]
  %v1031 = vld [vmem:[#allocation2 + $0xe8] sm:$0xff]
  %v1032 = vld [vmem:[#allocation2 + $0xf0] sm:$0xff]
  %v1033 = vld [vmem:[#allocation2 + $0xf8] sm:$0xff]
  %v1034 = vld [vmem:[#allocation2 + $0x100] sm:$0xff]
  %v1035 = vld [vmem:[#allocation2 + $0x108] sm:$0xff]
  %v1036 = vld [vmem:[#allocation2 + $0x110] sm:$0xff]
  %v1037 = vld [vmem:[#allocation2 + $0x118] sm:$0xff]
  %v1038 = vld [vmem:[#allocation2 + $0x120] sm:$0xff]
  %v1039 = vld [vmem:[#allocation2 + $0x128] sm:$0xff]
  %v1040 = vld [vmem:[#allocation2 + $0x130] sm:$0xff]
  %v1041 = vld [vmem:[#allocation2 + $0x138] sm:$0xff]
  %v1042 = vld [vmem:[#allocation2 + $0x140] sm:$0xff]
  %v1043 = vld [vmem:[#allocation2 + $0x148] sm:$0xff]
  %v1044 = vld [vmem:[#allocation2 + $0x150] sm:$0xff]
  %v1045 = vld [vmem:[#allocation2 + $0x158] sm:$0xff]
  %v1046 = vld [vmem:[#allocation2 + $0x160] sm:$0xff]
  %v1047 = vld [vmem:[#allocation2 + $0x168] sm:$0xff]
  %v1048 = vld [vmem:[#allocation2 + $0x170] sm:$0xff]
  %v1049 = vld [vmem:[#allocation2 + $0x178] sm:$0xff]
  %v1050 = vld [vmem:[#allocation2 + $0x180] sm:$0xff]
  %v1051 = vld [vmem:[#allocation2 + $0x188] sm:$0xff]
  %v1052 = vld [vmem:[#allocation2 + $0x190] sm:$0xff]
  %v1053 = vld [vmem:[#allocation2 + $0x198] sm:$0xff]
  %v1054 = vld [vmem:[#allocation2 + $0x1a0] sm:$0xff]
  %v1055 = vld [vmem:[#allocation2 + $0x1a8] sm:$0xff]
  %v1056 = vld [vmem:[#allocation2 + $0x1b0] sm:$0xff]
  %v1057 = vld [vmem:[#allocation2 + $0x1b8] sm:$0xff]
  %v1058 = vld [vmem:[#allocation2 + $0x1c0] sm:$0xff]
  %v1059 = vld [vmem:[#allocation2 + $0x1c8] sm:$0xff]
  %v1060 = vld [vmem:[#allocation2 + $0x1d0] sm:$0xff]
  %v1061 = vld [vmem:[#allocation2 + $0x1d8] sm:$0xff]
  %v1062 = vld [vmem:[#allocation2 + $0x1e0] sm:$0xff]
  %v1063 = vld [vmem:[#allocation2 + $0x1e8] sm:$0xff]
  %v1064 = vld [vmem:[#allocation2 + $0x1f0] sm:$0xff]
  %v1065 = vld [vmem:[#allocation2 + $0x1f8] sm:$0xff]
  %v1066 = vld [vmem:[#allocation2 + $0x200] sm:$0xff]
  %v1067 = vld [vmem:[#allocation2 + $0x208] sm:$0xff]
  %v1068 = vld [vmem:[#allocation2 + $0x210] sm:$0xff]
  %v1069 = vld [vmem:[#allocation2 + $0x218] sm:$0xff]
  %v1070 = vld [vmem:[#allocation2 + $0x220] sm:$0xff]
  %v1071 = vld [vmem:[#allocation2 + $0x228] sm:$0xff]
  %v1072 = vld [vmem:[#allocation2 + $0x230] sm:$0xff]
  %v1073 = vld [vmem:[#allocation2 + $0x238] sm:$0xff]
  %v1074 = vld [vmem:[#allocation2 + $0x240] sm:$0xff]
  %v1075 = vld [vmem:[#allocation2 + $0x248] sm:$0xff]
  %v1076 = vld [vmem:[#allocation2 + $0x250] sm:$0xff]
  %v1077 = vld [vmem:[#allocation2 + $0x258] sm:$0xff]
  %v1078 = vld [vmem:[#allocation2 + $0x260] sm:$0xff]
  %v1079 = vld [vmem:[#allocation2 + $0x268] sm:$0xff]
  %v1080 = vld [vmem:[#allocation2 + $0x270] sm:$0xff]
  %v1081 = vld [vmem:[#allocation2 + $0x278] sm:$0xff]
  %v1082 = vld [vmem:[#allocation2 + $0x280] sm:$0xff]
  %v1083 = vld [vmem:[#allocation2 + $0x288] sm:$0xff]
  %v1084 = vld [vmem:[#allocation2 + $0x290] sm:$0xff]
  %v1085 = vld [vmem:[#allocation2 + $0x298] sm:$0xff]
  %v1086 = vld [vmem:[#allocation2 + $0x2a0] sm:$0xff]
  %v1087 = vld [vmem:[#allocation2 + $0x2a8] sm:$0xff]
  %v1088 = vld [vmem:[#allocation2 + $0x2b0] sm:$0xff]
  %v1089 = vld [vmem:[#allocation2 + $0x2b8] sm:$0xff]
  %v1090 = vld [vmem:[#allocation2 + $0x2c0] sm:$0xff]
  %v1091 = vld [vmem:[#allocation2 + $0x2c8] sm:$0xff]
  %v1092 = vld [vmem:[#allocation2 + $0x2d0] sm:$0xff]
  %v1093 = vld [vmem:[#allocation2 + $0x2d8] sm:$0xff]
  %v1094 = vld [vmem:[#allocation2 + $0x2e0] sm:$0xff]
  %v1095 = vld [vmem:[#allocation2 + $0x2e8] sm:$0xff]
  %v1096 = vld [vmem:[#allocation2 + $0x2f0] sm:$0xff]
  %v1097 = vld [vmem:[#allocation2 + $0x2f8] sm:$0xff]
  %v1098 = vld [vmem:[#allocation2 + $0x300] sm:$0xff]
  %v1099 = vld [vmem:[#allocation2 + $0x308] sm:$0xff]
  %v1100 = vld [vmem:[#allocation2 + $0x310] sm:$0xff]
  %v1101 = vld [vmem:[#allocation2 + $0x318] sm:$0xff]
  %v1102 = vld [vmem:[#allocation2 + $0x320] sm:$0xff]
  %v1103 = vld [vmem:[#allocation2 + $0x328] sm:$0xff]
  %v1104 = vld [vmem:[#allocation2 + $0x330] sm:$0xff]
  %v1105 = vld [vmem:[#allocation2 + $0x338] sm:$0xff]
  %v1106 = vld [vmem:[#allocation2 + $0x340] sm:$0xff]
  %v1107 = vld [vmem:[#allocation2 + $0x348] sm:$0xff]
  %v1108 = vld [vmem:[#allocation2 + $0x350] sm:$0xff]
  %v1109 = vld [vmem:[#allocation2 + $0x358] sm:$0xff]
  %v1110 = vld [vmem:[#allocation2 + $0x360] sm:$0xff]
  %v1111 = vld [vmem:[#allocation2 + $0x368] sm:$0xff]
  %v1112 = vld [vmem:[#allocation2 + $0x370] sm:$0xff]
  %v1113 = vld [vmem:[#allocation2 + $0x378] sm:$0xff]
  %v1114 = vld [vmem:[#allocation2 + $0x380] sm:$0xff]
  %v1115 = vld [vmem:[#allocation2 + $0x388] sm:$0xff]
  %v1116 = vld [vmem:[#allocation2 + $0x390] sm:$0xff]
  %v1117 = vld [vmem:[#allocation2 + $0x398] sm:$0xff]
  %v1118 = vld [vmem:[#allocation2 + $0x3a0] sm:$0xff]
  %v1119 = vld [vmem:[#allocation2 + $0x3a8] sm:$0xff]
  %v1120 = vld [vmem:[#allocation2 + $0x3b0] sm:$0xff]
  %v1121 = vld [vmem:[#allocation2 + $0x3b8] sm:$0xff]
  %v1122 = vld [vmem:[#allocation2 + $0x3c0] sm:$0xff]
  %v1123 = vld [vmem:[#allocation2 + $0x3c8] sm:$0xff]
  %v1124 = vld [vmem:[#allocation2 + $0x3d0] sm:$0xff]
  %v1125 = vld [vmem:[#allocation2 + $0x3d8] sm:$0xff]
  %v1126 = vld [vmem:[#allocation2 + $0x3e0] sm:$0xff]
  %v1127 = vld [vmem:[#allocation2 + $0x3e8] sm:$0xff]
  %v1128 = vld [vmem:[#allocation2 + $0x3f0] sm:$0xff]
  %v1129 = vld [vmem:[#allocation2 + $0x3f8] sm:$0xff]
  %v1130 = vld [vmem:[#allocation2 + $0x400] sm:$0xff]
  %v1131 = vld [vmem:[#allocation2 + $0x408] sm:$0xff]
  %v1132 = vld [vmem:[#allocation2 + $0x410] sm:$0xff]
  %v1133 = vld [vmem:[#allocation2 + $0x418] sm:$0xff]
  %v1134 = vld [vmem:[#allocation2 + $0x420] sm:$0xff]
  %v1135 = vld [vmem:[#allocation2 + $0x428] sm:$0xff]
  %v1136 = vld [vmem:[#allocation2 + $0x430] sm:$0xff]
  %v1137 = vld [vmem:[#allocation2 + $0x438] sm:$0xff]
  %v1138 = vld [vmem:[#allocation2 + $0x440] sm:$0xff]
  %v1139 = vld [vmem:[#allocation2 + $0x448] sm:$0xff]
  %v1140 = vld [vmem:[#allocation2 + $0x450] sm:$0xff]
  %v1141 = vld [vmem:[#allocation2 + $0x458] sm:$0xff]
  %v1142 = vld [vmem:[#allocation2 + $0x460] sm:$0xff]
  %v1143 = vld [vmem:[#allocation2 + $0x468] sm:$0xff]
  %v1144 = vld [vmem:[#allocation2 + $0x470] sm:$0xff]
  %v1145 = vld [vmem:[#allocation2 + $0x478] sm:$0xff]
  %v1146 = vld [vmem:[#allocation2 + $0x480] sm:$0xff]
  %v1147 = vld [vmem:[#allocation2 + $0x488] sm:$0xff]
  %v1148 = vld [vmem:[#allocation2 + $0x490] sm:$0xff]
  %v1149 = vld [vmem:[#allocation2 + $0x498] sm:$0xff]
  %v1150 = vld [vmem:[#allocation2 + $0x4a0] sm:$0xff]
  %v1151 = vld [vmem:[#allocation2 + $0x4a8] sm:$0xff]
  %v1152 = vld [vmem:[#allocation2 + $0x4b0] sm:$0xff]
  %v1153 = vld [vmem:[#allocation2 + $0x4b8] sm:$0xff]
  %v1154 = vld [vmem:[#allocation2 + $0x4c0] sm:$0xff]
  %v1155 = vld [vmem:[#allocation2 + $0x4c8] sm:$0xff]
  %v1156 = vld [vmem:[#allocation2 + $0x4d0] sm:$0xff]
  %v1157 = vld [vmem:[#allocation2 + $0x4d8] sm:$0xff]
  %v1158 = vld [vmem:[#allocation2 + $0x4e0] sm:$0xff]
  %v1159 = vld [vmem:[#allocation2 + $0x4e8] sm:$0xff]
  %v1160 = vld [vmem:[#allocation2 + $0x4f0] sm:$0xff]
  %v1161 = vld [vmem:[#allocation2 + $0x4f8] sm:$0xff]
  %v1162 = vld [vmem:[#allocation2 + $0x500] sm:$0xff]
  %v1163 = vld [vmem:[#allocation2 + $0x508] sm:$0xff]
  %v1164 = vld [vmem:[#allocation2 + $0x510] sm:$0xff]
  %v1165 = vld [vmem:[#allocation2 + $0x518] sm:$0xff]
  %v1166 = vld [vmem:[#allocation2 + $0x520] sm:$0xff]
  %v1167 = vld [vmem:[#allocation2 + $0x528] sm:$0xff]
  %v1168 = vld [vmem:[#allocation2 + $0x530] sm:$0xff]
  %v1169 = vld [vmem:[#allocation2 + $0x538] sm:$0xff]
  %v1170 = vld [vmem:[#allocation2 + $0x540] sm:$0xff]
  %v1171 = vld [vmem:[#allocation2 + $0x548] sm:$0xff]
  %v1172 = vld [vmem:[#allocation2 + $0x550] sm:$0xff]
  %v1173 = vld [vmem:[#allocation2 + $0x558] sm:$0xff]
  %v1174 = vld [vmem:[#allocation2 + $0x560] sm:$0xff]
  %v1175 = vld [vmem:[#allocation2 + $0x568] sm:$0xff]
  %v1176 = vld [vmem:[#allocation2 + $0x570] sm:$0xff]
  %v1177 = vld [vmem:[#allocation2 + $0x578] sm:$0xff]
  %v1178 = vld [vmem:[#allocation2 + $0x580] sm:$0xff]
  %v1179 = vld [vmem:[#allocation2 + $0x588] sm:$0xff]
  %v1180 = vld [vmem:[#allocation2 + $0x590] sm:$0xff]
  %v1181 = vld [vmem:[#allocation2 + $0x598] sm:$0xff]
  %v1182 = vld [vmem:[%s2] sm:$0xff]
  %v1183 = vld [vmem:[%s2 + $0x8] sm:$0xff]
  %1185 = vset.pattern.permute.xlu0 0
  %1186 = vperm.xlu0 %1185, %v1182
  %v1187 = vpop.permute.xlu0 %1186
  %1190 = vset.pattern.permute.xlu0 0
  %1191 = vperm.xlu0 %1190, %v1183
  %v1192 = vpop.permute.xlu0 %1191
  %vm1194 = vcmask 130048
  %v1196 = vsel %vm1194, %v999, 0
  %v1199 = vsel %vm1194, %v1001, 0
  %1201 = vmatpush.msra.mxu0 %v1152
  %1202 = vmatpush.msra.mxu0 %v1142
  %1203 = vmatpush.msra.mxu0 %v1132
  %1204 = vmatpush.msra.mxu0 %v1122
  %1205 = vmatpush.msra.mxu0 %v1112
  %1206 = vmatpush.msra.mxu0 %v1102
  %1207 = vmatpush.msra.mxu0 %v1092
  %1208 = vmatpush.msra.mxu0 %v1082
  %1209 = vmatpush.msra.mxu0 %v1072
  %1210 = vmatpush.msra.mxu0 %v1062
  %1211 = vmatpush.msra.mxu0 %v1052
  %1212 = vmatpush.msra.mxu0 %v1042
  %1213 = vmatpush.msra.mxu0 %v1032
  %1214 = vmatpush.msra.mxu0 %v1022
  %1215 = vmatpush.msra.mxu0 %v1012
  %1216 = vmatpush.msra.mxu0 %v1002
  %1217 = vmatmul.f32.gmra.mxu0 %v998
  %v1218 = vpop.f32.mrf.mxu0
  %v1219 = vadd.f32 %v1187, %v1218
  %1220 = vmatmul.f32.gmra.mxu0 %v1000
  %v1221 = vpop.f32.mrf.mxu0
  %v1222 = vadd.f32 %v1192, %v1221
  %1223 = vdwg.mxu0
  %1224 = vmatpush.msra.mxu0 0.0
  %1225 = vmatpush.msra.mxu0 0.0
  %1226 = vmatpush.msra.mxu0 0.0
  %1227 = vmatpush.msra.mxu0 0.0
  %1228 = vmatpush.msra.mxu0 0.0
  %1229 = vmatpush.msra.mxu0 0.0
  %1230 = vmatpush.msra.mxu0 0.0
  %1231 = vmatpush.msra.mxu0 0.0
  %1232 = vmatpush.msra.mxu0 0.0
  %1233 = vmatpush.msra.mxu0 0.0
  %1234 = vmatpush.msra.mxu0 0.0
  %1235 = vmatpush.msra.mxu0 0.0
  %1236 = vmatpush.msra.mxu0 0.0
  %1237 = vmatpush.msra.mxu0 0.0
  %1238 = vmatpush.msra.mxu0 %v1172
  %1239 = vmatpush.msra.mxu0 %v1162
  %1240 = vmatmul.f32.gmra.mxu0 %v1196
  %v1241 = vpop.f32.mrf.mxu0
  %v1242 = vadd.f32 %v1219, %v1241
  %1243 = vmatmul.f32.gmra.mxu0 %v1199
  %v1244 = vpop.f32.mrf.mxu0
  %v1245 = vadd.f32 %v1222, %v1244
  %1246 = vdwg.mxu0
  %1247 = vmatpush.msra.mxu0 %v1153
  %1248 = vmatpush.msra.mxu0 %v1143
  %1249 = vmatpush.msra.mxu0 %v1133
  %1250 = vmatpush.msra.mxu0 %v1123
  %1251 = vmatpush.msra.mxu0 %v1113
  %1252 = vmatpush.msra.mxu0 %v1103
  %1253 = vmatpush.msra.mxu0 %v1093
  %1254 = vmatpush.msra.mxu0 %v1083
  %1255 = vmatpush.msra.mxu0 %v1073
  %1256 = vmatpush.msra.mxu0 %v1063
  %1257 = vmatpush.msra.mxu0 %v1053
  %1258 = vmatpush.msra.mxu0 %v1043
  %1259 = vmatpush.msra.mxu0 %v1033
  %1260 = vmatpush.msra.mxu0 %v1023
  %1261 = vmatpush.msra.mxu0 %v1013
  %1262 = vmatpush.msra.mxu0 %v1003
  %1263 = vmatmul.f32.gmra.mxu0 %v998
  %v1264 = vpop.f32.mrf.mxu0
  %v1265 = vadd.f32 %v1187, %v1264
  %1266 = vmatmul.f32.gmra.mxu0 %v1000
  %v1267 = vpop.f32.mrf.mxu0
  %v1268 = vadd.f32 %v1192, %v1267
  %1269 = vdwg.mxu0
  %1270 = vmatpush.msra.mxu0 0.0
  %1271 = vmatpush.msra.mxu0 0.0
  %1272 = vmatpush.msra.mxu0 0.0
  %1273 = vmatpush.msra.mxu0 0.0
  %1274 = vmatpush.msra.mxu0 0.0
  %1275 = vmatpush.msra.mxu0 0.0
  %1276 = vmatpush.msra.mxu0 0.0
  %1277 = vmatpush.msra.mxu0 0.0
  %1278 = vmatpush.msra.mxu0 0.0
  %1279 = vmatpush.msra.mxu0 0.0
  %1280 = vmatpush.msra.mxu0 0.0
  %1281 = vmatpush.msra.mxu0 0.0
  %1282 = vmatpush.msra.mxu0 0.0
  %1283 = vmatpush.msra.mxu0 0.0
  %1284 = vmatpush.msra.mxu0 %v1173
  %1285 = vmatpush.msra.mxu0 %v1163
  %1286 = vmatmul.f32.gmra.mxu0 %v1196
  %v1287 = vpop.f32.mrf.mxu0
  %v1288 = vadd.f32 %v1265, %v1287
  %1289 = vmatmul.f32.gmra.mxu0 %v1199
  %v1290 = vpop.f32.mrf.mxu0
  %v1291 = vadd.f32 %v1268, %v1290
  %1292 = vdwg.mxu0
  %1293 = vmatpush.msra.mxu0 %v1154
  %1294 = vmatpush.msra.mxu0 %v1144
  %1295 = vmatpush.msra.mxu0 %v1134
  %1296 = vmatpush.msra.mxu0 %v1124
  %1297 = vmatpush.msra.mxu0 %v1114
  %1298 = vmatpush.msra.mxu0 %v1104
  %1299 = vmatpush.msra.mxu0 %v1094
  %1300 = vmatpush.msra.mxu0 %v1084
  %1301 = vmatpush.msra.mxu0 %v1074
  %1302 = vmatpush.msra.mxu0 %v1064
  %1303 = vmatpush.msra.mxu0 %v1054
  %1304 = vmatpush.msra.mxu0 %v1044
  %1305 = vmatpush.msra.mxu0 %v1034
  %1306 = vmatpush.msra.mxu0 %v1024
  %1307 = vmatpush.msra.mxu0 %v1014
  %1308 = vmatpush.msra.mxu0 %v1004
  %1309 = vmatmul.f32.gmra.mxu0 %v998
  %v1310 = vpop.f32.mrf.mxu0
  %v1311 = vadd.f32 %v1187, %v1310
  %1312 = vmatmul.f32.gmra.mxu0 %v1000
  %v1313 = vpop.f32.mrf.mxu0
  %v1314 = vadd.f32 %v1192, %v1313
  %1315 = vdwg.mxu0
  %1316 = vmatpush.msra.mxu0 0.0
  %1317 = vmatpush.msra.mxu0 0.0
  %1318 = vmatpush.msra.mxu0 0.0
  %1319 = vmatpush.msra.mxu0 0.0
  %1320 = vmatpush.msra.mxu0 0.0
  %1321 = vmatpush.msra.mxu0 0.0
  %1322 = vmatpush.msra.mxu0 0.0
  %1323 = vmatpush.msra.mxu0 0.0
  %1324 = vmatpush.msra.mxu0 0.0
  %1325 = vmatpush.msra.mxu0 0.0
  %1326 = vmatpush.msra.mxu0 0.0
  %1327 = vmatpush.msra.mxu0 0.0
  %1328 = vmatpush.msra.mxu0 0.0
  %1329 = vmatpush.msra.mxu0 0.0
  %1330 = vmatpush.msra.mxu0 %v1174
  %1331 = vmatpush.msra.mxu0 %v1164
  %1332 = vmatmul.f32.gmra.mxu0 %v1196
  %v1333 = vpop.f32.mrf.mxu0
  %v1334 = vadd.f32 %v1311, %v1333
  %1335 = vmatmul.f32.gmra.mxu0 %v1199
  %v1336 = vpop.f32.mrf.mxu0
  %v1337 = vadd.f32 %v1314, %v1336
  %1338 = vdwg.mxu0
  %1339 = vmatpush.msra.mxu0 %v1155
  %1340 = vmatpush.msra.mxu0 %v1145
  %1341 = vmatpush.msra.mxu0 %v1135
  %1342 = vmatpush.msra.mxu0 %v1125
  %1343 = vmatpush.msra.mxu0 %v1115
  %1344 = vmatpush.msra.mxu0 %v1105
  %1345 = vmatpush.msra.mxu0 %v1095
  %1346 = vmatpush.msra.mxu0 %v1085
  %1347 = vmatpush.msra.mxu0 %v1075
  %1348 = vmatpush.msra.mxu0 %v1065
  %1349 = vmatpush.msra.mxu0 %v1055
  %1350 = vmatpush.msra.mxu0 %v1045
  %1351 = vmatpush.msra.mxu0 %v1035
  %1352 = vmatpush.msra.mxu0 %v1025
  %1353 = vmatpush.msra.mxu0 %v1015
  %1354 = vmatpush.msra.mxu0 %v1005
  %1355 = vmatmul.f32.gmra.mxu0 %v998
  %v1356 = vpop.f32.mrf.mxu0
  %v1357 = vadd.f32 %v1187, %v1356
  %1358 = vmatmul.f32.gmra.mxu0 %v1000
  %v1359 = vpop.f32.mrf.mxu0
  %v1360 = vadd.f32 %v1192, %v1359
  %1361 = vdwg.mxu0
  %1362 = vmatpush.msra.mxu0 0.0
  %1363 = vmatpush.msra.mxu0 0.0
  %1364 = vmatpush.msra.mxu0 0.0
  %1365 = vmatpush.msra.mxu0 0.0
  %1366 = vmatpush.msra.mxu0 0.0
  %1367 = vmatpush.msra.mxu0 0.0
  %1368 = vmatpush.msra.mxu0 0.0
  %1369 = vmatpush.msra.mxu0 0.0
  %1370 = vmatpush.msra.mxu0 0.0
  %1371 = vmatpush.msra.mxu0 0.0
  %1372 = vmatpush.msra.mxu0 0.0
  %1373 = vmatpush.msra.mxu0 0.0
  %1374 = vmatpush.msra.mxu0 0.0
  %1375 = vmatpush.msra.mxu0 0.0
  %1376 = vmatpush.msra.mxu0 %v1175
  %1377 = vmatpush.msra.mxu0 %v1165
  %1378 = vmatmul.f32.gmra.mxu0 %v1196
  %v1379 = vpop.f32.mrf.mxu0
  %v1380 = vadd.f32 %v1357, %v1379
  %1381 = vmatmul.f32.gmra.mxu0 %v1199
  %v1382 = vpop.f32.mrf.mxu0
  %v1383 = vadd.f32 %v1360, %v1382
  %1384 = vdwg.mxu0
  %1385 = vmatpush.msra.mxu0 %v1156
  %1386 = vmatpush.msra.mxu0 %v1146
  %1387 = vmatpush.msra.mxu0 %v1136
  %1388 = vmatpush.msra.mxu0 %v1126
  %1389 = vmatpush.msra.mxu0 %v1116
  %1390 = vmatpush.msra.mxu0 %v1106
  %1391 = vmatpush.msra.mxu0 %v1096
  %1392 = vmatpush.msra.mxu0 %v1086
  %1393 = vmatpush.msra.mxu0 %v1076
  %1394 = vmatpush.msra.mxu0 %v1066
  %1395 = vmatpush.msra.mxu0 %v1056
  %1396 = vmatpush.msra.mxu0 %v1046
  %1397 = vmatpush.msra.mxu0 %v1036
  %1398 = vmatpush.msra.mxu0 %v1026
  %1399 = vmatpush.msra.mxu0 %v1016
  %1400 = vmatpush.msra.mxu0 %v1006
  %1401 = vmatmul.f32.gmra.mxu0 %v998
  %v1402 = vpop.f32.mrf.mxu0
  %v1403 = vadd.f32 %v1187, %v1402
  %1404 = vmatmul.f32.gmra.mxu0 %v1000
  %v1405 = vpop.f32.mrf.mxu0
  %v1406 = vadd.f32 %v1192, %v1405
  %1407 = vdwg.mxu0
  %1408 = vmatpush.msra.mxu0 0.0
  %1409 = vmatpush.msra.mxu0 0.0
  %1410 = vmatpush.msra.mxu0 0.0
  %1411 = vmatpush.msra.mxu0 0.0
  %1412 = vmatpush.msra.mxu0 0.0
  %1413 = vmatpush.msra.mxu0 0.0
  %1414 = vmatpush.msra.mxu0 0.0
  %1415 = vmatpush.msra.mxu0 0.0
  %1416 = vmatpush.msra.mxu0 0.0
  %1417 = vmatpush.msra.mxu0 0.0
  %1418 = vmatpush.msra.mxu0 0.0
  %1419 = vmatpush.msra.mxu0 0.0
  %1420 = vmatpush.msra.mxu0 0.0
  %1421 = vmatpush.msra.mxu0 0.0
  %1422 = vmatpush.msra.mxu0 %v1176
  %1423 = vmatpush.msra.mxu0 %v1166
  %1424 = vmatmul.f32.gmra.mxu0 %v1196
  %v1425 = vpop.f32.mrf.mxu0
  %v1426 = vadd.f32 %v1403, %v1425
  %1427 = vmatmul.f32.gmra.mxu0 %v1199
  %v1428 = vpop.f32.mrf.mxu0
  %v1429 = vadd.f32 %v1406, %v1428
  %1430 = vdwg.mxu0
  %1431 = vmatpush.msra.mxu0 %v1157
  %1432 = vmatpush.msra.mxu0 %v1147
  %1433 = vmatpush.msra.mxu0 %v1137
  %1434 = vmatpush.msra.mxu0 %v1127
  %1435 = vmatpush.msra.mxu0 %v1117
  %1436 = vmatpush.msra.mxu0 %v1107
  %1437 = vmatpush.msra.mxu0 %v1097
  %1438 = vmatpush.msra.mxu0 %v1087
  %1439 = vmatpush.msra.mxu0 %v1077
  %1440 = vmatpush.msra.mxu0 %v1067
  %1441 = vmatpush.msra.mxu0 %v1057
  %1442 = vmatpush.msra.mxu0 %v1047
  %1443 = vmatpush.msra.mxu0 %v1037
  %1444 = vmatpush.msra.mxu0 %v1027
  %1445 = vmatpush.msra.mxu0 %v1017
  %1446 = vmatpush.msra.mxu0 %v1007
  %1447 = vmatmul.f32.gmra.mxu0 %v998
  %v1448 = vpop.f32.mrf.mxu0
  %v1449 = vadd.f32 %v1187, %v1448
  %1450 = vmatmul.f32.gmra.mxu0 %v1000
  %v1451 = vpop.f32.mrf.mxu0
  %v1452 = vadd.f32 %v1192, %v1451
  %1453 = vdwg.mxu0
  %1454 = vmatpush.msra.mxu0 0.0
  %1455 = vmatpush.msra.mxu0 0.0
  %1456 = vmatpush.msra.mxu0 0.0
  %1457 = vmatpush.msra.mxu0 0.0
  %1458 = vmatpush.msra.mxu0 0.0
  %1459 = vmatpush.msra.mxu0 0.0
  %1460 = vmatpush.msra.mxu0 0.0
  %1461 = vmatpush.msra.mxu0 0.0
  %1462 = vmatpush.msra.mxu0 0.0
  %1463 = vmatpush.msra.mxu0 0.0
  %1464 = vmatpush.msra.mxu0 0.0
  %1465 = vmatpush.msra.mxu0 0.0
  %1466 = vmatpush.msra.mxu0 0.0
  %1467 = vmatpush.msra.mxu0 0.0
  %1468 = vmatpush.msra.mxu0 %v1177
  %1469 = vmatpush.msra.mxu0 %v1167
  %1470 = vmatmul.f32.gmra.mxu0 %v1196
  %v1471 = vpop.f32.mrf.mxu0
  %v1472 = vadd.f32 %v1449, %v1471
  %1473 = vmatmul.f32.gmra.mxu0 %v1199
  %v1474 = vpop.f32.mrf.mxu0
  %v1475 = vadd.f32 %v1452, %v1474
  %1476 = vdwg.mxu0
  %1477 = vmatpush.msra.mxu0 %v1158
  %1478 = vmatpush.msra.mxu0 %v1148
  %1479 = vmatpush.msra.mxu0 %v1138
  %1480 = vmatpush.msra.mxu0 %v1128
  %1481 = vmatpush.msra.mxu0 %v1118
  %1482 = vmatpush.msra.mxu0 %v1108
  %1483 = vmatpush.msra.mxu0 %v1098
  %1484 = vmatpush.msra.mxu0 %v1088
  %1485 = vmatpush.msra.mxu0 %v1078
  %1486 = vmatpush.msra.mxu0 %v1068
  %1487 = vmatpush.msra.mxu0 %v1058
  %1488 = vmatpush.msra.mxu0 %v1048
  %1489 = vmatpush.msra.mxu0 %v1038
  %1490 = vmatpush.msra.mxu0 %v1028
  %1491 = vmatpush.msra.mxu0 %v1018
  %1492 = vmatpush.msra.mxu0 %v1008
  %1493 = vmatmul.f32.gmra.mxu0 %v998
  %v1494 = vpop.f32.mrf.mxu0
  %v1495 = vadd.f32 %v1187, %v1494
  %1496 = vmatmul.f32.gmra.mxu0 %v1000
  %v1497 = vpop.f32.mrf.mxu0
  %v1498 = vadd.f32 %v1192, %v1497
  %1499 = vdwg.mxu0
  %1500 = vmatpush.msra.mxu0 0.0
  %1501 = vmatpush.msra.mxu0 0.0
  %1502 = vmatpush.msra.mxu0 0.0
  %1503 = vmatpush.msra.mxu0 0.0
  %1504 = vmatpush.msra.mxu0 0.0
  %1505 = vmatpush.msra.mxu0 0.0
  %1506 = vmatpush.msra.mxu0 0.0
  %1507 = vmatpush.msra.mxu0 0.0
  %1508 = vmatpush.msra.mxu0 0.0
  %1509 = vmatpush.msra.mxu0 0.0
  %1510 = vmatpush.msra.mxu0 0.0
  %1511 = vmatpush.msra.mxu0 0.0
  %1512 = vmatpush.msra.mxu0 0.0
  %1513 = vmatpush.msra.mxu0 0.0
  %1514 = vmatpush.msra.mxu0 %v1178
  %1515 = vmatpush.msra.mxu0 %v1168
  %1516 = vmatmul.f32.gmra.mxu0 %v1196
  %v1517 = vpop.f32.mrf.mxu0
  %v1518 = vadd.f32 %v1495, %v1517
  %1519 = vmatmul.f32.gmra.mxu0 %v1199
  %v1520 = vpop.f32.mrf.mxu0
  %v1521 = vadd.f32 %v1498, %v1520
  %1522 = vdwg.mxu0
  %1523 = vmatpush.msra.mxu0 %v1159
  %1524 = vmatpush.msra.mxu0 %v1149
  %1525 = vmatpush.msra.mxu0 %v1139
  %1526 = vmatpush.msra.mxu0 %v1129
  %1527 = vmatpush.msra.mxu0 %v1119
  %1528 = vmatpush.msra.mxu0 %v1109
  %1529 = vmatpush.msra.mxu0 %v1099
  %1530 = vmatpush.msra.mxu0 %v1089
  %1531 = vmatpush.msra.mxu0 %v1079
  %1532 = vmatpush.msra.mxu0 %v1069
  %1533 = vmatpush.msra.mxu0 %v1059
  %1534 = vmatpush.msra.mxu0 %v1049
  %1535 = vmatpush.msra.mxu0 %v1039
  %1536 = vmatpush.msra.mxu0 %v1029
  %1537 = vmatpush.msra.mxu0 %v1019
  %1538 = vmatpush.msra.mxu0 %v1009
  %1539 = vmatmul.f32.gmra.mxu0 %v998
  %v1540 = vpop.f32.mrf.mxu0
  %v1541 = vadd.f32 %v1187, %v1540
  %1542 = vmatmul.f32.gmra.mxu0 %v1000
  %v1543 = vpop.f32.mrf.mxu0
  %v1544 = vadd.f32 %v1192, %v1543
  %1545 = vdwg.mxu0
  %1546 = vmatpush.msra.mxu0 0.0
  %1547 = vmatpush.msra.mxu0 0.0
  %1548 = vmatpush.msra.mxu0 0.0
  %1549 = vmatpush.msra.mxu0 0.0
  %1550 = vmatpush.msra.mxu0 0.0
  %1551 = vmatpush.msra.mxu0 0.0
  %1552 = vmatpush.msra.mxu0 0.0
  %1553 = vmatpush.msra.mxu0 0.0
  %1554 = vmatpush.msra.mxu0 0.0
  %1555 = vmatpush.msra.mxu0 0.0
  %1556 = vmatpush.msra.mxu0 0.0
  %1557 = vmatpush.msra.mxu0 0.0
  %1558 = vmatpush.msra.mxu0 0.0
  %1559 = vmatpush.msra.mxu0 0.0
  %1560 = vmatpush.msra.mxu0 %v1179
  %1561 = vmatpush.msra.mxu0 %v1169
  %1562 = vmatmul.f32.gmra.mxu0 %v1196
  %v1563 = vpop.f32.mrf.mxu0
  %v1564 = vadd.f32 %v1541, %v1563
  %1565 = vmatmul.f32.gmra.mxu0 %v1199
  %v1566 = vpop.f32.mrf.mxu0
  %v1567 = vadd.f32 %v1544, %v1566
  %1568 = vdwg.mxu0
  %1569 = vmatpush.msra.mxu0 %v1160
  %1570 = vmatpush.msra.mxu0 %v1150
  %1571 = vmatpush.msra.mxu0 %v1140
  %1572 = vmatpush.msra.mxu0 %v1130
  %1573 = vmatpush.msra.mxu0 %v1120
  %1574 = vmatpush.msra.mxu0 %v1110
  %1575 = vmatpush.msra.mxu0 %v1100
  %1576 = vmatpush.msra.mxu0 %v1090
  %1577 = vmatpush.msra.mxu0 %v1080
  %1578 = vmatpush.msra.mxu0 %v1070
  %1579 = vmatpush.msra.mxu0 %v1060
  %1580 = vmatpush.msra.mxu0 %v1050
  %1581 = vmatpush.msra.mxu0 %v1040
  %1582 = vmatpush.msra.mxu0 %v1030
  %1583 = vmatpush.msra.mxu0 %v1020
  %1584 = vmatpush.msra.mxu0 %v1010
  %1585 = vmatmul.f32.gmra.mxu0 %v998
  %v1586 = vpop.f32.mrf.mxu0
  %v1587 = vadd.f32 %v1187, %v1586
  %1588 = vmatmul.f32.gmra.mxu0 %v1000
  %v1589 = vpop.f32.mrf.mxu0
  %v1590 = vadd.f32 %v1192, %v1589
  %1591 = vdwg.mxu0
  %1592 = vmatpush.msra.mxu0 0.0
  %1593 = vmatpush.msra.mxu0 0.0
  %1594 = vmatpush.msra.mxu0 0.0
  %1595 = vmatpush.msra.mxu0 0.0
  %1596 = vmatpush.msra.mxu0 0.0
  %1597 = vmatpush.msra.mxu0 0.0
  %1598 = vmatpush.msra.mxu0 0.0
  %1599 = vmatpush.msra.mxu0 0.0
  %1600 = vmatpush.msra.mxu0 0.0
  %1601 = vmatpush.msra.mxu0 0.0
  %1602 = vmatpush.msra.mxu0 0.0
  %1603 = vmatpush.msra.mxu0 0.0
  %1604 = vmatpush.msra.mxu0 0.0
  %1605 = vmatpush.msra.mxu0 0.0
  %1606 = vmatpush.msra.mxu0 %v1180
  %1607 = vmatpush.msra.mxu0 %v1170
  %1608 = vmatmul.f32.gmra.mxu0 %v1196
  %v1609 = vpop.f32.mrf.mxu0
  %v1610 = vadd.f32 %v1587, %v1609
  %1611 = vmatmul.f32.gmra.mxu0 %v1199
  %v1612 = vpop.f32.mrf.mxu0
  %v1613 = vadd.f32 %v1590, %v1612
  %1614 = vdwg.mxu0
  %1615 = vmatpush.msra.mxu0 %v1161
  %1616 = vmatpush.msra.mxu0 %v1151
  %1617 = vmatpush.msra.mxu0 %v1141
  %1618 = vmatpush.msra.mxu0 %v1131
  %1619 = vmatpush.msra.mxu0 %v1121
  %1620 = vmatpush.msra.mxu0 %v1111
  %1621 = vmatpush.msra.mxu0 %v1101
  %1622 = vmatpush.msra.mxu0 %v1091
  %1623 = vmatpush.msra.mxu0 %v1081
  %1624 = vmatpush.msra.mxu0 %v1071
  %1625 = vmatpush.msra.mxu0 %v1061
  %1626 = vmatpush.msra.mxu0 %v1051
  %1627 = vmatpush.msra.mxu0 %v1041
  %1628 = vmatpush.msra.mxu0 %v1031
  %1629 = vmatpush.msra.mxu0 %v1021
  %1630 = vmatpush.msra.mxu0 %v1011
  %1631 = vmatmul.f32.gmra.mxu0 %v998
  %v1632 = vpop.f32.mrf.mxu0
  %v1633 = vadd.f32 %v1187, %v1632
  %1634 = vmatmul.f32.gmra.mxu0 %v1000
  %v1635 = vpop.f32.mrf.mxu0
  %v1636 = vadd.f32 %v1192, %v1635
  %1637 = vdwg.mxu0
  %1638 = vmatpush.msra.mxu0 0.0
  %1639 = vmatpush.msra.mxu0 0.0
  %1640 = vmatpush.msra.mxu0 0.0
  %1641 = vmatpush.msra.mxu0 0.0
  %1642 = vmatpush.msra.mxu0 0.0
  %1643 = vmatpush.msra.mxu0 0.0
  %1644 = vmatpush.msra.mxu0 0.0
  %1645 = vmatpush.msra.mxu0 0.0
  %1646 = vmatpush.msra.mxu0 0.0
  %1647 = vmatpush.msra.mxu0 0.0
  %1648 = vmatpush.msra.mxu0 0.0
  %1649 = vmatpush.msra.mxu0 0.0
  %1650 = vmatpush.msra.mxu0 0.0
  %1651 = vmatpush.msra.mxu0 0.0
  %1652 = vmatpush.msra.mxu0 %v1181
  %1653 = vmatpush.msra.mxu0 %v1171
  %1654 = vmatmul.f32.gmra.mxu0 %v1196
  %v1655 = vpop.f32.mrf.mxu0
  %v1656 = vadd.f32 %v1633, %v1655
  %1657 = vmatmul.f32.gmra.mxu0 %v1199
  %v1658 = vpop.f32.mrf.mxu0
  %v1659 = vadd.f32 %v1636, %v1658
  %1660 = vdwg.mxu0
  %v1661 = vmax.f32 %v1242, 0.0
  %v1662 = vmax.f32 %v1288, 0.0
  %v1663 = vmax.f32 %v1334, 0.0
  %v1664 = vmax.f32 %v1380, 0.0
  %v1665 = vmax.f32 %v1426, 0.0
  %v1666 = vmax.f32 %v1472, 0.0
  %v1667 = vmax.f32 %v1518, 0.0
  %v1668 = vmax.f32 %v1564, 0.0
  %v1669 = vmax.f32 %v1610, 0.0
  %v1670 = vmax.f32 %v1656, 0.0
  %v1671 = vmax.f32 %v1245, 0.0
  %v1672 = vmax.f32 %v1291, 0.0
  %v1673 = vmax.f32 %v1337, 0.0
  %v1674 = vmax.f32 %v1383, 0.0
  %v1675 = vmax.f32 %v1429, 0.0
  %v1676 = vmax.f32 %v1475, 0.0
  %v1677 = vmax.f32 %v1521, 0.0
  %v1678 = vmax.f32 %v1567, 0.0
  %v1679 = vmax.f32 %v1613, 0.0
  %v1680 = vmax.f32 %v1659, 0.0
  %1682 = vset.pattern.permute.xlu0 0
  %1683 = vperm.xlu0 %1682, %v110
  %v1684 = vpop.permute.xlu0 %1683
  %1687 = vset.pattern.permute.xlu0 0
  %1688 = vperm.xlu0 %1687, %v111
  %v1689 = vpop.permute.xlu0 %1688
  %v1691 = vmul.f32 %v1661, %v1684
  %v1692 = vmul.f32 %v1662, %v1684
  %v1693 = vmul.f32 %v1663, %v1684
  %v1694 = vmul.f32 %v1664, %v1684
  %v1695 = vmul.f32 %v1665, %v1684
  %v1696 = vmul.f32 %v1666, %v1684
  %v1697 = vmul.f32 %v1667, %v1684
  %v1698 = vmul.f32 %v1668, %v1684
  %v1699 = vmul.f32 %v1669, %v1684
  %v1700 = vmul.f32 %v1670, %v1684
  %v1701 = vmul.f32 %v1671, %v1689
  %v1702 = vmul.f32 %v1672, %v1689
  %v1703 = vmul.f32 %v1673, %v1689
  %v1704 = vmul.f32 %v1674, %v1689
  %v1705 = vmul.f32 %v1675, %v1689
  %v1706 = vmul.f32 %v1676, %v1689
  %v1707 = vmul.f32 %v1677, %v1689
  %v1708 = vmul.f32 %v1678, %v1689
  %v1709 = vmul.f32 %v1679, %v1689
  %v1710 = vmul.f32 %v1680, %v1689
  %1712 = vset.pattern.permute.xlu0 0
  %1713 = vperm.xlu0 %1712, %v112
  %v1714 = vpop.permute.xlu0 %1713
  %1717 = vset.pattern.permute.xlu0 0
  %1718 = vperm.xlu0 %1717, %v113
  %v1719 = vpop.permute.xlu0 %1718
  %v1721 = vsub.f32 %v1691, %v1714
  %v1722 = vsub.f32 %v1692, %v1714
  %v1723 = vsub.f32 %v1693, %v1714
  %v1724 = vsub.f32 %v1694, %v1714
  %v1725 = vsub.f32 %v1695, %v1714
  %v1726 = vsub.f32 %v1696, %v1714
  %v1727 = vsub.f32 %v1697, %v1714
  %v1728 = vsub.f32 %v1698, %v1714
  %v1729 = vsub.f32 %v1699, %v1714
  %v1730 = vsub.f32 %v1700, %v1714
  %v1731 = vsub.f32 %v1701, %v1719
  %v1732 = vsub.f32 %v1702, %v1719
  %v1733 = vsub.f32 %v1703, %v1719
  %v1734 = vsub.f32 %v1704, %v1719
  %v1735 = vsub.f32 %v1705, %v1719
  %v1736 = vsub.f32 %v1706, %v1719
  %v1737 = vsub.f32 %v1707, %v1719
  %v1738 = vsub.f32 %v1708, %v1719
  %v1739 = vsub.f32 %v1709, %v1719
  %v1740 = vsub.f32 %v1710, %v1719
  %v1741 = vmax.f32 %v1721, 0.0
  %v1742 = vmax.f32 %v1722, 0.0
  %v1743 = vmax.f32 %v1723, 0.0
  %v1744 = vmax.f32 %v1724, 0.0
  %v1745 = vmax.f32 %v1725, 0.0
  %v1746 = vmax.f32 %v1726, 0.0
  %v1747 = vmax.f32 %v1727, 0.0
  %v1748 = vmax.f32 %v1728, 0.0
  %v1749 = vmax.f32 %v1729, 0.0
  %v1750 = vmax.f32 %v1730, 0.0
  %v1751 = vmax.f32 %v1731, 0.0
  %v1752 = vmax.f32 %v1732, 0.0
  %v1753 = vmax.f32 %v1733, 0.0
  %v1754 = vmax.f32 %v1734, 0.0
  %v1755 = vmax.f32 %v1735, 0.0
  %v1756 = vmax.f32 %v1736, 0.0
  %v1757 = vmax.f32 %v1737, 0.0
  %v1758 = vmax.f32 %v1738, 0.0
  %v1759 = vmax.f32 %v1739, 0.0
  %v1760 = vmax.f32 %v1740, 0.0
  %1761 = vst [vmem:[%s5] sm:$0xff] %v1741
  %1762 = vst [vmem:[%s5 + $0x8] sm:$0xff] %v1742
  %1763 = vst [vmem:[%s5 + $0x10] sm:$0xff] %v1743
  %1764 = vst [vmem:[%s5 + $0x18] sm:$0xff] %v1744
  %1765 = vst [vmem:[%s5 + $0x20] sm:$0xff] %v1745
  %1766 = vst [vmem:[%s5 + $0x28] sm:$0xff] %v1746
  %1767 = vst [vmem:[%s5 + $0x30] sm:$0xff] %v1747
  %1768 = vst [vmem:[%s5 + $0x38] sm:$0xff] %v1748
  %1769 = vst [vmem:[%s5 + $0x40] sm:$0xff] %v1749
  %1770 = vst [vmem:[%s5 + $0x48] sm:$0xff] %v1750
  %1771 = vst [vmem:[%s5 + $0x50] sm:$0xff] %v1751
  %1772 = vst [vmem:[%s5 + $0x58] sm:$0xff] %v1752
  %1773 = vst [vmem:[%s5 + $0x60] sm:$0xff] %v1753
  %1774 = vst [vmem:[%s5 + $0x68] sm:$0xff] %v1754
  %1775 = vst [vmem:[%s5 + $0x70] sm:$0xff] %v1755
  %1776 = vst [vmem:[%s5 + $0x78] sm:$0xff] %v1756
  %1777 = vst [vmem:[%s5 + $0x80] sm:$0xff] %v1757
  %1778 = vst [vmem:[%s5 + $0x88] sm:$0xff] %v1758
  %1779 = vst [vmem:[%s5 + $0x90] sm:$0xff] %v1759
  %1780 = vst [vmem:[%s5 + $0x98] sm:$0xff] %v1760
  %s1781 = scalar_lea.vmem %s0, 160
  %v1782 = vld [vmem:[%s1781] sm:$0xff]
  %v1783 = vld [vmem:[%s1781 + $0x8] sm:$0xff]
  %v1784 = vld [vmem:[%s1781 + $0x10] sm:$0xff]
  %v1785 = vld [vmem:[%s1781 + $0x18] sm:$0xff]
  %v1786 = vld [vmem:[%s1781 + $0x20] sm:$0xff]
  %v1787 = vld [vmem:[%s1781 + $0x28] sm:$0xff]
  %v1788 = vld [vmem:[%s1781 + $0x30] sm:$0xff]
  %v1789 = vld [vmem:[%s1781 + $0x38] sm:$0xff]
  %v1790 = vld [vmem:[%s1781 + $0x40] sm:$0xff]
  %v1791 = vld [vmem:[%s1781 + $0x48] sm:$0xff]
  %v1792 = vld [vmem:[%s1781 + $0x50] sm:$0xf]
  %v1793 = vld [vmem:[%s1781 + $0x58] sm:$0xf]
  %v1794 = vld [vmem:[%s1781 + $0x60] sm:$0xf]
  %v1795 = vld [vmem:[%s1781 + $0x68] sm:$0xf]
  %v1796 = vld [vmem:[%s1781 + $0x70] sm:$0xf]
  %v1797 = vld [vmem:[%s1781 + $0x78] sm:$0xf]
  %v1798 = vld [vmem:[%s1781 + $0x80] sm:$0xf]
  %v1799 = vld [vmem:[%s1781 + $0x88] sm:$0xf]
  %v1800 = vld [vmem:[%s1781 + $0x90] sm:$0xf]
  %v1801 = vld [vmem:[%s1781 + $0x98] sm:$0xf]
  %1802 = vst [vmem:[#allocation2] sm:$0xff] %v1782
  %1803 = vst [vmem:[#allocation2 + $0x8] sm:$0xff] %v1783
  %1804 = vst [vmem:[#allocation2 + $0x10] sm:$0xff] %v1784
  %1805 = vst [vmem:[#allocation2 + $0x18] sm:$0xff] %v1785
  %1806 = vst [vmem:[#allocation2 + $0x20] sm:$0xff] %v1786
  %1807 = vst [vmem:[#allocation2 + $0x28] sm:$0xff] %v1787
  %1808 = vst [vmem:[#allocation2 + $0x30] sm:$0xff] %v1788
  %1809 = vst [vmem:[#allocation2 + $0x38] sm:$0xff] %v1789
  %1810 = vst [vmem:[#allocation2 + $0x40] sm:$0xff] %v1790
  %1811 = vst [vmem:[#allocation2 + $0x48] sm:$0xff] %v1791
  %1812 = vst [vmem:[#allocation2 + $0x50] sm:$0xf] %v1792
  %1813 = vst [vmem:[#allocation2 + $0x58] sm:$0xf] %v1793
  %1814 = vst [vmem:[#allocation2 + $0x60] sm:$0xf] %v1794
  %1815 = vst [vmem:[#allocation2 + $0x68] sm:$0xf] %v1795
  %1816 = vst [vmem:[#allocation2 + $0x70] sm:$0xf] %v1796
  %1817 = vst [vmem:[#allocation2 + $0x78] sm:$0xf] %v1797
  %1818 = vst [vmem:[#allocation2 + $0x80] sm:$0xf] %v1798
  %1819 = vst [vmem:[#allocation2 + $0x88] sm:$0xf] %v1799
  %1820 = vst [vmem:[#allocation2 + $0x90] sm:$0xf] %v1800
  %1821 = vst [vmem:[#allocation2 + $0x98] sm:$0xf] %v1801
  %1842 = vrot.lane.b32.xlu0 %v1782, 127
  %v1843 = vpop.permute.xlu0 %1842
  %1844 = vrot.lane.b32.xlu0 %v1783, 127
  %v1845 = vpop.permute.xlu0 %1844
  %1846 = vrot.lane.b32.xlu0 %v1784, 127
  %v1847 = vpop.permute.xlu0 %1846
  %1848 = vrot.lane.b32.xlu0 %v1785, 127
  %v1849 = vpop.permute.xlu0 %1848
  %1850 = vrot.lane.b32.xlu0 %v1786, 127
  %v1851 = vpop.permute.xlu0 %1850
  %1852 = vrot.lane.b32.xlu0 %v1787, 127
  %v1853 = vpop.permute.xlu0 %1852
  %1854 = vrot.lane.b32.xlu0 %v1788, 127
  %v1855 = vpop.permute.xlu0 %1854
  %1856 = vrot.lane.b32.xlu0 %v1789, 127
  %v1857 = vpop.permute.xlu0 %1856
  %1858 = vrot.lane.b32.xlu0 %v1790, 127
  %v1859 = vpop.permute.xlu0 %1858
  %1860 = vrot.lane.b32.xlu0 %v1791, 127
  %v1861 = vpop.permute.xlu0 %1860
  %1862 = vrot.lane.b32.xlu0 %v1792, 127
  %v1863 = vpop.permute.xlu0 %1862
  %1864 = vrot.lane.b32.xlu0 %v1793, 127
  %v1865 = vpop.permute.xlu0 %1864
  %1866 = vrot.lane.b32.xlu0 %v1794, 127
  %v1867 = vpop.permute.xlu0 %1866
  %1868 = vrot.lane.b32.xlu0 %v1795, 127
  %v1869 = vpop.permute.xlu0 %1868
  %1870 = vrot.lane.b32.xlu0 %v1796, 127
  %v1871 = vpop.permute.xlu0 %1870
  %1872 = vrot.lane.b32.xlu0 %v1797, 127
  %v1873 = vpop.permute.xlu0 %1872
  %1874 = vrot.lane.b32.xlu0 %v1798, 127
  %v1875 = vpop.permute.xlu0 %1874
  %1876 = vrot.lane.b32.xlu0 %v1799, 127
  %v1877 = vpop.permute.xlu0 %1876
  %1878 = vrot.lane.b32.xlu0 %v1800, 127
  %v1879 = vpop.permute.xlu0 %1878
  %1880 = vrot.lane.b32.xlu0 %v1801, 127
  %v1881 = vpop.permute.xlu0 %1880
  %v1882 = vsel %vm214, %v1843, %v1845
  %v1883 = vsel %vm214, %v1845, %v1847
  %v1884 = vsel %vm214, %v1847, %v1849
  %v1885 = vsel %vm214, %v1849, %v1851
  %v1886 = vsel %vm214, %v1851, %v1853
  %v1887 = vsel %vm214, %v1853, %v1855
  %v1888 = vsel %vm214, %v1855, %v1857
  %v1889 = vsel %vm214, %v1857, %v1859
  %v1890 = vsel %vm214, %v1859, %v1861
  %v1891 = vsel %vm214, %v1863, %v1865
  %v1892 = vsel %vm214, %v1865, %v1867
  %v1893 = vsel %vm214, %v1867, %v1869
  %v1894 = vsel %vm214, %v1869, %v1871
  %v1895 = vsel %vm214, %v1871, %v1873
  %v1896 = vsel %vm214, %v1873, %v1875
  %v1897 = vsel %vm214, %v1875, %v1877
  %v1898 = vsel %vm214, %v1877, %v1879
  %v1899 = vsel %vm214, %v1879, %v1881
  %v1922 = vsel %vm214, %v1861, %v1843
  %v1923 = vsel %vm214, %v1881, %v1863
  %1924 = vst [vmem:[#allocation2 + $0xa0] sm:$0xff] %v1882
  %1925 = vst [vmem:[#allocation2 + $0xa8] sm:$0xff] %v1883
  %1926 = vst [vmem:[#allocation2 + $0xb0] sm:$0xff] %v1884
  %1927 = vst [vmem:[#allocation2 + $0xb8] sm:$0xff] %v1885
  %1928 = vst [vmem:[#allocation2 + $0xc0] sm:$0xff] %v1886
  %1929 = vst [vmem:[#allocation2 + $0xc8] sm:$0xff] %v1887
  %1930 = vst [vmem:[#allocation2 + $0xd0] sm:$0xff] %v1888
  %1931 = vst [vmem:[#allocation2 + $0xd8] sm:$0xff] %v1889
  %1932 = vst [vmem:[#allocation2 + $0xe0] sm:$0xff] %v1890
  %1933 = vst [vmem:[#allocation2 + $0xe8] sm:$0xff] %v1922
  %1934 = vst [vmem:[#allocation2 + $0xf0] sm:$0xf] %v1891
  %1935 = vst [vmem:[#allocation2 + $0xf8] sm:$0xf] %v1892
  %1936 = vst [vmem:[#allocation2 + $0x100] sm:$0xf] %v1893
  %1937 = vst [vmem:[#allocation2 + $0x108] sm:$0xf] %v1894
  %1938 = vst [vmem:[#allocation2 + $0x110] sm:$0xf] %v1895
  %1939 = vst [vmem:[#allocation2 + $0x118] sm:$0xf] %v1896
  %1940 = vst [vmem:[#allocation2 + $0x120] sm:$0xf] %v1897
  %1941 = vst [vmem:[#allocation2 + $0x128] sm:$0xf] %v1898
  %1942 = vst [vmem:[#allocation2 + $0x130] sm:$0xf] %v1899
  %1943 = vst [vmem:[#allocation2 + $0x138] sm:$0xf] %v1923
  %1944 = vrot.lane.b32.xlu0 %v1782, 126
  %v1945 = vpop.permute.xlu0 %1944
  %1946 = vrot.lane.b32.xlu0 %v1783, 126
  %v1947 = vpop.permute.xlu0 %1946
  %1948 = vrot.lane.b32.xlu0 %v1784, 126
  %v1949 = vpop.permute.xlu0 %1948
  %1950 = vrot.lane.b32.xlu0 %v1785, 126
  %v1951 = vpop.permute.xlu0 %1950
  %1952 = vrot.lane.b32.xlu0 %v1786, 126
  %v1953 = vpop.permute.xlu0 %1952
  %1954 = vrot.lane.b32.xlu0 %v1787, 126
  %v1955 = vpop.permute.xlu0 %1954
  %1956 = vrot.lane.b32.xlu0 %v1788, 126
  %v1957 = vpop.permute.xlu0 %1956
  %1958 = vrot.lane.b32.xlu0 %v1789, 126
  %v1959 = vpop.permute.xlu0 %1958
  %1960 = vrot.lane.b32.xlu0 %v1790, 126
  %v1961 = vpop.permute.xlu0 %1960
  %1962 = vrot.lane.b32.xlu0 %v1791, 126
  %v1963 = vpop.permute.xlu0 %1962
  %1964 = vrot.lane.b32.xlu0 %v1792, 126
  %v1965 = vpop.permute.xlu0 %1964
  %1966 = vrot.lane.b32.xlu0 %v1793, 126
  %v1967 = vpop.permute.xlu0 %1966
  %1968 = vrot.lane.b32.xlu0 %v1794, 126
  %v1969 = vpop.permute.xlu0 %1968
  %1970 = vrot.lane.b32.xlu0 %v1795, 126
  %v1971 = vpop.permute.xlu0 %1970
  %1972 = vrot.lane.b32.xlu0 %v1796, 126
  %v1973 = vpop.permute.xlu0 %1972
  %1974 = vrot.lane.b32.xlu0 %v1797, 126
  %v1975 = vpop.permute.xlu0 %1974
  %1976 = vrot.lane.b32.xlu0 %v1798, 126
  %v1977 = vpop.permute.xlu0 %1976
  %1978 = vrot.lane.b32.xlu0 %v1799, 126
  %v1979 = vpop.permute.xlu0 %1978
  %1980 = vrot.lane.b32.xlu0 %v1800, 126
  %v1981 = vpop.permute.xlu0 %1980
  %1982 = vrot.lane.b32.xlu0 %v1801, 126
  %v1983 = vpop.permute.xlu0 %1982
  %v1984 = vsel %vm317, %v1945, %v1947
  %v1985 = vsel %vm317, %v1947, %v1949
  %v1986 = vsel %vm317, %v1949, %v1951
  %v1987 = vsel %vm317, %v1951, %v1953
  %v1988 = vsel %vm317, %v1953, %v1955
  %v1989 = vsel %vm317, %v1955, %v1957
  %v1990 = vsel %vm317, %v1957, %v1959
  %v1991 = vsel %vm317, %v1959, %v1961
  %v1992 = vsel %vm317, %v1961, %v1963
  %v1993 = vsel %vm317, %v1965, %v1967
  %v1994 = vsel %vm317, %v1967, %v1969
  %v1995 = vsel %vm317, %v1969, %v1971
  %v1996 = vsel %vm317, %v1971, %v1973
  %v1997 = vsel %vm317, %v1973, %v1975
  %v1998 = vsel %vm317, %v1975, %v1977
  %v1999 = vsel %vm317, %v1977, %v1979
  %v2000 = vsel %vm317, %v1979, %v1981
  %v2001 = vsel %vm317, %v1981, %v1983
  %v2024 = vsel %vm317, %v1963, %v1945
  %v2025 = vsel %vm317, %v1983, %v1965
  %2026 = vst [vmem:[#allocation2 + $0x140] sm:$0xff] %v1984
  %2027 = vst [vmem:[#allocation2 + $0x148] sm:$0xff] %v1985
  %2028 = vst [vmem:[#allocation2 + $0x150] sm:$0xff] %v1986
  %2029 = vst [vmem:[#allocation2 + $0x158] sm:$0xff] %v1987
  %2030 = vst [vmem:[#allocation2 + $0x160] sm:$0xff] %v1988
  %2031 = vst [vmem:[#allocation2 + $0x168] sm:$0xff] %v1989
  %2032 = vst [vmem:[#allocation2 + $0x170] sm:$0xff] %v1990
  %2033 = vst [vmem:[#allocation2 + $0x178] sm:$0xff] %v1991
  %2034 = vst [vmem:[#allocation2 + $0x180] sm:$0xff] %v1992
  %2035 = vst [vmem:[#allocation2 + $0x188] sm:$0xff] %v2024
  %2036 = vst [vmem:[#allocation2 + $0x190] sm:$0xf] %v1993
  %2037 = vst [vmem:[#allocation2 + $0x198] sm:$0xf] %v1994
  %2038 = vst [vmem:[#allocation2 + $0x1a0] sm:$0xf] %v1995
  %2039 = vst [vmem:[#allocation2 + $0x1a8] sm:$0xf] %v1996
  %2040 = vst [vmem:[#allocation2 + $0x1b0] sm:$0xf] %v1997
  %2041 = vst [vmem:[#allocation2 + $0x1b8] sm:$0xf] %v1998
  %2042 = vst [vmem:[#allocation2 + $0x1c0] sm:$0xf] %v1999
  %2043 = vst [vmem:[#allocation2 + $0x1c8] sm:$0xf] %v2000
  %2044 = vst [vmem:[#allocation2 + $0x1d0] sm:$0xf] %v2001
  %2045 = vst [vmem:[#allocation2 + $0x1d8] sm:$0xf] %v2025
  %2046 = vrot.lane.b32.xlu0 %v1782, 94
  %v2047 = vpop.permute.xlu0 %2046
  %2048 = vrot.lane.b32.xlu0 %v1783, 94
  %v2049 = vpop.permute.xlu0 %2048
  %2050 = vrot.lane.b32.xlu0 %v1784, 94
  %v2051 = vpop.permute.xlu0 %2050
  %2052 = vrot.lane.b32.xlu0 %v1785, 94
  %v2053 = vpop.permute.xlu0 %2052
  %2054 = vrot.lane.b32.xlu0 %v1786, 94
  %v2055 = vpop.permute.xlu0 %2054
  %2056 = vrot.lane.b32.xlu0 %v1787, 94
  %v2057 = vpop.permute.xlu0 %2056
  %2058 = vrot.lane.b32.xlu0 %v1788, 94
  %v2059 = vpop.permute.xlu0 %2058
  %2060 = vrot.lane.b32.xlu0 %v1789, 94
  %v2061 = vpop.permute.xlu0 %2060
  %2062 = vrot.lane.b32.xlu0 %v1790, 94
  %v2063 = vpop.permute.xlu0 %2062
  %2064 = vrot.lane.b32.xlu0 %v1791, 94
  %v2065 = vpop.permute.xlu0 %2064
  %2066 = vrot.lane.b32.xlu0 %v1792, 94
  %v2067 = vpop.permute.xlu0 %2066
  %2068 = vrot.lane.b32.xlu0 %v1793, 94
  %v2069 = vpop.permute.xlu0 %2068
  %2070 = vrot.lane.b32.xlu0 %v1794, 94
  %v2071 = vpop.permute.xlu0 %2070
  %2072 = vrot.lane.b32.xlu0 %v1795, 94
  %v2073 = vpop.permute.xlu0 %2072
  %2074 = vrot.lane.b32.xlu0 %v1796, 94
  %v2075 = vpop.permute.xlu0 %2074
  %2076 = vrot.lane.b32.xlu0 %v1797, 94
  %v2077 = vpop.permute.xlu0 %2076
  %2078 = vrot.lane.b32.xlu0 %v1798, 94
  %v2079 = vpop.permute.xlu0 %2078
  %2080 = vrot.lane.b32.xlu0 %v1799, 94
  %v2081 = vpop.permute.xlu0 %2080
  %2082 = vrot.lane.b32.xlu0 %v1800, 94
  %v2083 = vpop.permute.xlu0 %2082
  %2084 = vrot.lane.b32.xlu0 %v1801, 94
  %v2085 = vpop.permute.xlu0 %2084
  %v2086 = vsel %vm420, %v2047, %v2049
  %v2087 = vsel %vm420, %v2049, %v2051
  %v2088 = vsel %vm420, %v2051, %v2053
  %v2089 = vsel %vm420, %v2053, %v2055
  %v2090 = vsel %vm420, %v2055, %v2057
  %v2091 = vsel %vm420, %v2057, %v2059
  %v2092 = vsel %vm420, %v2059, %v2061
  %v2093 = vsel %vm420, %v2061, %v2063
  %v2094 = vsel %vm420, %v2063, %v2065
  %v2095 = vsel %vm420, %v2067, %v2069
  %v2096 = vsel %vm420, %v2069, %v2071
  %v2097 = vsel %vm420, %v2071, %v2073
  %v2098 = vsel %vm420, %v2073, %v2075
  %v2099 = vsel %vm420, %v2075, %v2077
  %v2100 = vsel %vm420, %v2077, %v2079
  %v2101 = vsel %vm420, %v2079, %v2081
  %v2102 = vsel %vm420, %v2081, %v2083
  %v2103 = vsel %vm420, %v2083, %v2085
  %v2126 = vsel %vm420, %v2065, %v2047
  %v2127 = vsel %vm420, %v2085, %v2067
  %2128 = vst [vmem:[#allocation2 + $0x1e0] sm:$0xff] %v2086
  %2129 = vst [vmem:[#allocation2 + $0x1e8] sm:$0xff] %v2087
  %2130 = vst [vmem:[#allocation2 + $0x1f0] sm:$0xff] %v2088
  %2131 = vst [vmem:[#allocation2 + $0x1f8] sm:$0xff] %v2089
  %2132 = vst [vmem:[#allocation2 + $0x200] sm:$0xff] %v2090
  %2133 = vst [vmem:[#allocation2 + $0x208] sm:$0xff] %v2091
  %2134 = vst [vmem:[#allocation2 + $0x210] sm:$0xff] %v2092
  %2135 = vst [vmem:[#allocation2 + $0x218] sm:$0xff] %v2093
  %2136 = vst [vmem:[#allocation2 + $0x220] sm:$0xff] %v2094
  %2137 = vst [vmem:[#allocation2 + $0x228] sm:$0xff] %v2126
  %2138 = vst [vmem:[#allocation2 + $0x230] sm:$0xf] %v2095
  %2139 = vst [vmem:[#allocation2 + $0x238] sm:$0xf] %v2096
  %2140 = vst [vmem:[#allocation2 + $0x240] sm:$0xf] %v2097
  %2141 = vst [vmem:[#allocation2 + $0x248] sm:$0xf] %v2098
  %2142 = vst [vmem:[#allocation2 + $0x250] sm:$0xf] %v2099
  %2143 = vst [vmem:[#allocation2 + $0x258] sm:$0xf] %v2100
  %2144 = vst [vmem:[#allocation2 + $0x260] sm:$0xf] %v2101
  %2145 = vst [vmem:[#allocation2 + $0x268] sm:$0xf] %v2102
  %2146 = vst [vmem:[#allocation2 + $0x270] sm:$0xf] %v2103
  %2147 = vst [vmem:[#allocation2 + $0x278] sm:$0xf] %v2127
  %2148 = vrot.lane.b32.xlu0 %v1782, 93
  %v2149 = vpop.permute.xlu0 %2148
  %2150 = vrot.lane.b32.xlu0 %v1783, 93
  %v2151 = vpop.permute.xlu0 %2150
  %2152 = vrot.lane.b32.xlu0 %v1784, 93
  %v2153 = vpop.permute.xlu0 %2152
  %2154 = vrot.lane.b32.xlu0 %v1785, 93
  %v2155 = vpop.permute.xlu0 %2154
  %2156 = vrot.lane.b32.xlu0 %v1786, 93
  %v2157 = vpop.permute.xlu0 %2156
  %2158 = vrot.lane.b32.xlu0 %v1787, 93
  %v2159 = vpop.permute.xlu0 %2158
  %2160 = vrot.lane.b32.xlu0 %v1788, 93
  %v2161 = vpop.permute.xlu0 %2160
  %2162 = vrot.lane.b32.xlu0 %v1789, 93
  %v2163 = vpop.permute.xlu0 %2162
  %2164 = vrot.lane.b32.xlu0 %v1790, 93
  %v2165 = vpop.permute.xlu0 %2164
  %2166 = vrot.lane.b32.xlu0 %v1791, 93
  %v2167 = vpop.permute.xlu0 %2166
  %2168 = vrot.lane.b32.xlu0 %v1792, 93
  %v2169 = vpop.permute.xlu0 %2168
  %2170 = vrot.lane.b32.xlu0 %v1793, 93
  %v2171 = vpop.permute.xlu0 %2170
  %2172 = vrot.lane.b32.xlu0 %v1794, 93
  %v2173 = vpop.permute.xlu0 %2172
  %2174 = vrot.lane.b32.xlu0 %v1795, 93
  %v2175 = vpop.permute.xlu0 %2174
  %2176 = vrot.lane.b32.xlu0 %v1796, 93
  %v2177 = vpop.permute.xlu0 %2176
  %2178 = vrot.lane.b32.xlu0 %v1797, 93
  %v2179 = vpop.permute.xlu0 %2178
  %2180 = vrot.lane.b32.xlu0 %v1798, 93
  %v2181 = vpop.permute.xlu0 %2180
  %2182 = vrot.lane.b32.xlu0 %v1799, 93
  %v2183 = vpop.permute.xlu0 %2182
  %2184 = vrot.lane.b32.xlu0 %v1800, 93
  %v2185 = vpop.permute.xlu0 %2184
  %2186 = vrot.lane.b32.xlu0 %v1801, 93
  %v2187 = vpop.permute.xlu0 %2186
  %v2188 = vsel %vm523, %v2149, %v2151
  %v2189 = vsel %vm523, %v2151, %v2153
  %v2190 = vsel %vm523, %v2153, %v2155
  %v2191 = vsel %vm523, %v2155, %v2157
  %v2192 = vsel %vm523, %v2157, %v2159
  %v2193 = vsel %vm523, %v2159, %v2161
  %v2194 = vsel %vm523, %v2161, %v2163
  %v2195 = vsel %vm523, %v2163, %v2165
  %v2196 = vsel %vm523, %v2165, %v2167
  %v2197 = vsel %vm523, %v2169, %v2171
  %v2198 = vsel %vm523, %v2171, %v2173
  %v2199 = vsel %vm523, %v2173, %v2175
  %v2200 = vsel %vm523, %v2175, %v2177
  %v2201 = vsel %vm523, %v2177, %v2179
  %v2202 = vsel %vm523, %v2179, %v2181
  %v2203 = vsel %vm523, %v2181, %v2183
  %v2204 = vsel %vm523, %v2183, %v2185
  %v2205 = vsel %vm523, %v2185, %v2187
  %v2228 = vsel %vm523, %v2167, %v2149
  %v2229 = vsel %vm523, %v2187, %v2169
  %2230 = vst [vmem:[#allocation2 + $0x280] sm:$0xff] %v2188
  %2231 = vst [vmem:[#allocation2 + $0x288] sm:$0xff] %v2189
  %2232 = vst [vmem:[#allocation2 + $0x290] sm:$0xff] %v2190
  %2233 = vst [vmem:[#allocation2 + $0x298] sm:$0xff] %v2191
  %2234 = vst [vmem:[#allocation2 + $0x2a0] sm:$0xff] %v2192
  %2235 = vst [vmem:[#allocation2 + $0x2a8] sm:$0xff] %v2193
  %2236 = vst [vmem:[#allocation2 + $0x2b0] sm:$0xff] %v2194
  %2237 = vst [vmem:[#allocation2 + $0x2b8] sm:$0xff] %v2195
  %2238 = vst [vmem:[#allocation2 + $0x2c0] sm:$0xff] %v2196
  %2239 = vst [vmem:[#allocation2 + $0x2c8] sm:$0xff] %v2228
  %2240 = vst [vmem:[#allocation2 + $0x2d0] sm:$0xf] %v2197
  %2241 = vst [vmem:[#allocation2 + $0x2d8] sm:$0xf] %v2198
  %2242 = vst [vmem:[#allocation2 + $0x2e0] sm:$0xf] %v2199
  %2243 = vst [vmem:[#allocation2 + $0x2e8] sm:$0xf] %v2200
  %2244 = vst [vmem:[#allocation2 + $0x2f0] sm:$0xf] %v2201
  %2245 = vst [vmem:[#allocation2 + $0x2f8] sm:$0xf] %v2202
  %2246 = vst [vmem:[#allocation2 + $0x300] sm:$0xf] %v2203
  %2247 = vst [vmem:[#allocation2 + $0x308] sm:$0xf] %v2204
  %2248 = vst [vmem:[#allocation2 + $0x310] sm:$0xf] %v2205
  %2249 = vst [vmem:[#allocation2 + $0x318] sm:$0xf] %v2229
  %2250 = vrot.lane.b32.xlu0 %v1782, 92
  %v2251 = vpop.permute.xlu0 %2250
  %2252 = vrot.lane.b32.xlu0 %v1783, 92
  %v2253 = vpop.permute.xlu0 %2252
  %2254 = vrot.lane.b32.xlu0 %v1784, 92
  %v2255 = vpop.permute.xlu0 %2254
  %2256 = vrot.lane.b32.xlu0 %v1785, 92
  %v2257 = vpop.permute.xlu0 %2256
  %2258 = vrot.lane.b32.xlu0 %v1786, 92
  %v2259 = vpop.permute.xlu0 %2258
  %2260 = vrot.lane.b32.xlu0 %v1787, 92
  %v2261 = vpop.permute.xlu0 %2260
  %2262 = vrot.lane.b32.xlu0 %v1788, 92
  %v2263 = vpop.permute.xlu0 %2262
  %2264 = vrot.lane.b32.xlu0 %v1789, 92
  %v2265 = vpop.permute.xlu0 %2264
  %2266 = vrot.lane.b32.xlu0 %v1790, 92
  %v2267 = vpop.permute.xlu0 %2266
  %2268 = vrot.lane.b32.xlu0 %v1791, 92
  %v2269 = vpop.permute.xlu0 %2268
  %2270 = vrot.lane.b32.xlu0 %v1792, 92
  %v2271 = vpop.permute.xlu0 %2270
  %2272 = vrot.lane.b32.xlu0 %v1793, 92
  %v2273 = vpop.permute.xlu0 %2272
  %2274 = vrot.lane.b32.xlu0 %v1794, 92
  %v2275 = vpop.permute.xlu0 %2274
  %2276 = vrot.lane.b32.xlu0 %v1795, 92
  %v2277 = vpop.permute.xlu0 %2276
  %2278 = vrot.lane.b32.xlu0 %v1796, 92
  %v2279 = vpop.permute.xlu0 %2278
  %2280 = vrot.lane.b32.xlu0 %v1797, 92
  %v2281 = vpop.permute.xlu0 %2280
  %2282 = vrot.lane.b32.xlu0 %v1798, 92
  %v2283 = vpop.permute.xlu0 %2282
  %2284 = vrot.lane.b32.xlu0 %v1799, 92
  %v2285 = vpop.permute.xlu0 %2284
  %2286 = vrot.lane.b32.xlu0 %v1800, 92
  %v2287 = vpop.permute.xlu0 %2286
  %2288 = vrot.lane.b32.xlu0 %v1801, 92
  %v2289 = vpop.permute.xlu0 %2288
  %v2290 = vsel %vm626, %v2251, %v2253
  %v2291 = vsel %vm626, %v2253, %v2255
  %v2292 = vsel %vm626, %v2255, %v2257
  %v2293 = vsel %vm626, %v2257, %v2259
  %v2294 = vsel %vm626, %v2259, %v2261
  %v2295 = vsel %vm626, %v2261, %v2263
  %v2296 = vsel %vm626, %v2263, %v2265
  %v2297 = vsel %vm626, %v2265, %v2267
  %v2298 = vsel %vm626, %v2267, %v2269
  %v2299 = vsel %vm626, %v2271, %v2273
  %v2300 = vsel %vm626, %v2273, %v2275
  %v2301 = vsel %vm626, %v2275, %v2277
  %v2302 = vsel %vm626, %v2277, %v2279
  %v2303 = vsel %vm626, %v2279, %v2281
  %v2304 = vsel %vm626, %v2281, %v2283
  %v2305 = vsel %vm626, %v2283, %v2285
  %v2306 = vsel %vm626, %v2285, %v2287
  %v2307 = vsel %vm626, %v2287, %v2289
  %v2330 = vsel %vm626, %v2269, %v2251
  %v2331 = vsel %vm626, %v2289, %v2271
  %2332 = vst [vmem:[#allocation2 + $0x320] sm:$0xff] %v2290
  %2333 = vst [vmem:[#allocation2 + $0x328] sm:$0xff] %v2291
  %2334 = vst [vmem:[#allocation2 + $0x330] sm:$0xff] %v2292
  %2335 = vst [vmem:[#allocation2 + $0x338] sm:$0xff] %v2293
  %2336 = vst [vmem:[#allocation2 + $0x340] sm:$0xff] %v2294
  %2337 = vst [vmem:[#allocation2 + $0x348] sm:$0xff] %v2295
  %2338 = vst [vmem:[#allocation2 + $0x350] sm:$0xff] %v2296
  %2339 = vst [vmem:[#allocation2 + $0x358] sm:$0xff] %v2297
  %2340 = vst [vmem:[#allocation2 + $0x360] sm:$0xff] %v2298
  %2341 = vst [vmem:[#allocation2 + $0x368] sm:$0xff] %v2330
  %2342 = vst [vmem:[#allocation2 + $0x370] sm:$0xf] %v2299
  %2343 = vst [vmem:[#allocation2 + $0x378] sm:$0xf] %v2300
  %2344 = vst [vmem:[#allocation2 + $0x380] sm:$0xf] %v2301
  %2345 = vst [vmem:[#allocation2 + $0x388] sm:$0xf] %v2302
  %2346 = vst [vmem:[#allocation2 + $0x390] sm:$0xf] %v2303
  %2347 = vst [vmem:[#allocation2 + $0x398] sm:$0xf] %v2304
  %2348 = vst [vmem:[#allocation2 + $0x3a0] sm:$0xf] %v2305
  %2349 = vst [vmem:[#allocation2 + $0x3a8] sm:$0xf] %v2306
  %2350 = vst [vmem:[#allocation2 + $0x3b0] sm:$0xf] %v2307
  %2351 = vst [vmem:[#allocation2 + $0x3b8] sm:$0xf] %v2331
  %2352 = vrot.lane.b32.xlu0 %v1782, 60
  %v2353 = vpop.permute.xlu0 %2352
  %2354 = vrot.lane.b32.xlu0 %v1783, 60
  %v2355 = vpop.permute.xlu0 %2354
  %2356 = vrot.lane.b32.xlu0 %v1784, 60
  %v2357 = vpop.permute.xlu0 %2356
  %2358 = vrot.lane.b32.xlu0 %v1785, 60
  %v2359 = vpop.permute.xlu0 %2358
  %2360 = vrot.lane.b32.xlu0 %v1786, 60
  %v2361 = vpop.permute.xlu0 %2360
  %2362 = vrot.lane.b32.xlu0 %v1787, 60
  %v2363 = vpop.permute.xlu0 %2362
  %2364 = vrot.lane.b32.xlu0 %v1788, 60
  %v2365 = vpop.permute.xlu0 %2364
  %2366 = vrot.lane.b32.xlu0 %v1789, 60
  %v2367 = vpop.permute.xlu0 %2366
  %2368 = vrot.lane.b32.xlu0 %v1790, 60
  %v2369 = vpop.permute.xlu0 %2368
  %2370 = vrot.lane.b32.xlu0 %v1791, 60
  %v2371 = vpop.permute.xlu0 %2370
  %2372 = vrot.lane.b32.xlu0 %v1792, 60
  %v2373 = vpop.permute.xlu0 %2372
  %2374 = vrot.lane.b32.xlu0 %v1793, 60
  %v2375 = vpop.permute.xlu0 %2374
  %2376 = vrot.lane.b32.xlu0 %v1794, 60
  %v2377 = vpop.permute.xlu0 %2376
  %2378 = vrot.lane.b32.xlu0 %v1795, 60
  %v2379 = vpop.permute.xlu0 %2378
  %2380 = vrot.lane.b32.xlu0 %v1796, 60
  %v2381 = vpop.permute.xlu0 %2380
  %2382 = vrot.lane.b32.xlu0 %v1797, 60
  %v2383 = vpop.permute.xlu0 %2382
  %2384 = vrot.lane.b32.xlu0 %v1798, 60
  %v2385 = vpop.permute.xlu0 %2384
  %2386 = vrot.lane.b32.xlu0 %v1799, 60
  %v2387 = vpop.permute.xlu0 %2386
  %2388 = vrot.lane.b32.xlu0 %v1800, 60
  %v2389 = vpop.permute.xlu0 %2388
  %2390 = vrot.lane.b32.xlu0 %v1801, 60
  %v2391 = vpop.permute.xlu0 %2390
  %v2392 = vsel %vm729, %v2353, %v2355
  %v2393 = vsel %vm729, %v2355, %v2357
  %v2394 = vsel %vm729, %v2357, %v2359
  %v2395 = vsel %vm729, %v2359, %v2361
  %v2396 = vsel %vm729, %v2361, %v2363
  %v2397 = vsel %vm729, %v2363, %v2365
  %v2398 = vsel %vm729, %v2365, %v2367
  %v2399 = vsel %vm729, %v2367, %v2369
  %v2400 = vsel %vm729, %v2369, %v2371
  %v2401 = vsel %vm729, %v2373, %v2375
  %v2402 = vsel %vm729, %v2375, %v2377
  %v2403 = vsel %vm729, %v2377, %v2379
  %v2404 = vsel %vm729, %v2379, %v2381
  %v2405 = vsel %vm729, %v2381, %v2383
  %v2406 = vsel %vm729, %v2383, %v2385
  %v2407 = vsel %vm729, %v2385, %v2387
  %v2408 = vsel %vm729, %v2387, %v2389
  %v2409 = vsel %vm729, %v2389, %v2391
  %v2432 = vsel %vm729, %v2371, %v2353
  %v2433 = vsel %vm729, %v2391, %v2373
  %2434 = vst [vmem:[#allocation2 + $0x3c0] sm:$0xff] %v2392
  %2435 = vst [vmem:[#allocation2 + $0x3c8] sm:$0xff] %v2393
  %2436 = vst [vmem:[#allocation2 + $0x3d0] sm:$0xff] %v2394
  %2437 = vst [vmem:[#allocation2 + $0x3d8] sm:$0xff] %v2395
  %2438 = vst [vmem:[#allocation2 + $0x3e0] sm:$0xff] %v2396
  %2439 = vst [vmem:[#allocation2 + $0x3e8] sm:$0xff] %v2397
  %2440 = vst [vmem:[#allocation2 + $0x3f0] sm:$0xff] %v2398
  %2441 = vst [vmem:[#allocation2 + $0x3f8] sm:$0xff] %v2399
  %2442 = vst [vmem:[#allocation2 + $0x400] sm:$0xff] %v2400
  %2443 = vst [vmem:[#allocation2 + $0x408] sm:$0xff] %v2432
  %2444 = vst [vmem:[#allocation2 + $0x410] sm:$0xf] %v2401
  %2445 = vst [vmem:[#allocation2 + $0x418] sm:$0xf] %v2402
  %2446 = vst [vmem:[#allocation2 + $0x420] sm:$0xf] %v2403
  %2447 = vst [vmem:[#allocation2 + $0x428] sm:$0xf] %v2404
  %2448 = vst [vmem:[#allocation2 + $0x430] sm:$0xf] %v2405
  %2449 = vst [vmem:[#allocation2 + $0x438] sm:$0xf] %v2406
  %2450 = vst [vmem:[#allocation2 + $0x440] sm:$0xf] %v2407
  %2451 = vst [vmem:[#allocation2 + $0x448] sm:$0xf] %v2408
  %2452 = vst [vmem:[#allocation2 + $0x450] sm:$0xf] %v2409
  %2453 = vst [vmem:[#allocation2 + $0x458] sm:$0xf] %v2433
  %2454 = vrot.lane.b32.xlu0 %v1782, 59
  %v2455 = vpop.permute.xlu0 %2454
  %2456 = vrot.lane.b32.xlu0 %v1783, 59
  %v2457 = vpop.permute.xlu0 %2456
  %2458 = vrot.lane.b32.xlu0 %v1784, 59
  %v2459 = vpop.permute.xlu0 %2458
  %2460 = vrot.lane.b32.xlu0 %v1785, 59
  %v2461 = vpop.permute.xlu0 %2460
  %2462 = vrot.lane.b32.xlu0 %v1786, 59
  %v2463 = vpop.permute.xlu0 %2462
  %2464 = vrot.lane.b32.xlu0 %v1787, 59
  %v2465 = vpop.permute.xlu0 %2464
  %2466 = vrot.lane.b32.xlu0 %v1788, 59
  %v2467 = vpop.permute.xlu0 %2466
  %2468 = vrot.lane.b32.xlu0 %v1789, 59
  %v2469 = vpop.permute.xlu0 %2468
  %2470 = vrot.lane.b32.xlu0 %v1790, 59
  %v2471 = vpop.permute.xlu0 %2470
  %2472 = vrot.lane.b32.xlu0 %v1791, 59
  %v2473 = vpop.permute.xlu0 %2472
  %2474 = vrot.lane.b32.xlu0 %v1792, 59
  %v2475 = vpop.permute.xlu0 %2474
  %2476 = vrot.lane.b32.xlu0 %v1793, 59
  %v2477 = vpop.permute.xlu0 %2476
  %2478 = vrot.lane.b32.xlu0 %v1794, 59
  %v2479 = vpop.permute.xlu0 %2478
  %2480 = vrot.lane.b32.xlu0 %v1795, 59
  %v2481 = vpop.permute.xlu0 %2480
  %2482 = vrot.lane.b32.xlu0 %v1796, 59
  %v2483 = vpop.permute.xlu0 %2482
  %2484 = vrot.lane.b32.xlu0 %v1797, 59
  %v2485 = vpop.permute.xlu0 %2484
  %2486 = vrot.lane.b32.xlu0 %v1798, 59
  %v2487 = vpop.permute.xlu0 %2486
  %2488 = vrot.lane.b32.xlu0 %v1799, 59
  %v2489 = vpop.permute.xlu0 %2488
  %2490 = vrot.lane.b32.xlu0 %v1800, 59
  %v2491 = vpop.permute.xlu0 %2490
  %2492 = vrot.lane.b32.xlu0 %v1801, 59
  %v2493 = vpop.permute.xlu0 %2492
  %v2494 = vsel %vm832, %v2455, %v2457
  %v2495 = vsel %vm832, %v2457, %v2459
  %v2496 = vsel %vm832, %v2459, %v2461
  %v2497 = vsel %vm832, %v2461, %v2463
  %v2498 = vsel %vm832, %v2463, %v2465
  %v2499 = vsel %vm832, %v2465, %v2467
  %v2500 = vsel %vm832, %v2467, %v2469
  %v2501 = vsel %vm832, %v2469, %v2471
  %v2502 = vsel %vm832, %v2471, %v2473
  %v2503 = vsel %vm832, %v2475, %v2477
  %v2504 = vsel %vm832, %v2477, %v2479
  %v2505 = vsel %vm832, %v2479, %v2481
  %v2506 = vsel %vm832, %v2481, %v2483
  %v2507 = vsel %vm832, %v2483, %v2485
  %v2508 = vsel %vm832, %v2485, %v2487
  %v2509 = vsel %vm832, %v2487, %v2489
  %v2510 = vsel %vm832, %v2489, %v2491
  %v2511 = vsel %vm832, %v2491, %v2493
  %v2534 = vsel %vm832, %v2473, %v2455
  %v2535 = vsel %vm832, %v2493, %v2475
  %2536 = vst [vmem:[#allocation2 + $0x460] sm:$0xff] %v2494
  %2537 = vst [vmem:[#allocation2 + $0x468] sm:$0xff] %v2495
  %2538 = vst [vmem:[#allocation2 + $0x470] sm:$0xff] %v2496
  %2539 = vst [vmem:[#allocation2 + $0x478] sm:$0xff] %v2497
  %2540 = vst [vmem:[#allocation2 + $0x480] sm:$0xff] %v2498
  %2541 = vst [vmem:[#allocation2 + $0x488] sm:$0xff] %v2499
  %2542 = vst [vmem:[#allocation2 + $0x490] sm:$0xff] %v2500
  %2543 = vst [vmem:[#allocation2 + $0x498] sm:$0xff] %v2501
  %2544 = vst [vmem:[#allocation2 + $0x4a0] sm:$0xff] %v2502
  %2545 = vst [vmem:[#allocation2 + $0x4a8] sm:$0xff] %v2534
  %2546 = vst [vmem:[#allocation2 + $0x4b0] sm:$0xf] %v2503
  %2547 = vst [vmem:[#allocation2 + $0x4b8] sm:$0xf] %v2504
  %2548 = vst [vmem:[#allocation2 + $0x4c0] sm:$0xf] %v2505
  %2549 = vst [vmem:[#allocation2 + $0x4c8] sm:$0xf] %v2506
  %2550 = vst [vmem:[#allocation2 + $0x4d0] sm:$0xf] %v2507
  %2551 = vst [vmem:[#allocation2 + $0x4d8] sm:$0xf] %v2508
  %2552 = vst [vmem:[#allocation2 + $0x4e0] sm:$0xf] %v2509
  %2553 = vst [vmem:[#allocation2 + $0x4e8] sm:$0xf] %v2510
  %2554 = vst [vmem:[#allocation2 + $0x4f0] sm:$0xf] %v2511
  %2555 = vst [vmem:[#allocation2 + $0x4f8] sm:$0xf] %v2535
  %2556 = vrot.lane.b32.xlu0 %v1782, 58
  %v2557 = vpop.permute.xlu0 %2556
  %2558 = vrot.lane.b32.xlu0 %v1783, 58
  %v2559 = vpop.permute.xlu0 %2558
  %2560 = vrot.lane.b32.xlu0 %v1784, 58
  %v2561 = vpop.permute.xlu0 %2560
  %2562 = vrot.lane.b32.xlu0 %v1785, 58
  %v2563 = vpop.permute.xlu0 %2562
  %2564 = vrot.lane.b32.xlu0 %v1786, 58
  %v2565 = vpop.permute.xlu0 %2564
  %2566 = vrot.lane.b32.xlu0 %v1787, 58
  %v2567 = vpop.permute.xlu0 %2566
  %2568 = vrot.lane.b32.xlu0 %v1788, 58
  %v2569 = vpop.permute.xlu0 %2568
  %2570 = vrot.lane.b32.xlu0 %v1789, 58
  %v2571 = vpop.permute.xlu0 %2570
  %2572 = vrot.lane.b32.xlu0 %v1790, 58
  %v2573 = vpop.permute.xlu0 %2572
  %2574 = vrot.lane.b32.xlu0 %v1791, 58
  %v2575 = vpop.permute.xlu0 %2574
  %2576 = vrot.lane.b32.xlu0 %v1792, 58
  %v2577 = vpop.permute.xlu0 %2576
  %2578 = vrot.lane.b32.xlu0 %v1793, 58
  %v2579 = vpop.permute.xlu0 %2578
  %2580 = vrot.lane.b32.xlu0 %v1794, 58
  %v2581 = vpop.permute.xlu0 %2580
  %2582 = vrot.lane.b32.xlu0 %v1795, 58
  %v2583 = vpop.permute.xlu0 %2582
  %2584 = vrot.lane.b32.xlu0 %v1796, 58
  %v2585 = vpop.permute.xlu0 %2584
  %2586 = vrot.lane.b32.xlu0 %v1797, 58
  %v2587 = vpop.permute.xlu0 %2586
  %2588 = vrot.lane.b32.xlu0 %v1798, 58
  %v2589 = vpop.permute.xlu0 %2588
  %2590 = vrot.lane.b32.xlu0 %v1799, 58
  %v2591 = vpop.permute.xlu0 %2590
  %2592 = vrot.lane.b32.xlu0 %v1800, 58
  %v2593 = vpop.permute.xlu0 %2592
  %2594 = vrot.lane.b32.xlu0 %v1801, 58
  %v2595 = vpop.permute.xlu0 %2594
  %v2596 = vsel %vm935, %v2557, %v2559
  %v2597 = vsel %vm935, %v2559, %v2561
  %v2598 = vsel %vm935, %v2561, %v2563
  %v2599 = vsel %vm935, %v2563, %v2565
  %v2600 = vsel %vm935, %v2565, %v2567
  %v2601 = vsel %vm935, %v2567, %v2569
  %v2602 = vsel %vm935, %v2569, %v2571
  %v2603 = vsel %vm935, %v2571, %v2573
  %v2604 = vsel %vm935, %v2573, %v2575
  %v2605 = vsel %vm935, %v2577, %v2579
  %v2606 = vsel %vm935, %v2579, %v2581
  %v2607 = vsel %vm935, %v2581, %v2583
  %v2608 = vsel %vm935, %v2583, %v2585
  %v2609 = vsel %vm935, %v2585, %v2587
  %v2610 = vsel %vm935, %v2587, %v2589
  %v2611 = vsel %vm935, %v2589, %v2591
  %v2612 = vsel %vm935, %v2591, %v2593
  %v2613 = vsel %vm935, %v2593, %v2595
  %v2636 = vsel %vm935, %v2575, %v2557
  %v2637 = vsel %vm935, %v2595, %v2577
  %2638 = vst [vmem:[#allocation2 + $0x500] sm:$0xff] %v2596
  %2639 = vst [vmem:[#allocation2 + $0x508] sm:$0xff] %v2597
  %2640 = vst [vmem:[#allocation2 + $0x510] sm:$0xff] %v2598
  %2641 = vst [vmem:[#allocation2 + $0x518] sm:$0xff] %v2599
  %2642 = vst [vmem:[#allocation2 + $0x520] sm:$0xff] %v2600
  %2643 = vst [vmem:[#allocation2 + $0x528] sm:$0xff] %v2601
  %2644 = vst [vmem:[#allocation2 + $0x530] sm:$0xff] %v2602
  %2645 = vst [vmem:[#allocation2 + $0x538] sm:$0xff] %v2603
  %2646 = vst [vmem:[#allocation2 + $0x540] sm:$0xff] %v2604
  %2647 = vst [vmem:[#allocation2 + $0x548] sm:$0xff] %v2636
  %2648 = vst [vmem:[#allocation2 + $0x550] sm:$0xf] %v2605
  %2649 = vst [vmem:[#allocation2 + $0x558] sm:$0xf] %v2606
  %2650 = vst [vmem:[#allocation2 + $0x560] sm:$0xf] %v2607
  %2651 = vst [vmem:[#allocation2 + $0x568] sm:$0xf] %v2608
  %2652 = vst [vmem:[#allocation2 + $0x570] sm:$0xf] %v2609
  %2653 = vst [vmem:[#allocation2 + $0x578] sm:$0xf] %v2610
  %2654 = vst [vmem:[#allocation2 + $0x580] sm:$0xf] %v2611
  %2655 = vst [vmem:[#allocation2 + $0x588] sm:$0xf] %v2612
  %2656 = vst [vmem:[#allocation2 + $0x590] sm:$0xf] %v2613
  %2657 = vst [vmem:[#allocation2 + $0x598] sm:$0xf] %v2637
  %v2658 = vld [vmem:[%s1] sm:$0xff]
  %v2659 = vld [vmem:[%s1 + $0x8] sm:$0xff]
  %v2660 = vld [vmem:[%s1 + $0x10] sm:$0xff]
  %v2661 = vld [vmem:[%s1 + $0x18] sm:$0xff]
  %v2662 = vld [vmem:[#allocation2] sm:$0xff]
  %v2663 = vld [vmem:[#allocation2 + $0x8] sm:$0xff]
  %v2664 = vld [vmem:[#allocation2 + $0x10] sm:$0xff]
  %v2665 = vld [vmem:[#allocation2 + $0x18] sm:$0xff]
  %v2666 = vld [vmem:[#allocation2 + $0x20] sm:$0xff]
  %v2667 = vld [vmem:[#allocation2 + $0x28] sm:$0xff]
  %v2668 = vld [vmem:[#allocation2 + $0x30] sm:$0xff]
  %v2669 = vld [vmem:[#allocation2 + $0x38] sm:$0xff]
  %v2670 = vld [vmem:[#allocation2 + $0x40] sm:$0xff]
  %v2671 = vld [vmem:[#allocation2 + $0x48] sm:$0xff]
  %v2672 = vld [vmem:[#allocation2 + $0x50] sm:$0xff]
  %v2673 = vld [vmem:[#allocation2 + $0x58] sm:$0xff]
  %v2674 = vld [vmem:[#allocation2 + $0x60] sm:$0xff]
  %v2675 = vld [vmem:[#allocation2 + $0x68] sm:$0xff]
  %v2676 = vld [vmem:[#allocation2 + $0x70] sm:$0xff]
  %v2677 = vld [vmem:[#allocation2 + $0x78] sm:$0xff]
  %v2678 = vld [vmem:[#allocation2 + $0x80] sm:$0xff]
  %v2679 = vld [vmem:[#allocation2 + $0x88] sm:$0xff]
  %v2680 = vld [vmem:[#allocation2 + $0x90] sm:$0xff]
  %v2681 = vld [vmem:[#allocation2 + $0x98] sm:$0xff]
  %v2682 = vld [vmem:[#allocation2 + $0xa0] sm:$0xff]
  %v2683 = vld [vmem:[#allocation2 + $0xa8] sm:$0xff]
  %v2684 = vld [vmem:[#allocation2 + $0xb0] sm:$0xff]
  %v2685 = vld [vmem:[#allocation2 + $0xb8] sm:$0xff]
  %v2686 = vld [vmem:[#allocation2 + $0xc0] sm:$0xff]
  %v2687 = vld [vmem:[#allocation2 + $0xc8] sm:$0xff]
  %v2688 = vld [vmem:[#allocation2 + $0xd0] sm:$0xff]
  %v2689 = vld [vmem:[#allocation2 + $0xd8] sm:$0xff]
  %v2690 = vld [vmem:[#allocation2 + $0xe0] sm:$0xff]
  %v2691 = vld [vmem:[#allocation2 + $0xe8] sm:$0xff]
  %v2692 = vld [vmem:[#allocation2 + $0xf0] sm:$0xff]
  %v2693 = vld [vmem:[#allocation2 + $0xf8] sm:$0xff]
  %v2694 = vld [vmem:[#allocation2 + $0x100] sm:$0xff]
  %v2695 = vld [vmem:[#allocation2 + $0x108] sm:$0xff]
  %v2696 = vld [vmem:[#allocation2 + $0x110] sm:$0xff]
  %v2697 = vld [vmem:[#allocation2 + $0x118] sm:$0xff]
  %v2698 = vld [vmem:[#allocation2 + $0x120] sm:$0xff]
  %v2699 = vld [vmem:[#allocation2 + $0x128] sm:$0xff]
  %v2700 = vld [vmem:[#allocation2 + $0x130] sm:$0xff]
  %v2701 = vld [vmem:[#allocation2 + $0x138] sm:$0xff]
  %v2702 = vld [vmem:[#allocation2 + $0x140] sm:$0xff]
  %v2703 = vld [vmem:[#allocation2 + $0x148] sm:$0xff]
  %v2704 = vld [vmem:[#allocation2 + $0x150] sm:$0xff]
  %v2705 = vld [vmem:[#allocation2 + $0x158] sm:$0xff]
  %v2706 = vld [vmem:[#allocation2 + $0x160] sm:$0xff]
  %v2707 = vld [vmem:[#allocation2 + $0x168] sm:$0xff]
  %v2708 = vld [vmem:[#allocation2 + $0x170] sm:$0xff]
  %v2709 = vld [vmem:[#allocation2 + $0x178] sm:$0xff]
  %v2710 = vld [vmem:[#allocation2 + $0x180] sm:$0xff]
  %v2711 = vld [vmem:[#allocation2 + $0x188] sm:$0xff]
  %v2712 = vld [vmem:[#allocation2 + $0x190] sm:$0xff]
  %v2713 = vld [vmem:[#allocation2 + $0x198] sm:$0xff]
  %v2714 = vld [vmem:[#allocation2 + $0x1a0] sm:$0xff]
  %v2715 = vld [vmem:[#allocation2 + $0x1a8] sm:$0xff]
  %v2716 = vld [vmem:[#allocation2 + $0x1b0] sm:$0xff]
  %v2717 = vld [vmem:[#allocation2 + $0x1b8] sm:$0xff]
  %v2718 = vld [vmem:[#allocation2 + $0x1c0] sm:$0xff]
  %v2719 = vld [vmem:[#allocation2 + $0x1c8] sm:$0xff]
  %v2720 = vld [vmem:[#allocation2 + $0x1d0] sm:$0xff]
  %v2721 = vld [vmem:[#allocation2 + $0x1d8] sm:$0xff]
  %v2722 = vld [vmem:[#allocation2 + $0x1e0] sm:$0xff]
  %v2723 = vld [vmem:[#allocation2 + $0x1e8] sm:$0xff]
  %v2724 = vld [vmem:[#allocation2 + $0x1f0] sm:$0xff]
  %v2725 = vld [vmem:[#allocation2 + $0x1f8] sm:$0xff]
  %v2726 = vld [vmem:[#allocation2 + $0x200] sm:$0xff]
  %v2727 = vld [vmem:[#allocation2 + $0x208] sm:$0xff]
  %v2728 = vld [vmem:[#allocation2 + $0x210] sm:$0xff]
  %v2729 = vld [vmem:[#allocation2 + $0x218] sm:$0xff]
  %v2730 = vld [vmem:[#allocation2 + $0x220] sm:$0xff]
  %v2731 = vld [vmem:[#allocation2 + $0x228] sm:$0xff]
  %v2732 = vld [vmem:[#allocation2 + $0x230] sm:$0xff]
  %v2733 = vld [vmem:[#allocation2 + $0x238] sm:$0xff]
  %v2734 = vld [vmem:[#allocation2 + $0x240] sm:$0xff]
  %v2735 = vld [vmem:[#allocation2 + $0x248] sm:$0xff]
  %v2736 = vld [vmem:[#allocation2 + $0x250] sm:$0xff]
  %v2737 = vld [vmem:[#allocation2 + $0x258] sm:$0xff]
  %v2738 = vld [vmem:[#allocation2 + $0x260] sm:$0xff]
  %v2739 = vld [vmem:[#allocation2 + $0x268] sm:$0xff]
  %v2740 = vld [vmem:[#allocation2 + $0x270] sm:$0xff]
  %v2741 = vld [vmem:[#allocation2 + $0x278] sm:$0xff]
  %v2742 = vld [vmem:[#allocation2 + $0x280] sm:$0xff]
  %v2743 = vld [vmem:[#allocation2 + $0x288] sm:$0xff]
  %v2744 = vld [vmem:[#allocation2 + $0x290] sm:$0xff]
  %v2745 = vld [vmem:[#allocation2 + $0x298] sm:$0xff]
  %v2746 = vld [vmem:[#allocation2 + $0x2a0] sm:$0xff]
  %v2747 = vld [vmem:[#allocation2 + $0x2a8] sm:$0xff]
  %v2748 = vld [vmem:[#allocation2 + $0x2b0] sm:$0xff]
  %v2749 = vld [vmem:[#allocation2 + $0x2b8] sm:$0xff]
  %v2750 = vld [vmem:[#allocation2 + $0x2c0] sm:$0xff]
  %v2751 = vld [vmem:[#allocation2 + $0x2c8] sm:$0xff]
  %v2752 = vld [vmem:[#allocation2 + $0x2d0] sm:$0xff]
  %v2753 = vld [vmem:[#allocation2 + $0x2d8] sm:$0xff]
  %v2754 = vld [vmem:[#allocation2 + $0x2e0] sm:$0xff]
  %v2755 = vld [vmem:[#allocation2 + $0x2e8] sm:$0xff]
  %v2756 = vld [vmem:[#allocation2 + $0x2f0] sm:$0xff]
  %v2757 = vld [vmem:[#allocation2 + $0x2f8] sm:$0xff]
  %v2758 = vld [vmem:[#allocation2 + $0x300] sm:$0xff]
  %v2759 = vld [vmem:[#allocation2 + $0x308] sm:$0xff]
  %v2760 = vld [vmem:[#allocation2 + $0x310] sm:$0xff]
  %v2761 = vld [vmem:[#allocation2 + $0x318] sm:$0xff]
  %v2762 = vld [vmem:[#allocation2 + $0x320] sm:$0xff]
  %v2763 = vld [vmem:[#allocation2 + $0x328] sm:$0xff]
  %v2764 = vld [vmem:[#allocation2 + $0x330] sm:$0xff]
  %v2765 = vld [vmem:[#allocation2 + $0x338] sm:$0xff]
  %v2766 = vld [vmem:[#allocation2 + $0x340] sm:$0xff]
  %v2767 = vld [vmem:[#allocation2 + $0x348] sm:$0xff]
  %v2768 = vld [vmem:[#allocation2 + $0x350] sm:$0xff]
  %v2769 = vld [vmem:[#allocation2 + $0x358] sm:$0xff]
  %v2770 = vld [vmem:[#allocation2 + $0x360] sm:$0xff]
  %v2771 = vld [vmem:[#allocation2 + $0x368] sm:$0xff]
  %v2772 = vld [vmem:[#allocation2 + $0x370] sm:$0xff]
  %v2773 = vld [vmem:[#allocation2 + $0x378] sm:$0xff]
  %v2774 = vld [vmem:[#allocation2 + $0x380] sm:$0xff]
  %v2775 = vld [vmem:[#allocation2 + $0x388] sm:$0xff]
  %v2776 = vld [vmem:[#allocation2 + $0x390] sm:$0xff]
  %v2777 = vld [vmem:[#allocation2 + $0x398] sm:$0xff]
  %v2778 = vld [vmem:[#allocation2 + $0x3a0] sm:$0xff]
  %v2779 = vld [vmem:[#allocation2 + $0x3a8] sm:$0xff]
  %v2780 = vld [vmem:[#allocation2 + $0x3b0] sm:$0xff]
  %v2781 = vld [vmem:[#allocation2 + $0x3b8] sm:$0xff]
  %v2782 = vld [vmem:[#allocation2 + $0x3c0] sm:$0xff]
  %v2783 = vld [vmem:[#allocation2 + $0x3c8] sm:$0xff]
  %v2784 = vld [vmem:[#allocation2 + $0x3d0] sm:$0xff]
  %v2785 = vld [vmem:[#allocation2 + $0x3d8] sm:$0xff]
  %v2786 = vld [vmem:[#allocation2 + $0x3e0] sm:$0xff]
  %v2787 = vld [vmem:[#allocation2 + $0x3e8] sm:$0xff]
  %v2788 = vld [vmem:[#allocation2 + $0x3f0] sm:$0xff]
  %v2789 = vld [vmem:[#allocation2 + $0x3f8] sm:$0xff]
  %v2790 = vld [vmem:[#allocation2 + $0x400] sm:$0xff]
  %v2791 = vld [vmem:[#allocation2 + $0x408] sm:$0xff]
  %v2792 = vld [vmem:[#allocation2 + $0x410] sm:$0xff]
  %v2793 = vld [vmem:[#allocation2 + $0x418] sm:$0xff]
  %v2794 = vld [vmem:[#allocation2 + $0x420] sm:$0xff]
  %v2795 = vld [vmem:[#allocation2 + $0x428] sm:$0xff]
  %v2796 = vld [vmem:[#allocation2 + $0x430] sm:$0xff]
  %v2797 = vld [vmem:[#allocation2 + $0x438] sm:$0xff]
  %v2798 = vld [vmem:[#allocation2 + $0x440] sm:$0xff]
  %v2799 = vld [vmem:[#allocation2 + $0x448] sm:$0xff]
  %v2800 = vld [vmem:[#allocation2 + $0x450] sm:$0xff]
  %v2801 = vld [vmem:[#allocation2 + $0x458] sm:$0xff]
  %v2802 = vld [vmem:[#allocation2 + $0x460] sm:$0xff]
  %v2803 = vld [vmem:[#allocation2 + $0x468] sm:$0xff]
  %v2804 = vld [vmem:[#allocation2 + $0x470] sm:$0xff]
  %v2805 = vld [vmem:[#allocation2 + $0x478] sm:$0xff]
  %v2806 = vld [vmem:[#allocation2 + $0x480] sm:$0xff]
  %v2807 = vld [vmem:[#allocation2 + $0x488] sm:$0xff]
  %v2808 = vld [vmem:[#allocation2 + $0x490] sm:$0xff]
  %v2809 = vld [vmem:[#allocation2 + $0x498] sm:$0xff]
  %v2810 = vld [vmem:[#allocation2 + $0x4a0] sm:$0xff]
  %v2811 = vld [vmem:[#allocation2 + $0x4a8] sm:$0xff]
  %v2812 = vld [vmem:[#allocation2 + $0x4b0] sm:$0xff]
  %v2813 = vld [vmem:[#allocation2 + $0x4b8] sm:$0xff]
  %v2814 = vld [vmem:[#allocation2 + $0x4c0] sm:$0xff]
  %v2815 = vld [vmem:[#allocation2 + $0x4c8] sm:$0xff]
  %v2816 = vld [vmem:[#allocation2 + $0x4d0] sm:$0xff]
  %v2817 = vld [vmem:[#allocation2 + $0x4d8] sm:$0xff]
  %v2818 = vld [vmem:[#allocation2 + $0x4e0] sm:$0xff]
  %v2819 = vld [vmem:[#allocation2 + $0x4e8] sm:$0xff]
  %v2820 = vld [vmem:[#allocation2 + $0x4f0] sm:$0xff]
  %v2821 = vld [vmem:[#allocation2 + $0x4f8] sm:$0xff]
  %v2822 = vld [vmem:[#allocation2 + $0x500] sm:$0xff]
  %v2823 = vld [vmem:[#allocation2 + $0x508] sm:$0xff]
  %v2824 = vld [vmem:[#allocation2 + $0x510] sm:$0xff]
  %v2825 = vld [vmem:[#allocation2 + $0x518] sm:$0xff]
  %v2826 = vld [vmem:[#allocation2 + $0x520] sm:$0xff]
  %v2827 = vld [vmem:[#allocation2 + $0x528] sm:$0xff]
  %v2828 = vld [vmem:[#allocation2 + $0x530] sm:$0xff]
  %v2829 = vld [vmem:[#allocation2 + $0x538] sm:$0xff]
  %v2830 = vld [vmem:[#allocation2 + $0x540] sm:$0xff]
  %v2831 = vld [vmem:[#allocation2 + $0x548] sm:$0xff]
  %v2832 = vld [vmem:[#allocation2 + $0x550] sm:$0xff]
  %v2833 = vld [vmem:[#allocation2 + $0x558] sm:$0xff]
  %v2834 = vld [vmem:[#allocation2 + $0x560] sm:$0xff]
  %v2835 = vld [vmem:[#allocation2 + $0x568] sm:$0xff]
  %v2836 = vld [vmem:[#allocation2 + $0x570] sm:$0xff]
  %v2837 = vld [vmem:[#allocation2 + $0x578] sm:$0xff]
  %v2838 = vld [vmem:[#allocation2 + $0x580] sm:$0xff]
  %v2839 = vld [vmem:[#allocation2 + $0x588] sm:$0xff]
  %v2840 = vld [vmem:[#allocation2 + $0x590] sm:$0xff]
  %v2841 = vld [vmem:[#allocation2 + $0x598] sm:$0xff]
  %v2842 = vld [vmem:[%s2] sm:$0xff]
  %v2843 = vld [vmem:[%s2 + $0x8] sm:$0xff]
  %2845 = vset.pattern.permute.xlu0 0
  %2846 = vperm.xlu0 %2845, %v2842
  %v2847 = vpop.permute.xlu0 %2846
  %2850 = vset.pattern.permute.xlu0 0
  %2851 = vperm.xlu0 %2850, %v2843
  %v2852 = vpop.permute.xlu0 %2851
  %v2855 = vsel %vm1194, %v2659, 0
  %v2858 = vsel %vm1194, %v2661, 0
  %2860 = vmatpush.msra.mxu0 %v2812
  %2861 = vmatpush.msra.mxu0 %v2802
  %2862 = vmatpush.msra.mxu0 %v2792
  %2863 = vmatpush.msra.mxu0 %v2782
  %2864 = vmatpush.msra.mxu0 %v2772
  %2865 = vmatpush.msra.mxu0 %v2762
  %2866 = vmatpush.msra.mxu0 %v2752
  %2867 = vmatpush.msra.mxu0 %v2742
  %2868 = vmatpush.msra.mxu0 %v2732
  %2869 = vmatpush.msra.mxu0 %v2722
  %2870 = vmatpush.msra.mxu0 %v2712
  %2871 = vmatpush.msra.mxu0 %v2702
  %2872 = vmatpush.msra.mxu0 %v2692
  %2873 = vmatpush.msra.mxu0 %v2682
  %2874 = vmatpush.msra.mxu0 %v2672
  %2875 = vmatpush.msra.mxu0 %v2662
  %2876 = vmatmul.f32.gmra.mxu0 %v2658
  %v2877 = vpop.f32.mrf.mxu0
  %v2878 = vadd.f32 %v2847, %v2877
  %2879 = vmatmul.f32.gmra.mxu0 %v2660
  %v2880 = vpop.f32.mrf.mxu0
  %v2881 = vadd.f32 %v2852, %v2880
  %2882 = vdwg.mxu0
  %2883 = vmatpush.msra.mxu0 0.0
  %2884 = vmatpush.msra.mxu0 0.0
  %2885 = vmatpush.msra.mxu0 0.0
  %2886 = vmatpush.msra.mxu0 0.0
  %2887 = vmatpush.msra.mxu0 0.0
  %2888 = vmatpush.msra.mxu0 0.0
  %2889 = vmatpush.msra.mxu0 0.0
  %2890 = vmatpush.msra.mxu0 0.0
  %2891 = vmatpush.msra.mxu0 0.0
  %2892 = vmatpush.msra.mxu0 0.0
  %2893 = vmatpush.msra.mxu0 0.0
  %2894 = vmatpush.msra.mxu0 0.0
  %2895 = vmatpush.msra.mxu0 0.0
  %2896 = vmatpush.msra.mxu0 0.0
  %2897 = vmatpush.msra.mxu0 %v2832
  %2898 = vmatpush.msra.mxu0 %v2822
  %2899 = vmatmul.f32.gmra.mxu0 %v2855
  %v2900 = vpop.f32.mrf.mxu0
  %v2901 = vadd.f32 %v2878, %v2900
  %2902 = vmatmul.f32.gmra.mxu0 %v2858
  %v2903 = vpop.f32.mrf.mxu0
  %v2904 = vadd.f32 %v2881, %v2903
  %2905 = vdwg.mxu0
  %2906 = vmatpush.msra.mxu0 %v2813
  %2907 = vmatpush.msra.mxu0 %v2803
  %2908 = vmatpush.msra.mxu0 %v2793
  %2909 = vmatpush.msra.mxu0 %v2783
  %2910 = vmatpush.msra.mxu0 %v2773
  %2911 = vmatpush.msra.mxu0 %v2763
  %2912 = vmatpush.msra.mxu0 %v2753
  %2913 = vmatpush.msra.mxu0 %v2743
  %2914 = vmatpush.msra.mxu0 %v2733
  %2915 = vmatpush.msra.mxu0 %v2723
  %2916 = vmatpush.msra.mxu0 %v2713
  %2917 = vmatpush.msra.mxu0 %v2703
  %2918 = vmatpush.msra.mxu0 %v2693
  %2919 = vmatpush.msra.mxu0 %v2683
  %2920 = vmatpush.msra.mxu0 %v2673
  %2921 = vmatpush.msra.mxu0 %v2663
  %2922 = vmatmul.f32.gmra.mxu0 %v2658
  %v2923 = vpop.f32.mrf.mxu0
  %v2924 = vadd.f32 %v2847, %v2923
  %2925 = vmatmul.f32.gmra.mxu0 %v2660
  %v2926 = vpop.f32.mrf.mxu0
  %v2927 = vadd.f32 %v2852, %v2926
  %2928 = vdwg.mxu0
  %2929 = vmatpush.msra.mxu0 0.0
  %2930 = vmatpush.msra.mxu0 0.0
  %2931 = vmatpush.msra.mxu0 0.0
  %2932 = vmatpush.msra.mxu0 0.0
  %2933 = vmatpush.msra.mxu0 0.0
  %2934 = vmatpush.msra.mxu0 0.0
  %2935 = vmatpush.msra.mxu0 0.0
  %2936 = vmatpush.msra.mxu0 0.0
  %2937 = vmatpush.msra.mxu0 0.0
  %2938 = vmatpush.msra.mxu0 0.0
  %2939 = vmatpush.msra.mxu0 0.0
  %2940 = vmatpush.msra.mxu0 0.0
  %2941 = vmatpush.msra.mxu0 0.0
  %2942 = vmatpush.msra.mxu0 0.0
  %2943 = vmatpush.msra.mxu0 %v2833
  %2944 = vmatpush.msra.mxu0 %v2823
  %2945 = vmatmul.f32.gmra.mxu0 %v2855
  %v2946 = vpop.f32.mrf.mxu0
  %v2947 = vadd.f32 %v2924, %v2946
  %2948 = vmatmul.f32.gmra.mxu0 %v2858
  %v2949 = vpop.f32.mrf.mxu0
  %v2950 = vadd.f32 %v2927, %v2949
  %2951 = vdwg.mxu0
  %2952 = vmatpush.msra.mxu0 %v2814
  %2953 = vmatpush.msra.mxu0 %v2804
  %2954 = vmatpush.msra.mxu0 %v2794
  %2955 = vmatpush.msra.mxu0 %v2784
  %2956 = vmatpush.msra.mxu0 %v2774
  %2957 = vmatpush.msra.mxu0 %v2764
  %2958 = vmatpush.msra.mxu0 %v2754
  %2959 = vmatpush.msra.mxu0 %v2744
  %2960 = vmatpush.msra.mxu0 %v2734
  %2961 = vmatpush.msra.mxu0 %v2724
  %2962 = vmatpush.msra.mxu0 %v2714
  %2963 = vmatpush.msra.mxu0 %v2704
  %2964 = vmatpush.msra.mxu0 %v2694
  %2965 = vmatpush.msra.mxu0 %v2684
  %2966 = vmatpush.msra.mxu0 %v2674
  %2967 = vmatpush.msra.mxu0 %v2664
  %2968 = vmatmul.f32.gmra.mxu0 %v2658
  %v2969 = vpop.f32.mrf.mxu0
  %v2970 = vadd.f32 %v2847, %v2969
  %2971 = vmatmul.f32.gmra.mxu0 %v2660
  %v2972 = vpop.f32.mrf.mxu0
  %v2973 = vadd.f32 %v2852, %v2972
  %2974 = vdwg.mxu0
  %2975 = vmatpush.msra.mxu0 0.0
  %2976 = vmatpush.msra.mxu0 0.0
  %2977 = vmatpush.msra.mxu0 0.0
  %2978 = vmatpush.msra.mxu0 0.0
  %2979 = vmatpush.msra.mxu0 0.0
  %2980 = vmatpush.msra.mxu0 0.0
  %2981 = vmatpush.msra.mxu0 0.0
  %2982 = vmatpush.msra.mxu0 0.0
  %2983 = vmatpush.msra.mxu0 0.0
  %2984 = vmatpush.msra.mxu0 0.0
  %2985 = vmatpush.msra.mxu0 0.0
  %2986 = vmatpush.msra.mxu0 0.0
  %2987 = vmatpush.msra.mxu0 0.0
  %2988 = vmatpush.msra.mxu0 0.0
  %2989 = vmatpush.msra.mxu0 %v2834
  %2990 = vmatpush.msra.mxu0 %v2824
  %2991 = vmatmul.f32.gmra.mxu0 %v2855
  %v2992 = vpop.f32.mrf.mxu0
  %v2993 = vadd.f32 %v2970, %v2992
  %2994 = vmatmul.f32.gmra.mxu0 %v2858
  %v2995 = vpop.f32.mrf.mxu0
  %v2996 = vadd.f32 %v2973, %v2995
  %2997 = vdwg.mxu0
  %2998 = vmatpush.msra.mxu0 %v2815
  %2999 = vmatpush.msra.mxu0 %v2805
  %3000 = vmatpush.msra.mxu0 %v2795
  %3001 = vmatpush.msra.mxu0 %v2785
  %3002 = vmatpush.msra.mxu0 %v2775
  %3003 = vmatpush.msra.mxu0 %v2765
  %3004 = vmatpush.msra.mxu0 %v2755
  %3005 = vmatpush.msra.mxu0 %v2745
  %3006 = vmatpush.msra.mxu0 %v2735
  %3007 = vmatpush.msra.mxu0 %v2725
  %3008 = vmatpush.msra.mxu0 %v2715
  %3009 = vmatpush.msra.mxu0 %v2705
  %3010 = vmatpush.msra.mxu0 %v2695
  %3011 = vmatpush.msra.mxu0 %v2685
  %3012 = vmatpush.msra.mxu0 %v2675
  %3013 = vmatpush.msra.mxu0 %v2665
  %3014 = vmatmul.f32.gmra.mxu0 %v2658
  %v3015 = vpop.f32.mrf.mxu0
  %v3016 = vadd.f32 %v2847, %v3015
  %3017 = vmatmul.f32.gmra.mxu0 %v2660
  %v3018 = vpop.f32.mrf.mxu0
  %v3019 = vadd.f32 %v2852, %v3018
  %3020 = vdwg.mxu0
  %3021 = vmatpush.msra.mxu0 0.0
  %3022 = vmatpush.msra.mxu0 0.0
  %3023 = vmatpush.msra.mxu0 0.0
  %3024 = vmatpush.msra.mxu0 0.0
  %3025 = vmatpush.msra.mxu0 0.0
  %3026 = vmatpush.msra.mxu0 0.0
  %3027 = vmatpush.msra.mxu0 0.0
  %3028 = vmatpush.msra.mxu0 0.0
  %3029 = vmatpush.msra.mxu0 0.0
  %3030 = vmatpush.msra.mxu0 0.0
  %3031 = vmatpush.msra.mxu0 0.0
  %3032 = vmatpush.msra.mxu0 0.0
  %3033 = vmatpush.msra.mxu0 0.0
  %3034 = vmatpush.msra.mxu0 0.0
  %3035 = vmatpush.msra.mxu0 %v2835
  %3036 = vmatpush.msra.mxu0 %v2825
  %3037 = vmatmul.f32.gmra.mxu0 %v2855
  %v3038 = vpop.f32.mrf.mxu0
  %v3039 = vadd.f32 %v3016, %v3038
  %3040 = vmatmul.f32.gmra.mxu0 %v2858
  %v3041 = vpop.f32.mrf.mxu0
  %v3042 = vadd.f32 %v3019, %v3041
  %3043 = vdwg.mxu0
  %3044 = vmatpush.msra.mxu0 %v2816
  %3045 = vmatpush.msra.mxu0 %v2806
  %3046 = vmatpush.msra.mxu0 %v2796
  %3047 = vmatpush.msra.mxu0 %v2786
  %3048 = vmatpush.msra.mxu0 %v2776
  %3049 = vmatpush.msra.mxu0 %v2766
  %3050 = vmatpush.msra.mxu0 %v2756
  %3051 = vmatpush.msra.mxu0 %v2746
  %3052 = vmatpush.msra.mxu0 %v2736
  %3053 = vmatpush.msra.mxu0 %v2726
  %3054 = vmatpush.msra.mxu0 %v2716
  %3055 = vmatpush.msra.mxu0 %v2706
  %3056 = vmatpush.msra.mxu0 %v2696
  %3057 = vmatpush.msra.mxu0 %v2686
  %3058 = vmatpush.msra.mxu0 %v2676
  %3059 = vmatpush.msra.mxu0 %v2666
  %3060 = vmatmul.f32.gmra.mxu0 %v2658
  %v3061 = vpop.f32.mrf.mxu0
  %v3062 = vadd.f32 %v2847, %v3061
  %3063 = vmatmul.f32.gmra.mxu0 %v2660
  %v3064 = vpop.f32.mrf.mxu0
  %v3065 = vadd.f32 %v2852, %v3064
  %3066 = vdwg.mxu0
  %3067 = vmatpush.msra.mxu0 0.0
  %3068 = vmatpush.msra.mxu0 0.0
  %3069 = vmatpush.msra.mxu0 0.0
  %3070 = vmatpush.msra.mxu0 0.0
  %3071 = vmatpush.msra.mxu0 0.0
  %3072 = vmatpush.msra.mxu0 0.0
  %3073 = vmatpush.msra.mxu0 0.0
  %3074 = vmatpush.msra.mxu0 0.0
  %3075 = vmatpush.msra.mxu0 0.0
  %3076 = vmatpush.msra.mxu0 0.0
  %3077 = vmatpush.msra.mxu0 0.0
  %3078 = vmatpush.msra.mxu0 0.0
  %3079 = vmatpush.msra.mxu0 0.0
  %3080 = vmatpush.msra.mxu0 0.0
  %3081 = vmatpush.msra.mxu0 %v2836
  %3082 = vmatpush.msra.mxu0 %v2826
  %3083 = vmatmul.f32.gmra.mxu0 %v2855
  %v3084 = vpop.f32.mrf.mxu0
  %v3085 = vadd.f32 %v3062, %v3084
  %3086 = vmatmul.f32.gmra.mxu0 %v2858
  %v3087 = vpop.f32.mrf.mxu0
  %v3088 = vadd.f32 %v3065, %v3087
  %3089 = vdwg.mxu0
  %3090 = vmatpush.msra.mxu0 %v2817
  %3091 = vmatpush.msra.mxu0 %v2807
  %3092 = vmatpush.msra.mxu0 %v2797
  %3093 = vmatpush.msra.mxu0 %v2787
  %3094 = vmatpush.msra.mxu0 %v2777
  %3095 = vmatpush.msra.mxu0 %v2767
  %3096 = vmatpush.msra.mxu0 %v2757
  %3097 = vmatpush.msra.mxu0 %v2747
  %3098 = vmatpush.msra.mxu0 %v2737
  %3099 = vmatpush.msra.mxu0 %v2727
  %3100 = vmatpush.msra.mxu0 %v2717
  %3101 = vmatpush.msra.mxu0 %v2707
  %3102 = vmatpush.msra.mxu0 %v2697
  %3103 = vmatpush.msra.mxu0 %v2687
  %3104 = vmatpush.msra.mxu0 %v2677
  %3105 = vmatpush.msra.mxu0 %v2667
  %3106 = vmatmul.f32.gmra.mxu0 %v2658
  %v3107 = vpop.f32.mrf.mxu0
  %v3108 = vadd.f32 %v2847, %v3107
  %3109 = vmatmul.f32.gmra.mxu0 %v2660
  %v3110 = vpop.f32.mrf.mxu0
  %v3111 = vadd.f32 %v2852, %v3110
  %3112 = vdwg.mxu0
  %3113 = vmatpush.msra.mxu0 0.0
  %3114 = vmatpush.msra.mxu0 0.0
  %3115 = vmatpush.msra.mxu0 0.0
  %3116 = vmatpush.msra.mxu0 0.0
  %3117 = vmatpush.msra.mxu0 0.0
  %3118 = vmatpush.msra.mxu0 0.0
  %3119 = vmatpush.msra.mxu0 0.0
  %3120 = vmatpush.msra.mxu0 0.0
  %3121 = vmatpush.msra.mxu0 0.0
  %3122 = vmatpush.msra.mxu0 0.0
  %3123 = vmatpush.msra.mxu0 0.0
  %3124 = vmatpush.msra.mxu0 0.0
  %3125 = vmatpush.msra.mxu0 0.0
  %3126 = vmatpush.msra.mxu0 0.0
  %3127 = vmatpush.msra.mxu0 %v2837
  %3128 = vmatpush.msra.mxu0 %v2827
  %3129 = vmatmul.f32.gmra.mxu0 %v2855
  %v3130 = vpop.f32.mrf.mxu0
  %v3131 = vadd.f32 %v3108, %v3130
  %3132 = vmatmul.f32.gmra.mxu0 %v2858
  %v3133 = vpop.f32.mrf.mxu0
  %v3134 = vadd.f32 %v3111, %v3133
  %3135 = vdwg.mxu0
  %3136 = vmatpush.msra.mxu0 %v2818
  %3137 = vmatpush.msra.mxu0 %v2808
  %3138 = vmatpush.msra.mxu0 %v2798
  %3139 = vmatpush.msra.mxu0 %v2788
  %3140 = vmatpush.msra.mxu0 %v2778
  %3141 = vmatpush.msra.mxu0 %v2768
  %3142 = vmatpush.msra.mxu0 %v2758
  %3143 = vmatpush.msra.mxu0 %v2748
  %3144 = vmatpush.msra.mxu0 %v2738
  %3145 = vmatpush.msra.mxu0 %v2728
  %3146 = vmatpush.msra.mxu0 %v2718
  %3147 = vmatpush.msra.mxu0 %v2708
  %3148 = vmatpush.msra.mxu0 %v2698
  %3149 = vmatpush.msra.mxu0 %v2688
  %3150 = vmatpush.msra.mxu0 %v2678
  %3151 = vmatpush.msra.mxu0 %v2668
  %3152 = vmatmul.f32.gmra.mxu0 %v2658
  %v3153 = vpop.f32.mrf.mxu0
  %v3154 = vadd.f32 %v2847, %v3153
  %3155 = vmatmul.f32.gmra.mxu0 %v2660
  %v3156 = vpop.f32.mrf.mxu0
  %v3157 = vadd.f32 %v2852, %v3156
  %3158 = vdwg.mxu0
  %3159 = vmatpush.msra.mxu0 0.0
  %3160 = vmatpush.msra.mxu0 0.0
  %3161 = vmatpush.msra.mxu0 0.0
  %3162 = vmatpush.msra.mxu0 0.0
  %3163 = vmatpush.msra.mxu0 0.0
  %3164 = vmatpush.msra.mxu0 0.0
  %3165 = vmatpush.msra.mxu0 0.0
  %3166 = vmatpush.msra.mxu0 0.0
  %3167 = vmatpush.msra.mxu0 0.0
  %3168 = vmatpush.msra.mxu0 0.0
  %3169 = vmatpush.msra.mxu0 0.0
  %3170 = vmatpush.msra.mxu0 0.0
  %3171 = vmatpush.msra.mxu0 0.0
  %3172 = vmatpush.msra.mxu0 0.0
  %3173 = vmatpush.msra.mxu0 %v2838
  %3174 = vmatpush.msra.mxu0 %v2828
  %3175 = vmatmul.f32.gmra.mxu0 %v2855
  %v3176 = vpop.f32.mrf.mxu0
  %v3177 = vadd.f32 %v3154, %v3176
  %3178 = vmatmul.f32.gmra.mxu0 %v2858
  %v3179 = vpop.f32.mrf.mxu0
  %v3180 = vadd.f32 %v3157, %v3179
  %3181 = vdwg.mxu0
  %3182 = vmatpush.msra.mxu0 %v2819
  %3183 = vmatpush.msra.mxu0 %v2809
  %3184 = vmatpush.msra.mxu0 %v2799
  %3185 = vmatpush.msra.mxu0 %v2789
  %3186 = vmatpush.msra.mxu0 %v2779
  %3187 = vmatpush.msra.mxu0 %v2769
  %3188 = vmatpush.msra.mxu0 %v2759
  %3189 = vmatpush.msra.mxu0 %v2749
  %3190 = vmatpush.msra.mxu0 %v2739
  %3191 = vmatpush.msra.mxu0 %v2729
  %3192 = vmatpush.msra.mxu0 %v2719
  %3193 = vmatpush.msra.mxu0 %v2709
  %3194 = vmatpush.msra.mxu0 %v2699
  %3195 = vmatpush.msra.mxu0 %v2689
  %3196 = vmatpush.msra.mxu0 %v2679
  %3197 = vmatpush.msra.mxu0 %v2669
  %3198 = vmatmul.f32.gmra.mxu0 %v2658
  %v3199 = vpop.f32.mrf.mxu0
  %v3200 = vadd.f32 %v2847, %v3199
  %3201 = vmatmul.f32.gmra.mxu0 %v2660
  %v3202 = vpop.f32.mrf.mxu0
  %v3203 = vadd.f32 %v2852, %v3202
  %3204 = vdwg.mxu0
  %3205 = vmatpush.msra.mxu0 0.0
  %3206 = vmatpush.msra.mxu0 0.0
  %3207 = vmatpush.msra.mxu0 0.0
  %3208 = vmatpush.msra.mxu0 0.0
  %3209 = vmatpush.msra.mxu0 0.0
  %3210 = vmatpush.msra.mxu0 0.0
  %3211 = vmatpush.msra.mxu0 0.0
  %3212 = vmatpush.msra.mxu0 0.0
  %3213 = vmatpush.msra.mxu0 0.0
  %3214 = vmatpush.msra.mxu0 0.0
  %3215 = vmatpush.msra.mxu0 0.0
  %3216 = vmatpush.msra.mxu0 0.0
  %3217 = vmatpush.msra.mxu0 0.0
  %3218 = vmatpush.msra.mxu0 0.0
  %3219 = vmatpush.msra.mxu0 %v2839
  %3220 = vmatpush.msra.mxu0 %v2829
  %3221 = vmatmul.f32.gmra.mxu0 %v2855
  %v3222 = vpop.f32.mrf.mxu0
  %v3223 = vadd.f32 %v3200, %v3222
  %3224 = vmatmul.f32.gmra.mxu0 %v2858
  %v3225 = vpop.f32.mrf.mxu0
  %v3226 = vadd.f32 %v3203, %v3225
  %3227 = vdwg.mxu0
  %3228 = vmatpush.msra.mxu0 %v2820
  %3229 = vmatpush.msra.mxu0 %v2810
  %3230 = vmatpush.msra.mxu0 %v2800
  %3231 = vmatpush.msra.mxu0 %v2790
  %3232 = vmatpush.msra.mxu0 %v2780
  %3233 = vmatpush.msra.mxu0 %v2770
  %3234 = vmatpush.msra.mxu0 %v2760
  %3235 = vmatpush.msra.mxu0 %v2750
  %3236 = vmatpush.msra.mxu0 %v2740
  %3237 = vmatpush.msra.mxu0 %v2730
  %3238 = vmatpush.msra.mxu0 %v2720
  %3239 = vmatpush.msra.mxu0 %v2710
  %3240 = vmatpush.msra.mxu0 %v2700
  %3241 = vmatpush.msra.mxu0 %v2690
  %3242 = vmatpush.msra.mxu0 %v2680
  %3243 = vmatpush.msra.mxu0 %v2670
  %3244 = vmatmul.f32.gmra.mxu0 %v2658
  %v3245 = vpop.f32.mrf.mxu0
  %v3246 = vadd.f32 %v2847, %v3245
  %3247 = vmatmul.f32.gmra.mxu0 %v2660
  %v3248 = vpop.f32.mrf.mxu0
  %v3249 = vadd.f32 %v2852, %v3248
  %3250 = vdwg.mxu0
  %3251 = vmatpush.msra.mxu0 0.0
  %3252 = vmatpush.msra.mxu0 0.0
  %3253 = vmatpush.msra.mxu0 0.0
  %3254 = vmatpush.msra.mxu0 0.0
  %3255 = vmatpush.msra.mxu0 0.0
  %3256 = vmatpush.msra.mxu0 0.0
  %3257 = vmatpush.msra.mxu0 0.0
  %3258 = vmatpush.msra.mxu0 0.0
  %3259 = vmatpush.msra.mxu0 0.0
  %3260 = vmatpush.msra.mxu0 0.0
  %3261 = vmatpush.msra.mxu0 0.0
  %3262 = vmatpush.msra.mxu0 0.0
  %3263 = vmatpush.msra.mxu0 0.0
  %3264 = vmatpush.msra.mxu0 0.0
  %3265 = vmatpush.msra.mxu0 %v2840
  %3266 = vmatpush.msra.mxu0 %v2830
  %3267 = vmatmul.f32.gmra.mxu0 %v2855
  %v3268 = vpop.f32.mrf.mxu0
  %v3269 = vadd.f32 %v3246, %v3268
  %3270 = vmatmul.f32.gmra.mxu0 %v2858
  %v3271 = vpop.f32.mrf.mxu0
  %v3272 = vadd.f32 %v3249, %v3271
  %3273 = vdwg.mxu0
  %3274 = vmatpush.msra.mxu0 %v2821
  %3275 = vmatpush.msra.mxu0 %v2811
  %3276 = vmatpush.msra.mxu0 %v2801
  %3277 = vmatpush.msra.mxu0 %v2791
  %3278 = vmatpush.msra.mxu0 %v2781
  %3279 = vmatpush.msra.mxu0 %v2771
  %3280 = vmatpush.msra.mxu0 %v2761
  %3281 = vmatpush.msra.mxu0 %v2751
  %3282 = vmatpush.msra.mxu0 %v2741
  %3283 = vmatpush.msra.mxu0 %v2731
  %3284 = vmatpush.msra.mxu0 %v2721
  %3285 = vmatpush.msra.mxu0 %v2711
  %3286 = vmatpush.msra.mxu0 %v2701
  %3287 = vmatpush.msra.mxu0 %v2691
  %3288 = vmatpush.msra.mxu0 %v2681
  %3289 = vmatpush.msra.mxu0 %v2671
  %3290 = vmatmul.f32.gmra.mxu0 %v2658
  %v3291 = vpop.f32.mrf.mxu0
  %v3292 = vadd.f32 %v2847, %v3291
  %3293 = vmatmul.f32.gmra.mxu0 %v2660
  %v3294 = vpop.f32.mrf.mxu0
  %v3295 = vadd.f32 %v2852, %v3294
  %3296 = vdwg.mxu0
  %3297 = vmatpush.msra.mxu0 0.0
  %3298 = vmatpush.msra.mxu0 0.0
  %3299 = vmatpush.msra.mxu0 0.0
  %3300 = vmatpush.msra.mxu0 0.0
  %3301 = vmatpush.msra.mxu0 0.0
  %3302 = vmatpush.msra.mxu0 0.0
  %3303 = vmatpush.msra.mxu0 0.0
  %3304 = vmatpush.msra.mxu0 0.0
  %3305 = vmatpush.msra.mxu0 0.0
  %3306 = vmatpush.msra.mxu0 0.0
  %3307 = vmatpush.msra.mxu0 0.0
  %3308 = vmatpush.msra.mxu0 0.0
  %3309 = vmatpush.msra.mxu0 0.0
  %3310 = vmatpush.msra.mxu0 0.0
  %3311 = vmatpush.msra.mxu0 %v2841
  %3312 = vmatpush.msra.mxu0 %v2831
  %3313 = vmatmul.f32.gmra.mxu0 %v2855
  %v3314 = vpop.f32.mrf.mxu0
  %v3315 = vadd.f32 %v3292, %v3314
  %3316 = vmatmul.f32.gmra.mxu0 %v2858
  %v3317 = vpop.f32.mrf.mxu0
  %v3318 = vadd.f32 %v3295, %v3317
  %3319 = vdwg.mxu0
  %v3320 = vmax.f32 %v2901, 0.0
  %v3321 = vmax.f32 %v2947, 0.0
  %v3322 = vmax.f32 %v2993, 0.0
  %v3323 = vmax.f32 %v3039, 0.0
  %v3324 = vmax.f32 %v3085, 0.0
  %v3325 = vmax.f32 %v3131, 0.0
  %v3326 = vmax.f32 %v3177, 0.0
  %v3327 = vmax.f32 %v3223, 0.0
  %v3328 = vmax.f32 %v3269, 0.0
  %v3329 = vmax.f32 %v3315, 0.0
  %v3330 = vmax.f32 %v2904, 0.0
  %v3331 = vmax.f32 %v2950, 0.0
  %v3332 = vmax.f32 %v2996, 0.0
  %v3333 = vmax.f32 %v3042, 0.0
  %v3334 = vmax.f32 %v3088, 0.0
  %v3335 = vmax.f32 %v3134, 0.0
  %v3336 = vmax.f32 %v3180, 0.0
  %v3337 = vmax.f32 %v3226, 0.0
  %v3338 = vmax.f32 %v3272, 0.0
  %v3339 = vmax.f32 %v3318, 0.0
  %v3340 = vmul.f32 %v3320, %v1684
  %v3341 = vmul.f32 %v3321, %v1684
  %v3342 = vmul.f32 %v3322, %v1684
  %v3343 = vmul.f32 %v3323, %v1684
  %v3344 = vmul.f32 %v3324, %v1684
  %v3345 = vmul.f32 %v3325, %v1684
  %v3346 = vmul.f32 %v3326, %v1684
  %v3347 = vmul.f32 %v3327, %v1684
  %v3348 = vmul.f32 %v3328, %v1684
  %v3349 = vmul.f32 %v3329, %v1684
  %v3350 = vmul.f32 %v3330, %v1689
  %v3351 = vmul.f32 %v3331, %v1689
  %v3352 = vmul.f32 %v3332, %v1689
  %v3353 = vmul.f32 %v3333, %v1689
  %v3354 = vmul.f32 %v3334, %v1689
  %v3355 = vmul.f32 %v3335, %v1689
  %v3356 = vmul.f32 %v3336, %v1689
  %v3357 = vmul.f32 %v3337, %v1689
  %v3358 = vmul.f32 %v3338, %v1689
  %v3359 = vmul.f32 %v3339, %v1689
  %v3360 = vsub.f32 %v3340, %v1714
  %v3361 = vsub.f32 %v3341, %v1714
  %v3362 = vsub.f32 %v3342, %v1714
  %v3363 = vsub.f32 %v3343, %v1714
  %v3364 = vsub.f32 %v3344, %v1714
  %v3365 = vsub.f32 %v3345, %v1714
  %v3366 = vsub.f32 %v3346, %v1714
  %v3367 = vsub.f32 %v3347, %v1714
  %v3368 = vsub.f32 %v3348, %v1714
  %v3369 = vsub.f32 %v3349, %v1714
  %v3370 = vsub.f32 %v3350, %v1719
  %v3371 = vsub.f32 %v3351, %v1719
  %v3372 = vsub.f32 %v3352, %v1719
  %v3373 = vsub.f32 %v3353, %v1719
  %v3374 = vsub.f32 %v3354, %v1719
  %v3375 = vsub.f32 %v3355, %v1719
  %v3376 = vsub.f32 %v3356, %v1719
  %v3377 = vsub.f32 %v3357, %v1719
  %v3378 = vsub.f32 %v3358, %v1719
  %v3379 = vsub.f32 %v3359, %v1719
  %v3380 = vmax.f32 %v3360, 0.0
  %v3381 = vmax.f32 %v3361, 0.0
  %v3382 = vmax.f32 %v3362, 0.0
  %v3383 = vmax.f32 %v3363, 0.0
  %v3384 = vmax.f32 %v3364, 0.0
  %v3385 = vmax.f32 %v3365, 0.0
  %v3386 = vmax.f32 %v3366, 0.0
  %v3387 = vmax.f32 %v3367, 0.0
  %v3388 = vmax.f32 %v3368, 0.0
  %v3389 = vmax.f32 %v3369, 0.0
  %v3390 = vmax.f32 %v3370, 0.0
  %v3391 = vmax.f32 %v3371, 0.0
  %v3392 = vmax.f32 %v3372, 0.0
  %v3393 = vmax.f32 %v3373, 0.0
  %v3394 = vmax.f32 %v3374, 0.0
  %v3395 = vmax.f32 %v3375, 0.0
  %v3396 = vmax.f32 %v3376, 0.0
  %v3397 = vmax.f32 %v3377, 0.0
  %v3398 = vmax.f32 %v3378, 0.0
  %v3399 = vmax.f32 %v3379, 0.0
  %s3400 = scalar_lea.vmem %s5, 160
  %3401 = vst [vmem:[%s3400] sm:$0xff] %v3380
  %3402 = vst [vmem:[%s3400 + $0x8] sm:$0xff] %v3381
  %3403 = vst [vmem:[%s3400 + $0x10] sm:$0xff] %v3382
  %3404 = vst [vmem:[%s3400 + $0x18] sm:$0xff] %v3383
  %3405 = vst [vmem:[%s3400 + $0x20] sm:$0xff] %v3384
  %3406 = vst [vmem:[%s3400 + $0x28] sm:$0xff] %v3385
  %3407 = vst [vmem:[%s3400 + $0x30] sm:$0xff] %v3386
  %3408 = vst [vmem:[%s3400 + $0x38] sm:$0xff] %v3387
  %3409 = vst [vmem:[%s3400 + $0x40] sm:$0xff] %v3388
  %3410 = vst [vmem:[%s3400 + $0x48] sm:$0xff] %v3389
  %3411 = vst [vmem:[%s3400 + $0x50] sm:$0xff] %v3390
  %3412 = vst [vmem:[%s3400 + $0x58] sm:$0xff] %v3391
  %3413 = vst [vmem:[%s3400 + $0x60] sm:$0xff] %v3392
  %3414 = vst [vmem:[%s3400 + $0x68] sm:$0xff] %v3393
  %3415 = vst [vmem:[%s3400 + $0x70] sm:$0xff] %v3394
  %3416 = vst [vmem:[%s3400 + $0x78] sm:$0xff] %v3395
  %3417 = vst [vmem:[%s3400 + $0x80] sm:$0xff] %v3396
  %3418 = vst [vmem:[%s3400 + $0x88] sm:$0xff] %v3397
  %3419 = vst [vmem:[%s3400 + $0x90] sm:$0xff] %v3398
  %3420 = vst [vmem:[%s3400 + $0x98] sm:$0xff] %v3399
  // Predicated region
  $region22: #{model_forward.3} parent=0 // pred_check
    _
  $region23: #{model_forward.3} parent=0 // pred_check_branch
    %3422 = sbr.rel (0) target = $region25
  $region24: #{model_forward.3} parent=0 // pred_region
    _
  $region25: #{model_forward.3} parent=0 // pred_fallthru
    _
  // Predicated region
  $region26: #{model_forward.3} parent=0 // pred_check
    _
  $region27: #{model_forward.3} parent=0 // pred_check_branch
    %3424 = sbr.rel (0) target = $region29
  $region28: #{model_forward.3} parent=0 // pred_region
    _
  $region29: #{model_forward.3} parent=0 // pred_fallthru
    _

</llo_original>
